<compile_context>
chip_gen: v7x
topology: tpu7x:2x2x1
jax: 0.10.0
libtpu: 0.0.40
codegen_flags: <defaults>
</compile_context>

<pallas_src>
import functools

import jax
import jax.numpy as jnp
from jax.experimental import pallas as pl
from jax.experimental.pallas import tpu as pltpu


# ----------------------------------------------------------------------------
# Constants / small helpers
# ----------------------------------------------------------------------------

_LANES = 128
_MAX_TILE_M = 1024                       # 1024-row tiles ~ 86% of HBM roofline
_VMEM_LIMIT_BYTES = 48 * 1024 * 1024     # > scoped default (16/32 MiB), < v7x 64 MiB


def _rup(n, m=_LANES):
    return ((n + m - 1) // m) * m


def _pad_lanes(a, target):
    pad = target - a.shape[-1]
    if pad == 0:
        return a
    cfg = [(0, 0)] * (a.ndim - 1) + [(0, pad)]
    return jnp.pad(a, cfg)


def _pad2(a, rows, cols):
    return jnp.pad(a, ((0, rows - a.shape[0]), (0, cols - a.shape[1])))


def _choose_tm(m):
    """Largest 8-aligned tile that divides m, capped at _MAX_TILE_M, preferring
    >= 2 grid steps so both v7x TensorCores get work."""
    for t in (1024, 512, 256, 128, 64, 32, 16, 8):
        if t <= _MAX_TILE_M and t <= m and m % t == 0 and (m // t) >= 2:
            return t
    return m  # single full block (block dim == array dim -> always legal)


def _layernorm_f32(x, g, b, c_real):
    """LayerNorm over the last (lane) dim of a lane-padded f32 tile.

    Padded lanes of x / g / b are zero, so one-pass stats over the padded width
    with an explicit /C_real are exact; padded output lanes stay zero (g=b=0).
    """
    inv_c = 1.0 / float(c_real)
    mu = jnp.sum(x, axis=-1, keepdims=True) * inv_c
    ex2 = jnp.sum(x * x, axis=-1, keepdims=True) * inv_c
    var = jnp.maximum(ex2 - mu * mu, 0.0)
    return (x - mu) * jax.lax.rsqrt(var + 1e-5) * g + b   # torch LN default eps


def _mlp_residual(x_f32, g, bb, w1, b1, w2, b2, c_real):
    """x + fc2(GELU(fc1(LayerNorm(x))))  -- residual stream kept in f32."""
    y = _layernorm_f32(x_f32, g[...], bb[...], c_real)
    h = jnp.dot(y.astype(jnp.bfloat16), w1[...],
                preferred_element_type=jnp.float32) + b1[...]
    # bf16 GELU: halves VPU work / vreg pressure (v6e/v7x bf16 paths); the cast
    # is needed for the second MXU matmul anyway.  tanh-approx stays on EUP.
    # (torch default is erf-GELU; ~1e-3 numeric divergence.)
    h = jax.nn.gelu(h.astype(jnp.bfloat16), approximate=True)
    return x_f32 + (jnp.dot(h, w2[...], preferred_element_type=jnp.float32)
                    + b2[...])


# ----------------------------------------------------------------------------
# Pallas kernels
# ----------------------------------------------------------------------------

def _stage_kernel(x_ref, *refs, depth, c_in, c_dim, has_prenorm):
    """One full SiMBA stage, fused:
       [LayerNorm(prev stage)] -> patch_embed linear -> depth x residual MLP."""
    o_ref = refs[-1]
    idx = 0
    xf = x_ref[...].astype(jnp.float32)
    if has_prenorm:
        g, bb = refs[0], refs[1]
        idx = 2
        y = _layernorm_f32(xf, g[...], bb[...], c_in)
    else:
        y = xf
    pw, pb = refs[idx], refs[idx + 1]
    idx += 2
    x1 = jnp.dot(y.astype(jnp.bfloat16), pw[...],
                 preferred_element_type=jnp.float32) + pb[...]
    # TODO(synk): Block_mamba's Mamba / EinFFT token mixer is not defined in the
    # provided model.py; only the pre-norm residual channel-MLP branch runs.
    for d in range(depth):
        g, bb, w1, b1, w2, b2 = refs[idx + 6 * d: idx + 6 * d + 6]
        x1 = _mlp_residual(x1, g, bb, w1, b1, w2, b2, c_dim)
    o_ref[...] = x1.astype(o_ref.dtype)


def _tail_kernel(x_ref, *refs, n_post, c_dim, inv_n, scale):
    """forward_cls + head, fused per batch element:
       mean-pool (MXU ones-matmul) -> post_network MLP blocks on the cls token
       -> final LayerNorm -> head linear -> * scale."""
    o_ref = refs[-1]
    xb = x_ref[...][0].astype(jnp.bfloat16)                 # (N, Cp)
    ones = jnp.ones((1, xb.shape[0]), jnp.bfloat16)
    cls = jnp.dot(ones, xb, preferred_element_type=jnp.float32) * inv_n  # (1,Cp)
    # TODO(synk): ClassBlock class-attention is not defined in the provided
    # model.py; only its pre-norm residual channel-MLP branch runs, which is
    # token-local, so it is applied to the cls token only (restore full-token
    # processing once real class attention is implemented).
    idx = 0
    for _ in range(n_post):
        g, bb, w1, b1, w2, b2 = refs[idx: idx + 6]
        idx += 6
        cls = _mlp_residual(cls, g, bb, w1, b1, w2, b2, c_dim)
    ng, nb, hw, hb = refs[idx: idx + 4]
    y = _layernorm_f32(cls, ng[...], nb[...], c_dim)
    out = (jnp.dot(y.astype(jnp.bfloat16), hw[...],
                   preferred_element_type=jnp.float32) + hb[...]) * scale
    o_ref[...] = out[None].astype(o_ref.dtype)              # (1,1,NCp)


# ----------------------------------------------------------------------------
# pallas_call wrappers
# ----------------------------------------------------------------------------

def pallas_stage(x2d, sp, *, has_prenorm, c_in, c_dim):
    m, cin_p = x2d.shape
    cp = sp["pe_w"].shape[1]
    consts = []
    if has_prenorm:
        consts += [sp["prenorm_g"], sp["prenorm_b"]]
    consts += [sp["pe_w"], sp["pe_b"]]
    for blk in sp["blocks"]:
        consts += [blk["norm_g"], blk["norm_b"], blk["w1"], blk["b1"],
                   blk["w2"], blk["b2"]]
    kern = functools.partial(_stage_kernel, depth=len(sp["blocks"]),
                             c_in=c_in, c_dim=c_dim, has_prenorm=has_prenorm)
    tm = _choose_tm(m)
    const_specs = [pl.BlockSpec(c.shape, lambda i: (0, 0)) for c in consts]
    out_dtype = jnp.bfloat16                      # bf16 inter-kernel activations
    # In-place residual stream in HBM when shapes/dtypes match.
    aliases = {0: 0} if (x2d.shape == (m, cp) and x2d.dtype == out_dtype) else {}
    return pl.pallas_call(
        kern,
        out_shape=jax.ShapeDtypeStruct((m, cp), out_dtype),
        grid_spec=pltpu.PrefetchScalarGridSpec(
            num_scalar_prefetch=0,
            grid=(pl.cdiv(m, tm),),
            in_specs=[pl.BlockSpec((tm, cin_p), lambda i: (i, 0))] + const_specs,
            out_specs=pl.BlockSpec((tm, cp), lambda i: (i, 0)),
        ),
        compiler_params=pltpu.CompilerParams(
            dimension_semantics=("parallel",),
            vmem_limit_bytes=_VMEM_LIMIT_BYTES),
        input_output_aliases=aliases,
    )(x2d, *consts)


def pallas_tail(x3d, tp, *, c_dim, scale):
    B, N, cp = x3d.shape
    consts = []
    for blk in tp["post"]:
        consts += [blk["norm_g"], blk["norm_b"], blk["w1"], blk["b1"],
                   blk["w2"], blk["b2"]]
    consts += [tp["norm_g"], tp["norm_b"], tp["head_w"], tp["head_b"]]
    ncp = tp["head_w"].shape[1]
    kern = functools.partial(_tail_kernel, n_post=len(tp["post"]), c_dim=c_dim,
                             inv_n=1.0 / N, scale=scale)
    const_specs = [pl.BlockSpec(c.shape, lambda b: (0, 0)) for c in consts]
    out = pl.pallas_call(
        kern,
        out_shape=jax.ShapeDtypeStruct((B, 1, ncp), jnp.float32),
        grid_spec=pltpu.PrefetchScalarGridSpec(
            num_scalar_prefetch=0,
            grid=(B,),
            in_specs=[pl.BlockSpec((1, N, cp), lambda b: (b, 0, 0))] + const_specs,
            out_specs=pl.BlockSpec((1, 1, ncp), lambda b: (b, 0, 0)),
        ),
        compiler_params=pltpu.CompilerParams(
            dimension_semantics=("parallel",),
            vmem_limit_bytes=_VMEM_LIMIT_BYTES),
    )(x3d, *consts)
    return out.reshape(B, ncp)


# ----------------------------------------------------------------------------
# Model forward
# ----------------------------------------------------------------------------

def simba_forward(x, params, *, num_stages, embed_dims, num_classes, scale):
    B, L, D = x.shape
    # One-time lane padding of the input channels to 128 (zero-filled).
    x = _pad_lanes(x, _rup(D))
    x2d = x.reshape(B * L, -1)

    prev_real = D
    for i in range(num_stages):
        # torch:  x = patch_embed{i+1}(x); for blk in block{i+1}: x = blk(x);
        #         if i != last: x = norm{i+1}(x)   (fused as next stage prenorm)
        x2d = pallas_stage(x2d, params[f"stage{i + 1}"],
                           has_prenorm=(i > 0), c_in=prev_real,
                           c_dim=embed_dims[i])
        prev_real = embed_dims[i]

    x3d = x2d.reshape(B, L, -1)
    # forward_cls (mean-pool + post_network on cls token) + norm{num_stages}
    # + head * scale, all in one kernel; head output is lane-dense (128 cols).
    out = pallas_tail(x3d, params["tail"], c_dim=embed_dims[-1], scale=scale)
    return out[:, :num_classes]


# ----------------------------------------------------------------------------
# Deterministic parameter init (matches _init_weights conventions),
# pre-padded to 128 lanes; weights bf16, biases / gamma / beta f32 (1, D).
# ----------------------------------------------------------------------------

def _trunc_normal(key, shape, std=0.02):
    return std * jax.random.truncated_normal(key, -2.0, 2.0, shape, jnp.float32)


def init_params(key, input_dim, num_classes, embed_dims, mlp_ratios, depths,
                num_stages):
    keys = iter(jax.random.split(key, 1024))
    params = {}
    prev = input_dim
    for i in range(num_stages):
        d = embed_dims[i]
        dp, prev_p = _rup(d), _rup(prev)
        st = {}
        if i > 0:
            # norm{i} of the torch model (dim = embed_dims[i-1]), fused as prenorm
            st["prenorm_g"] = _pad2(jnp.ones((1, prev), jnp.float32), 1, prev_p)
            st["prenorm_b"] = jnp.zeros((1, prev_p), jnp.float32)
        st["pe_w"] = _pad2(_trunc_normal(next(keys), (prev, d)),
                           prev_p, dp).astype(jnp.bfloat16)
        st["pe_b"] = jnp.zeros((1, dp), jnp.float32)
        blocks = []
        for _ in range(depths[i]):
            hid = d * mlp_ratios[i]
            hp = _rup(hid)
            blocks.append({
                "norm_g": _pad2(jnp.ones((1, d), jnp.float32), 1, dp),
                "norm_b": jnp.zeros((1, dp), jnp.float32),
                "w1": _pad2(_trunc_normal(next(keys), (d, hid)),
                            dp, hp).astype(jnp.bfloat16),
                "b1": jnp.zeros((1, hp), jnp.float32),
                "w2": _pad2(_trunc_normal(next(keys), (hid, d)),
                            hp, dp).astype(jnp.bfloat16),
                "b2": jnp.zeros((1, dp), jnp.float32),
            })
        st["blocks"] = blocks
        params[f"stage{i + 1}"] = st
        prev = d

    d = embed_dims[-1]
    dp = _rup(d)
    hid = d * mlp_ratios[-1]
    hp = _rup(hid)
    ncp = _rup(num_classes)
    params["tail"] = {
        "post": [{
            "norm_g": _pad2(jnp.ones((1, d), jnp.float32), 1, dp),
            "norm_b": jnp.zeros((1, dp), jnp.float32),
            "w1": _pad2(_trunc_normal(next(keys), (d, hid)),
                        dp, hp).astype(jnp.bfloat16),
            "b1": jnp.zeros((1, hp), jnp.float32),
            "w2": _pad2(_trunc_normal(next(keys), (hid, d)),
                        hp, dp).astype(jnp.bfloat16),
            "b2": jnp.zeros((1, dp), jnp.float32),
        }],
        "norm_g": _pad2(jnp.ones((1, d), jnp.float32), 1, dp),  # norm{num_stages}
        "norm_b": jnp.zeros((1, dp), jnp.float32),
        "head_w": _pad2(_trunc_normal(next(keys), (d, num_classes)),
                        dp, ncp).astype(jnp.bfloat16),
        "head_b": jnp.zeros((1, ncp), jnp.float32),
    }
    return params


# ----------------------------------------------------------------------------
# Main
# ----------------------------------------------------------------------------

if __name__ == "__main__":
    # Small, module-consistent config.
    input_dim = 32
    num_classes = 10
    embed_dims = [16, 32, 48, 64]
    mlp_ratios = [2, 2, 2, 2]
    depths = [2, 2, 2, 2]      # >1 per stage to exercise in-kernel stage fusion
    num_stages = 4
    scale = 1.0
    B, L = 2, 8

    root = jax.random.PRNGKey(0)
    k_x, k_p = jax.random.split(root)
    x = jax.random.normal(k_x, (B, L, input_dim), jnp.float32)
    params = init_params(k_p, input_dim, num_classes, embed_dims, mlp_ratios,
                         depths, num_stages)

    fwd = jax.jit(functools.partial(
        simba_forward, num_stages=num_stages, embed_dims=tuple(embed_dims),
        num_classes=num_classes, scale=scale))
    out = fwd(x, params)
    out = jax.block_until_ready(out)
    assert out.shape == (B, num_classes)
    assert bool(jnp.all(jnp.isfinite(out)))
    print("KERNEL_OK")
</pallas_src>

<mosaic_0001>
module attributes {stable_mosaic.version = 11 : i64} {
  func.func @_stage_kernel(%arg0: i32, %arg1: memref<8x128xbf16, #tpu.memory_space<vmem>>, %arg2: memref<1x128xf32, #tpu.memory_space<vmem>>, %arg3: memref<1x128xf32, #tpu.memory_space<vmem>>, %arg4: memref<128x128xbf16, #tpu.memory_space<vmem>>, %arg5: memref<1x128xf32, #tpu.memory_space<vmem>>, %arg6: memref<1x128xf32, #tpu.memory_space<vmem>>, %arg7: memref<1x128xf32, #tpu.memory_space<vmem>>, %arg8: memref<128x128xbf16, #tpu.memory_space<vmem>>, %arg9: memref<1x128xf32, #tpu.memory_space<vmem>>, %arg10: memref<128x128xbf16, #tpu.memory_space<vmem>>, %arg11: memref<1x128xf32, #tpu.memory_space<vmem>>, %arg12: memref<1x128xf32, #tpu.memory_space<vmem>>, %arg13: memref<1x128xf32, #tpu.memory_space<vmem>>, %arg14: memref<128x128xbf16, #tpu.memory_space<vmem>>, %arg15: memref<1x128xf32, #tpu.memory_space<vmem>>, %arg16: memref<128x128xbf16, #tpu.memory_space<vmem>>, %arg17: memref<1x128xf32, #tpu.memory_space<vmem>>, %arg18: memref<8x128xbf16, #tpu.memory_space<vmem>>) attributes {dimension_semantics = [#tpu.dimension_semantics<parallel>], iteration_bounds = array<i64: 2>, scalar_prefetch = 0 : i64, scratch_operands = 0 : i64, tpu.core_type = #tpu.core_type<tc>, window_params = [{transform_indices = @transform_0, window_bounds = array<i64: 8, 128>}, {pipeline_mode = #tpu.pipeline_mode<synchronous>, transform_indices = @transform_1, window_bounds = array<i64: 1, 128>}, {pipeline_mode = #tpu.pipeline_mode<synchronous>, transform_indices = @transform_2, window_bounds = array<i64: 1, 128>}, {pipeline_mode = #tpu.pipeline_mode<synchronous>, transform_indices = @transform_3, window_bounds = array<i64: 128, 128>}, {pipeline_mode = #tpu.pipeline_mode<synchronous>, transform_indices = @transform_4, window_bounds = array<i64: 1, 128>}, {pipeline_mode = #tpu.pipeline_mode<synchronous>, transform_indices = @transform_5, window_bounds = array<i64: 1, 128>}, {pipeline_mode = #tpu.pipeline_mode<synchronous>, transform_indices = @transform_6, window_bounds = array<i64: 1, 128>}, {pipeline_mode = #tpu.pipeline_mode<synchronous>, transform_indices = @transform_7, window_bounds = array<i64: 128, 128>}, {pipeline_mode = #tpu.pipeline_mode<synchronous>, transform_indices = @transform_8, window_bounds = array<i64: 1, 128>}, {pipeline_mode = #tpu.pipeline_mode<synchronous>, transform_indices = @transform_9, window_bounds = array<i64: 128, 128>}, {pipeline_mode = #tpu.pipeline_mode<synchronous>, transform_indices = @transform_10, window_bounds = array<i64: 1, 128>}, {pipeline_mode = #tpu.pipeline_mode<synchronous>, transform_indices = @transform_11, window_bounds = array<i64: 1, 128>}, {pipeline_mode = #tpu.pipeline_mode<synchronous>, transform_indices = @transform_12, window_bounds = array<i64: 1, 128>}, {pipeline_mode = #tpu.pipeline_mode<synchronous>, transform_indices = @transform_13, window_bounds = array<i64: 128, 128>}, {pipeline_mode = #tpu.pipeline_mode<synchronous>, transform_indices = @transform_14, window_bounds = array<i64: 1, 128>}, {pipeline_mode = #tpu.pipeline_mode<synchronous>, transform_indices = @transform_15, window_bounds = array<i64: 128, 128>}, {pipeline_mode = #tpu.pipeline_mode<synchronous>, transform_indices = @transform_16, window_bounds = array<i64: 1, 128>}, {transform_indices = @transform_17, window_bounds = array<i64: 8, 128>}]} {
    %c0 = arith.constant 0 : index
    %c0_0 = arith.constant 0 : index
    %0 = vector.load %arg1[%c0, %c0_0] : memref<8x128xbf16, #tpu.memory_space<vmem>>, vector<8x128xbf16>
    %1 = arith.extf %0 : vector<8x128xbf16> to vector<8x128xf32>
    %c0_1 = arith.constant 0 : index
    %c0_2 = arith.constant 0 : index
    %2 = vector.load %arg2[%c0_1, %c0_2] : memref<1x128xf32, #tpu.memory_space<vmem>>, vector<1x128xf32>
    %c0_3 = arith.constant 0 : index
    %c0_4 = arith.constant 0 : index
    %3 = vector.load %arg3[%c0_3, %c0_4] : memref<1x128xf32, #tpu.memory_space<vmem>>, vector<1x128xf32>
    %cst = arith.constant dense<0.000000e+00> : vector<8xf32>
    %4 = vector.multi_reduction <add>, %1, %cst [1] : vector<8x128xf32> to vector<8xf32>
    %5 = vector.shape_cast %4 : vector<8xf32> to vector<8x1xf32>
    %cst_5 = arith.constant 3.125000e-02 : f32
    %6 = vector.broadcast %cst_5 : f32 to vector<8x1xf32>
    %7 = arith.mulf %5, %6 : vector<8x1xf32>
    %8 = arith.mulf %1, %1 : vector<8x128xf32>
    %cst_6 = arith.constant dense<0.000000e+00> : vector<8xf32>
    %9 = vector.multi_reduction <add>, %8, %cst_6 [1] : vector<8x128xf32> to vector<8xf32>
    %10 = vector.shape_cast %9 : vector<8xf32> to vector<8x1xf32>
    %cst_7 = arith.constant 3.125000e-02 : f32
    %11 = vector.broadcast %cst_7 : f32 to vector<8x1xf32>
    %12 = arith.mulf %10, %11 : vector<8x1xf32>
    %13 = arith.mulf %7, %7 : vector<8x1xf32>
    %14 = arith.subf %12, %13 : vector<8x1xf32>
    %cst_8 = arith.constant 0.000000e+00 : f32
    %15 = vector.broadcast %cst_8 : f32 to vector<8x1xf32>
    %16 = arith.maximumf %14, %15 : vector<8x1xf32>
    %17 = vector.broadcast %7 : vector<8x1xf32> to vector<8x128xf32>
    %18 = arith.subf %1, %17 : vector<8x128xf32>
    %cst_9 = arith.constant 9.99999974E-6 : f32
    %19 = vector.broadcast %cst_9 : f32 to vector<8x1xf32>
    %20 = arith.addf %16, %19 : vector<8x1xf32>
    %21 = math.rsqrt %20 : vector<8x1xf32>
    %22 = vector.broadcast %21 : vector<8x1xf32> to vector<8x128xf32>
    %23 = arith.mulf %18, %22 : vector<8x128xf32>
    %24 = vector.broadcast %2 : vector<1x128xf32> to vector<8x128xf32>
    %25 = arith.mulf %23, %24 : vector<8x128xf32>
    %26 = vector.broadcast %3 : vector<1x128xf32> to vector<8x128xf32>
    %27 = arith.addf %25, %26 : vector<8x128xf32>
    %28 = arith.truncf %27 : vector<8x128xf32> to vector<8x128xbf16>
    %c0_10 = arith.constant 0 : index
    %c0_11 = arith.constant 0 : index
    %29 = vector.load %arg4[%c0_10, %c0_11] : memref<128x128xbf16, #tpu.memory_space<vmem>>, vector<128x128xbf16>
    %cst_12 = arith.constant dense<0.000000e+00> : vector<8x128xf32>
    %30 = tpu.matmul %28, %29, %cst_12 {dimension_numbers = #tpu.dot_dimension_numbers<[1], [0], [0], [1], [0, 0, 1, 1], [], []>} : vector<8x128xbf16>, vector<128x128xbf16>, vector<8x128xf32> -> vector<8x128xf32>
    %c0_13 = arith.constant 0 : index
    %c0_14 = arith.constant 0 : index
    %31 = vector.load %arg5[%c0_13, %c0_14] : memref<1x128xf32, #tpu.memory_space<vmem>>, vector<1x128xf32>
    %32 = vector.broadcast %31 : vector<1x128xf32> to vector<8x128xf32>
    %33 = arith.addf %30, %32 : vector<8x128xf32>
    %c0_15 = arith.constant 0 : index
    %c0_16 = arith.constant 0 : index
    %34 = vector.load %arg6[%c0_15, %c0_16] : memref<1x128xf32, #tpu.memory_space<vmem>>, vector<1x128xf32>
    %c0_17 = arith.constant 0 : index
    %c0_18 = arith.constant 0 : index
    %35 = vector.load %arg7[%c0_17, %c0_18] : memref<1x128xf32, #tpu.memory_space<vmem>>, vector<1x128xf32>
    %cst_19 = arith.constant dense<0.000000e+00> : vector<8xf32>
    %36 = vector.multi_reduction <add>, %33, %cst_19 [1] : vector<8x128xf32> to vector<8xf32>
    %37 = vector.shape_cast %36 : vector<8xf32> to vector<8x1xf32>
    %cst_20 = arith.constant 0.020833334 : f32
    %38 = vector.broadcast %cst_20 : f32 to vector<8x1xf32>
    %39 = arith.mulf %37, %38 : vector<8x1xf32>
    %40 = arith.mulf %33, %33 : vector<8x128xf32>
    %cst_21 = arith.constant dense<0.000000e+00> : vector<8xf32>
    %41 = vector.multi_reduction <add>, %40, %cst_21 [1] : vector<8x128xf32> to vector<8xf32>
    %42 = vector.shape_cast %41 : vector<8xf32> to vector<8x1xf32>
    %cst_22 = arith.constant 0.020833334 : f32
    %43 = vector.broadcast %cst_22 : f32 to vector<8x1xf32>
    %44 = arith.mulf %42, %43 : vector<8x1xf32>
    %45 = arith.mulf %39, %39 : vector<8x1xf32>
    %46 = arith.subf %44, %45 : vector<8x1xf32>
    %cst_23 = arith.constant 0.000000e+00 : f32
    %47 = vector.broadcast %cst_23 : f32 to vector<8x1xf32>
    %48 = arith.maximumf %46, %47 : vector<8x1xf32>
    %49 = vector.broadcast %39 : vector<8x1xf32> to vector<8x128xf32>
    %50 = arith.subf %33, %49 : vector<8x128xf32>
    %cst_24 = arith.constant 9.99999974E-6 : f32
    %51 = vector.broadcast %cst_24 : f32 to vector<8x1xf32>
    %52 = arith.addf %48, %51 : vector<8x1xf32>
    %53 = math.rsqrt %52 : vector<8x1xf32>
    %54 = vector.broadcast %53 : vector<8x1xf32> to vector<8x128xf32>
    %55 = arith.mulf %50, %54 : vector<8x128xf32>
    %56 = vector.broadcast %34 : vector<1x128xf32> to vector<8x128xf32>
    %57 = arith.mulf %55, %56 : vector<8x128xf32>
    %58 = vector.broadcast %35 : vector<1x128xf32> to vector<8x128xf32>
    %59 = arith.addf %57, %58 : vector<8x128xf32>
    %60 = arith.truncf %59 : vector<8x128xf32> to vector<8x128xbf16>
    %c0_25 = arith.constant 0 : index
    %c0_26 = arith.constant 0 : index
    %61 = vector.load %arg8[%c0_25, %c0_26] : memref<128x128xbf16, #tpu.memory_space<vmem>>, vector<128x128xbf16>
    %cst_27 = arith.constant dense<0.000000e+00> : vector<8x128xf32>
    %62 = tpu.matmul %60, %61, %cst_27 {dimension_numbers = #tpu.dot_dimension_numbers<[1], [0], [0], [1], [0, 0, 1, 1], [], []>} : vector<8x128xbf16>, vector<128x128xbf16>, vector<8x128xf32> -> vector<8x128xf32>
    %c0_28 = arith.constant 0 : index
    %c0_29 = arith.constant 0 : index
    %63 = vector.load %arg9[%c0_28, %c0_29] : memref<1x128xf32, #tpu.memory_space<vmem>>, vector<1x128xf32>
    %64 = vector.broadcast %63 : vector<1x128xf32> to vector<8x128xf32>
    %65 = arith.addf %62, %64 : vector<8x128xf32>
    %66 = arith.truncf %65 : vector<8x128xf32> to vector<8x128xbf16>
    %67 = arith.mulf %66, %66 : vector<8x128xbf16>
    %68 = arith.mulf %66, %67 : vector<8x128xbf16>
    %cst_30 = arith.constant 4.467770e-02 : bf16
    %69 = vector.broadcast %cst_30 : bf16 to vector<8x128xbf16>
    %70 = arith.mulf %69, %68 : vector<8x128xbf16>
    %71 = arith.addf %66, %70 : vector<8x128xbf16>
    %cst_31 = arith.constant 7.968750e-01 : bf16
    %72 = vector.broadcast %cst_31 : bf16 to vector<8x128xbf16>
    %73 = arith.mulf %72, %71 : vector<8x128xbf16>
    %74 = math.tanh %73 : vector<8x128xbf16>
    %cst_32 = arith.constant 1.000000e+00 : bf16
    %75 = vector.broadcast %cst_32 : bf16 to vector<8x128xbf16>
    %76 = arith.addf %75, %74 : vector<8x128xbf16>
    %cst_33 = arith.constant 5.000000e-01 : bf16
    %77 = vector.broadcast %cst_33 : bf16 to vector<8x128xbf16>
    %78 = arith.mulf %77, %76 : vector<8x128xbf16>
    %79 = arith.mulf %66, %78 : vector<8x128xbf16>
    %c0_34 = arith.constant 0 : index
    %c0_35 = arith.constant 0 : index
    %80 = vector.load %arg10[%c0_34, %c0_35] : memref<128x128xbf16, #tpu.memory_space<vmem>>, vector<128x128xbf16>
    %cst_36 = arith.constant dense<0.000000e+00> : vector<8x128xf32>
    %81 = tpu.matmul %79, %80, %cst_36 {dimension_numbers = #tpu.dot_dimension_numbers<[1], [0], [0], [1], [0, 0, 1, 1], [], []>} : vector<8x128xbf16>, vector<128x128xbf16>, vector<8x128xf32> -> vector<8x128xf32>
    %c0_37 = arith.constant 0 : index
    %c0_38 = arith.constant 0 : index
    %82 = vector.load %arg11[%c0_37, %c0_38] : memref<1x128xf32, #tpu.memory_space<vmem>>, vector<1x128xf32>
    %83 = vector.broadcast %82 : vector<1x128xf32> to vector<8x128xf32>
    %84 = arith.addf %81, %83 : vector<8x128xf32>
    %85 = arith.addf %33, %84 : vector<8x128xf32>
    %c0_39 = arith.constant 0 : index
    %c0_40 = arith.constant 0 : index
    %86 = vector.load %arg12[%c0_39, %c0_40] : memref<1x128xf32, #tpu.memory_space<vmem>>, vector<1x128xf32>
    %c0_41 = arith.constant 0 : index
    %c0_42 = arith.constant 0 : index
    %87 = vector.load %arg13[%c0_41, %c0_42] : memref<1x128xf32, #tpu.memory_space<vmem>>, vector<1x128xf32>
    %cst_43 = arith.constant dense<0.000000e+00> : vector<8xf32>
    %88 = vector.multi_reduction <add>, %85, %cst_43 [1] : vector<8x128xf32> to vector<8xf32>
    %89 = vector.shape_cast %88 : vector<8xf32> to vector<8x1xf32>
    %cst_44 = arith.constant 0.020833334 : f32
    %90 = vector.broadcast %cst_44 : f32 to vector<8x1xf32>
    %91 = arith.mulf %89, %90 : vector<8x1xf32>
    %92 = arith.mulf %85, %85 : vector<8x128xf32>
    %cst_45 = arith.constant dense<0.000000e+00> : vector<8xf32>
    %93 = vector.multi_reduction <add>, %92, %cst_45 [1] : vector<8x128xf32> to vector<8xf32>
    %94 = vector.shape_cast %93 : vector<8xf32> to vector<8x1xf32>
    %cst_46 = arith.constant 0.020833334 : f32
    %95 = vector.broadcast %cst_46 : f32 to vector<8x1xf32>
    %96 = arith.mulf %94, %95 : vector<8x1xf32>
    %97 = arith.mulf %91, %91 : vector<8x1xf32>
    %98 = arith.subf %96, %97 : vector<8x1xf32>
    %cst_47 = arith.constant 0.000000e+00 : f32
    %99 = vector.broadcast %cst_47 : f32 to vector<8x1xf32>
    %100 = arith.maximumf %98, %99 : vector<8x1xf32>
    %101 = vector.broadcast %91 : vector<8x1xf32> to vector<8x128xf32>
    %102 = arith.subf %85, %101 : vector<8x128xf32>
    %cst_48 = arith.constant 9.99999974E-6 : f32
    %103 = vector.broadcast %cst_48 : f32 to vector<8x1xf32>
    %104 = arith.addf %100, %103 : vector<8x1xf32>
    %105 = math.rsqrt %104 : vector<8x1xf32>
    %106 = vector.broadcast %105 : vector<8x1xf32> to vector<8x128xf32>
    %107 = arith.mulf %102, %106 : vector<8x128xf32>
    %108 = vector.broadcast %86 : vector<1x128xf32> to vector<8x128xf32>
    %109 = arith.mulf %107, %108 : vector<8x128xf32>
    %110 = vector.broadcast %87 : vector<1x128xf32> to vector<8x128xf32>
    %111 = arith.addf %109, %110 : vector<8x128xf32>
    %112 = arith.truncf %111 : vector<8x128xf32> to vector<8x128xbf16>
    %c0_49 = arith.constant 0 : index
    %c0_50 = arith.constant 0 : index
    %113 = vector.load %arg14[%c0_49, %c0_50] : memref<128x128xbf16, #tpu.memory_space<vmem>>, vector<128x128xbf16>
    %cst_51 = arith.constant dense<0.000000e+00> : vector<8x128xf32>
    %114 = tpu.matmul %112, %113, %cst_51 {dimension_numbers = #tpu.dot_dimension_numbers<[1], [0], [0], [1], [0, 0, 1, 1], [], []>} : vector<8x128xbf16>, vector<128x128xbf16>, vector<8x128xf32> -> vector<8x128xf32>
    %c0_52 = arith.constant 0 : index
    %c0_53 = arith.constant 0 : index
    %115 = vector.load %arg15[%c0_52, %c0_53] : memref<1x128xf32, #tpu.memory_space<vmem>>, vector<1x128xf32>
    %116 = vector.broadcast %115 : vector<1x128xf32> to vector<8x128xf32>
    %117 = arith.addf %114, %116 : vector<8x128xf32>
    %118 = arith.truncf %117 : vector<8x128xf32> to vector<8x128xbf16>
    %119 = arith.mulf %118, %118 : vector<8x128xbf16>
    %120 = arith.mulf %118, %119 : vector<8x128xbf16>
    %cst_54 = arith.constant 4.467770e-02 : bf16
    %121 = vector.broadcast %cst_54 : bf16 to vector<8x128xbf16>
    %122 = arith.mulf %121, %120 : vector<8x128xbf16>
    %123 = arith.addf %118, %122 : vector<8x128xbf16>
    %cst_55 = arith.constant 7.968750e-01 : bf16
    %124 = vector.broadcast %cst_55 : bf16 to vector<8x128xbf16>
    %125 = arith.mulf %124, %123 : vector<8x128xbf16>
    %126 = math.tanh %125 : vector<8x128xbf16>
    %cst_56 = arith.constant 1.000000e+00 : bf16
    %127 = vector.broadcast %cst_56 : bf16 to vector<8x128xbf16>
    %128 = arith.addf %127, %126 : vector<8x128xbf16>
    %cst_57 = arith.constant 5.000000e-01 : bf16
    %129 = vector.broadcast %cst_57 : bf16 to vector<8x128xbf16>
    %130 = arith.mulf %129, %128 : vector<8x128xbf16>
    %131 = arith.mulf %118, %130 : vector<8x128xbf16>
    %c0_58 = arith.constant 0 : index
    %c0_59 = arith.constant 0 : index
    %132 = vector.load %arg16[%c0_58, %c0_59] : memref<128x128xbf16, #tpu.memory_space<vmem>>, vector<128x128xbf16>
    %cst_60 = arith.constant dense<0.000000e+00> : vector<8x128xf32>
    %133 = tpu.matmul %131, %132, %cst_60 {dimension_numbers = #tpu.dot_dimension_numbers<[1], [0], [0], [1], [0, 0, 1, 1], [], []>} : vector<8x128xbf16>, vector<128x128xbf16>, vector<8x128xf32> -> vector<8x128xf32>
    %c0_61 = arith.constant 0 : index
    %c0_62 = arith.constant 0 : index
    %134 = vector.load %arg17[%c0_61, %c0_62] : memref<1x128xf32, #tpu.memory_space<vmem>>, vector<1x128xf32>
    %135 = vector.broadcast %134 : vector<1x128xf32> to vector<8x128xf32>
    %136 = arith.addf %133, %135 : vector<8x128xf32>
    %137 = arith.addf %85, %136 : vector<8x128xf32>
    %138 = arith.truncf %137 : vector<8x128xf32> to vector<8x128xbf16>
    %c0_63 = arith.constant 0 : index
    %c0_64 = arith.constant 0 : index
    %139 = vector.load %arg18[%c0_63, %c0_64] : memref<8x128xbf16, #tpu.memory_space<vmem>>, vector<8x128xbf16>
    tpu.vector_store %arg18[%c0_63, %c0_64], %138 {strides = array<i32>} : memref<8x128xbf16, #tpu.memory_space<vmem>>, vector<8x128xbf16>,
    return
  }
  func.func @transform_0(%arg0: i32) -> (i32, i32) {
    %c0_i32 = arith.constant 0 : i32
    %c0_i32_0 = arith.constant 0 : i32
    return %arg0, %c0_i32 : i32, i32
  }
  func.func @transform_1(%arg0: i32) -> (i32, i32) {
    %c0_i32 = arith.constant 0 : i32
    %c0_i32_0 = arith.constant 0 : i32
    %c0_i32_1 = arith.constant 0 : i32
    return %c0_i32, %c0_i32_0 : i32, i32
  }
  func.func @transform_2(%arg0: i32) -> (i32, i32) {
    %c0_i32 = arith.constant 0 : i32
    %c0_i32_0 = arith.constant 0 : i32
    %c0_i32_1 = arith.constant 0 : i32
    return %c0_i32, %c0_i32_0 : i32, i32
  }
  func.func @transform_3(%arg0: i32) -> (i32, i32) {
    %c0_i32 = arith.constant 0 : i32
    %c0_i32_0 = arith.constant 0 : i32
    %c0_i32_1 = arith.constant 0 : i32
    return %c0_i32, %c0_i32_0 : i32, i32
  }
  func.func @transform_4(%arg0: i32) -> (i32, i32) {
    %c0_i32 = arith.constant 0 : i32
    %c0_i32_0 = arith.constant 0 : i32
    %c0_i32_1 = arith.constant 0 : i32
    return %c0_i32, %c0_i32_0 : i32, i32
  }
  func.func @transform_5(%arg0: i32) -> (i32, i32) {
    %c0_i32 = arith.constant 0 : i32
    %c0_i32_0 = arith.constant 0 : i32
    %c0_i32_1 = arith.constant 0 : i32
    return %c0_i32, %c0_i32_0 : i32, i32
  }
  func.func @transform_6(%arg0: i32) -> (i32, i32) {
    %c0_i32 = arith.constant 0 : i32
    %c0_i32_0 = arith.constant 0 : i32
    %c0_i32_1 = arith.constant 0 : i32
    return %c0_i32, %c0_i32_0 : i32, i32
  }
  func.func @transform_7(%arg0: i32) -> (i32, i32) {
    %c0_i32 = arith.constant 0 : i32
    %c0_i32_0 = arith.constant 0 : i32
    %c0_i32_1 = arith.constant 0 : i32
    return %c0_i32, %c0_i32_0 : i32, i32
  }
  func.func @transform_8(%arg0: i32) -> (i32, i32) {
    %c0_i32 = arith.constant 0 : i32
    %c0_i32_0 = arith.constant 0 : i32
    %c0_i32_1 = arith.constant 0 : i32
    return %c0_i32, %c0_i32_0 : i32, i32
  }
  func.func @transform_9(%arg0: i32) -> (i32, i32) {
    %c0_i32 = arith.constant 0 : i32
    %c0_i32_0 = arith.constant 0 : i32
    %c0_i32_1 = arith.constant 0 : i32
    return %c0_i32, %c0_i32_0 : i32, i32
  }
  func.func @transform_10(%arg0: i32) -> (i32, i32) {
    %c0_i32 = arith.constant 0 : i32
    %c0_i32_0 = arith.constant 0 : i32
    %c0_i32_1 = arith.constant 0 : i32
    return %c0_i32, %c0_i32_0 : i32, i32
  }
  func.func @transform_11(%arg0: i32) -> (i32, i32) {
    %c0_i32 = arith.constant 0 : i32
    %c0_i32_0 = arith.constant 0 : i32
    %c0_i32_1 = arith.constant 0 : i32
    return %c0_i32, %c0_i32_0 : i32, i32
  }
  func.func @transform_12(%arg0: i32) -> (i32, i32) {
    %c0_i32 = arith.constant 0 : i32
    %c0_i32_0 = arith.constant 0 : i32
    %c0_i32_1 = arith.constant 0 : i32
    return %c0_i32, %c0_i32_0 : i32, i32
  }
  func.func @transform_13(%arg0: i32) -> (i32, i32) {
    %c0_i32 = arith.constant 0 : i32
    %c0_i32_0 = arith.constant 0 : i32
    %c0_i32_1 = arith.constant 0 : i32
    return %c0_i32, %c0_i32_0 : i32, i32
  }
  func.func @transform_14(%arg0: i32) -> (i32, i32) {
    %c0_i32 = arith.constant 0 : i32
    %c0_i32_0 = arith.constant 0 : i32
    %c0_i32_1 = arith.constant 0 : i32
    return %c0_i32, %c0_i32_0 : i32, i32
  }
  func.func @transform_15(%arg0: i32) -> (i32, i32) {
    %c0_i32 = arith.constant 0 : i32
    %c0_i32_0 = arith.constant 0 : i32
    %c0_i32_1 = arith.constant 0 : i32
    return %c0_i32, %c0_i32_0 : i32, i32
  }
  func.func @transform_16(%arg0: i32) -> (i32, i32) {
    %c0_i32 = arith.constant 0 : i32
    %c0_i32_0 = arith.constant 0 : i32
    %c0_i32_1 = arith.constant 0 : i32
    return %c0_i32, %c0_i32_0 : i32, i32
  }
  func.func @transform_17(%arg0: i32) -> (i32, i32) {
    %c0_i32 = arith.constant 0 : i32
    %c0_i32_0 = arith.constant 0 : i32
    return %arg0, %c0_i32 : i32, i32
  }
}

module attributes {stable_mosaic.version = 11 : i64} {
  func.func @_stage_kernel(%arg0: i32, %arg1: memref<8x128xf32, #tpu.memory_space<vmem>>, %arg2: memref<128x128xbf16, #tpu.memory_space<vmem>>, %arg3: memref<1x128xf32, #tpu.memory_space<vmem>>, %arg4: memref<1x128xf32, #tpu.memory_space<vmem>>, %arg5: memref<1x128xf32, #tpu.memory_space<vmem>>, %arg6: memref<128x128xbf16, #tpu.memory_space<vmem>>, %arg7: memref<1x128xf32, #tpu.memory_space<vmem>>, %arg8: memref<128x128xbf16, #tpu.memory_space<vmem>>, %arg9: memref<1x128xf32, #tpu.memory_space<vmem>>, %arg10: memref<1x128xf32, #tpu.memory_space<vmem>>, %arg11: memref<1x128xf32, #tpu.memory_space<vmem>>, %arg12: memref<128x128xbf16, #tpu.memory_space<vmem>>, %arg13: memref<1x128xf32, #tpu.memory_space<vmem>>, %arg14: memref<128x128xbf16, #tpu.memory_space<vmem>>, %arg15: memref<1x128xf32, #tpu.memory_space<vmem>>, %arg16: memref<8x128xbf16, #tpu.memory_space<vmem>>) attributes {dimension_semantics = [#tpu.dimension_semantics<parallel>], iteration_bounds = array<i64: 2>, scalar_prefetch = 0 : i64, scratch_operands = 0 : i64, tpu.core_type = #tpu.core_type<tc>, window_params = [{transform_indices = @transform_0, window_bounds = array<i64: 8, 128>}, {pipeline_mode = #tpu.pipeline_mode<synchronous>, transform_indices = @transform_1, window_bounds = array<i64: 128, 128>}, {pipeline_mode = #tpu.pipeline_mode<synchronous>, transform_indices = @transform_2, window_bounds = array<i64: 1, 128>}, {pipeline_mode = #tpu.pipeline_mode<synchronous>, transform_indices = @transform_3, window_bounds = array<i64: 1, 128>}, {pipeline_mode = #tpu.pipeline_mode<synchronous>, transform_indices = @transform_4, window_bounds = array<i64: 1, 128>}, {pipeline_mode = #tpu.pipeline_mode<synchronous>, transform_indices = @transform_5, window_bounds = array<i64: 128, 128>}, {pipeline_mode = #tpu.pipeline_mode<synchronous>, transform_indices = @transform_6, window_bounds = array<i64: 1, 128>}, {pipeline_mode = #tpu.pipeline_mode<synchronous>, transform_indices = @transform_7, window_bounds = array<i64: 128, 128>}, {pipeline_mode = #tpu.pipeline_mode<synchronous>, transform_indices = @transform_8, window_bounds = array<i64: 1, 128>}, {pipeline_mode = #tpu.pipeline_mode<synchronous>, transform_indices = @transform_9, window_bounds = array<i64: 1, 128>}, {pipeline_mode = #tpu.pipeline_mode<synchronous>, transform_indices = @transform_10, window_bounds = array<i64: 1, 128>}, {pipeline_mode = #tpu.pipeline_mode<synchronous>, transform_indices = @transform_11, window_bounds = array<i64: 128, 128>}, {pipeline_mode = #tpu.pipeline_mode<synchronous>, transform_indices = @transform_12, window_bounds = array<i64: 1, 128>}, {pipeline_mode = #tpu.pipeline_mode<synchronous>, transform_indices = @transform_13, window_bounds = array<i64: 128, 128>}, {pipeline_mode = #tpu.pipeline_mode<synchronous>, transform_indices = @transform_14, window_bounds = array<i64: 1, 128>}, {transform_indices = @transform_15, window_bounds = array<i64: 8, 128>}]} {
    %c0 = arith.constant 0 : index
    %c0_0 = arith.constant 0 : index
    %0 = vector.load %arg1[%c0, %c0_0] : memref<8x128xf32, #tpu.memory_space<vmem>>, vector<8x128xf32>
    %1 = arith.truncf %0 : vector<8x128xf32> to vector<8x128xbf16>
    %c0_1 = arith.constant 0 : index
    %c0_2 = arith.constant 0 : index
    %2 = vector.load %arg2[%c0_1, %c0_2] : memref<128x128xbf16, #tpu.memory_space<vmem>>, vector<128x128xbf16>
    %cst = arith.constant dense<0.000000e+00> : vector<8x128xf32>
    %3 = tpu.matmul %1, %2, %cst {dimension_numbers = #tpu.dot_dimension_numbers<[1], [0], [0], [1], [0, 0, 1, 1], [], []>} : vector<8x128xbf16>, vector<128x128xbf16>, vector<8x128xf32> -> vector<8x128xf32>
    %c0_3 = arith.constant 0 : index
    %c0_4 = arith.constant 0 : index
    %4 = vector.load %arg3[%c0_3, %c0_4] : memref<1x128xf32, #tpu.memory_space<vmem>>, vector<1x128xf32>
    %5 = vector.broadcast %4 : vector<1x128xf32> to vector<8x128xf32>
    %6 = arith.addf %3, %5 : vector<8x128xf32>
    %c0_5 = arith.constant 0 : index
    %c0_6 = arith.constant 0 : index
    %7 = vector.load %arg4[%c0_5, %c0_6] : memref<1x128xf32, #tpu.memory_space<vmem>>, vector<1x128xf32>
    %c0_7 = arith.constant 0 : index
    %c0_8 = arith.constant 0 : index
    %8 = vector.load %arg5[%c0_7, %c0_8] : memref<1x128xf32, #tpu.memory_space<vmem>>, vector<1x128xf32>
    %cst_9 = arith.constant dense<0.000000e+00> : vector<8xf32>
    %9 = vector.multi_reduction <add>, %6, %cst_9 [1] : vector<8x128xf32> to vector<8xf32>
    %10 = vector.shape_cast %9 : vector<8xf32> to vector<8x1xf32>
    %cst_10 = arith.constant 6.250000e-02 : f32
    %11 = vector.broadcast %cst_10 : f32 to vector<8x1xf32>
    %12 = arith.mulf %10, %11 : vector<8x1xf32>
    %13 = arith.mulf %6, %6 : vector<8x128xf32>
    %cst_11 = arith.constant dense<0.000000e+00> : vector<8xf32>
    %14 = vector.multi_reduction <add>, %13, %cst_11 [1] : vector<8x128xf32> to vector<8xf32>
    %15 = vector.shape_cast %14 : vector<8xf32> to vector<8x1xf32>
    %cst_12 = arith.constant 6.250000e-02 : f32
    %16 = vector.broadcast %cst_12 : f32 to vector<8x1xf32>
    %17 = arith.mulf %15, %16 : vector<8x1xf32>
    %18 = arith.mulf %12, %12 : vector<8x1xf32>
    %19 = arith.subf %17, %18 : vector<8x1xf32>
    %cst_13 = arith.constant 0.000000e+00 : f32
    %20 = vector.broadcast %cst_13 : f32 to vector<8x1xf32>
    %21 = arith.maximumf %19, %20 : vector<8x1xf32>
    %22 = vector.broadcast %12 : vector<8x1xf32> to vector<8x128xf32>
    %23 = arith.subf %6, %22 : vector<8x128xf32>
    %cst_14 = arith.constant 9.99999974E-6 : f32
    %24 = vector.broadcast %cst_14 : f32 to vector<8x1xf32>
    %25 = arith.addf %21, %24 : vector<8x1xf32>
    %26 = math.rsqrt %25 : vector<8x1xf32>
    %27 = vector.broadcast %26 : vector<8x1xf32> to vector<8x128xf32>
    %28 = arith.mulf %23, %27 : vector<8x128xf32>
    %29 = vector.broadcast %7 : vector<1x128xf32> to vector<8x128xf32>
    %30 = arith.mulf %28, %29 : vector<8x128xf32>
    %31 = vector.broadcast %8 : vector<1x128xf32> to vector<8x128xf32>
    %32 = arith.addf %30, %31 : vector<8x128xf32>
    %33 = arith.truncf %32 : vector<8x128xf32> to vector<8x128xbf16>
    %c0_15 = arith.constant 0 : index
    %c0_16 = arith.constant 0 : index
    %34 = vector.load %arg6[%c0_15, %c0_16] : memref<128x128xbf16, #tpu.memory_space<vmem>>, vector<128x128xbf16>
    %cst_17 = arith.constant dense<0.000000e+00> : vector<8x128xf32>
    %35 = tpu.matmul %33, %34, %cst_17 {dimension_numbers = #tpu.dot_dimension_numbers<[1], [0], [0], [1], [0, 0, 1, 1], [], []>} : vector<8x128xbf16>, vector<128x128xbf16>, vector<8x128xf32> -> vector<8x128xf32>
    %c0_18 = arith.constant 0 : index
    %c0_19 = arith.constant 0 : index
    %36 = vector.load %arg7[%c0_18, %c0_19] : memref<1x128xf32, #tpu.memory_space<vmem>>, vector<1x128xf32>
    %37 = vector.broadcast %36 : vector<1x128xf32> to vector<8x128xf32>
    %38 = arith.addf %35, %37 : vector<8x128xf32>
    %39 = arith.truncf %38 : vector<8x128xf32> to vector<8x128xbf16>
    %40 = arith.mulf %39, %39 : vector<8x128xbf16>
    %41 = arith.mulf %39, %40 : vector<8x128xbf16>
    %cst_20 = arith.constant 4.467770e-02 : bf16
    %42 = vector.broadcast %cst_20 : bf16 to vector<8x128xbf16>
    %43 = arith.mulf %42, %41 : vector<8x128xbf16>
    %44 = arith.addf %39, %43 : vector<8x128xbf16>
    %cst_21 = arith.constant 7.968750e-01 : bf16
    %45 = vector.broadcast %cst_21 : bf16 to vector<8x128xbf16>
    %46 = arith.mulf %45, %44 : vector<8x128xbf16>
    %47 = math.tanh %46 : vector<8x128xbf16>
    %cst_22 = arith.constant 1.000000e+00 : bf16
    %48 = vector.broadcast %cst_22 : bf16 to vector<8x128xbf16>
    %49 = arith.addf %48, %47 : vector<8x128xbf16>
    %cst_23 = arith.constant 5.000000e-01 : bf16
    %50 = vector.broadcast %cst_23 : bf16 to vector<8x128xbf16>
    %51 = arith.mulf %50, %49 : vector<8x128xbf16>
    %52 = arith.mulf %39, %51 : vector<8x128xbf16>
    %c0_24 = arith.constant 0 : index
    %c0_25 = arith.constant 0 : index
    %53 = vector.load %arg8[%c0_24, %c0_25] : memref<128x128xbf16, #tpu.memory_space<vmem>>, vector<128x128xbf16>
    %cst_26 = arith.constant dense<0.000000e+00> : vector<8x128xf32>
    %54 = tpu.matmul %52, %53, %cst_26 {dimension_numbers = #tpu.dot_dimension_numbers<[1], [0], [0], [1], [0, 0, 1, 1], [], []>} : vector<8x128xbf16>, vector<128x128xbf16>, vector<8x128xf32> -> vector<8x128xf32>
    %c0_27 = arith.constant 0 : index
    %c0_28 = arith.constant 0 : index
    %55 = vector.load %arg9[%c0_27, %c0_28] : memref<1x128xf32, #tpu.memory_space<vmem>>, vector<1x128xf32>
    %56 = vector.broadcast %55 : vector<1x128xf32> to vector<8x128xf32>
    %57 = arith.addf %54, %56 : vector<8x128xf32>
    %58 = arith.addf %6, %57 : vector<8x128xf32>
    %c0_29 = arith.constant 0 : index
    %c0_30 = arith.constant 0 : index
    %59 = vector.load %arg10[%c0_29, %c0_30] : memref<1x128xf32, #tpu.memory_space<vmem>>, vector<1x128xf32>
    %c0_31 = arith.constant 0 : index
    %c0_32 = arith.constant 0 : index
    %60 = vector.load %arg11[%c0_31, %c0_32] : memref<1x128xf32, #tpu.memory_space<vmem>>, vector<1x128xf32>
    %cst_33 = arith.constant dense<0.000000e+00> : vector<8xf32>
    %61 = vector.multi_reduction <add>, %58, %cst_33 [1] : vector<8x128xf32> to vector<8xf32>
    %62 = vector.shape_cast %61 : vector<8xf32> to vector<8x1xf32>
    %cst_34 = arith.constant 6.250000e-02 : f32
    %63 = vector.broadcast %cst_34 : f32 to vector<8x1xf32>
    %64 = arith.mulf %62, %63 : vector<8x1xf32>
    %65 = arith.mulf %58, %58 : vector<8x128xf32>
    %cst_35 = arith.constant dense<0.000000e+00> : vector<8xf32>
    %66 = vector.multi_reduction <add>, %65, %cst_35 [1] : vector<8x128xf32> to vector<8xf32>
    %67 = vector.shape_cast %66 : vector<8xf32> to vector<8x1xf32>
    %cst_36 = arith.constant 6.250000e-02 : f32
    %68 = vector.broadcast %cst_36 : f32 to vector<8x1xf32>
    %69 = arith.mulf %67, %68 : vector<8x1xf32>
    %70 = arith.mulf %64, %64 : vector<8x1xf32>
    %71 = arith.subf %69, %70 : vector<8x1xf32>
    %cst_37 = arith.constant 0.000000e+00 : f32
    %72 = vector.broadcast %cst_37 : f32 to vector<8x1xf32>
    %73 = arith.maximumf %71, %72 : vector<8x1xf32>
    %74 = vector.broadcast %64 : vector<8x1xf32> to vector<8x128xf32>
    %75 = arith.subf %58, %74 : vector<8x128xf32>
    %cst_38 = arith.constant 9.99999974E-6 : f32
    %76 = vector.broadcast %cst_38 : f32 to vector<8x1xf32>
    %77 = arith.addf %73, %76 : vector<8x1xf32>
    %78 = math.rsqrt %77 : vector<8x1xf32>
    %79 = vector.broadcast %78 : vector<8x1xf32> to vector<8x128xf32>
    %80 = arith.mulf %75, %79 : vector<8x128xf32>
    %81 = vector.broadcast %59 : vector<1x128xf32> to vector<8x128xf32>
    %82 = arith.mulf %80, %81 : vector<8x128xf32>
    %83 = vector.broadcast %60 : vector<1x128xf32> to vector<8x128xf32>
    %84 = arith.addf %82, %83 : vector<8x128xf32>
    %85 = arith.truncf %84 : vector<8x128xf32> to vector<8x128xbf16>
    %c0_39 = arith.constant 0 : index
    %c0_40 = arith.constant 0 : index
    %86 = vector.load %arg12[%c0_39, %c0_40] : memref<128x128xbf16, #tpu.memory_space<vmem>>, vector<128x128xbf16>
    %cst_41 = arith.constant dense<0.000000e+00> : vector<8x128xf32>
    %87 = tpu.matmul %85, %86, %cst_41 {dimension_numbers = #tpu.dot_dimension_numbers<[1], [0], [0], [1], [0, 0, 1, 1], [], []>} : vector<8x128xbf16>, vector<128x128xbf16>, vector<8x128xf32> -> vector<8x128xf32>
    %c0_42 = arith.constant 0 : index
    %c0_43 = arith.constant 0 : index
    %88 = vector.load %arg13[%c0_42, %c0_43] : memref<1x128xf32, #tpu.memory_space<vmem>>, vector<1x128xf32>
    %89 = vector.broadcast %88 : vector<1x128xf32> to vector<8x128xf32>
    %90 = arith.addf %87, %89 : vector<8x128xf32>
    %91 = arith.truncf %90 : vector<8x128xf32> to vector<8x128xbf16>
    %92 = arith.mulf %91, %91 : vector<8x128xbf16>
    %93 = arith.mulf %91, %92 : vector<8x128xbf16>
    %cst_44 = arith.constant 4.467770e-02 : bf16
    %94 = vector.broadcast %cst_44 : bf16 to vector<8x128xbf16>
    %95 = arith.mulf %94, %93 : vector<8x128xbf16>
    %96 = arith.addf %91, %95 : vector<8x128xbf16>
    %cst_45 = arith.constant 7.968750e-01 : bf16
    %97 = vector.broadcast %cst_45 : bf16 to vector<8x128xbf16>
    %98 = arith.mulf %97, %96 : vector<8x128xbf16>
    %99 = math.tanh %98 : vector<8x128xbf16>
    %cst_46 = arith.constant 1.000000e+00 : bf16
    %100 = vector.broadcast %cst_46 : bf16 to vector<8x128xbf16>
    %101 = arith.addf %100, %99 : vector<8x128xbf16>
    %cst_47 = arith.constant 5.000000e-01 : bf16
    %102 = vector.broadcast %cst_47 : bf16 to vector<8x128xbf16>
    %103 = arith.mulf %102, %101 : vector<8x128xbf16>
    %104 = arith.mulf %91, %103 : vector<8x128xbf16>
    %c0_48 = arith.constant 0 : index
    %c0_49 = arith.constant 0 : index
    %105 = vector.load %arg14[%c0_48, %c0_49] : memref<128x128xbf16, #tpu.memory_space<vmem>>, vector<128x128xbf16>
    %cst_50 = arith.constant dense<0.000000e+00> : vector<8x128xf32>
    %106 = tpu.matmul %104, %105, %cst_50 {dimension_numbers = #tpu.dot_dimension_numbers<[1], [0], [0], [1], [0, 0, 1, 1], [], []>} : vector<8x128xbf16>, vector<128x128xbf16>, vector<8x128xf32> -> vector<8x128xf32>
    %c0_51 = arith.constant 0 : index
    %c0_52 = arith.constant 0 : index
    %107 = vector.load %arg15[%c0_51, %c0_52] : memref<1x128xf32, #tpu.memory_space<vmem>>, vector<1x128xf32>
    %108 = vector.broadcast %107 : vector<1x128xf32> to vector<8x128xf32>
    %109 = arith.addf %106, %108 : vector<8x128xf32>
    %110 = arith.addf %58, %109 : vector<8x128xf32>
    %111 = arith.truncf %110 : vector<8x128xf32> to vector<8x128xbf16>
    %c0_53 = arith.constant 0 : index
    %c0_54 = arith.constant 0 : index
    %112 = vector.load %arg16[%c0_53, %c0_54] : memref<8x128xbf16, #tpu.memory_space<vmem>>, vector<8x128xbf16>
    tpu.vector_store %arg16[%c0_53, %c0_54], %111 {strides = array<i32>} : memref<8x128xbf16, #tpu.memory_space<vmem>>, vector<8x128xbf16>,
    return
  }
  func.func @transform_0(%arg0: i32) -> (i32, i32) {
    %c0_i32 = arith.constant 0 : i32
    %c0_i32_0 = arith.constant 0 : i32
    return %arg0, %c0_i32 : i32, i32
  }
  func.func @transform_1(%arg0: i32) -> (i32, i32) {
    %c0_i32 = arith.constant 0 : i32
    %c0_i32_0 = arith.constant 0 : i32
    %c0_i32_1 = arith.constant 0 : i32
    return %c0_i32, %c0_i32_0 : i32, i32
  }
  func.func @transform_2(%arg0: i32) -> (i32, i32) {
    %c0_i32 = arith.constant 0 : i32
    %c0_i32_0 = arith.constant 0 : i32
    %c0_i32_1 = arith.constant 0 : i32
    return %c0_i32, %c0_i32_0 : i32, i32
  }
  func.func @transform_3(%arg0: i32) -> (i32, i32) {
    %c0_i32 = arith.constant 0 : i32
    %c0_i32_0 = arith.constant 0 : i32
    %c0_i32_1 = arith.constant 0 : i32
    return %c0_i32, %c0_i32_0 : i32, i32
  }
  func.func @transform_4(%arg0: i32) -> (i32, i32) {
    %c0_i32 = arith.constant 0 : i32
    %c0_i32_0 = arith.constant 0 : i32
    %c0_i32_1 = arith.constant 0 : i32
    return %c0_i32, %c0_i32_0 : i32, i32
  }
  func.func @transform_5(%arg0: i32) -> (i32, i32) {
    %c0_i32 = arith.constant 0 : i32
    %c0_i32_0 = arith.constant 0 : i32
    %c0_i32_1 = arith.constant 0 : i32
    return %c0_i32, %c0_i32_0 : i32, i32
  }
  func.func @transform_6(%arg0: i32) -> (i32, i32) {
    %c0_i32 = arith.constant 0 : i32
    %c0_i32_0 = arith.constant 0 : i32
    %c0_i32_1 = arith.constant 0 : i32
    return %c0_i32, %c0_i32_0 : i32, i32
  }
  func.func @transform_7(%arg0: i32) -> (i32, i32) {
    %c0_i32 = arith.constant 0 : i32
    %c0_i32_0 = arith.constant 0 : i32
    %c0_i32_1 = arith.constant 0 : i32
    return %c0_i32, %c0_i32_0 : i32, i32
  }
  func.func @transform_8(%arg0: i32) -> (i32, i32) {
    %c0_i32 = arith.constant 0 : i32
    %c0_i32_0 = arith.constant 0 : i32
    %c0_i32_1 = arith.constant 0 : i32
    return %c0_i32, %c0_i32_0 : i32, i32
  }
  func.func @transform_9(%arg0: i32) -> (i32, i32) {
    %c0_i32 = arith.constant 0 : i32
    %c0_i32_0 = arith.constant 0 : i32
    %c0_i32_1 = arith.constant 0 : i32
    return %c0_i32, %c0_i32_0 : i32, i32
  }
  func.func @transform_10(%arg0: i32) -> (i32, i32) {
    %c0_i32 = arith.constant 0 : i32
    %c0_i32_0 = arith.constant 0 : i32
    %c0_i32_1 = arith.constant 0 : i32
    return %c0_i32, %c0_i32_0 : i32, i32
  }
  func.func @transform_11(%arg0: i32) -> (i32, i32) {
    %c0_i32 = arith.constant 0 : i32
    %c0_i32_0 = arith.constant 0 : i32
    %c0_i32_1 = arith.constant 0 : i32
    return %c0_i32, %c0_i32_0 : i32, i32
  }
  func.func @transform_12(%arg0: i32) -> (i32, i32) {
    %c0_i32 = arith.constant 0 : i32
    %c0_i32_0 = arith.constant 0 : i32
    %c0_i32_1 = arith.constant 0 : i32
    return %c0_i32, %c0_i32_0 : i32, i32
  }
  func.func @transform_13(%arg0: i32) -> (i32, i32) {
    %c0_i32 = arith.constant 0 : i32
    %c0_i32_0 = arith.constant 0 : i32
    %c0_i32_1 = arith.constant 0 : i32
    return %c0_i32, %c0_i32_0 : i32, i32
  }
  func.func @transform_14(%arg0: i32) -> (i32, i32) {
    %c0_i32 = arith.constant 0 : i32
    %c0_i32_0 = arith.constant 0 : i32
    %c0_i32_1 = arith.constant 0 : i32
    return %c0_i32, %c0_i32_0 : i32, i32
  }
  func.func @transform_15(%arg0: i32) -> (i32, i32) {
    %c0_i32 = arith.constant 0 : i32
    %c0_i32_0 = arith.constant 0 : i32
    return %arg0, %c0_i32 : i32, i32
  }
}

module attributes {stable_mosaic.version = 11 : i64} {
  func.func @_stage_kernel(%arg0: i32, %arg1: memref<8x128xbf16, #tpu.memory_space<vmem>>, %arg2: memref<1x128xf32, #tpu.memory_space<vmem>>, %arg3: memref<1x128xf32, #tpu.memory_space<vmem>>, %arg4: memref<128x128xbf16, #tpu.memory_space<vmem>>, %arg5: memref<1x128xf32, #tpu.memory_space<vmem>>, %arg6: memref<1x128xf32, #tpu.memory_space<vmem>>, %arg7: memref<1x128xf32, #tpu.memory_space<vmem>>, %arg8: memref<128x128xbf16, #tpu.memory_space<vmem>>, %arg9: memref<1x128xf32, #tpu.memory_space<vmem>>, %arg10: memref<128x128xbf16, #tpu.memory_space<vmem>>, %arg11: memref<1x128xf32, #tpu.memory_space<vmem>>, %arg12: memref<1x128xf32, #tpu.memory_space<vmem>>, %arg13: memref<1x128xf32, #tpu.memory_space<vmem>>, %arg14: memref<128x128xbf16, #tpu.memory_space<vmem>>, %arg15: memref<1x128xf32, #tpu.memory_space<vmem>>, %arg16: memref<128x128xbf16, #tpu.memory_space<vmem>>, %arg17: memref<1x128xf32, #tpu.memory_space<vmem>>, %arg18: memref<8x128xbf16, #tpu.memory_space<vmem>>) attributes {dimension_semantics = [#tpu.dimension_semantics<parallel>], iteration_bounds = array<i64: 2>, scalar_prefetch = 0 : i64, scratch_operands = 0 : i64, tpu.core_type = #tpu.core_type<tc>, window_params = [{transform_indices = @transform_0, window_bounds = array<i64: 8, 128>}, {pipeline_mode = #tpu.pipeline_mode<synchronous>, transform_indices = @transform_1, window_bounds = array<i64: 1, 128>}, {pipeline_mode = #tpu.pipeline_mode<synchronous>, transform_indices = @transform_2, window_bounds = array<i64: 1, 128>}, {pipeline_mode = #tpu.pipeline_mode<synchronous>, transform_indices = @transform_3, window_bounds = array<i64: 128, 128>}, {pipeline_mode = #tpu.pipeline_mode<synchronous>, transform_indices = @transform_4, window_bounds = array<i64: 1, 128>}, {pipeline_mode = #tpu.pipeline_mode<synchronous>, transform_indices = @transform_5, window_bounds = array<i64: 1, 128>}, {pipeline_mode = #tpu.pipeline_mode<synchronous>, transform_indices = @transform_6, window_bounds = array<i64: 1, 128>}, {pipeline_mode = #tpu.pipeline_mode<synchronous>, transform_indices = @transform_7, window_bounds = array<i64: 128, 128>}, {pipeline_mode = #tpu.pipeline_mode<synchronous>, transform_indices = @transform_8, window_bounds = array<i64: 1, 128>}, {pipeline_mode = #tpu.pipeline_mode<synchronous>, transform_indices = @transform_9, window_bounds = array<i64: 128, 128>}, {pipeline_mode = #tpu.pipeline_mode<synchronous>, transform_indices = @transform_10, window_bounds = array<i64: 1, 128>}, {pipeline_mode = #tpu.pipeline_mode<synchronous>, transform_indices = @transform_11, window_bounds = array<i64: 1, 128>}, {pipeline_mode = #tpu.pipeline_mode<synchronous>, transform_indices = @transform_12, window_bounds = array<i64: 1, 128>}, {pipeline_mode = #tpu.pipeline_mode<synchronous>, transform_indices = @transform_13, window_bounds = array<i64: 128, 128>}, {pipeline_mode = #tpu.pipeline_mode<synchronous>, transform_indices = @transform_14, window_bounds = array<i64: 1, 128>}, {pipeline_mode = #tpu.pipeline_mode<synchronous>, transform_indices = @transform_15, window_bounds = array<i64: 128, 128>}, {pipeline_mode = #tpu.pipeline_mode<synchronous>, transform_indices = @transform_16, window_bounds = array<i64: 1, 128>}, {transform_indices = @transform_17, window_bounds = array<i64: 8, 128>}]} {
    %c0 = arith.constant 0 : index
    %c0_0 = arith.constant 0 : index
    %0 = vector.load %arg1[%c0, %c0_0] : memref<8x128xbf16, #tpu.memory_space<vmem>>, vector<8x128xbf16>
    %1 = arith.extf %0 : vector<8x128xbf16> to vector<8x128xf32>
    %c0_1 = arith.constant 0 : index
    %c0_2 = arith.constant 0 : index
    %2 = vector.load %arg2[%c0_1, %c0_2] : memref<1x128xf32, #tpu.memory_space<vmem>>, vector<1x128xf32>
    %c0_3 = arith.constant 0 : index
    %c0_4 = arith.constant 0 : index
    %3 = vector.load %arg3[%c0_3, %c0_4] : memref<1x128xf32, #tpu.memory_space<vmem>>, vector<1x128xf32>
    %cst = arith.constant dense<0.000000e+00> : vector<8xf32>
    %4 = vector.multi_reduction <add>, %1, %cst [1] : vector<8x128xf32> to vector<8xf32>
    %5 = vector.shape_cast %4 : vector<8xf32> to vector<8x1xf32>
    %cst_5 = arith.constant 6.250000e-02 : f32
    %6 = vector.broadcast %cst_5 : f32 to vector<8x1xf32>
    %7 = arith.mulf %5, %6 : vector<8x1xf32>
    %8 = arith.mulf %1, %1 : vector<8x128xf32>
    %cst_6 = arith.constant dense<0.000000e+00> : vector<8xf32>
    %9 = vector.multi_reduction <add>, %8, %cst_6 [1] : vector<8x128xf32> to vector<8xf32>
    %10 = vector.shape_cast %9 : vector<8xf32> to vector<8x1xf32>
    %cst_7 = arith.constant 6.250000e-02 : f32
    %11 = vector.broadcast %cst_7 : f32 to vector<8x1xf32>
    %12 = arith.mulf %10, %11 : vector<8x1xf32>
    %13 = arith.mulf %7, %7 : vector<8x1xf32>
    %14 = arith.subf %12, %13 : vector<8x1xf32>
    %cst_8 = arith.constant 0.000000e+00 : f32
    %15 = vector.broadcast %cst_8 : f32 to vector<8x1xf32>
    %16 = arith.maximumf %14, %15 : vector<8x1xf32>
    %17 = vector.broadcast %7 : vector<8x1xf32> to vector<8x128xf32>
    %18 = arith.subf %1, %17 : vector<8x128xf32>
    %cst_9 = arith.constant 9.99999974E-6 : f32
    %19 = vector.broadcast %cst_9 : f32 to vector<8x1xf32>
    %20 = arith.addf %16, %19 : vector<8x1xf32>
    %21 = math.rsqrt %20 : vector<8x1xf32>
    %22 = vector.broadcast %21 : vector<8x1xf32> to vector<8x128xf32>
    %23 = arith.mulf %18, %22 : vector<8x128xf32>
    %24 = vector.broadcast %2 : vector<1x128xf32> to vector<8x128xf32>
    %25 = arith.mulf %23, %24 : vector<8x128xf32>
    %26 = vector.broadcast %3 : vector<1x128xf32> to vector<8x128xf32>
    %27 = arith.addf %25, %26 : vector<8x128xf32>
    %28 = arith.truncf %27 : vector<8x128xf32> to vector<8x128xbf16>
    %c0_10 = arith.constant 0 : index
    %c0_11 = arith.constant 0 : index
    %29 = vector.load %arg4[%c0_10, %c0_11] : memref<128x128xbf16, #tpu.memory_space<vmem>>, vector<128x128xbf16>
    %cst_12 = arith.constant dense<0.000000e+00> : vector<8x128xf32>
    %30 = tpu.matmul %28, %29, %cst_12 {dimension_numbers = #tpu.dot_dimension_numbers<[1], [0], [0], [1], [0, 0, 1, 1], [], []>} : vector<8x128xbf16>, vector<128x128xbf16>, vector<8x128xf32> -> vector<8x128xf32>
    %c0_13 = arith.constant 0 : index
    %c0_14 = arith.constant 0 : index
    %31 = vector.load %arg5[%c0_13, %c0_14] : memref<1x128xf32, #tpu.memory_space<vmem>>, vector<1x128xf32>
    %32 = vector.broadcast %31 : vector<1x128xf32> to vector<8x128xf32>
    %33 = arith.addf %30, %32 : vector<8x128xf32>
    %c0_15 = arith.constant 0 : index
    %c0_16 = arith.constant 0 : index
    %34 = vector.load %arg6[%c0_15, %c0_16] : memref<1x128xf32, #tpu.memory_space<vmem>>, vector<1x128xf32>
    %c0_17 = arith.constant 0 : index
    %c0_18 = arith.constant 0 : index
    %35 = vector.load %arg7[%c0_17, %c0_18] : memref<1x128xf32, #tpu.memory_space<vmem>>, vector<1x128xf32>
    %cst_19 = arith.constant dense<0.000000e+00> : vector<8xf32>
    %36 = vector.multi_reduction <add>, %33, %cst_19 [1] : vector<8x128xf32> to vector<8xf32>
    %37 = vector.shape_cast %36 : vector<8xf32> to vector<8x1xf32>
    %cst_20 = arith.constant 3.125000e-02 : f32
    %38 = vector.broadcast %cst_20 : f32 to vector<8x1xf32>
    %39 = arith.mulf %37, %38 : vector<8x1xf32>
    %40 = arith.mulf %33, %33 : vector<8x128xf32>
    %cst_21 = arith.constant dense<0.000000e+00> : vector<8xf32>
    %41 = vector.multi_reduction <add>, %40, %cst_21 [1] : vector<8x128xf32> to vector<8xf32>
    %42 = vector.shape_cast %41 : vector<8xf32> to vector<8x1xf32>
    %cst_22 = arith.constant 3.125000e-02 : f32
    %43 = vector.broadcast %cst_22 : f32 to vector<8x1xf32>
    %44 = arith.mulf %42, %43 : vector<8x1xf32>
    %45 = arith.mulf %39, %39 : vector<8x1xf32>
    %46 = arith.subf %44, %45 : vector<8x1xf32>
    %cst_23 = arith.constant 0.000000e+00 : f32
    %47 = vector.broadcast %cst_23 : f32 to vector<8x1xf32>
    %48 = arith.maximumf %46, %47 : vector<8x1xf32>
    %49 = vector.broadcast %39 : vector<8x1xf32> to vector<8x128xf32>
    %50 = arith.subf %33, %49 : vector<8x128xf32>
    %cst_24 = arith.constant 9.99999974E-6 : f32
    %51 = vector.broadcast %cst_24 : f32 to vector<8x1xf32>
    %52 = arith.addf %48, %51 : vector<8x1xf32>
    %53 = math.rsqrt %52 : vector<8x1xf32>
    %54 = vector.broadcast %53 : vector<8x1xf32> to vector<8x128xf32>
    %55 = arith.mulf %50, %54 : vector<8x128xf32>
    %56 = vector.broadcast %34 : vector<1x128xf32> to vector<8x128xf32>
    %57 = arith.mulf %55, %56 : vector<8x128xf32>
    %58 = vector.broadcast %35 : vector<1x128xf32> to vector<8x128xf32>
    %59 = arith.addf %57, %58 : vector<8x128xf32>
    %60 = arith.truncf %59 : vector<8x128xf32> to vector<8x128xbf16>
    %c0_25 = arith.constant 0 : index
    %c0_26 = arith.constant 0 : index
    %61 = vector.load %arg8[%c0_25, %c0_26] : memref<128x128xbf16, #tpu.memory_space<vmem>>, vector<128x128xbf16>
    %cst_27 = arith.constant dense<0.000000e+00> : vector<8x128xf32>
    %62 = tpu.matmul %60, %61, %cst_27 {dimension_numbers = #tpu.dot_dimension_numbers<[1], [0], [0], [1], [0, 0, 1, 1], [], []>} : vector<8x128xbf16>, vector<128x128xbf16>, vector<8x128xf32> -> vector<8x128xf32>
    %c0_28 = arith.constant 0 : index
    %c0_29 = arith.constant 0 : index
    %63 = vector.load %arg9[%c0_28, %c0_29] : memref<1x128xf32, #tpu.memory_space<vmem>>, vector<1x128xf32>
    %64 = vector.broadcast %63 : vector<1x128xf32> to vector<8x128xf32>
    %65 = arith.addf %62, %64 : vector<8x128xf32>
    %66 = arith.truncf %65 : vector<8x128xf32> to vector<8x128xbf16>
    %67 = arith.mulf %66, %66 : vector<8x128xbf16>
    %68 = arith.mulf %66, %67 : vector<8x128xbf16>
    %cst_30 = arith.constant 4.467770e-02 : bf16
    %69 = vector.broadcast %cst_30 : bf16 to vector<8x128xbf16>
    %70 = arith.mulf %69, %68 : vector<8x128xbf16>
    %71 = arith.addf %66, %70 : vector<8x128xbf16>
    %cst_31 = arith.constant 7.968750e-01 : bf16
    %72 = vector.broadcast %cst_31 : bf16 to vector<8x128xbf16>
    %73 = arith.mulf %72, %71 : vector<8x128xbf16>
    %74 = math.tanh %73 : vector<8x128xbf16>
    %cst_32 = arith.constant 1.000000e+00 : bf16
    %75 = vector.broadcast %cst_32 : bf16 to vector<8x128xbf16>
    %76 = arith.addf %75, %74 : vector<8x128xbf16>
    %cst_33 = arith.constant 5.000000e-01 : bf16
    %77 = vector.broadcast %cst_33 : bf16 to vector<8x128xbf16>
    %78 = arith.mulf %77, %76 : vector<8x128xbf16>
    %79 = arith.mulf %66, %78 : vector<8x128xbf16>
    %c0_34 = arith.constant 0 : index
    %c0_35 = arith.constant 0 : index
    %80 = vector.load %arg10[%c0_34, %c0_35] : memref<128x128xbf16, #tpu.memory_space<vmem>>, vector<128x128xbf16>
    %cst_36 = arith.constant dense<0.000000e+00> : vector<8x128xf32>
    %81 = tpu.matmul %79, %80, %cst_36 {dimension_numbers = #tpu.dot_dimension_numbers<[1], [0], [0], [1], [0, 0, 1, 1], [], []>} : vector<8x128xbf16>, vector<128x128xbf16>, vector<8x128xf32> -> vector<8x128xf32>
    %c0_37 = arith.constant 0 : index
    %c0_38 = arith.constant 0 : index
    %82 = vector.load %arg11[%c0_37, %c0_38] : memref<1x128xf32, #tpu.memory_space<vmem>>, vector<1x128xf32>
    %83 = vector.broadcast %82 : vector<1x128xf32> to vector<8x128xf32>
    %84 = arith.addf %81, %83 : vector<8x128xf32>
    %85 = arith.addf %33, %84 : vector<8x128xf32>
    %c0_39 = arith.constant 0 : index
    %c0_40 = arith.constant 0 : index
    %86 = vector.load %arg12[%c0_39, %c0_40] : memref<1x128xf32, #tpu.memory_space<vmem>>, vector<1x128xf32>
    %c0_41 = arith.constant 0 : index
    %c0_42 = arith.constant 0 : index
    %87 = vector.load %arg13[%c0_41, %c0_42] : memref<1x128xf32, #tpu.memory_space<vmem>>, vector<1x128xf32>
    %cst_43 = arith.constant dense<0.000000e+00> : vector<8xf32>
    %88 = vector.multi_reduction <add>, %85, %cst_43 [1] : vector<8x128xf32> to vector<8xf32>
    %89 = vector.shape_cast %88 : vector<8xf32> to vector<8x1xf32>
    %cst_44 = arith.constant 3.125000e-02 : f32
    %90 = vector.broadcast %cst_44 : f32 to vector<8x1xf32>
    %91 = arith.mulf %89, %90 : vector<8x1xf32>
    %92 = arith.mulf %85, %85 : vector<8x128xf32>
    %cst_45 = arith.constant dense<0.000000e+00> : vector<8xf32>
    %93 = vector.multi_reduction <add>, %92, %cst_45 [1] : vector<8x128xf32> to vector<8xf32>
    %94 = vector.shape_cast %93 : vector<8xf32> to vector<8x1xf32>
    %cst_46 = arith.constant 3.125000e-02 : f32
    %95 = vector.broadcast %cst_46 : f32 to vector<8x1xf32>
    %96 = arith.mulf %94, %95 : vector<8x1xf32>
    %97 = arith.mulf %91, %91 : vector<8x1xf32>
    %98 = arith.subf %96, %97 : vector<8x1xf32>
    %cst_47 = arith.constant 0.000000e+00 : f32
    %99 = vector.broadcast %cst_47 : f32 to vector<8x1xf32>
    %100 = arith.maximumf %98, %99 : vector<8x1xf32>
    %101 = vector.broadcast %91 : vector<8x1xf32> to vector<8x128xf32>
    %102 = arith.subf %85, %101 : vector<8x128xf32>
    %cst_48 = arith.constant 9.99999974E-6 : f32
    %103 = vector.broadcast %cst_48 : f32 to vector<8x1xf32>
    %104 = arith.addf %100, %103 : vector<8x1xf32>
    %105 = math.rsqrt %104 : vector<8x1xf32>
    %106 = vector.broadcast %105 : vector<8x1xf32> to vector<8x128xf32>
    %107 = arith.mulf %102, %106 : vector<8x128xf32>
    %108 = vector.broadcast %86 : vector<1x128xf32> to vector<8x128xf32>
    %109 = arith.mulf %107, %108 : vector<8x128xf32>
    %110 = vector.broadcast %87 : vector<1x128xf32> to vector<8x128xf32>
    %111 = arith.addf %109, %110 : vector<8x128xf32>
    %112 = arith.truncf %111 : vector<8x128xf32> to vector<8x128xbf16>
    %c0_49 = arith.constant 0 : index
    %c0_50 = arith.constant 0 : index
    %113 = vector.load %arg14[%c0_49, %c0_50] : memref<128x128xbf16, #tpu.memory_space<vmem>>, vector<128x128xbf16>
    %cst_51 = arith.constant dense<0.000000e+00> : vector<8x128xf32>
    %114 = tpu.matmul %112, %113, %cst_51 {dimension_numbers = #tpu.dot_dimension_numbers<[1], [0], [0], [1], [0, 0, 1, 1], [], []>} : vector<8x128xbf16>, vector<128x128xbf16>, vector<8x128xf32> -> vector<8x128xf32>
    %c0_52 = arith.constant 0 : index
    %c0_53 = arith.constant 0 : index
    %115 = vector.load %arg15[%c0_52, %c0_53] : memref<1x128xf32, #tpu.memory_space<vmem>>, vector<1x128xf32>
    %116 = vector.broadcast %115 : vector<1x128xf32> to vector<8x128xf32>
    %117 = arith.addf %114, %116 : vector<8x128xf32>
    %118 = arith.truncf %117 : vector<8x128xf32> to vector<8x128xbf16>
    %119 = arith.mulf %118, %118 : vector<8x128xbf16>
    %120 = arith.mulf %118, %119 : vector<8x128xbf16>
    %cst_54 = arith.constant 4.467770e-02 : bf16
    %121 = vector.broadcast %cst_54 : bf16 to vector<8x128xbf16>
    %122 = arith.mulf %121, %120 : vector<8x128xbf16>
    %123 = arith.addf %118, %122 : vector<8x128xbf16>
    %cst_55 = arith.constant 7.968750e-01 : bf16
    %124 = vector.broadcast %cst_55 : bf16 to vector<8x128xbf16>
    %125 = arith.mulf %124, %123 : vector<8x128xbf16>
    %126 = math.tanh %125 : vector<8x128xbf16>
    %cst_56 = arith.constant 1.000000e+00 : bf16
    %127 = vector.broadcast %cst_56 : bf16 to vector<8x128xbf16>
    %128 = arith.addf %127, %126 : vector<8x128xbf16>
    %cst_57 = arith.constant 5.000000e-01 : bf16
    %129 = vector.broadcast %cst_57 : bf16 to vector<8x128xbf16>
    %130 = arith.mulf %129, %128 : vector<8x128xbf16>
    %131 = arith.mulf %118, %130 : vector<8x128xbf16>
    %c0_58 = arith.constant 0 : index
    %c0_59 = arith.constant 0 : index
    %132 = vector.load %arg16[%c0_58, %c0_59] : memref<128x128xbf16, #tpu.memory_space<vmem>>, vector<128x128xbf16>
    %cst_60 = arith.constant dense<0.000000e+00> : vector<8x128xf32>
    %133 = tpu.matmul %131, %132, %cst_60 {dimension_numbers = #tpu.dot_dimension_numbers<[1], [0], [0], [1], [0, 0, 1, 1], [], []>} : vector<8x128xbf16>, vector<128x128xbf16>, vector<8x128xf32> -> vector<8x128xf32>
    %c0_61 = arith.constant 0 : index
    %c0_62 = arith.constant 0 : index
    %134 = vector.load %arg17[%c0_61, %c0_62] : memref<1x128xf32, #tpu.memory_space<vmem>>, vector<1x128xf32>
    %135 = vector.broadcast %134 : vector<1x128xf32> to vector<8x128xf32>
    %136 = arith.addf %133, %135 : vector<8x128xf32>
    %137 = arith.addf %85, %136 : vector<8x128xf32>
    %138 = arith.truncf %137 : vector<8x128xf32> to vector<8x128xbf16>
    %c0_63 = arith.constant 0 : index
    %c0_64 = arith.constant 0 : index
    %139 = vector.load %arg18[%c0_63, %c0_64] : memref<8x128xbf16, #tpu.memory_space<vmem>>, vector<8x128xbf16>
    tpu.vector_store %arg18[%c0_63, %c0_64], %138 {strides = array<i32>} : memref<8x128xbf16, #tpu.memory_space<vmem>>, vector<8x128xbf16>,
    return
  }
  func.func @transform_0(%arg0: i32) -> (i32, i32) {
    %c0_i32 = arith.constant 0 : i32
    %c0_i32_0 = arith.constant 0 : i32
    return %arg0, %c0_i32 : i32, i32
  }
  func.func @transform_1(%arg0: i32) -> (i32, i32) {
    %c0_i32 = arith.constant 0 : i32
    %c0_i32_0 = arith.constant 0 : i32
    %c0_i32_1 = arith.constant 0 : i32
    return %c0_i32, %c0_i32_0 : i32, i32
  }
  func.func @transform_2(%arg0: i32) -> (i32, i32) {
    %c0_i32 = arith.constant 0 : i32
    %c0_i32_0 = arith.constant 0 : i32
    %c0_i32_1 = arith.constant 0 : i32
    return %c0_i32, %c0_i32_0 : i32, i32
  }
  func.func @transform_3(%arg0: i32) -> (i32, i32) {
    %c0_i32 = arith.constant 0 : i32
    %c0_i32_0 = arith.constant 0 : i32
    %c0_i32_1 = arith.constant 0 : i32
    return %c0_i32, %c0_i32_0 : i32, i32
  }
  func.func @transform_4(%arg0: i32) -> (i32, i32) {
    %c0_i32 = arith.constant 0 : i32
    %c0_i32_0 = arith.constant 0 : i32
    %c0_i32_1 = arith.constant 0 : i32
    return %c0_i32, %c0_i32_0 : i32, i32
  }
  func.func @transform_5(%arg0: i32) -> (i32, i32) {
    %c0_i32 = arith.constant 0 : i32
    %c0_i32_0 = arith.constant 0 : i32
    %c0_i32_1 = arith.constant 0 : i32
    return %c0_i32, %c0_i32_0 : i32, i32
  }
  func.func @transform_6(%arg0: i32) -> (i32, i32) {
    %c0_i32 = arith.constant 0 : i32
    %c0_i32_0 = arith.constant 0 : i32
    %c0_i32_1 = arith.constant 0 : i32
    return %c0_i32, %c0_i32_0 : i32, i32
  }
  func.func @transform_7(%arg0: i32) -> (i32, i32) {
    %c0_i32 = arith.constant 0 : i32
    %c0_i32_0 = arith.constant 0 : i32
    %c0_i32_1 = arith.constant 0 : i32
    return %c0_i32, %c0_i32_0 : i32, i32
  }
  func.func @transform_8(%arg0: i32) -> (i32, i32) {
    %c0_i32 = arith.constant 0 : i32
    %c0_i32_0 = arith.constant 0 : i32
    %c0_i32_1 = arith.constant 0 : i32
    return %c0_i32, %c0_i32_0 : i32, i32
  }
  func.func @transform_9(%arg0: i32) -> (i32, i32) {
    %c0_i32 = arith.constant 0 : i32
    %c0_i32_0 = arith.constant 0 : i32
    %c0_i32_1 = arith.constant 0 : i32
    return %c0_i32, %c0_i32_0 : i32, i32
  }
  func.func @transform_10(%arg0: i32) -> (i32, i32) {
    %c0_i32 = arith.constant 0 : i32
    %c0_i32_0 = arith.constant 0 : i32
    %c0_i32_1 = arith.constant 0 : i32
    return %c0_i32, %c0_i32_0 : i32, i32
  }
  func.func @transform_11(%arg0: i32) -> (i32, i32) {
    %c0_i32 = arith.constant 0 : i32
    %c0_i32_0 = arith.constant 0 : i32
    %c0_i32_1 = arith.constant 0 : i32
    return %c0_i32, %c0_i32_0 : i32, i32
  }
  func.func @transform_12(%arg0: i32) -> (i32, i32) {
    %c0_i32 = arith.constant 0 : i32
    %c0_i32_0 = arith.constant 0 : i32
    %c0_i32_1 = arith.constant 0 : i32
    return %c0_i32, %c0_i32_0 : i32, i32
  }
  func.func @transform_13(%arg0: i32) -> (i32, i32) {
    %c0_i32 = arith.constant 0 : i32
    %c0_i32_0 = arith.constant 0 : i32
    %c0_i32_1 = arith.constant 0 : i32
    return %c0_i32, %c0_i32_0 : i32, i32
  }
  func.func @transform_14(%arg0: i32) -> (i32, i32) {
    %c0_i32 = arith.constant 0 : i32
    %c0_i32_0 = arith.constant 0 : i32
    %c0_i32_1 = arith.constant 0 : i32
    return %c0_i32, %c0_i32_0 : i32, i32
  }
  func.func @transform_15(%arg0: i32) -> (i32, i32) {
    %c0_i32 = arith.constant 0 : i32
    %c0_i32_0 = arith.constant 0 : i32
    %c0_i32_1 = arith.constant 0 : i32
    return %c0_i32, %c0_i32_0 : i32, i32
  }
  func.func @transform_16(%arg0: i32) -> (i32, i32) {
    %c0_i32 = arith.constant 0 : i32
    %c0_i32_0 = arith.constant 0 : i32
    %c0_i32_1 = arith.constant 0 : i32
    return %c0_i32, %c0_i32_0 : i32, i32
  }
  func.func @transform_17(%arg0: i32) -> (i32, i32) {
    %c0_i32 = arith.constant 0 : i32
    %c0_i32_0 = arith.constant 0 : i32
    return %arg0, %c0_i32 : i32, i32
  }
}

module attributes {stable_mosaic.version = 11 : i64} {
  func.func @_stage_kernel(%arg0: i32, %arg1: memref<8x128xbf16, #tpu.memory_space<vmem>>, %arg2: memref<1x128xf32, #tpu.memory_space<vmem>>, %arg3: memref<1x128xf32, #tpu.memory_space<vmem>>, %arg4: memref<128x128xbf16, #tpu.memory_space<vmem>>, %arg5: memref<1x128xf32, #tpu.memory_space<vmem>>, %arg6: memref<1x128xf32, #tpu.memory_space<vmem>>, %arg7: memref<1x128xf32, #tpu.memory_space<vmem>>, %arg8: memref<128x128xbf16, #tpu.memory_space<vmem>>, %arg9: memref<1x128xf32, #tpu.memory_space<vmem>>, %arg10: memref<128x128xbf16, #tpu.memory_space<vmem>>, %arg11: memref<1x128xf32, #tpu.memory_space<vmem>>, %arg12: memref<1x128xf32, #tpu.memory_space<vmem>>, %arg13: memref<1x128xf32, #tpu.memory_space<vmem>>, %arg14: memref<128x128xbf16, #tpu.memory_space<vmem>>, %arg15: memref<1x128xf32, #tpu.memory_space<vmem>>, %arg16: memref<128x128xbf16, #tpu.memory_space<vmem>>, %arg17: memref<1x128xf32, #tpu.memory_space<vmem>>, %arg18: memref<8x128xbf16, #tpu.memory_space<vmem>>) attributes {dimension_semantics = [#tpu.dimension_semantics<parallel>], iteration_bounds = array<i64: 2>, scalar_prefetch = 0 : i64, scratch_operands = 0 : i64, tpu.core_type = #tpu.core_type<tc>, window_params = [{transform_indices = @transform_0, window_bounds = array<i64: 8, 128>}, {pipeline_mode = #tpu.pipeline_mode<synchronous>, transform_indices = @transform_1, window_bounds = array<i64: 1, 128>}, {pipeline_mode = #tpu.pipeline_mode<synchronous>, transform_indices = @transform_2, window_bounds = array<i64: 1, 128>}, {pipeline_mode = #tpu.pipeline_mode<synchronous>, transform_indices = @transform_3, window_bounds = array<i64: 128, 128>}, {pipeline_mode = #tpu.pipeline_mode<synchronous>, transform_indices = @transform_4, window_bounds = array<i64: 1, 128>}, {pipeline_mode = #tpu.pipeline_mode<synchronous>, transform_indices = @transform_5, window_bounds = array<i64: 1, 128>}, {pipeline_mode = #tpu.pipeline_mode<synchronous>, transform_indices = @transform_6, window_bounds = array<i64: 1, 128>}, {pipeline_mode = #tpu.pipeline_mode<synchronous>, transform_indices = @transform_7, window_bounds = array<i64: 128, 128>}, {pipeline_mode = #tpu.pipeline_mode<synchronous>, transform_indices = @transform_8, window_bounds = array<i64: 1, 128>}, {pipeline_mode = #tpu.pipeline_mode<synchronous>, transform_indices = @transform_9, window_bounds = array<i64: 128, 128>}, {pipeline_mode = #tpu.pipeline_mode<synchronous>, transform_indices = @transform_10, window_bounds = array<i64: 1, 128>}, {pipeline_mode = #tpu.pipeline_mode<synchronous>, transform_indices = @transform_11, window_bounds = array<i64: 1, 128>}, {pipeline_mode = #tpu.pipeline_mode<synchronous>, transform_indices = @transform_12, window_bounds = array<i64: 1, 128>}, {pipeline_mode = #tpu.pipeline_mode<synchronous>, transform_indices = @transform_13, window_bounds = array<i64: 128, 128>}, {pipeline_mode = #tpu.pipeline_mode<synchronous>, transform_indices = @transform_14, window_bounds = array<i64: 1, 128>}, {pipeline_mode = #tpu.pipeline_mode<synchronous>, transform_indices = @transform_15, window_bounds = array<i64: 128, 128>}, {pipeline_mode = #tpu.pipeline_mode<synchronous>, transform_indices = @transform_16, window_bounds = array<i64: 1, 128>}, {transform_indices = @transform_17, window_bounds = array<i64: 8, 128>}]} {
    %c0 = arith.constant 0 : index
    %c0_0 = arith.constant 0 : index
    %0 = vector.load %arg1[%c0, %c0_0] : memref<8x128xbf16, #tpu.memory_space<vmem>>, vector<8x128xbf16>
    %1 = arith.extf %0 : vector<8x128xbf16> to vector<8x128xf32>
    %c0_1 = arith.constant 0 : index
    %c0_2 = arith.constant 0 : index
    %2 = vector.load %arg2[%c0_1, %c0_2] : memref<1x128xf32, #tpu.memory_space<vmem>>, vector<1x128xf32>
    %c0_3 = arith.constant 0 : index
    %c0_4 = arith.constant 0 : index
    %3 = vector.load %arg3[%c0_3, %c0_4] : memref<1x128xf32, #tpu.memory_space<vmem>>, vector<1x128xf32>
    %cst = arith.constant dense<0.000000e+00> : vector<8xf32>
    %4 = vector.multi_reduction <add>, %1, %cst [1] : vector<8x128xf32> to vector<8xf32>
    %5 = vector.shape_cast %4 : vector<8xf32> to vector<8x1xf32>
    %cst_5 = arith.constant 0.020833334 : f32
    %6 = vector.broadcast %cst_5 : f32 to vector<8x1xf32>
    %7 = arith.mulf %5, %6 : vector<8x1xf32>
    %8 = arith.mulf %1, %1 : vector<8x128xf32>
    %cst_6 = arith.constant dense<0.000000e+00> : vector<8xf32>
    %9 = vector.multi_reduction <add>, %8, %cst_6 [1] : vector<8x128xf32> to vector<8xf32>
    %10 = vector.shape_cast %9 : vector<8xf32> to vector<8x1xf32>
    %cst_7 = arith.constant 0.020833334 : f32
    %11 = vector.broadcast %cst_7 : f32 to vector<8x1xf32>
    %12 = arith.mulf %10, %11 : vector<8x1xf32>
    %13 = arith.mulf %7, %7 : vector<8x1xf32>
    %14 = arith.subf %12, %13 : vector<8x1xf32>
    %cst_8 = arith.constant 0.000000e+00 : f32
    %15 = vector.broadcast %cst_8 : f32 to vector<8x1xf32>
    %16 = arith.maximumf %14, %15 : vector<8x1xf32>
    %17 = vector.broadcast %7 : vector<8x1xf32> to vector<8x128xf32>
    %18 = arith.subf %1, %17 : vector<8x128xf32>
    %cst_9 = arith.constant 9.99999974E-6 : f32
    %19 = vector.broadcast %cst_9 : f32 to vector<8x1xf32>
    %20 = arith.addf %16, %19 : vector<8x1xf32>
    %21 = math.rsqrt %20 : vector<8x1xf32>
    %22 = vector.broadcast %21 : vector<8x1xf32> to vector<8x128xf32>
    %23 = arith.mulf %18, %22 : vector<8x128xf32>
    %24 = vector.broadcast %2 : vector<1x128xf32> to vector<8x128xf32>
    %25 = arith.mulf %23, %24 : vector<8x128xf32>
    %26 = vector.broadcast %3 : vector<1x128xf32> to vector<8x128xf32>
    %27 = arith.addf %25, %26 : vector<8x128xf32>
    %28 = arith.truncf %27 : vector<8x128xf32> to vector<8x128xbf16>
    %c0_10 = arith.constant 0 : index
    %c0_11 = arith.constant 0 : index
    %29 = vector.load %arg4[%c0_10, %c0_11] : memref<128x128xbf16, #tpu.memory_space<vmem>>, vector<128x128xbf16>
    %cst_12 = arith.constant dense<0.000000e+00> : vector<8x128xf32>
    %30 = tpu.matmul %28, %29, %cst_12 {dimension_numbers = #tpu.dot_dimension_numbers<[1], [0], [0], [1], [0, 0, 1, 1], [], []>} : vector<8x128xbf16>, vector<128x128xbf16>, vector<8x128xf32> -> vector<8x128xf32>
    %c0_13 = arith.constant 0 : index
    %c0_14 = arith.constant 0 : index
    %31 = vector.load %arg5[%c0_13, %c0_14] : memref<1x128xf32, #tpu.memory_space<vmem>>, vector<1x128xf32>
    %32 = vector.broadcast %31 : vector<1x128xf32> to vector<8x128xf32>
    %33 = arith.addf %30, %32 : vector<8x128xf32>
    %c0_15 = arith.constant 0 : index
    %c0_16 = arith.constant 0 : index
    %34 = vector.load %arg6[%c0_15, %c0_16] : memref<1x128xf32, #tpu.memory_space<vmem>>, vector<1x128xf32>
    %c0_17 = arith.constant 0 : index
    %c0_18 = arith.constant 0 : index
    %35 = vector.load %arg7[%c0_17, %c0_18] : memref<1x128xf32, #tpu.memory_space<vmem>>, vector<1x128xf32>
    %cst_19 = arith.constant dense<0.000000e+00> : vector<8xf32>
    %36 = vector.multi_reduction <add>, %33, %cst_19 [1] : vector<8x128xf32> to vector<8xf32>
    %37 = vector.shape_cast %36 : vector<8xf32> to vector<8x1xf32>
    %cst_20 = arith.constant 1.562500e-02 : f32
    %38 = vector.broadcast %cst_20 : f32 to vector<8x1xf32>
    %39 = arith.mulf %37, %38 : vector<8x1xf32>
    %40 = arith.mulf %33, %33 : vector<8x128xf32>
    %cst_21 = arith.constant dense<0.000000e+00> : vector<8xf32>
    %41 = vector.multi_reduction <add>, %40, %cst_21 [1] : vector<8x128xf32> to vector<8xf32>
    %42 = vector.shape_cast %41 : vector<8xf32> to vector<8x1xf32>
    %cst_22 = arith.constant 1.562500e-02 : f32
    %43 = vector.broadcast %cst_22 : f32 to vector<8x1xf32>
    %44 = arith.mulf %42, %43 : vector<8x1xf32>
    %45 = arith.mulf %39, %39 : vector<8x1xf32>
    %46 = arith.subf %44, %45 : vector<8x1xf32>
    %cst_23 = arith.constant 0.000000e+00 : f32
    %47 = vector.broadcast %cst_23 : f32 to vector<8x1xf32>
    %48 = arith.maximumf %46, %47 : vector<8x1xf32>
    %49 = vector.broadcast %39 : vector<8x1xf32> to vector<8x128xf32>
    %50 = arith.subf %33, %49 : vector<8x128xf32>
    %cst_24 = arith.constant 9.99999974E-6 : f32
    %51 = vector.broadcast %cst_24 : f32 to vector<8x1xf32>
    %52 = arith.addf %48, %51 : vector<8x1xf32>
    %53 = math.rsqrt %52 : vector<8x1xf32>
    %54 = vector.broadcast %53 : vector<8x1xf32> to vector<8x128xf32>
    %55 = arith.mulf %50, %54 : vector<8x128xf32>
    %56 = vector.broadcast %34 : vector<1x128xf32> to vector<8x128xf32>
    %57 = arith.mulf %55, %56 : vector<8x128xf32>
    %58 = vector.broadcast %35 : vector<1x128xf32> to vector<8x128xf32>
    %59 = arith.addf %57, %58 : vector<8x128xf32>
    %60 = arith.truncf %59 : vector<8x128xf32> to vector<8x128xbf16>
    %c0_25 = arith.constant 0 : index
    %c0_26 = arith.constant 0 : index
    %61 = vector.load %arg8[%c0_25, %c0_26] : memref<128x128xbf16, #tpu.memory_space<vmem>>, vector<128x128xbf16>
    %cst_27 = arith.constant dense<0.000000e+00> : vector<8x128xf32>
    %62 = tpu.matmul %60, %61, %cst_27 {dimension_numbers = #tpu.dot_dimension_numbers<[1], [0], [0], [1], [0, 0, 1, 1], [], []>} : vector<8x128xbf16>, vector<128x128xbf16>, vector<8x128xf32> -> vector<8x128xf32>
    %c0_28 = arith.constant 0 : index
    %c0_29 = arith.constant 0 : index
    %63 = vector.load %arg9[%c0_28, %c0_29] : memref<1x128xf32, #tpu.memory_space<vmem>>, vector<1x128xf32>
    %64 = vector.broadcast %63 : vector<1x128xf32> to vector<8x128xf32>
    %65 = arith.addf %62, %64 : vector<8x128xf32>
    %66 = arith.truncf %65 : vector<8x128xf32> to vector<8x128xbf16>
    %67 = arith.mulf %66, %66 : vector<8x128xbf16>
    %68 = arith.mulf %66, %67 : vector<8x128xbf16>
    %cst_30 = arith.constant 4.467770e-02 : bf16
    %69 = vector.broadcast %cst_30 : bf16 to vector<8x128xbf16>
    %70 = arith.mulf %69, %68 : vector<8x128xbf16>
    %71 = arith.addf %66, %70 : vector<8x128xbf16>
    %cst_31 = arith.constant 7.968750e-01 : bf16
    %72 = vector.broadcast %cst_31 : bf16 to vector<8x128xbf16>
    %73 = arith.mulf %72, %71 : vector<8x128xbf16>
    %74 = math.tanh %73 : vector<8x128xbf16>
    %cst_32 = arith.constant 1.000000e+00 : bf16
    %75 = vector.broadcast %cst_32 : bf16 to vector<8x128xbf16>
    %76 = arith.addf %75, %74 : vector<8x128xbf16>
    %cst_33 = arith.constant 5.000000e-01 : bf16
    %77 = vector.broadcast %cst_33 : bf16 to vector<8x128xbf16>
    %78 = arith.mulf %77, %76 : vector<8x128xbf16>
    %79 = arith.mulf %66, %78 : vector<8x128xbf16>
    %c0_34 = arith.constant 0 : index
    %c0_35 = arith.constant 0 : index
    %80 = vector.load %arg10[%c0_34, %c0_35] : memref<128x128xbf16, #tpu.memory_space<vmem>>, vector<128x128xbf16>
    %cst_36 = arith.constant dense<0.000000e+00> : vector<8x128xf32>
    %81 = tpu.matmul %79, %80, %cst_36 {dimension_numbers = #tpu.dot_dimension_numbers<[1], [0], [0], [1], [0, 0, 1, 1], [], []>} : vector<8x128xbf16>, vector<128x128xbf16>, vector<8x128xf32> -> vector<8x128xf32>
    %c0_37 = arith.constant 0 : index
    %c0_38 = arith.constant 0 : index
    %82 = vector.load %arg11[%c0_37, %c0_38] : memref<1x128xf32, #tpu.memory_space<vmem>>, vector<1x128xf32>
    %83 = vector.broadcast %82 : vector<1x128xf32> to vector<8x128xf32>
    %84 = arith.addf %81, %83 : vector<8x128xf32>
    %85 = arith.addf %33, %84 : vector<8x128xf32>
    %c0_39 = arith.constant 0 : index
    %c0_40 = arith.constant 0 : index
    %86 = vector.load %arg12[%c0_39, %c0_40] : memref<1x128xf32, #tpu.memory_space<vmem>>, vector<1x128xf32>
    %c0_41 = arith.constant 0 : index
    %c0_42 = arith.constant 0 : index
    %87 = vector.load %arg13[%c0_41, %c0_42] : memref<1x128xf32, #tpu.memory_space<vmem>>, vector<1x128xf32>
    %cst_43 = arith.constant dense<0.000000e+00> : vector<8xf32>
    %88 = vector.multi_reduction <add>, %85, %cst_43 [1] : vector<8x128xf32> to vector<8xf32>
    %89 = vector.shape_cast %88 : vector<8xf32> to vector<8x1xf32>
    %cst_44 = arith.constant 1.562500e-02 : f32
    %90 = vector.broadcast %cst_44 : f32 to vector<8x1xf32>
    %91 = arith.mulf %89, %90 : vector<8x1xf32>
    %92 = arith.mulf %85, %85 : vector<8x128xf32>
    %cst_45 = arith.constant dense<0.000000e+00> : vector<8xf32>
    %93 = vector.multi_reduction <add>, %92, %cst_45 [1] : vector<8x128xf32> to vector<8xf32>
    %94 = vector.shape_cast %93 : vector<8xf32> to vector<8x1xf32>
    %cst_46 = arith.constant 1.562500e-02 : f32
    %95 = vector.broadcast %cst_46 : f32 to vector<8x1xf32>
    %96 = arith.mulf %94, %95 : vector<8x1xf32>
    %97 = arith.mulf %91, %91 : vector<8x1xf32>
    %98 = arith.subf %96, %97 : vector<8x1xf32>
    %cst_47 = arith.constant 0.000000e+00 : f32
    %99 = vector.broadcast %cst_47 : f32 to vector<8x1xf32>
    %100 = arith.maximumf %98, %99 : vector<8x1xf32>
    %101 = vector.broadcast %91 : vector<8x1xf32> to vector<8x128xf32>
    %102 = arith.subf %85, %101 : vector<8x128xf32>
    %cst_48 = arith.constant 9.99999974E-6 : f32
    %103 = vector.broadcast %cst_48 : f32 to vector<8x1xf32>
    %104 = arith.addf %100, %103 : vector<8x1xf32>
    %105 = math.rsqrt %104 : vector<8x1xf32>
    %106 = vector.broadcast %105 : vector<8x1xf32> to vector<8x128xf32>
    %107 = arith.mulf %102, %106 : vector<8x128xf32>
    %108 = vector.broadcast %86 : vector<1x128xf32> to vector<8x128xf32>
    %109 = arith.mulf %107, %108 : vector<8x128xf32>
    %110 = vector.broadcast %87 : vector<1x128xf32> to vector<8x128xf32>
    %111 = arith.addf %109, %110 : vector<8x128xf32>
    %112 = arith.truncf %111 : vector<8x128xf32> to vector<8x128xbf16>
    %c0_49 = arith.constant 0 : index
    %c0_50 = arith.constant 0 : index
    %113 = vector.load %arg14[%c0_49, %c0_50] : memref<128x128xbf16, #tpu.memory_space<vmem>>, vector<128x128xbf16>
    %cst_51 = arith.constant dense<0.000000e+00> : vector<8x128xf32>
    %114 = tpu.matmul %112, %113, %cst_51 {dimension_numbers = #tpu.dot_dimension_numbers<[1], [0], [0], [1], [0, 0, 1, 1], [], []>} : vector<8x128xbf16>, vector<128x128xbf16>, vector<8x128xf32> -> vector<8x128xf32>
    %c0_52 = arith.constant 0 : index
    %c0_53 = arith.constant 0 : index
    %115 = vector.load %arg15[%c0_52, %c0_53] : memref<1x128xf32, #tpu.memory_space<vmem>>, vector<1x128xf32>
    %116 = vector.broadcast %115 : vector<1x128xf32> to vector<8x128xf32>
    %117 = arith.addf %114, %116 : vector<8x128xf32>
    %118 = arith.truncf %117 : vector<8x128xf32> to vector<8x128xbf16>
    %119 = arith.mulf %118, %118 : vector<8x128xbf16>
    %120 = arith.mulf %118, %119 : vector<8x128xbf16>
    %cst_54 = arith.constant 4.467770e-02 : bf16
    %121 = vector.broadcast %cst_54 : bf16 to vector<8x128xbf16>
    %122 = arith.mulf %121, %120 : vector<8x128xbf16>
    %123 = arith.addf %118, %122 : vector<8x128xbf16>
    %cst_55 = arith.constant 7.968750e-01 : bf16
    %124 = vector.broadcast %cst_55 : bf16 to vector<8x128xbf16>
    %125 = arith.mulf %124, %123 : vector<8x128xbf16>
    %126 = math.tanh %125 : vector<8x128xbf16>
    %cst_56 = arith.constant 1.000000e+00 : bf16
    %127 = vector.broadcast %cst_56 : bf16 to vector<8x128xbf16>
    %128 = arith.addf %127, %126 : vector<8x128xbf16>
    %cst_57 = arith.constant 5.000000e-01 : bf16
    %129 = vector.broadcast %cst_57 : bf16 to vector<8x128xbf16>
    %130 = arith.mulf %129, %128 : vector<8x128xbf16>
    %131 = arith.mulf %118, %130 : vector<8x128xbf16>
    %c0_58 = arith.constant 0 : index
    %c0_59 = arith.constant 0 : index
    %132 = vector.load %arg16[%c0_58, %c0_59] : memref<128x128xbf16, #tpu.memory_space<vmem>>, vector<128x128xbf16>
    %cst_60 = arith.constant dense<0.000000e+00> : vector<8x128xf32>
    %133 = tpu.matmul %131, %132, %cst_60 {dimension_numbers = #tpu.dot_dimension_numbers<[1], [0], [0], [1], [0, 0, 1, 1], [], []>} : vector<8x128xbf16>, vector<128x128xbf16>, vector<8x128xf32> -> vector<8x128xf32>
    %c0_61 = arith.constant 0 : index
    %c0_62 = arith.constant 0 : index
    %134 = vector.load %arg17[%c0_61, %c0_62] : memref<1x128xf32, #tpu.memory_space<vmem>>, vector<1x128xf32>
    %135 = vector.broadcast %134 : vector<1x128xf32> to vector<8x128xf32>
    %136 = arith.addf %133, %135 : vector<8x128xf32>
    %137 = arith.addf %85, %136 : vector<8x128xf32>
    %138 = arith.truncf %137 : vector<8x128xf32> to vector<8x128xbf16>
    %c0_63 = arith.constant 0 : index
    %c0_64 = arith.constant 0 : index
    %139 = vector.load %arg18[%c0_63, %c0_64] : memref<8x128xbf16, #tpu.memory_space<vmem>>, vector<8x128xbf16>
    tpu.vector_store %arg18[%c0_63, %c0_64], %138 {strides = array<i32>} : memref<8x128xbf16, #tpu.memory_space<vmem>>, vector<8x128xbf16>,
    return
  }
  func.func @transform_0(%arg0: i32) -> (i32, i32) {
    %c0_i32 = arith.constant 0 : i32
    %c0_i32_0 = arith.constant 0 : i32
    return %arg0, %c0_i32 : i32, i32
  }
  func.func @transform_1(%arg0: i32) -> (i32, i32) {
    %c0_i32 = arith.constant 0 : i32
    %c0_i32_0 = arith.constant 0 : i32
    %c0_i32_1 = arith.constant 0 : i32
    return %c0_i32, %c0_i32_0 : i32, i32
  }
  func.func @transform_2(%arg0: i32) -> (i32, i32) {
    %c0_i32 = arith.constant 0 : i32
    %c0_i32_0 = arith.constant 0 : i32
    %c0_i32_1 = arith.constant 0 : i32
    return %c0_i32, %c0_i32_0 : i32, i32
  }
  func.func @transform_3(%arg0: i32) -> (i32, i32) {
    %c0_i32 = arith.constant 0 : i32
    %c0_i32_0 = arith.constant 0 : i32
    %c0_i32_1 = arith.constant 0 : i32
    return %c0_i32, %c0_i32_0 : i32, i32
  }
  func.func @transform_4(%arg0: i32) -> (i32, i32) {
    %c0_i32 = arith.constant 0 : i32
    %c0_i32_0 = arith.constant 0 : i32
    %c0_i32_1 = arith.constant 0 : i32
    return %c0_i32, %c0_i32_0 : i32, i32
  }
  func.func @transform_5(%arg0: i32) -> (i32, i32) {
    %c0_i32 = arith.constant 0 : i32
    %c0_i32_0 = arith.constant 0 : i32
    %c0_i32_1 = arith.constant 0 : i32
    return %c0_i32, %c0_i32_0 : i32, i32
  }
  func.func @transform_6(%arg0: i32) -> (i32, i32) {
    %c0_i32 = arith.constant 0 : i32
    %c0_i32_0 = arith.constant 0 : i32
    %c0_i32_1 = arith.constant 0 : i32
    return %c0_i32, %c0_i32_0 : i32, i32
  }
  func.func @transform_7(%arg0: i32) -> (i32, i32) {
    %c0_i32 = arith.constant 0 : i32
    %c0_i32_0 = arith.constant 0 : i32
    %c0_i32_1 = arith.constant 0 : i32
    return %c0_i32, %c0_i32_0 : i32, i32
  }
  func.func @transform_8(%arg0: i32) -> (i32, i32) {
    %c0_i32 = arith.constant 0 : i32
    %c0_i32_0 = arith.constant 0 : i32
    %c0_i32_1 = arith.constant 0 : i32
    return %c0_i32, %c0_i32_0 : i32, i32
  }
  func.func @transform_9(%arg0: i32) -> (i32, i32) {
    %c0_i32 = arith.constant 0 : i32
    %c0_i32_0 = arith.constant 0 : i32
    %c0_i32_1 = arith.constant 0 : i32
    return %c0_i32, %c0_i32_0 : i32, i32
  }
  func.func @transform_10(%arg0: i32) -> (i32, i32) {
    %c0_i32 = arith.constant 0 : i32
    %c0_i32_0 = arith.constant 0 : i32
    %c0_i32_1 = arith.constant 0 : i32
    return %c0_i32, %c0_i32_0 : i32, i32
  }
  func.func @transform_11(%arg0: i32) -> (i32, i32) {
    %c0_i32 = arith.constant 0 : i32
    %c0_i32_0 = arith.constant 0 : i32
    %c0_i32_1 = arith.constant 0 : i32
    return %c0_i32, %c0_i32_0 : i32, i32
  }
  func.func @transform_12(%arg0: i32) -> (i32, i32) {
    %c0_i32 = arith.constant 0 : i32
    %c0_i32_0 = arith.constant 0 : i32
    %c0_i32_1 = arith.constant 0 : i32
    return %c0_i32, %c0_i32_0 : i32, i32
  }
  func.func @transform_13(%arg0: i32) -> (i32, i32) {
    %c0_i32 = arith.constant 0 : i32
    %c0_i32_0 = arith.constant 0 : i32
    %c0_i32_1 = arith.constant 0 : i32
    return %c0_i32, %c0_i32_0 : i32, i32
  }
  func.func @transform_14(%arg0: i32) -> (i32, i32) {
    %c0_i32 = arith.constant 0 : i32
    %c0_i32_0 = arith.constant 0 : i32
    %c0_i32_1 = arith.constant 0 : i32
    return %c0_i32, %c0_i32_0 : i32, i32
  }
  func.func @transform_15(%arg0: i32) -> (i32, i32) {
    %c0_i32 = arith.constant 0 : i32
    %c0_i32_0 = arith.constant 0 : i32
    %c0_i32_1 = arith.constant 0 : i32
    return %c0_i32, %c0_i32_0 : i32, i32
  }
  func.func @transform_16(%arg0: i32) -> (i32, i32) {
    %c0_i32 = arith.constant 0 : i32
    %c0_i32_0 = arith.constant 0 : i32
    %c0_i32_1 = arith.constant 0 : i32
    return %c0_i32, %c0_i32_0 : i32, i32
  }
  func.func @transform_17(%arg0: i32) -> (i32, i32) {
    %c0_i32 = arith.constant 0 : i32
    %c0_i32_0 = arith.constant 0 : i32
    return %arg0, %c0_i32 : i32, i32
  }
}

module attributes {stable_mosaic.version = 11 : i64} {
  func.func @_tail_kernel(%arg0: i32, %arg1: memref<1x8x128xbf16, #tpu.memory_space<vmem>>, %arg2: memref<1x128xf32, #tpu.memory_space<vmem>>, %arg3: memref<1x128xf32, #tpu.memory_space<vmem>>, %arg4: memref<128x128xbf16, #tpu.memory_space<vmem>>, %arg5: memref<1x128xf32, #tpu.memory_space<vmem>>, %arg6: memref<128x128xbf16, #tpu.memory_space<vmem>>, %arg7: memref<1x128xf32, #tpu.memory_space<vmem>>, %arg8: memref<1x128xf32, #tpu.memory_space<vmem>>, %arg9: memref<1x128xf32, #tpu.memory_space<vmem>>, %arg10: memref<128x128xbf16, #tpu.memory_space<vmem>>, %arg11: memref<1x128xf32, #tpu.memory_space<vmem>>, %arg12: memref<1x1x128xf32, #tpu.memory_space<vmem>>) attributes {dimension_semantics = [#tpu.dimension_semantics<parallel>], iteration_bounds = array<i64: 2>, scalar_prefetch = 0 : i64, scratch_operands = 0 : i64, tpu.core_type = #tpu.core_type<tc>, window_params = [{transform_indices = @transform_0, window_bounds = array<i64: 1, 8, 128>}, {pipeline_mode = #tpu.pipeline_mode<synchronous>, transform_indices = @transform_1, window_bounds = array<i64: 1, 128>}, {pipeline_mode = #tpu.pipeline_mode<synchronous>, transform_indices = @transform_2, window_bounds = array<i64: 1, 128>}, {pipeline_mode = #tpu.pipeline_mode<synchronous>, transform_indices = @transform_3, window_bounds = array<i64: 128, 128>}, {pipeline_mode = #tpu.pipeline_mode<synchronous>, transform_indices = @transform_4, window_bounds = array<i64: 1, 128>}, {pipeline_mode = #tpu.pipeline_mode<synchronous>, transform_indices = @transform_5, window_bounds = array<i64: 128, 128>}, {pipeline_mode = #tpu.pipeline_mode<synchronous>, transform_indices = @transform_6, window_bounds = array<i64: 1, 128>}, {pipeline_mode = #tpu.pipeline_mode<synchronous>, transform_indices = @transform_7, window_bounds = array<i64: 1, 128>}, {pipeline_mode = #tpu.pipeline_mode<synchronous>, transform_indices = @transform_8, window_bounds = array<i64: 1, 128>}, {pipeline_mode = #tpu.pipeline_mode<synchronous>, transform_indices = @transform_9, window_bounds = array<i64: 128, 128>}, {pipeline_mode = #tpu.pipeline_mode<synchronous>, transform_indices = @transform_10, window_bounds = array<i64: 1, 128>}, {transform_indices = @transform_11, window_bounds = array<i64: 1, 1, 128>}]} {
    %c0 = arith.constant 0 : index
    %c0_0 = arith.constant 0 : index
    %c0_1 = arith.constant 0 : index
    %0 = vector.load %arg1[%c0, %c0_0, %c0_1] : memref<1x8x128xbf16, #tpu.memory_space<vmem>>, vector<1x8x128xbf16>
    %1 = vector.shape_cast %0 : vector<1x8x128xbf16> to vector<8x128xbf16>
    %cst = arith.constant 1.000000e+00 : bf16
    %2 = vector.broadcast %cst : bf16 to vector<1x8xbf16>
    %cst_2 = arith.constant dense<0.000000e+00> : vector<1x128xf32>
    %3 = tpu.matmul %2, %1, %cst_2 {dimension_numbers = #tpu.dot_dimension_numbers<[1], [0], [0], [1], [0, 0, 1, 1], [], []>} : vector<1x8xbf16>, vector<8x128xbf16>, vector<1x128xf32> -> vector<1x128xf32>
    %cst_3 = arith.constant 1.250000e-01 : f32
    %4 = vector.broadcast %cst_3 : f32 to vector<1x128xf32>
    %5 = arith.mulf %3, %4 : vector<1x128xf32>
    %c0_4 = arith.constant 0 : index
    %c0_5 = arith.constant 0 : index
    %6 = vector.load %arg2[%c0_4, %c0_5] : memref<1x128xf32, #tpu.memory_space<vmem>>, vector<1x128xf32>
    %c0_6 = arith.constant 0 : index
    %c0_7 = arith.constant 0 : index
    %7 = vector.load %arg3[%c0_6, %c0_7] : memref<1x128xf32, #tpu.memory_space<vmem>>, vector<1x128xf32>
    %cst_8 = arith.constant dense<0.000000e+00> : vector<1xf32>
    %8 = vector.multi_reduction <add>, %5, %cst_8 [1] : vector<1x128xf32> to vector<1xf32>
    %9 = vector.shape_cast %8 : vector<1xf32> to vector<1x1xf32>
    %cst_9 = arith.constant 1.562500e-02 : f32
    %10 = vector.broadcast %cst_9 : f32 to vector<1x1xf32>
    %11 = arith.mulf %9, %10 : vector<1x1xf32>
    %12 = arith.mulf %5, %5 : vector<1x128xf32>
    %cst_10 = arith.constant dense<0.000000e+00> : vector<1xf32>
    %13 = vector.multi_reduction <add>, %12, %cst_10 [1] : vector<1x128xf32> to vector<1xf32>
    %14 = vector.shape_cast %13 : vector<1xf32> to vector<1x1xf32>
    %cst_11 = arith.constant 1.562500e-02 : f32
    %15 = vector.broadcast %cst_11 : f32 to vector<1x1xf32>
    %16 = arith.mulf %14, %15 : vector<1x1xf32>
    %17 = arith.mulf %11, %11 : vector<1x1xf32>
    %18 = arith.subf %16, %17 : vector<1x1xf32>
    %cst_12 = arith.constant 0.000000e+00 : f32
    %19 = vector.broadcast %cst_12 : f32 to vector<1x1xf32>
    %20 = arith.maximumf %18, %19 : vector<1x1xf32>
    %21 = vector.broadcast %11 : vector<1x1xf32> to vector<1x128xf32>
    %22 = arith.subf %5, %21 : vector<1x128xf32>
    %cst_13 = arith.constant 9.99999974E-6 : f32
    %23 = vector.broadcast %cst_13 : f32 to vector<1x1xf32>
    %24 = arith.addf %20, %23 : vector<1x1xf32>
    %25 = math.rsqrt %24 : vector<1x1xf32>
    %26 = vector.broadcast %25 : vector<1x1xf32> to vector<1x128xf32>
    %27 = arith.mulf %22, %26 : vector<1x128xf32>
    %28 = arith.mulf %27, %6 : vector<1x128xf32>
    %29 = arith.addf %28, %7 : vector<1x128xf32>
    %30 = arith.truncf %29 : vector<1x128xf32> to vector<1x128xbf16>
    %c0_14 = arith.constant 0 : index
    %c0_15 = arith.constant 0 : index
    %31 = vector.load %arg4[%c0_14, %c0_15] : memref<128x128xbf16, #tpu.memory_space<vmem>>, vector<128x128xbf16>
    %cst_16 = arith.constant dense<0.000000e+00> : vector<1x128xf32>
    %32 = tpu.matmul %30, %31, %cst_16 {dimension_numbers = #tpu.dot_dimension_numbers<[1], [0], [0], [1], [0, 0, 1, 1], [], []>} : vector<1x128xbf16>, vector<128x128xbf16>, vector<1x128xf32> -> vector<1x128xf32>
    %c0_17 = arith.constant 0 : index
    %c0_18 = arith.constant 0 : index
    %33 = vector.load %arg5[%c0_17, %c0_18] : memref<1x128xf32, #tpu.memory_space<vmem>>, vector<1x128xf32>
    %34 = arith.addf %32, %33 : vector<1x128xf32>
    %35 = arith.truncf %34 : vector<1x128xf32> to vector<1x128xbf16>
    %36 = arith.mulf %35, %35 : vector<1x128xbf16>
    %37 = arith.mulf %35, %36 : vector<1x128xbf16>
    %cst_19 = arith.constant 4.467770e-02 : bf16
    %38 = vector.broadcast %cst_19 : bf16 to vector<1x128xbf16>
    %39 = arith.mulf %38, %37 : vector<1x128xbf16>
    %40 = arith.addf %35, %39 : vector<1x128xbf16>
    %cst_20 = arith.constant 7.968750e-01 : bf16
    %41 = vector.broadcast %cst_20 : bf16 to vector<1x128xbf16>
    %42 = arith.mulf %41, %40 : vector<1x128xbf16>
    %43 = math.tanh %42 : vector<1x128xbf16>
    %cst_21 = arith.constant 1.000000e+00 : bf16
    %44 = vector.broadcast %cst_21 : bf16 to vector<1x128xbf16>
    %45 = arith.addf %44, %43 : vector<1x128xbf16>
    %cst_22 = arith.constant 5.000000e-01 : bf16
    %46 = vector.broadcast %cst_22 : bf16 to vector<1x128xbf16>
    %47 = arith.mulf %46, %45 : vector<1x128xbf16>
    %48 = arith.mulf %35, %47 : vector<1x128xbf16>
    %c0_23 = arith.constant 0 : index
    %c0_24 = arith.constant 0 : index
    %49 = vector.load %arg6[%c0_23, %c0_24] : memref<128x128xbf16, #tpu.memory_space<vmem>>, vector<128x128xbf16>
    %cst_25 = arith.constant dense<0.000000e+00> : vector<1x128xf32>
    %50 = tpu.matmul %48, %49, %cst_25 {dimension_numbers = #tpu.dot_dimension_numbers<[1], [0], [0], [1], [0, 0, 1, 1], [], []>} : vector<1x128xbf16>, vector<128x128xbf16>, vector<1x128xf32> -> vector<1x128xf32>
    %c0_26 = arith.constant 0 : index
    %c0_27 = arith.constant 0 : index
    %51 = vector.load %arg7[%c0_26, %c0_27] : memref<1x128xf32, #tpu.memory_space<vmem>>, vector<1x128xf32>
    %52 = arith.addf %50, %51 : vector<1x128xf32>
    %53 = arith.addf %5, %52 : vector<1x128xf32>
    %c0_28 = arith.constant 0 : index
    %c0_29 = arith.constant 0 : index
    %54 = vector.load %arg8[%c0_28, %c0_29] : memref<1x128xf32, #tpu.memory_space<vmem>>, vector<1x128xf32>
    %c0_30 = arith.constant 0 : index
    %c0_31 = arith.constant 0 : index
    %55 = vector.load %arg9[%c0_30, %c0_31] : memref<1x128xf32, #tpu.memory_space<vmem>>, vector<1x128xf32>
    %cst_32 = arith.constant dense<0.000000e+00> : vector<1xf32>
    %56 = vector.multi_reduction <add>, %53, %cst_32 [1] : vector<1x128xf32> to vector<1xf32>
    %57 = vector.shape_cast %56 : vector<1xf32> to vector<1x1xf32>
    %cst_33 = arith.constant 1.562500e-02 : f32
    %58 = vector.broadcast %cst_33 : f32 to vector<1x1xf32>
    %59 = arith.mulf %57, %58 : vector<1x1xf32>
    %60 = arith.mulf %53, %53 : vector<1x128xf32>
    %cst_34 = arith.constant dense<0.000000e+00> : vector<1xf32>
    %61 = vector.multi_reduction <add>, %60, %cst_34 [1] : vector<1x128xf32> to vector<1xf32>
    %62 = vector.shape_cast %61 : vector<1xf32> to vector<1x1xf32>
    %cst_35 = arith.constant 1.562500e-02 : f32
    %63 = vector.broadcast %cst_35 : f32 to vector<1x1xf32>
    %64 = arith.mulf %62, %63 : vector<1x1xf32>
    %65 = arith.mulf %59, %59 : vector<1x1xf32>
    %66 = arith.subf %64, %65 : vector<1x1xf32>
    %cst_36 = arith.constant 0.000000e+00 : f32
    %67 = vector.broadcast %cst_36 : f32 to vector<1x1xf32>
    %68 = arith.maximumf %66, %67 : vector<1x1xf32>
    %69 = vector.broadcast %59 : vector<1x1xf32> to vector<1x128xf32>
    %70 = arith.subf %53, %69 : vector<1x128xf32>
    %cst_37 = arith.constant 9.99999974E-6 : f32
    %71 = vector.broadcast %cst_37 : f32 to vector<1x1xf32>
    %72 = arith.addf %68, %71 : vector<1x1xf32>
    %73 = math.rsqrt %72 : vector<1x1xf32>
    %74 = vector.broadcast %73 : vector<1x1xf32> to vector<1x128xf32>
    %75 = arith.mulf %70, %74 : vector<1x128xf32>
    %76 = arith.mulf %75, %54 : vector<1x128xf32>
    %77 = arith.addf %76, %55 : vector<1x128xf32>
    %78 = arith.truncf %77 : vector<1x128xf32> to vector<1x128xbf16>
    %c0_38 = arith.constant 0 : index
    %c0_39 = arith.constant 0 : index
    %79 = vector.load %arg10[%c0_38, %c0_39] : memref<128x128xbf16, #tpu.memory_space<vmem>>, vector<128x128xbf16>
    %cst_40 = arith.constant dense<0.000000e+00> : vector<1x128xf32>
    %80 = tpu.matmul %78, %79, %cst_40 {dimension_numbers = #tpu.dot_dimension_numbers<[1], [0], [0], [1], [0, 0, 1, 1], [], []>} : vector<1x128xbf16>, vector<128x128xbf16>, vector<1x128xf32> -> vector<1x128xf32>
    %c0_41 = arith.constant 0 : index
    %c0_42 = arith.constant 0 : index
    %81 = vector.load %arg11[%c0_41, %c0_42] : memref<1x128xf32, #tpu.memory_space<vmem>>, vector<1x128xf32>
    %82 = arith.addf %80, %81 : vector<1x128xf32>
    %cst_43 = arith.constant 1.000000e+00 : f32
    %83 = vector.broadcast %cst_43 : f32 to vector<1x128xf32>
    %84 = arith.mulf %82, %83 : vector<1x128xf32>
    %85 = vector.shape_cast %84 : vector<1x128xf32> to vector<1x1x128xf32>
    %c0_44 = arith.constant 0 : index
    %c0_45 = arith.constant 0 : index
    %c0_46 = arith.constant 0 : index
    %86 = vector.load %arg12[%c0_44, %c0_45, %c0_46] : memref<1x1x128xf32, #tpu.memory_space<vmem>>, vector<1x1x128xf32>
    tpu.vector_store %arg12[%c0_44, %c0_45, %c0_46], %85 {strides = array<i32>} : memref<1x1x128xf32, #tpu.memory_space<vmem>>, vector<1x1x128xf32>,
    return
  }
  func.func @transform_0(%arg0: i32) -> (i32, i32, i32) {
    %c0_i32 = arith.constant 0 : i32
    %c0_i32_0 = arith.constant 0 : i32
    %c0_i32_1 = arith.constant 0 : i32
    return %arg0, %c0_i32, %c0_i32_0 : i32, i32, i32
  }
  func.func @transform_1(%arg0: i32) -> (i32, i32) {
    %c0_i32 = arith.constant 0 : i32
    %c0_i32_0 = arith.constant 0 : i32
    %c0_i32_1 = arith.constant 0 : i32
    return %c0_i32, %c0_i32_0 : i32, i32
  }
  func.func @transform_2(%arg0: i32) -> (i32, i32) {
    %c0_i32 = arith.constant 0 : i32
    %c0_i32_0 = arith.constant 0 : i32
    %c0_i32_1 = arith.constant 0 : i32
    return %c0_i32, %c0_i32_0 : i32, i32
  }
  func.func @transform_3(%arg0: i32) -> (i32, i32) {
    %c0_i32 = arith.constant 0 : i32
    %c0_i32_0 = arith.constant 0 : i32
    %c0_i32_1 = arith.constant 0 : i32
    return %c0_i32, %c0_i32_0 : i32, i32
  }
  func.func @transform_4(%arg0: i32) -> (i32, i32) {
    %c0_i32 = arith.constant 0 : i32
    %c0_i32_0 = arith.constant 0 : i32
    %c0_i32_1 = arith.constant 0 : i32
    return %c0_i32, %c0_i32_0 : i32, i32
  }
  func.func @transform_5(%arg0: i32) -> (i32, i32) {
    %c0_i32 = arith.constant 0 : i32
    %c0_i32_0 = arith.constant 0 : i32
    %c0_i32_1 = arith.constant 0 : i32
    return %c0_i32, %c0_i32_0 : i32, i32
  }
  func.func @transform_6(%arg0: i32) -> (i32, i32) {
    %c0_i32 = arith.constant 0 : i32
    %c0_i32_0 = arith.constant 0 : i32
    %c0_i32_1 = arith.constant 0 : i32
    return %c0_i32, %c0_i32_0 : i32, i32
  }
  func.func @transform_7(%arg0: i32) -> (i32, i32) {
    %c0_i32 = arith.constant 0 : i32
    %c0_i32_0 = arith.constant 0 : i32
    %c0_i32_1 = arith.constant 0 : i32
    return %c0_i32, %c0_i32_0 : i32, i32
  }
  func.func @transform_8(%arg0: i32) -> (i32, i32) {
    %c0_i32 = arith.constant 0 : i32
    %c0_i32_0 = arith.constant 0 : i32
    %c0_i32_1 = arith.constant 0 : i32
    return %c0_i32, %c0_i32_0 : i32, i32
  }
  func.func @transform_9(%arg0: i32) -> (i32, i32) {
    %c0_i32 = arith.constant 0 : i32
    %c0_i32_0 = arith.constant 0 : i32
    %c0_i32_1 = arith.constant 0 : i32
    return %c0_i32, %c0_i32_0 : i32, i32
  }
  func.func @transform_10(%arg0: i32) -> (i32, i32) {
    %c0_i32 = arith.constant 0 : i32
    %c0_i32_0 = arith.constant 0 : i32
    %c0_i32_1 = arith.constant 0 : i32
    return %c0_i32, %c0_i32_0 : i32, i32
  }
  func.func @transform_11(%arg0: i32) -> (i32, i32, i32) {
    %c0_i32 = arith.constant 0 : i32
    %c0_i32_0 = arith.constant 0 : i32
    %c0_i32_1 = arith.constant 0 : i32
    return %arg0, %c0_i32, %c0_i32_0 : i32, i32, i32
  }
}

</mosaic_0001>

<llo_original>
// kernel: simba_forward.5
$region0: #{simba_forward.5}
  #allocation0 [shape = 'u32[]', space=smem, size = 0x4, offset = 0x4, fixed_abs, tag = 'smem constant byte address 0x4 - core index']
  #allocation1 [shape = 'u32[144,128]{1,0:T(1,128)}', space=vmem, size = 0x12000, scoped, tag = 'internal scratch']
  %s0 = inlined_call_operand.vmem [shape: f32[16,128], index: 0, kind: input, shape index: {}]
  %s1 = inlined_call_operand.vmem [shape: bf16[128,128], index: 1, kind: input, shape index: {}]
  %s2 = inlined_call_operand.vmem [shape: f32[1,128], index: 2, kind: input, shape index: {}]
  %s3 = inlined_call_operand.vmem [shape: f32[1,128], index: 3, kind: input, shape index: {}]
  %s4 = inlined_call_operand.vmem [shape: f32[1,128], index: 4, kind: input, shape index: {}]
  %s5 = inlined_call_operand.hbm [shape: bf16[128,128], index: 5, kind: input, shape index: {}]
  %s6 = inlined_call_operand.vmem [shape: f32[1,128], index: 6, kind: input, shape index: {}]
  %s7 = inlined_call_operand.hbm [shape: bf16[128,128], index: 7, kind: input, shape index: {}]
  %s8 = inlined_call_operand.vmem [shape: f32[1,128], index: 8, kind: input, shape index: {}]
  %s9 = inlined_call_operand.vmem [shape: f32[1,128], index: 9, kind: input, shape index: {}]
  %s10 = inlined_call_operand.vmem [shape: f32[1,128], index: 10, kind: input, shape index: {}]
  %s11 = inlined_call_operand.hbm [shape: bf16[128,128], index: 11, kind: input, shape index: {}]
  %s12 = inlined_call_operand.vmem [shape: f32[1,128], index: 12, kind: input, shape index: {}]
  %s13 = inlined_call_operand.hbm [shape: bf16[128,128], index: 13, kind: input, shape index: {}]
  %s14 = inlined_call_operand.vmem [shape: f32[1,128], index: 14, kind: input, shape index: {}]
  %s15 = inlined_call_operand.vmem [shape: bf16[16,128], index: 15, kind: output, shape index: {}]
  %s16 = sld [smem:[#allocation0]]
  $region109: #{simba_forward.5} parent=0
    _
  %s18 = ssub.s32 1, %s16
  %s19 = scalar_select 0, %s18, %s16
  $region1: #{simba_forward.5} parent=0
    #allocation2 [shape = 'u8[32768]{0}', space=vmem, size = 0x8000, scoped, tag = 'input window, operand 5, single buffered']
    #allocation3 [shape = 's32[2]{0}', space=sflag, size = 0x8, scoped, tag = 'scoped memory for simba_forward.5']
    #allocation4 [shape = 'u8[32768]{0}', space=vmem, size = 0x8000, scoped, tag = 'input window, operand 7, single buffered']
    #allocation5 [shape = 's32[1]{0}', space=sflag, size = 0x4, scoped, tag = 'scoped memory for simba_forward.5']
    #allocation6 [shape = 'u8[32768]{0}', space=vmem, size = 0x8000, scoped, tag = 'input window, operand 11, single buffered']
    #allocation7 [shape = 'u8[32768]{0}', space=vmem, size = 0x8000, scoped, tag = 'input window, operand 13, single buffered']
    #allocation8 [shape = 's32[1]{0}', space=sflag, size = 0x4, scoped, tag = 'scoped memory for simba_forward.5']
    %20 = vsyncpa [#allocation3], 0
    %21 = vsyncpa [#allocation5], 0
    %22 = vsyncpa [#allocation8], 0
    loop: start=0, step=1, limit=4
    $region2: #{simba_forward.5} parent=1 // loop_pre_header
      _
    $region3: #{simba_forward.5} parent=1 // loop_header
      %s24 = sphi 0, %s28
      %p25 = scmp.ge.s32.totalorder %s24, 4
      %s34 = sphi 0, %s36
      %s37 = sphi 0, %s34
      %s38 = sphi 0, %s37
      %s54 = sphi 0, %s38
      %s58 = sphi 0, %s58
      %s60 = sphi 0, %s58
      %s61 = sphi 0, %s60
      %s75 = sphi 0, %s61
      %s79 = sphi 0, %s79
      %s81 = sphi 0, %s79
      %s82 = sphi 0, %s81
      %s96 = sphi 0, %s82
      %s100 = sphi 0, %s100
      %s102 = sphi 0, %s100
      %s103 = sphi 0, %s102
      %s117 = sphi 0, %s103
      %s121 = sphi 0, %s121
      %s123 = sphi 0, %s121
      %s124 = sphi 0, %s123
      %s138 = sphi 0, %s124
      %s142 = sphi 0, %s142
      %s144 = sphi 0, %s142
      %s145 = sphi 0, %s144
      %s159 = sphi 0, %s145
      %s163 = sphi 0, %s163
      %s165 = sphi 0, %s163
      %s166 = sphi 0, %s165
      %s180 = sphi 0, %s166
      %s184 = sphi 0, %s184
      %s186 = sphi 0, %s184
      %s187 = sphi 0, %s186
      %s201 = sphi 0, %s187
      %s205 = sphi 0, %s205
      %s207 = sphi 0, %s205
      %s208 = sphi 0, %s207
      %s222 = sphi 0, %s208
      %s226 = sphi 0, %s226
      %s228 = sphi 0, %s226
      %s229 = sphi 0, %s228
      %s243 = sphi 0, %s229
      %s247 = sphi 0, %s247
      %s249 = sphi 0, %s247
      %s250 = sphi 0, %s249
      %s264 = sphi 0, %s250
      %s268 = sphi 0, %s268
      %s270 = sphi 0, %s268
      %s271 = sphi 0, %s270
      %s285 = sphi 0, %s271
      %s289 = sphi 0, %s289
      %s291 = sphi 0, %s289
      %s292 = sphi 0, %s291
      %s306 = sphi 0, %s292
      %s310 = sphi 0, %s310
      %s312 = sphi 0, %s310
      %s313 = sphi 0, %s312
      %s327 = sphi 0, %s313
      %s331 = sphi 0, %s331
      %s333 = sphi 0, %s331
      %s334 = sphi 0, %s333
      %s348 = sphi 0, %s334
      %s354 = sphi 0, %s356
      %s357 = sphi 0, %s354
      %s358 = sphi 0, %s357
      %s374 = sphi 0, %s358
    $region4: #{simba_forward.5} parent=1 // loop_header_branch
      %27 = sbr.rel (%p25) target = $region8
    $region5: #{simba_forward.5} parent=1 // loop_body
      %s29 = ssub.s32 %s24, 1
      %s30 = ssub.s32 %s24, 2
      %s31 = sadd.s32 %s24, 1
      %s32 = ssub.s32 %s24, %s31
      %p33 = scmp.eq.s32.totalorder %s32, 0
      %s35 = sadd.s32 %s34, 1
      %s36 = scalar_select %p33, %s34, %s35
      %p39 = pneg %p33
      %p40 = scmp.eq.s32.totalorder %s24, 1
      %p41 = por %p39, %p40
      %p42 = scmp.ne.s32.totalorder %s34, %s37
      %p43 = scmp.eq.s32.totalorder %s24, 0
      %p44 = por %p42, %p43
      %p45 = scmp.ne.s32.totalorder %s34, %s37
      %p46 = scmp.eq.s32.totalorder %s29, 1
      %p47 = por %p45, %p46
      %p48 = scmp.ne.s32.totalorder %s37, %s38
      %p49 = scmp.eq.s32.totalorder %s29, 0
      %p50 = por %p48, %p49
      %p51 = scmp.ne.s32.totalorder %s37, %s38
      %p52 = scmp.eq.s32.totalorder %s30, 1
      %p53 = por %p51, %p52
      %p55 = scmp.ne.s32.totalorder %s38, %s54
      %p56 = scmp.eq.s32.totalorder %s30, 0
      %p57 = por %p55, %p56
      %s59 = sadd.s32 %s58, 1
      %p62 = scmp.eq.s32.totalorder %s24, 1
      %p63 = scmp.ne.s32.totalorder %s58, %s60
      %p64 = scmp.eq.s32.totalorder %s24, 0
      %p65 = por %p63, %p64
      %p66 = scmp.ne.s32.totalorder %s58, %s60
      %p67 = scmp.eq.s32.totalorder %s29, 1
      %p68 = por %p66, %p67
      %p69 = scmp.ne.s32.totalorder %s60, %s61
      %p70 = scmp.eq.s32.totalorder %s29, 0
      %p71 = por %p69, %p70
      %p72 = scmp.ne.s32.totalorder %s60, %s61
      %p73 = scmp.eq.s32.totalorder %s30, 1
      %p74 = por %p72, %p73
      %p76 = scmp.ne.s32.totalorder %s61, %s75
      %p77 = scmp.eq.s32.totalorder %s30, 0
      %p78 = por %p76, %p77
      %s80 = sadd.s32 %s79, 1
      %p83 = scmp.eq.s32.totalorder %s24, 1
      %p84 = scmp.ne.s32.totalorder %s79, %s81
      %p85 = scmp.eq.s32.totalorder %s24, 0
      %p86 = por %p84, %p85
      %p87 = scmp.ne.s32.totalorder %s79, %s81
      %p88 = scmp.eq.s32.totalorder %s29, 1
      %p89 = por %p87, %p88
      %p90 = scmp.ne.s32.totalorder %s81, %s82
      %p91 = scmp.eq.s32.totalorder %s29, 0
      %p92 = por %p90, %p91
      %p93 = scmp.ne.s32.totalorder %s81, %s82
      %p94 = scmp.eq.s32.totalorder %s30, 1
      %p95 = por %p93, %p94
      %p97 = scmp.ne.s32.totalorder %s82, %s96
      %p98 = scmp.eq.s32.totalorder %s30, 0
      %p99 = por %p97, %p98
      %s101 = sadd.s32 %s100, 1
      %p104 = scmp.eq.s32.totalorder %s24, 1
      %p105 = scmp.ne.s32.totalorder %s100, %s102
      %p106 = scmp.eq.s32.totalorder %s24, 0
      %p107 = por %p105, %p106
      %p108 = scmp.ne.s32.totalorder %s100, %s102
      %p109 = scmp.eq.s32.totalorder %s29, 1
      %p110 = por %p108, %p109
      %p111 = scmp.ne.s32.totalorder %s102, %s103
      %p112 = scmp.eq.s32.totalorder %s29, 0
      %p113 = por %p111, %p112
      %p114 = scmp.ne.s32.totalorder %s102, %s103
      %p115 = scmp.eq.s32.totalorder %s30, 1
      %p116 = por %p114, %p115
      %p118 = scmp.ne.s32.totalorder %s103, %s117
      %p119 = scmp.eq.s32.totalorder %s30, 0
      %p120 = por %p118, %p119
      %s122 = sadd.s32 %s121, 1
      %p125 = scmp.eq.s32.totalorder %s24, 1
      %p126 = scmp.ne.s32.totalorder %s121, %s123
      %p127 = scmp.eq.s32.totalorder %s24, 0
      %p128 = por %p126, %p127
      %p129 = scmp.ne.s32.totalorder %s121, %s123
      %p130 = scmp.eq.s32.totalorder %s29, 1
      %p131 = por %p129, %p130
      %p132 = scmp.ne.s32.totalorder %s123, %s124
      %p133 = scmp.eq.s32.totalorder %s29, 0
      %p134 = por %p132, %p133
      %p135 = scmp.ne.s32.totalorder %s123, %s124
      %p136 = scmp.eq.s32.totalorder %s30, 1
      %p137 = por %p135, %p136
      %p139 = scmp.ne.s32.totalorder %s124, %s138
      %p140 = scmp.eq.s32.totalorder %s30, 0
      %p141 = por %p139, %p140
      %s143 = sadd.s32 %s142, 1
      %p146 = scmp.eq.s32.totalorder %s24, 1
      %p147 = scmp.ne.s32.totalorder %s142, %s144
      %p148 = scmp.eq.s32.totalorder %s24, 0
      %p149 = por %p147, %p148
      %p150 = scmp.ne.s32.totalorder %s142, %s144
      %p151 = scmp.eq.s32.totalorder %s29, 1
      %p152 = por %p150, %p151
      %p153 = scmp.ne.s32.totalorder %s144, %s145
      %p154 = scmp.eq.s32.totalorder %s29, 0
      %p155 = por %p153, %p154
      %p156 = scmp.ne.s32.totalorder %s144, %s145
      %p157 = scmp.eq.s32.totalorder %s30, 1
      %p158 = por %p156, %p157
      %p160 = scmp.ne.s32.totalorder %s145, %s159
      %p161 = scmp.eq.s32.totalorder %s30, 0
      %p162 = por %p160, %p161
      %s164 = sadd.s32 %s163, 1
      %p167 = scmp.eq.s32.totalorder %s24, 1
      %p168 = scmp.ne.s32.totalorder %s163, %s165
      %p169 = scmp.eq.s32.totalorder %s24, 0
      %p170 = por %p168, %p169
      %p171 = scmp.ne.s32.totalorder %s163, %s165
      %p172 = scmp.eq.s32.totalorder %s29, 1
      %p173 = por %p171, %p172
      %p174 = scmp.ne.s32.totalorder %s165, %s166
      %p175 = scmp.eq.s32.totalorder %s29, 0
      %p176 = por %p174, %p175
      %p177 = scmp.ne.s32.totalorder %s165, %s166
      %p178 = scmp.eq.s32.totalorder %s30, 1
      %p179 = por %p177, %p178
      %p181 = scmp.ne.s32.totalorder %s166, %s180
      %p182 = scmp.eq.s32.totalorder %s30, 0
      %p183 = por %p181, %p182
      %s185 = sadd.s32 %s184, 1
      %p188 = scmp.eq.s32.totalorder %s24, 1
      %p189 = scmp.ne.s32.totalorder %s184, %s186
      %p190 = scmp.eq.s32.totalorder %s24, 0
      %p191 = por %p189, %p190
      %p192 = scmp.ne.s32.totalorder %s184, %s186
      %p193 = scmp.eq.s32.totalorder %s29, 1
      %p194 = por %p192, %p193
      %p195 = scmp.ne.s32.totalorder %s186, %s187
      %p196 = scmp.eq.s32.totalorder %s29, 0
      %p197 = por %p195, %p196
      %p198 = scmp.ne.s32.totalorder %s186, %s187
      %p199 = scmp.eq.s32.totalorder %s30, 1
      %p200 = por %p198, %p199
      %p202 = scmp.ne.s32.totalorder %s187, %s201
      %p203 = scmp.eq.s32.totalorder %s30, 0
      %p204 = por %p202, %p203
      %s206 = sadd.s32 %s205, 1
      %p209 = scmp.eq.s32.totalorder %s24, 1
      %p210 = scmp.ne.s32.totalorder %s205, %s207
      %p211 = scmp.eq.s32.totalorder %s24, 0
      %p212 = por %p210, %p211
      %p213 = scmp.ne.s32.totalorder %s205, %s207
      %p214 = scmp.eq.s32.totalorder %s29, 1
      %p215 = por %p213, %p214
      %p216 = scmp.ne.s32.totalorder %s207, %s208
      %p217 = scmp.eq.s32.totalorder %s29, 0
      %p218 = por %p216, %p217
      %p219 = scmp.ne.s32.totalorder %s207, %s208
      %p220 = scmp.eq.s32.totalorder %s30, 1
      %p221 = por %p219, %p220
      %p223 = scmp.ne.s32.totalorder %s208, %s222
      %p224 = scmp.eq.s32.totalorder %s30, 0
      %p225 = por %p223, %p224
      %s227 = sadd.s32 %s226, 1
      %p230 = scmp.eq.s32.totalorder %s24, 1
      %p231 = scmp.ne.s32.totalorder %s226, %s228
      %p232 = scmp.eq.s32.totalorder %s24, 0
      %p233 = por %p231, %p232
      %p234 = scmp.ne.s32.totalorder %s226, %s228
      %p235 = scmp.eq.s32.totalorder %s29, 1
      %p236 = por %p234, %p235
      %p237 = scmp.ne.s32.totalorder %s228, %s229
      %p238 = scmp.eq.s32.totalorder %s29, 0
      %p239 = por %p237, %p238
      %p240 = scmp.ne.s32.totalorder %s228, %s229
      %p241 = scmp.eq.s32.totalorder %s30, 1
      %p242 = por %p240, %p241
      %p244 = scmp.ne.s32.totalorder %s229, %s243
      %p245 = scmp.eq.s32.totalorder %s30, 0
      %p246 = por %p244, %p245
      %s248 = sadd.s32 %s247, 1
      %p251 = scmp.eq.s32.totalorder %s24, 1
      %p252 = scmp.ne.s32.totalorder %s247, %s249
      %p253 = scmp.eq.s32.totalorder %s24, 0
      %p254 = por %p252, %p253
      %p255 = scmp.ne.s32.totalorder %s247, %s249
      %p256 = scmp.eq.s32.totalorder %s29, 1
      %p257 = por %p255, %p256
      %p258 = scmp.ne.s32.totalorder %s249, %s250
      %p259 = scmp.eq.s32.totalorder %s29, 0
      %p260 = por %p258, %p259
      %p261 = scmp.ne.s32.totalorder %s249, %s250
      %p262 = scmp.eq.s32.totalorder %s30, 1
      %p263 = por %p261, %p262
      %p265 = scmp.ne.s32.totalorder %s250, %s264
      %p266 = scmp.eq.s32.totalorder %s30, 0
      %p267 = por %p265, %p266
      %s269 = sadd.s32 %s268, 1
      %p272 = scmp.eq.s32.totalorder %s24, 1
      %p273 = scmp.ne.s32.totalorder %s268, %s270
      %p274 = scmp.eq.s32.totalorder %s24, 0
      %p275 = por %p273, %p274
      %p276 = scmp.ne.s32.totalorder %s268, %s270
      %p277 = scmp.eq.s32.totalorder %s29, 1
      %p278 = por %p276, %p277
      %p279 = scmp.ne.s32.totalorder %s270, %s271
      %p280 = scmp.eq.s32.totalorder %s29, 0
      %p281 = por %p279, %p280
      %p282 = scmp.ne.s32.totalorder %s270, %s271
      %p283 = scmp.eq.s32.totalorder %s30, 1
      %p284 = por %p282, %p283
      %p286 = scmp.ne.s32.totalorder %s271, %s285
      %p287 = scmp.eq.s32.totalorder %s30, 0
      %p288 = por %p286, %p287
      %s290 = sadd.s32 %s289, 1
      %p293 = scmp.eq.s32.totalorder %s24, 1
      %p294 = scmp.ne.s32.totalorder %s289, %s291
      %p295 = scmp.eq.s32.totalorder %s24, 0
      %p296 = por %p294, %p295
      %p297 = scmp.ne.s32.totalorder %s289, %s291
      %p298 = scmp.eq.s32.totalorder %s29, 1
      %p299 = por %p297, %p298
      %p300 = scmp.ne.s32.totalorder %s291, %s292
      %p301 = scmp.eq.s32.totalorder %s29, 0
      %p302 = por %p300, %p301
      %p303 = scmp.ne.s32.totalorder %s291, %s292
      %p304 = scmp.eq.s32.totalorder %s30, 1
      %p305 = por %p303, %p304
      %p307 = scmp.ne.s32.totalorder %s292, %s306
      %p308 = scmp.eq.s32.totalorder %s30, 0
      %p309 = por %p307, %p308
      %s311 = sadd.s32 %s310, 1
      %p314 = scmp.eq.s32.totalorder %s24, 1
      %p315 = scmp.ne.s32.totalorder %s310, %s312
      %p316 = scmp.eq.s32.totalorder %s24, 0
      %p317 = por %p315, %p316
      %p318 = scmp.ne.s32.totalorder %s310, %s312
      %p319 = scmp.eq.s32.totalorder %s29, 1
      %p320 = por %p318, %p319
      %p321 = scmp.ne.s32.totalorder %s312, %s313
      %p322 = scmp.eq.s32.totalorder %s29, 0
      %p323 = por %p321, %p322
      %p324 = scmp.ne.s32.totalorder %s312, %s313
      %p325 = scmp.eq.s32.totalorder %s30, 1
      %p326 = por %p324, %p325
      %p328 = scmp.ne.s32.totalorder %s313, %s327
      %p329 = scmp.eq.s32.totalorder %s30, 0
      %p330 = por %p328, %p329
      %s332 = sadd.s32 %s331, 1
      %p335 = scmp.eq.s32.totalorder %s24, 1
      %p336 = scmp.ne.s32.totalorder %s331, %s333
      %p337 = scmp.eq.s32.totalorder %s24, 0
      %p338 = por %p336, %p337
      %p339 = scmp.ne.s32.totalorder %s331, %s333
      %p340 = scmp.eq.s32.totalorder %s29, 1
      %p341 = por %p339, %p340
      %p342 = scmp.ne.s32.totalorder %s333, %s334
      %p343 = scmp.eq.s32.totalorder %s29, 0
      %p344 = por %p342, %p343
      %p345 = scmp.ne.s32.totalorder %s333, %s334
      %p346 = scmp.eq.s32.totalorder %s30, 1
      %p347 = por %p345, %p346
      %p349 = scmp.ne.s32.totalorder %s334, %s348
      %p350 = scmp.eq.s32.totalorder %s30, 0
      %p351 = por %p349, %p350
      %s352 = ssub.s32 %s24, %s31
      %p353 = scmp.eq.s32.totalorder %s352, 0
      %s355 = sadd.s32 %s354, 1
      %s356 = scalar_select %p353, %s354, %s355
      %p359 = pneg %p353
      %p360 = scmp.eq.s32.totalorder %s24, 1
      %p361 = por %p359, %p360
      %p362 = scmp.ne.s32.totalorder %s354, %s357
      %p363 = scmp.eq.s32.totalorder %s24, 0
      %p364 = por %p362, %p363
      %p365 = scmp.ne.s32.totalorder %s354, %s357
      %p366 = scmp.eq.s32.totalorder %s29, 1
      %p367 = por %p365, %p366
      %p368 = scmp.ne.s32.totalorder %s357, %s358
      %p369 = scmp.eq.s32.totalorder %s29, 0
      %p370 = por %p368, %p369
      %p371 = scmp.ne.s32.totalorder %s357, %s358
      %p372 = scmp.eq.s32.totalorder %s30, 1
      %p373 = por %p371, %p372
      %p375 = scmp.ne.s32.totalorder %s358, %s374
      %p376 = scmp.eq.s32.totalorder %s30, 0
      %p377 = por %p375, %p376
      %p378 = scmp.le.s32.totalorder 1, %s24
      %p379 = scmp.lt.s32.totalorder %s24, 3
      %p380 = pnand %p378, %p379
      %p381 = pneg %p380
      // Predicated region
      $region9: #{simba_forward.5} parent=5 // pred_check
        _
      $region10: #{simba_forward.5} parent=5 // pred_check_branch
        %383 = sbr.rel (%p380) target = $region12
      $region11: #{simba_forward.5} parent=5 // pred_region
        %s384 = ssub.s32 %s24, 1
        // Predicated region
        $region13: #{simba_forward.5} parent=11 // pred_check
          %p385 = pneg %p71
        $region14: #{simba_forward.5} parent=11 // pred_check_branch
          %387 = sbr.rel (%p385) target = $region16
        $region15: #{simba_forward.5} parent=11 // pred_region
          _
        $region16: #{simba_forward.5} parent=11 // pred_fallthru
          _
        // Predicated region
        $region17: #{simba_forward.5} parent=11 // pred_check
          %p388 = pneg %p92
        $region18: #{simba_forward.5} parent=11 // pred_check_branch
          %390 = sbr.rel (%p388) target = $region20
        $region19: #{simba_forward.5} parent=11 // pred_region
          _
        $region20: #{simba_forward.5} parent=11 // pred_fallthru
          _
        // Predicated region
        $region21: #{simba_forward.5} parent=11 // pred_check
          %p391 = pneg %p113
        $region22: #{simba_forward.5} parent=11 // pred_check_branch
          %393 = sbr.rel (%p391) target = $region24
        $region23: #{simba_forward.5} parent=11 // pred_region
          _
        $region24: #{simba_forward.5} parent=11 // pred_fallthru
          _
        // Predicated region
        $region25: #{simba_forward.5} parent=11 // pred_check
          %p394 = pneg %p134
        $region26: #{simba_forward.5} parent=11 // pred_check_branch
          %396 = sbr.rel (%p394) target = $region28
        $region27: #{simba_forward.5} parent=11 // pred_region
          _
        $region28: #{simba_forward.5} parent=11 // pred_fallthru
          _
        // Predicated region
        $region29: #{simba_forward.5} parent=11 // pred_check
          %p397 = pneg %p155
        $region30: #{simba_forward.5} parent=11 // pred_check_branch
          %399 = sbr.rel (%p397) target = $region32
        $region31: #{simba_forward.5} parent=11 // pred_region
          %s401 = ssub.s32 1024, 1024
          %402 = vsyncadd [#allocation3], %s401
          %s403 = sshll.u32 [#allocation2], 4
          %s404 = int_to_ptr.vmem [resolvable:$true] %s403
          %409 = dma.hbm_to_vmem [thread:$0]  %s5, 1024, %s404, [#allocation3], 64, 64, 4
        $region32: #{simba_forward.5} parent=11 // pred_fallthru
          _
        // Predicated region
        $region33: #{simba_forward.5} parent=11 // pred_check
          %p410 = pneg %p176
        $region34: #{simba_forward.5} parent=11 // pred_check_branch
          %412 = sbr.rel (%p410) target = $region36
        $region35: #{simba_forward.5} parent=11 // pred_region
          _
        $region36: #{simba_forward.5} parent=11 // pred_fallthru
          _
        // Predicated region
        $region37: #{simba_forward.5} parent=11 // pred_check
          %p413 = pneg %p197
        $region38: #{simba_forward.5} parent=11 // pred_check_branch
          %415 = sbr.rel (%p413) target = $region40
        $region39: #{simba_forward.5} parent=11 // pred_region
          %s417 = ssub.s32 1024, 1024
          %418 = vsyncadd [#allocation5], %s417
          %s419 = sshll.u32 [#allocation4], 4
          %s420 = int_to_ptr.vmem [resolvable:$true] %s419
          %425 = dma.hbm_to_vmem [thread:$0]  %s7, 1024, %s420, [#allocation5], 64, 64, 4
        $region40: #{simba_forward.5} parent=11 // pred_fallthru
          _
        // Predicated region
        $region41: #{simba_forward.5} parent=11 // pred_check
          %p426 = pneg %p218
        $region42: #{simba_forward.5} parent=11 // pred_check_branch
          %428 = sbr.rel (%p426) target = $region44
        $region43: #{simba_forward.5} parent=11 // pred_region
          _
        $region44: #{simba_forward.5} parent=11 // pred_fallthru
          _
        // Predicated region
        $region45: #{simba_forward.5} parent=11 // pred_check
          %p429 = pneg %p239
        $region46: #{simba_forward.5} parent=11 // pred_check_branch
          %431 = sbr.rel (%p429) target = $region48
        $region47: #{simba_forward.5} parent=11 // pred_region
          _
        $region48: #{simba_forward.5} parent=11 // pred_fallthru
          _
        // Predicated region
        $region49: #{simba_forward.5} parent=11 // pred_check
          %p432 = pneg %p260
        $region50: #{simba_forward.5} parent=11 // pred_check_branch
          %434 = sbr.rel (%p432) target = $region52
        $region51: #{simba_forward.5} parent=11 // pred_region
          _
        $region52: #{simba_forward.5} parent=11 // pred_fallthru
          _
        // Predicated region
        $region53: #{simba_forward.5} parent=11 // pred_check
          %p435 = pneg %p281
        $region54: #{simba_forward.5} parent=11 // pred_check_branch
          %437 = sbr.rel (%p435) target = $region56
        $region55: #{simba_forward.5} parent=11 // pred_region
          %s439 = ssub.s32 1024, 1024
          %440 = vsyncadd [#allocation5], %s439
          %s441 = sshll.u32 [#allocation6], 4
          %s442 = int_to_ptr.vmem [resolvable:$true] %s441
          %447 = dma.hbm_to_vmem [thread:$0]  %s11, 1024, %s442, [#allocation5], 64, 64, 4
        $region56: #{simba_forward.5} parent=11 // pred_fallthru
          _
        // Predicated region
        $region57: #{simba_forward.5} parent=11 // pred_check
          %p448 = pneg %p302
        $region58: #{simba_forward.5} parent=11 // pred_check_branch
          %450 = sbr.rel (%p448) target = $region60
        $region59: #{simba_forward.5} parent=11 // pred_region
          _
        $region60: #{simba_forward.5} parent=11 // pred_fallthru
          _
        // Predicated region
        $region61: #{simba_forward.5} parent=11 // pred_check
          %p451 = pneg %p323
        $region62: #{simba_forward.5} parent=11 // pred_check_branch
          %453 = sbr.rel (%p451) target = $region64
        $region63: #{simba_forward.5} parent=11 // pred_region
          %s455 = ssub.s32 1024, 1024
          %456 = vsyncadd [#allocation8], %s455
          %s457 = sshll.u32 [#allocation7], 4
          %s458 = int_to_ptr.vmem [resolvable:$true] %s457
          %463 = dma.hbm_to_vmem [thread:$0]  %s13, 1024, %s458, [#allocation8], 64, 64, 4
        $region64: #{simba_forward.5} parent=11 // pred_fallthru
          _
        // Predicated region
        $region65: #{simba_forward.5} parent=11 // pred_check
          %p464 = pneg %p344
        $region66: #{simba_forward.5} parent=11 // pred_check_branch
          %466 = sbr.rel (%p464) target = $region68
        $region67: #{simba_forward.5} parent=11 // pred_region
          _
        $region68: #{simba_forward.5} parent=11 // pred_fallthru
          _
      $region12: #{simba_forward.5} parent=5 // pred_fallthru
        _
      %p467 = scmp.lt.s32.totalorder %s24, 2
      // Predicated region
      $region69: #{simba_forward.5} parent=5 // pred_check
        %p468 = pneg %p467
      $region70: #{simba_forward.5} parent=5 // pred_check_branch
        %470 = sbr.rel (%p468) target = $region72
      $region71: #{simba_forward.5} parent=5 // pred_region
        // Predicated region
        $region73: #{simba_forward.5} parent=71 // pred_check
          %p471 = pneg %p44
        $region74: #{simba_forward.5} parent=71 // pred_check_branch
          %473 = sbr.rel (%p471) target = $region76
        $region75: #{simba_forward.5} parent=71 // pred_region
          %p474 = scmp.lt.s32.totalorder %s24, 1
          %s475 = scalar_select %p474, %s24, 1
          %s476 = smul.addr %s475, 8
          %s477 = scalar_lea.vmem %s0, %s476
        $region76: #{simba_forward.5} parent=71 // pred_fallthru
          _
      $region72: #{simba_forward.5} parent=5 // pred_fallthru
        _
      %p478 = scmp.le.s32.totalorder 1, %s24
      %p479 = scmp.lt.s32.totalorder %s24, 3
      %p480 = pnand %p478, %p479
      %p481 = pneg %p480
      // Predicated region
      $region77: #{simba_forward.5} parent=5 // pred_check
        _
      $region78: #{simba_forward.5} parent=5 // pred_check_branch
        %483 = sbr.rel (%p480) target = $region80
      $region79: #{simba_forward.5} parent=5 // pred_region
        %s484 = ssub.s32 %s24, 1
        // Predicated region
        $region81: #{simba_forward.5} parent=79 // pred_check
          %p485 = pneg %p155
        $region82: #{simba_forward.5} parent=79 // pred_check_branch
          %487 = sbr.rel (%p485) target = $region84
        $region83: #{simba_forward.5} parent=79 // pred_region
          %488 = dma.done [#allocation3], 1024
        $region84: #{simba_forward.5} parent=79 // pred_fallthru
          _
        // Predicated region
        $region85: #{simba_forward.5} parent=79 // pred_check
          %p489 = pneg %p197
        $region86: #{simba_forward.5} parent=79 // pred_check_branch
          %491 = sbr.rel (%p489) target = $region88
        $region87: #{simba_forward.5} parent=79 // pred_region
          %492 = dma.done [#allocation5], 1024
        $region88: #{simba_forward.5} parent=79 // pred_fallthru
          _
        // Predicated region
        $region89: #{simba_forward.5} parent=79 // pred_check
          %p493 = pneg %p281
        $region90: #{simba_forward.5} parent=79 // pred_check_branch
          %495 = sbr.rel (%p493) target = $region92
        $region91: #{simba_forward.5} parent=79 // pred_region
          %496 = dma.done [#allocation5], 1024
        $region92: #{simba_forward.5} parent=79 // pred_fallthru
          _
        // Predicated region
        $region93: #{simba_forward.5} parent=79 // pred_check
          %p497 = pneg %p323
        $region94: #{simba_forward.5} parent=79 // pred_check_branch
          %499 = sbr.rel (%p497) target = $region96
        $region95: #{simba_forward.5} parent=79 // pred_region
          %500 = dma.done [#allocation8], 1024
        $region96: #{simba_forward.5} parent=79 // pred_fallthru
          _
        %p501 = scmp.lt.s32.totalorder %s29, 1
        %s502 = scalar_select %p501, %s29, 1
        %s503 = smul.addr %s502, 8
        %s504 = scalar_lea.vmem %s0, %s503
        %p505 = pneg %p50
        %p506 = pneg %p47
        %p507 = pneg %p71
        %p508 = pneg %p68
        %p509 = pneg %p92
        %p510 = pneg %p89
        %p511 = pneg %p113
        %p512 = pneg %p110
        %p513 = pneg %p134
        %p514 = pneg %p131
        %p515 = pneg %p155
        %p516 = pneg %p152
        %p517 = pneg %p176
        %p518 = pneg %p173
        %p519 = pneg %p197
        %p520 = pneg %p194
        %p521 = pneg %p218
        %p522 = pneg %p215
        %p523 = pneg %p239
        %p524 = pneg %p236
        %p525 = pneg %p260
        %p526 = pneg %p257
        %p527 = pneg %p281
        %p528 = pneg %p278
        %p529 = pneg %p302
        %p530 = pneg %p299
        %p531 = pneg %p323
        %p532 = pneg %p320
        %p533 = pneg %p344
        %p534 = pneg %p341
        %p535 = pneg %p370
        %p536 = pneg %p367
        %p537 = scmp.lt.s32.totalorder %s29, 1
        %s538 = scalar_select %p537, %s29, 1
        %s539 = smul.addr %s538, 4
        %s540 = scalar_lea.vmem %s15, %s539
        %p541 = scmp.lt.s32.totalorder %s29, 1
        %s542 = scalar_select %p541, %s29, 1
        %s543 = smul.addr %s542, 8
        %s544 = scalar_lea.vmem %s0, %s543
        %p545 = scmp.lt.s32.totalorder %s29, 1
        %s546 = scalar_select %p545, %s29, 1
        %s547 = smul.addr %s546, 4
        %s548 = scalar_lea.vmem %s15, %s547
        %v554 = vld [vmem:[%s544] sm:$0xff]
        %v555 = vpack.c.bf16 %v554, %v554
        %v556 = vld [vmem:[%s1] sm:$0xf]
        %v557 = vld [vmem:[%s1 + $0x4] sm:$0xf]
        %v558 = vld [vmem:[%s1 + $0x8] sm:$0xf]
        %v559 = vld [vmem:[%s1 + $0xc] sm:$0xf]
        %v560 = vld [vmem:[%s1 + $0x10] sm:$0xf]
        %v561 = vld [vmem:[%s1 + $0x14] sm:$0xf]
        %v562 = vld [vmem:[%s1 + $0x18] sm:$0xf]
        %v563 = vld [vmem:[%s1 + $0x1c] sm:$0xf]
        %v564 = vld [vmem:[%s1 + $0x20] sm:$0xf]
        %v565 = vld [vmem:[%s1 + $0x24] sm:$0xf]
        %v566 = vld [vmem:[%s1 + $0x28] sm:$0xf]
        %v567 = vld [vmem:[%s1 + $0x2c] sm:$0xf]
        %v568 = vld [vmem:[%s1 + $0x30] sm:$0xf]
        %v569 = vld [vmem:[%s1 + $0x34] sm:$0xf]
        %v570 = vld [vmem:[%s1 + $0x38] sm:$0xf]
        %v571 = vld [vmem:[%s1 + $0x3c] sm:$0xf]
        %v572 = vld [vmem:[%s2] sm:$0x1]
        %v574 = vlaneseq
        %v575 = vshrl.u32 %v574, 7
        %v576 = vsub.s32 0, %v575
        %v577 = vrot.slane %v572, %v576
        %v595 = vunpack.c.l.b16 %v556
        %v596 = vunpack.c.l.b16 %v557
        %v597 = vunpack.c.l.b16 %v558
        %v598 = vunpack.c.l.b16 %v559
        %v599 = vunpack.c.l.b16 %v560
        %v600 = vunpack.c.l.b16 %v561
        %v601 = vunpack.c.l.b16 %v562
        %v602 = vunpack.c.l.b16 %v563
        %v603 = vunpack.c.l.b16 %v564
        %v604 = vunpack.c.l.b16 %v565
        %v605 = vunpack.c.l.b16 %v566
        %v606 = vunpack.c.l.b16 %v567
        %v607 = vunpack.c.l.b16 %v568
        %v608 = vunpack.c.l.b16 %v569
        %v609 = vunpack.c.l.b16 %v570
        %v610 = vunpack.c.l.b16 %v571
        %v611 = vpack.c.b16 %v596, %v595
        %v612 = vpack.c.b16 %v598, %v597
        %v613 = vpack.c.b16 %v600, %v599
        %v614 = vpack.c.b16 %v602, %v601
        %v615 = vpack.c.b16 %v604, %v603
        %v616 = vpack.c.b16 %v606, %v605
        %v617 = vpack.c.b16 %v608, %v607
        %v618 = vpack.c.b16 %v610, %v609
        %627 = vmatprep.subr.bf16.mxu0 0
        %628 = vmatpush1.bf16.msra.mxu0 %v611
        %629 = vmatprep.subr.bf16.mxu0 0
        %630 = vmatpush1.bf16.msra.mxu0 %v612
        %631 = vmatprep.subr.bf16.mxu0 0
        %632 = vmatpush1.bf16.msra.mxu0 %v613
        %633 = vmatprep.subr.bf16.mxu0 0
        %634 = vmatpush1.bf16.msra.mxu0 %v614
        %635 = vmatprep.subr.bf16.mxu0 0
        %636 = vmatpush1.bf16.msra.mxu0 %v615
        %637 = vmatprep.subr.bf16.mxu0 0
        %638 = vmatpush1.bf16.msra.mxu0 %v616
        %639 = vmatprep.subr.bf16.mxu0 0
        %640 = vmatpush1.bf16.msra.mxu0 %v617
        %641 = vmatprep.subr.bf16.mxu0 0
        %642 = vmatpush1.bf16.msra.mxu0 %v618
        %643 = vmatprep.subr.bf16.mxu0 0
        %644 = vmatpush1.bf16.msra.mxu0 0
        %645 = vmatprep.subr.bf16.mxu0 0
        %646 = vmatpush1.bf16.msra.mxu0 0
        %647 = vmatprep.subr.bf16.mxu0 0
        %648 = vmatpush1.bf16.msra.mxu0 0
        %649 = vmatprep.subr.bf16.mxu0 0
        %650 = vmatpush1.bf16.msra.mxu0 0
        %651 = vmatprep.subr.bf16.mxu0 0
        %652 = vmatpush1.bf16.msra.mxu0 0
        %653 = vmatprep.subr.bf16.mxu0 0
        %654 = vmatpush1.bf16.msra.mxu0 0
        %655 = vmatprep.subr.bf16.mxu0 0
        %656 = vmatpush1.bf16.msra.mxu0 0
        %657 = vmatprep.subr.bf16.mxu0 0
        %658 = vmatpush1.bf16.msra.mxu0 0
        %659 = vmatprep.mubr.bf16.mxu0 0
        %660 = vmatmul.mubr.bf16.gmra.mrb[0].mxu0 %v555
        %v661 = vpop.f32.mrb[0].mxu0
        %v662 = vadd.f32 %v577, %v661
        %v663 = vpop.f32.mrb[0].mxu0
        %v664 = vpop.f32.mrb[0].mxu0
        %v665 = vpop.f32.mrb[0].mxu0
        %666 = vdwg.mxu0
        %v667 = vld [vmem:[%s3] sm:$0x1]
        %v668 = vld [vmem:[%s4] sm:$0x1]
        %669 = vadd.xlane.f32.xlu0 %v662
        %v670 = vpop.xlane.xlu0 %669
        %v671 = vmul.f32 %v670, 0.0625
        %v672 = vmul.f32 %v662, %v662
        %673 = vadd.xlane.f32.xlu0 %v672
        %v674 = vpop.xlane.xlu0 %673
        %v675 = vmul.f32 %v674, 0.0625
        %v676 = vmul.f32 %v671, %v671
        %v677 = vsub.f32 %v675, %v676
        %v678 = vmax.f32 %v677, 0.0
        %v679 = vsub.f32 %v662, %v671
        %v680 = vadd.f32 %v678, 1e-05
        %v681 = vrsqrt.pop %v680
        %v682 = vmul.f32 %v679, %v681
        %v684 = vlaneseq
        %v685 = vshrl.u32 %v684, 7
        %v686 = vsub.s32 0, %v685
        %v687 = vrot.slane %v667, %v686
        %v689 = vmul.f32 %v682, %v687
        %v691 = vlaneseq
        %v692 = vshrl.u32 %v691, 7
        %v693 = vsub.s32 0, %v692
        %v694 = vrot.slane %v668, %v693
        %v696 = vadd.f32 %v689, %v694
        %v697 = vpack.c.bf16 %v696, %v696
        %v698 = vld [vmem:[#allocation2] sm:$0xf]
        %v699 = vld [vmem:[#allocation2 + $0x4] sm:$0xf]
        %v700 = vld [vmem:[#allocation2 + $0x8] sm:$0xf]
        %v701 = vld [vmem:[#allocation2 + $0xc] sm:$0xf]
        %v702 = vld [vmem:[#allocation2 + $0x10] sm:$0xf]
        %v703 = vld [vmem:[#allocation2 + $0x14] sm:$0xf]
        %v704 = vld [vmem:[#allocation2 + $0x18] sm:$0xf]
        %v705 = vld [vmem:[#allocation2 + $0x1c] sm:$0xf]
        %v706 = vld [vmem:[#allocation2 + $0x20] sm:$0xf]
        %v707 = vld [vmem:[#allocation2 + $0x24] sm:$0xf]
        %v708 = vld [vmem:[#allocation2 + $0x28] sm:$0xf]
        %v709 = vld [vmem:[#allocation2 + $0x2c] sm:$0xf]
        %v710 = vld [vmem:[#allocation2 + $0x30] sm:$0xf]
        %v711 = vld [vmem:[#allocation2 + $0x34] sm:$0xf]
        %v712 = vld [vmem:[#allocation2 + $0x38] sm:$0xf]
        %v713 = vld [vmem:[#allocation2 + $0x3c] sm:$0xf]
        %v714 = vld [vmem:[%s6] sm:$0x1]
        %v716 = vlaneseq
        %v717 = vshrl.u32 %v716, 7
        %v718 = vsub.s32 0, %v717
        %v719 = vrot.slane %v714, %v718
        %v737 = vunpack.c.l.b16 %v698
        %v738 = vunpack.c.l.b16 %v699
        %v739 = vunpack.c.l.b16 %v700
        %v740 = vunpack.c.l.b16 %v701
        %v741 = vunpack.c.l.b16 %v702
        %v742 = vunpack.c.l.b16 %v703
        %v743 = vunpack.c.l.b16 %v704
        %v744 = vunpack.c.l.b16 %v705
        %v745 = vunpack.c.l.b16 %v706
        %v746 = vunpack.c.l.b16 %v707
        %v747 = vunpack.c.l.b16 %v708
        %v748 = vunpack.c.l.b16 %v709
        %v749 = vunpack.c.l.b16 %v710
        %v750 = vunpack.c.l.b16 %v711
        %v751 = vunpack.c.l.b16 %v712
        %v752 = vunpack.c.l.b16 %v713
        %v753 = vpack.c.b16 %v738, %v737
        %v754 = vpack.c.b16 %v740, %v739
        %v755 = vpack.c.b16 %v742, %v741
        %v756 = vpack.c.b16 %v744, %v743
        %v757 = vpack.c.b16 %v746, %v745
        %v758 = vpack.c.b16 %v748, %v747
        %v759 = vpack.c.b16 %v750, %v749
        %v760 = vpack.c.b16 %v752, %v751
        %769 = vmatprep.subr.bf16.mxu0 0
        %770 = vmatpush1.bf16.msra.mxu0 %v753
        %771 = vmatprep.subr.bf16.mxu0 0
        %772 = vmatpush1.bf16.msra.mxu0 %v754
        %773 = vmatprep.subr.bf16.mxu0 0
        %774 = vmatpush1.bf16.msra.mxu0 %v755
        %775 = vmatprep.subr.bf16.mxu0 0
        %776 = vmatpush1.bf16.msra.mxu0 %v756
        %777 = vmatprep.subr.bf16.mxu0 0
        %778 = vmatpush1.bf16.msra.mxu0 %v757
        %779 = vmatprep.subr.bf16.mxu0 0
        %780 = vmatpush1.bf16.msra.mxu0 %v758
        %781 = vmatprep.subr.bf16.mxu0 0
        %782 = vmatpush1.bf16.msra.mxu0 %v759
        %783 = vmatprep.subr.bf16.mxu0 0
        %784 = vmatpush1.bf16.msra.mxu0 %v760
        %785 = vmatprep.subr.bf16.mxu0 0
        %786 = vmatpush1.bf16.msra.mxu0 0
        %787 = vmatprep.subr.bf16.mxu0 0
        %788 = vmatpush1.bf16.msra.mxu0 0
        %789 = vmatprep.subr.bf16.mxu0 0
        %790 = vmatpush1.bf16.msra.mxu0 0
        %791 = vmatprep.subr.bf16.mxu0 0
        %792 = vmatpush1.bf16.msra.mxu0 0
        %793 = vmatprep.subr.bf16.mxu0 0
        %794 = vmatpush1.bf16.msra.mxu0 0
        %795 = vmatprep.subr.bf16.mxu0 0
        %796 = vmatpush1.bf16.msra.mxu0 0
        %797 = vmatprep.subr.bf16.mxu0 0
        %798 = vmatpush1.bf16.msra.mxu0 0
        %799 = vmatprep.subr.bf16.mxu0 0
        %800 = vmatpush1.bf16.msra.mxu0 0
        %801 = vmatprep.mubr.bf16.mxu0 0
        %802 = vmatmul.mubr.bf16.gmra.mrb[0].mxu0 %v697
        %v803 = vpop.f32.mrb[0].mxu0
        %v804 = vadd.f32 %v719, %v803
        %v805 = vpop.f32.mrb[0].mxu0
        %v806 = vpop.f32.mrb[0].mxu0
        %v807 = vpop.f32.mrb[0].mxu0
        %808 = vdwg.mxu0
        %v809 = vpack.c.bf16 %v804, %v804
        %v810 = vmul.bf16 %v809, %v809
        %v811 = vmul.bf16 %v809, %v810
        %v812 = vmul.bf16 %v811, 1027030327
        %v813 = vadd.bf16 %v809, %v812
        %v814 = vmul.bf16 %v813, 1061961548
        %v815 = vtanh.bf16.pop %v814
        %v816 = vadd.bf16 %v815, 1065369472
        %v817 = vmul.bf16 %v816, 1056980736
        %v818 = vmul.bf16 %v809, %v817
        %v819 = vld [vmem:[#allocation4] sm:$0xf]
        %v820 = vld [vmem:[#allocation4 + $0x4] sm:$0xf]
        %v821 = vld [vmem:[#allocation4 + $0x8] sm:$0xf]
        %v822 = vld [vmem:[#allocation4 + $0xc] sm:$0xf]
        %v823 = vld [vmem:[#allocation4 + $0x10] sm:$0xf]
        %v824 = vld [vmem:[#allocation4 + $0x14] sm:$0xf]
        %v825 = vld [vmem:[#allocation4 + $0x18] sm:$0xf]
        %v826 = vld [vmem:[#allocation4 + $0x1c] sm:$0xf]
        %v827 = vld [vmem:[#allocation4 + $0x20] sm:$0xf]
        %v828 = vld [vmem:[#allocation4 + $0x24] sm:$0xf]
        %v829 = vld [vmem:[#allocation4 + $0x28] sm:$0xf]
        %v830 = vld [vmem:[#allocation4 + $0x2c] sm:$0xf]
        %v831 = vld [vmem:[#allocation4 + $0x30] sm:$0xf]
        %v832 = vld [vmem:[#allocation4 + $0x34] sm:$0xf]
        %v833 = vld [vmem:[#allocation4 + $0x38] sm:$0xf]
        %v834 = vld [vmem:[#allocation4 + $0x3c] sm:$0xf]
        %v835 = vld [vmem:[%s8] sm:$0x1]
        %v837 = vlaneseq
        %v838 = vshrl.u32 %v837, 7
        %v839 = vsub.s32 0, %v838
        %v840 = vrot.slane %v835, %v839
        %v858 = vunpack.c.l.b16 %v819
        %v859 = vunpack.c.l.b16 %v820
        %v860 = vunpack.c.l.b16 %v821
        %v861 = vunpack.c.l.b16 %v822
        %v862 = vunpack.c.l.b16 %v823
        %v863 = vunpack.c.l.b16 %v824
        %v864 = vunpack.c.l.b16 %v825
        %v865 = vunpack.c.l.b16 %v826
        %v866 = vunpack.c.l.b16 %v827
        %v867 = vunpack.c.l.b16 %v828
        %v868 = vunpack.c.l.b16 %v829
        %v869 = vunpack.c.l.b16 %v830
        %v870 = vunpack.c.l.b16 %v831
        %v871 = vunpack.c.l.b16 %v832
        %v872 = vunpack.c.l.b16 %v833
        %v873 = vunpack.c.l.b16 %v834
        %v874 = vpack.c.b16 %v859, %v858
        %v875 = vpack.c.b16 %v861, %v860
        %v876 = vpack.c.b16 %v863, %v862
        %v877 = vpack.c.b16 %v865, %v864
        %v878 = vpack.c.b16 %v867, %v866
        %v879 = vpack.c.b16 %v869, %v868
        %v880 = vpack.c.b16 %v871, %v870
        %v881 = vpack.c.b16 %v873, %v872
        %890 = vmatprep.subr.bf16.mxu0 0
        %891 = vmatpush1.bf16.msra.mxu0 %v874
        %892 = vmatprep.subr.bf16.mxu0 0
        %893 = vmatpush1.bf16.msra.mxu0 %v875
        %894 = vmatprep.subr.bf16.mxu0 0
        %895 = vmatpush1.bf16.msra.mxu0 %v876
        %896 = vmatprep.subr.bf16.mxu0 0
        %897 = vmatpush1.bf16.msra.mxu0 %v877
        %898 = vmatprep.subr.bf16.mxu0 0
        %899 = vmatpush1.bf16.msra.mxu0 %v878
        %900 = vmatprep.subr.bf16.mxu0 0
        %901 = vmatpush1.bf16.msra.mxu0 %v879
        %902 = vmatprep.subr.bf16.mxu0 0
        %903 = vmatpush1.bf16.msra.mxu0 %v880
        %904 = vmatprep.subr.bf16.mxu0 0
        %905 = vmatpush1.bf16.msra.mxu0 %v881
        %906 = vmatprep.subr.bf16.mxu0 0
        %907 = vmatpush1.bf16.msra.mxu0 0
        %908 = vmatprep.subr.bf16.mxu0 0
        %909 = vmatpush1.bf16.msra.mxu0 0
        %910 = vmatprep.subr.bf16.mxu0 0
        %911 = vmatpush1.bf16.msra.mxu0 0
        %912 = vmatprep.subr.bf16.mxu0 0
        %913 = vmatpush1.bf16.msra.mxu0 0
        %914 = vmatprep.subr.bf16.mxu0 0
        %915 = vmatpush1.bf16.msra.mxu0 0
        %916 = vmatprep.subr.bf16.mxu0 0
        %917 = vmatpush1.bf16.msra.mxu0 0
        %918 = vmatprep.subr.bf16.mxu0 0
        %919 = vmatpush1.bf16.msra.mxu0 0
        %920 = vmatprep.subr.bf16.mxu0 0
        %921 = vmatpush1.bf16.msra.mxu0 0
        %922 = vmatprep.mubr.bf16.mxu0 0
        %923 = vmatmul.mubr.bf16.gmra.mrb[0].mxu0 %v818
        %v924 = vpop.f32.mrb[0].mxu0
        %v925 = vadd.f32 %v840, %v924
        %v926 = vpop.f32.mrb[0].mxu0
        %v927 = vpop.f32.mrb[0].mxu0
        %v928 = vpop.f32.mrb[0].mxu0
        %929 = vdwg.mxu0
        %v930 = vadd.f32 %v662, %v925
        %v931 = vld [vmem:[%s9] sm:$0x1]
        %v932 = vld [vmem:[%s10] sm:$0x1]
        %933 = vadd.xlane.f32.xlu0 %v930
        %v934 = vpop.xlane.xlu0 %933
        %v935 = vmul.f32 %v934, 0.0625
        %v936 = vmul.f32 %v930, %v930
        %937 = vadd.xlane.f32.xlu0 %v936
        %v938 = vpop.xlane.xlu0 %937
        %v939 = vmul.f32 %v938, 0.0625
        %v940 = vmul.f32 %v935, %v935
        %v941 = vsub.f32 %v939, %v940
        %v942 = vmax.f32 %v941, 0.0
        %v943 = vsub.f32 %v930, %v935
        %v944 = vadd.f32 %v942, 1e-05
        %v945 = vrsqrt.pop %v944
        %v946 = vmul.f32 %v943, %v945
        %v948 = vlaneseq
        %v949 = vshrl.u32 %v948, 7
        %v950 = vsub.s32 0, %v949
        %v951 = vrot.slane %v931, %v950
        %v953 = vmul.f32 %v946, %v951
        %v955 = vlaneseq
        %v956 = vshrl.u32 %v955, 7
        %v957 = vsub.s32 0, %v956
        %v958 = vrot.slane %v932, %v957
        %v960 = vadd.f32 %v953, %v958
        %v961 = vpack.c.bf16 %v960, %v960
        %v962 = vld [vmem:[#allocation6] sm:$0xf]
        %v963 = vld [vmem:[#allocation6 + $0x4] sm:$0xf]
        %v964 = vld [vmem:[#allocation6 + $0x8] sm:$0xf]
        %v965 = vld [vmem:[#allocation6 + $0xc] sm:$0xf]
        %v966 = vld [vmem:[#allocation6 + $0x10] sm:$0xf]
        %v967 = vld [vmem:[#allocation6 + $0x14] sm:$0xf]
        %v968 = vld [vmem:[#allocation6 + $0x18] sm:$0xf]
        %v969 = vld [vmem:[#allocation6 + $0x1c] sm:$0xf]
        %v970 = vld [vmem:[#allocation6 + $0x20] sm:$0xf]
        %v971 = vld [vmem:[#allocation6 + $0x24] sm:$0xf]
        %v972 = vld [vmem:[#allocation6 + $0x28] sm:$0xf]
        %v973 = vld [vmem:[#allocation6 + $0x2c] sm:$0xf]
        %v974 = vld [vmem:[#allocation6 + $0x30] sm:$0xf]
        %v975 = vld [vmem:[#allocation6 + $0x34] sm:$0xf]
        %v976 = vld [vmem:[#allocation6 + $0x38] sm:$0xf]
        %v977 = vld [vmem:[#allocation6 + $0x3c] sm:$0xf]
        %v978 = vld [vmem:[%s12] sm:$0x1]
        %v980 = vlaneseq
        %v981 = vshrl.u32 %v980, 7
        %v982 = vsub.s32 0, %v981
        %v983 = vrot.slane %v978, %v982
        %v1001 = vunpack.c.l.b16 %v962
        %v1002 = vunpack.c.l.b16 %v963
        %v1003 = vunpack.c.l.b16 %v964
        %v1004 = vunpack.c.l.b16 %v965
        %v1005 = vunpack.c.l.b16 %v966
        %v1006 = vunpack.c.l.b16 %v967
        %v1007 = vunpack.c.l.b16 %v968
        %v1008 = vunpack.c.l.b16 %v969
        %v1009 = vunpack.c.l.b16 %v970
        %v1010 = vunpack.c.l.b16 %v971
        %v1011 = vunpack.c.l.b16 %v972
        %v1012 = vunpack.c.l.b16 %v973
        %v1013 = vunpack.c.l.b16 %v974
        %v1014 = vunpack.c.l.b16 %v975
        %v1015 = vunpack.c.l.b16 %v976
        %v1016 = vunpack.c.l.b16 %v977
        %v1017 = vpack.c.b16 %v1002, %v1001
        %v1018 = vpack.c.b16 %v1004, %v1003
        %v1019 = vpack.c.b16 %v1006, %v1005
        %v1020 = vpack.c.b16 %v1008, %v1007
        %v1021 = vpack.c.b16 %v1010, %v1009
        %v1022 = vpack.c.b16 %v1012, %v1011
        %v1023 = vpack.c.b16 %v1014, %v1013
        %v1024 = vpack.c.b16 %v1016, %v1015
        %1033 = vmatprep.subr.bf16.mxu0 0
        %1034 = vmatpush1.bf16.msra.mxu0 %v1017
        %1035 = vmatprep.subr.bf16.mxu0 0
        %1036 = vmatpush1.bf16.msra.mxu0 %v1018
        %1037 = vmatprep.subr.bf16.mxu0 0
        %1038 = vmatpush1.bf16.msra.mxu0 %v1019
        %1039 = vmatprep.subr.bf16.mxu0 0
        %1040 = vmatpush1.bf16.msra.mxu0 %v1020
        %1041 = vmatprep.subr.bf16.mxu0 0
        %1042 = vmatpush1.bf16.msra.mxu0 %v1021
        %1043 = vmatprep.subr.bf16.mxu0 0
        %1044 = vmatpush1.bf16.msra.mxu0 %v1022
        %1045 = vmatprep.subr.bf16.mxu0 0
        %1046 = vmatpush1.bf16.msra.mxu0 %v1023
        %1047 = vmatprep.subr.bf16.mxu0 0
        %1048 = vmatpush1.bf16.msra.mxu0 %v1024
        %1049 = vmatprep.subr.bf16.mxu0 0
        %1050 = vmatpush1.bf16.msra.mxu0 0
        %1051 = vmatprep.subr.bf16.mxu0 0
        %1052 = vmatpush1.bf16.msra.mxu0 0
        %1053 = vmatprep.subr.bf16.mxu0 0
        %1054 = vmatpush1.bf16.msra.mxu0 0
        %1055 = vmatprep.subr.bf16.mxu0 0
        %1056 = vmatpush1.bf16.msra.mxu0 0
        %1057 = vmatprep.subr.bf16.mxu0 0
        %1058 = vmatpush1.bf16.msra.mxu0 0
        %1059 = vmatprep.subr.bf16.mxu0 0
        %1060 = vmatpush1.bf16.msra.mxu0 0
        %1061 = vmatprep.subr.bf16.mxu0 0
        %1062 = vmatpush1.bf16.msra.mxu0 0
        %1063 = vmatprep.subr.bf16.mxu0 0
        %1064 = vmatpush1.bf16.msra.mxu0 0
        %1065 = vmatprep.mubr.bf16.mxu0 0
        %1066 = vmatmul.mubr.bf16.gmra.mrb[0].mxu0 %v961
        %v1067 = vpop.f32.mrb[0].mxu0
        %v1068 = vadd.f32 %v983, %v1067
        %v1069 = vpop.f32.mrb[0].mxu0
        %v1070 = vpop.f32.mrb[0].mxu0
        %v1071 = vpop.f32.mrb[0].mxu0
        %1072 = vdwg.mxu0
        %v1073 = vpack.c.bf16 %v1068, %v1068
        %v1074 = vmul.bf16 %v1073, %v1073
        %v1075 = vmul.bf16 %v1073, %v1074
        %v1076 = vmul.bf16 %v1075, 1027030327
        %v1077 = vadd.bf16 %v1073, %v1076
        %v1078 = vmul.bf16 %v1077, 1061961548
        %v1079 = vtanh.bf16.pop %v1078
        %v1080 = vadd.bf16 %v1079, 1065369472
        %v1081 = vmul.bf16 %v1080, 1056980736
        %v1082 = vmul.bf16 %v1073, %v1081
        %v1083 = vld [vmem:[#allocation7] sm:$0xf]
        %v1084 = vld [vmem:[#allocation7 + $0x4] sm:$0xf]
        %v1085 = vld [vmem:[#allocation7 + $0x8] sm:$0xf]
        %v1086 = vld [vmem:[#allocation7 + $0xc] sm:$0xf]
        %v1087 = vld [vmem:[#allocation7 + $0x10] sm:$0xf]
        %v1088 = vld [vmem:[#allocation7 + $0x14] sm:$0xf]
        %v1089 = vld [vmem:[#allocation7 + $0x18] sm:$0xf]
        %v1090 = vld [vmem:[#allocation7 + $0x1c] sm:$0xf]
        %v1091 = vld [vmem:[#allocation7 + $0x20] sm:$0xf]
        %v1092 = vld [vmem:[#allocation7 + $0x24] sm:$0xf]
        %v1093 = vld [vmem:[#allocation7 + $0x28] sm:$0xf]
        %v1094 = vld [vmem:[#allocation7 + $0x2c] sm:$0xf]
        %v1095 = vld [vmem:[#allocation7 + $0x30] sm:$0xf]
        %v1096 = vld [vmem:[#allocation7 + $0x34] sm:$0xf]
        %v1097 = vld [vmem:[#allocation7 + $0x38] sm:$0xf]
        %v1098 = vld [vmem:[#allocation7 + $0x3c] sm:$0xf]
        %v1099 = vld [vmem:[%s14] sm:$0x1]
        %v1101 = vlaneseq
        %v1102 = vshrl.u32 %v1101, 7
        %v1103 = vsub.s32 0, %v1102
        %v1104 = vrot.slane %v1099, %v1103
        %v1122 = vunpack.c.l.b16 %v1083
        %v1123 = vunpack.c.l.b16 %v1084
        %v1124 = vunpack.c.l.b16 %v1085
        %v1125 = vunpack.c.l.b16 %v1086
        %v1126 = vunpack.c.l.b16 %v1087
        %v1127 = vunpack.c.l.b16 %v1088
        %v1128 = vunpack.c.l.b16 %v1089
        %v1129 = vunpack.c.l.b16 %v1090
        %v1130 = vunpack.c.l.b16 %v1091
        %v1131 = vunpack.c.l.b16 %v1092
        %v1132 = vunpack.c.l.b16 %v1093
        %v1133 = vunpack.c.l.b16 %v1094
        %v1134 = vunpack.c.l.b16 %v1095
        %v1135 = vunpack.c.l.b16 %v1096
        %v1136 = vunpack.c.l.b16 %v1097
        %v1137 = vunpack.c.l.b16 %v1098
        %v1138 = vpack.c.b16 %v1123, %v1122
        %v1139 = vpack.c.b16 %v1125, %v1124
        %v1140 = vpack.c.b16 %v1127, %v1126
        %v1141 = vpack.c.b16 %v1129, %v1128
        %v1142 = vpack.c.b16 %v1131, %v1130
        %v1143 = vpack.c.b16 %v1133, %v1132
        %v1144 = vpack.c.b16 %v1135, %v1134
        %v1145 = vpack.c.b16 %v1137, %v1136
        %1154 = vmatprep.subr.bf16.mxu0 0
        %1155 = vmatpush1.bf16.msra.mxu0 %v1138
        %1156 = vmatprep.subr.bf16.mxu0 0
        %1157 = vmatpush1.bf16.msra.mxu0 %v1139
        %1158 = vmatprep.subr.bf16.mxu0 0
        %1159 = vmatpush1.bf16.msra.mxu0 %v1140
        %1160 = vmatprep.subr.bf16.mxu0 0
        %1161 = vmatpush1.bf16.msra.mxu0 %v1141
        %1162 = vmatprep.subr.bf16.mxu0 0
        %1163 = vmatpush1.bf16.msra.mxu0 %v1142
        %1164 = vmatprep.subr.bf16.mxu0 0
        %1165 = vmatpush1.bf16.msra.mxu0 %v1143
        %1166 = vmatprep.subr.bf16.mxu0 0
        %1167 = vmatpush1.bf16.msra.mxu0 %v1144
        %1168 = vmatprep.subr.bf16.mxu0 0
        %1169 = vmatpush1.bf16.msra.mxu0 %v1145
        %1170 = vmatprep.subr.bf16.mxu0 0
        %1171 = vmatpush1.bf16.msra.mxu0 0
        %1172 = vmatprep.subr.bf16.mxu0 0
        %1173 = vmatpush1.bf16.msra.mxu0 0
        %1174 = vmatprep.subr.bf16.mxu0 0
        %1175 = vmatpush1.bf16.msra.mxu0 0
        %1176 = vmatprep.subr.bf16.mxu0 0
        %1177 = vmatpush1.bf16.msra.mxu0 0
        %1178 = vmatprep.subr.bf16.mxu0 0
        %1179 = vmatpush1.bf16.msra.mxu0 0
        %1180 = vmatprep.subr.bf16.mxu0 0
        %1181 = vmatpush1.bf16.msra.mxu0 0
        %1182 = vmatprep.subr.bf16.mxu0 0
        %1183 = vmatpush1.bf16.msra.mxu0 0
        %1184 = vmatprep.subr.bf16.mxu0 0
        %1185 = vmatpush1.bf16.msra.mxu0 0
        %1186 = vmatprep.mubr.bf16.mxu0 0
        %1187 = vmatmul.mubr.bf16.gmra.mrb[0].mxu0 %v1082
        %v1188 = vpop.f32.mrb[0].mxu0
        %v1189 = vadd.f32 %v1104, %v1188
        %v1190 = vpop.f32.mrb[0].mxu0
        %v1191 = vpop.f32.mrb[0].mxu0
        %v1192 = vpop.f32.mrb[0].mxu0
        %1193 = vdwg.mxu0
        %v1194 = vadd.f32 %v930, %v1189
        %v1195 = vpack.c.bf16 %v1194, %v1194
        %1196 = vst [vmem:[%s548] sm:$0xf] %v1195
        %p1197 = scmp.lt.s32.totalorder %s29, 1
        %s1198 = scalar_select %p1197, %s29, 1
        %s1199 = smul.addr %s1198, 4
        %s1200 = scalar_lea.vmem %s15, %s1199
        // Predicated region
        $region97: #{simba_forward.5} parent=79 // pred_check
          %p1201 = pneg %p367
        $region98: #{simba_forward.5} parent=79 // pred_check_branch
          %1203 = sbr.rel (%p1201) target = $region100
        $region99: #{simba_forward.5} parent=79 // pred_region
          _
        $region100: #{simba_forward.5} parent=79 // pred_fallthru
          _
      $region80: #{simba_forward.5} parent=5 // pred_fallthru
        _
      %p1204 = scmp.le.s32.totalorder 2, %s24
      // Predicated region
      $region101: #{simba_forward.5} parent=5 // pred_check
        %p1205 = pneg %p1204
      $region102: #{simba_forward.5} parent=5 // pred_check_branch
        %1207 = sbr.rel (%p1205) target = $region104
      $region103: #{simba_forward.5} parent=5 // pred_region
        %s1208 = ssub.s32 %s24, 2
        // Predicated region
        $region105: #{simba_forward.5} parent=103 // pred_check
          %p1209 = pneg %p373
        $region106: #{simba_forward.5} parent=103 // pred_check_branch
          %1211 = sbr.rel (%p1209) target = $region108
        $region107: #{simba_forward.5} parent=103 // pred_region
          %p1212 = scmp.lt.s32.totalorder %s30, 1
          %s1213 = scalar_select %p1212, %s30, 1
          %s1214 = smul.addr %s1213, 4
          %s1215 = scalar_lea.vmem %s15, %s1214
        $region108: #{simba_forward.5} parent=103 // pred_fallthru
          _
      $region104: #{simba_forward.5} parent=5 // pred_fallthru
        _
    $region6: #{simba_forward.5} parent=1 // loop_footer
      %s28 = sadd.s32 1, %s24
    $region7: #{simba_forward.5} parent=1 // loop_footer_branch
      %23 = sbr.rel target = $region3
    $region8: #{simba_forward.5} parent=1 // loop_exit
      _
    %1216 = vsyncpa [#allocation3], 1
    %s1217 = scalar_lea.sflag [#allocation3], 1
    %1218 = vsyncpa %s1217, 1
    %1219 = vsyncpa [#allocation5], 1
    %1220 = vsyncpa [#allocation8], 1

// kernel: simba_forward.7
$region0: #{simba_forward.7}
  #allocation0 [shape = 'u32[]', space=smem, size = 0x4, offset = 0x4, fixed_abs, tag = 'smem constant byte address 0x4 - core index']
  #allocation1 [shape = 'u32[144,128]{1,0:T(1,128)}', space=vmem, size = 0x12000, scoped, tag = 'internal scratch']
  %s0 = inlined_call_operand.vmem [shape: bf16[16,128], index: 0, kind: input, shape index: {}, may-alias: {0,17}]
  %s1 = inlined_call_operand.vmem [shape: f32[1,128], index: 1, kind: input, shape index: {}]
  %s2 = inlined_call_operand.vmem [shape: f32[1,128], index: 2, kind: input, shape index: {}]
  %s3 = inlined_call_operand.vmem [shape: bf16[128,128], index: 3, kind: input, shape index: {}]
  %s4 = inlined_call_operand.vmem [shape: f32[1,128], index: 4, kind: input, shape index: {}]
  %s5 = inlined_call_operand.vmem [shape: f32[1,128], index: 5, kind: input, shape index: {}]
  %s6 = inlined_call_operand.hbm [shape: f32[1,128], index: 6, kind: input, shape index: {}]
  %s7 = inlined_call_operand.vmem [shape: bf16[128,128], index: 7, kind: input, shape index: {}]
  %s8 = inlined_call_operand.hbm [shape: f32[1,128], index: 8, kind: input, shape index: {}]
  %s9 = inlined_call_operand.vmem [shape: bf16[128,128], index: 9, kind: input, shape index: {}]
  %s10 = inlined_call_operand.hbm [shape: f32[1,128], index: 10, kind: input, shape index: {}]
  %s11 = inlined_call_operand.hbm [shape: f32[1,128], index: 11, kind: input, shape index: {}]
  %s12 = inlined_call_operand.hbm [shape: f32[1,128], index: 12, kind: input, shape index: {}]
  %s13 = inlined_call_operand.vmem [shape: bf16[128,128], index: 13, kind: input, shape index: {}]
  %s14 = inlined_call_operand.hbm [shape: f32[1,128], index: 14, kind: input, shape index: {}]
  %s15 = inlined_call_operand.vmem [shape: bf16[128,128], index: 15, kind: input, shape index: {}]
  %s16 = inlined_call_operand.hbm [shape: f32[1,128], index: 16, kind: input, shape index: {}]
  %s17 = inlined_call_operand.vmem [shape: bf16[16,128], index: 17, kind: output, shape index: {}, may-alias: {0,17}]
  %s18 = sld [smem:[#allocation0]]
  $region129: #{simba_forward.7} parent=0
    _
  %s20 = ssub.s32 1, %s18
  %s21 = scalar_select 0, %s20, %s18
  $region1: #{simba_forward.7} parent=0
    #allocation2 [shape = 'u8[512]{0}', space=vmem, size = 0x400, scoped, tag = 'input window, operand 6, single buffered']
    #allocation3 [shape = 's32[2]{0}', space=sflag, size = 0x8, scoped, tag = 'scoped memory for simba_forward.7']
    #allocation4 [shape = 'u8[512]{0}', space=vmem, size = 0x400, scoped, tag = 'input window, operand 8, single buffered']
    #allocation5 [shape = 's32[1]{0}', space=sflag, size = 0x4, scoped, tag = 'scoped memory for simba_forward.7']
    #allocation6 [shape = 'u8[512]{0}', space=vmem, size = 0x400, scoped, tag = 'input window, operand 10, single buffered']
    #allocation7 [shape = 'u8[512]{0}', space=vmem, size = 0x400, scoped, tag = 'input window, operand 11, single buffered']
    #allocation8 [shape = 's32[1]{0}', space=sflag, size = 0x4, scoped, tag = 'scoped memory for simba_forward.7']
    #allocation9 [shape = 'u8[512]{0}', space=vmem, size = 0x400, scoped, tag = 'input window, operand 12, single buffered']
    #allocation10 [shape = 'u8[512]{0}', space=vmem, size = 0x400, scoped, tag = 'input window, operand 14, single buffered']
    #allocation11 [shape = 's32[1]{0}', space=sflag, size = 0x4, scoped, tag = 'scoped memory for simba_forward.7']
    #allocation12 [shape = 'u8[512]{0}', space=vmem, size = 0x400, scoped, tag = 'input window, operand 16, single buffered']
    %22 = vsyncpa [#allocation3], 0
    %23 = vsyncpa [#allocation5], 0
    %24 = vsyncpa [#allocation8], 0
    %25 = vsyncpa [#allocation11], 0
    loop: start=0, step=1, limit=4
    $region2: #{simba_forward.7} parent=1 // loop_pre_header
      _
    $region3: #{simba_forward.7} parent=1 // loop_header
      %s27 = sphi 0, %s31
      %p28 = scmp.ge.s32.totalorder %s27, 4
      %s37 = sphi 0, %s39
      %s40 = sphi 0, %s37
      %s41 = sphi 0, %s40
      %s57 = sphi 0, %s41
      %s61 = sphi 0, %s61
      %s63 = sphi 0, %s61
      %s64 = sphi 0, %s63
      %s78 = sphi 0, %s64
      %s82 = sphi 0, %s82
      %s84 = sphi 0, %s82
      %s85 = sphi 0, %s84
      %s99 = sphi 0, %s85
      %s103 = sphi 0, %s103
      %s105 = sphi 0, %s103
      %s106 = sphi 0, %s105
      %s120 = sphi 0, %s106
      %s124 = sphi 0, %s124
      %s126 = sphi 0, %s124
      %s127 = sphi 0, %s126
      %s141 = sphi 0, %s127
      %s145 = sphi 0, %s145
      %s147 = sphi 0, %s145
      %s148 = sphi 0, %s147
      %s162 = sphi 0, %s148
      %s166 = sphi 0, %s166
      %s168 = sphi 0, %s166
      %s169 = sphi 0, %s168
      %s183 = sphi 0, %s169
      %s187 = sphi 0, %s187
      %s189 = sphi 0, %s187
      %s190 = sphi 0, %s189
      %s204 = sphi 0, %s190
      %s208 = sphi 0, %s208
      %s210 = sphi 0, %s208
      %s211 = sphi 0, %s210
      %s225 = sphi 0, %s211
      %s229 = sphi 0, %s229
      %s231 = sphi 0, %s229
      %s232 = sphi 0, %s231
      %s246 = sphi 0, %s232
      %s250 = sphi 0, %s250
      %s252 = sphi 0, %s250
      %s253 = sphi 0, %s252
      %s267 = sphi 0, %s253
      %s271 = sphi 0, %s271
      %s273 = sphi 0, %s271
      %s274 = sphi 0, %s273
      %s288 = sphi 0, %s274
      %s292 = sphi 0, %s292
      %s294 = sphi 0, %s292
      %s295 = sphi 0, %s294
      %s309 = sphi 0, %s295
      %s313 = sphi 0, %s313
      %s315 = sphi 0, %s313
      %s316 = sphi 0, %s315
      %s330 = sphi 0, %s316
      %s334 = sphi 0, %s334
      %s336 = sphi 0, %s334
      %s337 = sphi 0, %s336
      %s351 = sphi 0, %s337
      %s355 = sphi 0, %s355
      %s357 = sphi 0, %s355
      %s358 = sphi 0, %s357
      %s372 = sphi 0, %s358
      %s376 = sphi 0, %s376
      %s378 = sphi 0, %s376
      %s379 = sphi 0, %s378
      %s393 = sphi 0, %s379
      %s399 = sphi 0, %s401
      %s402 = sphi 0, %s399
      %s403 = sphi 0, %s402
      %s419 = sphi 0, %s403
    $region4: #{simba_forward.7} parent=1 // loop_header_branch
      %30 = sbr.rel (%p28) target = $region8
    $region5: #{simba_forward.7} parent=1 // loop_body
      %s32 = ssub.s32 %s27, 1
      %s33 = ssub.s32 %s27, 2
      %s34 = sadd.s32 %s27, 1
      %s35 = ssub.s32 %s27, %s34
      %p36 = scmp.eq.s32.totalorder %s35, 0
      %s38 = sadd.s32 %s37, 1
      %s39 = scalar_select %p36, %s37, %s38
      %p42 = pneg %p36
      %p43 = scmp.eq.s32.totalorder %s27, 1
      %p44 = por %p42, %p43
      %p45 = scmp.ne.s32.totalorder %s37, %s40
      %p46 = scmp.eq.s32.totalorder %s27, 0
      %p47 = por %p45, %p46
      %p48 = scmp.ne.s32.totalorder %s37, %s40
      %p49 = scmp.eq.s32.totalorder %s32, 1
      %p50 = por %p48, %p49
      %p51 = scmp.ne.s32.totalorder %s40, %s41
      %p52 = scmp.eq.s32.totalorder %s32, 0
      %p53 = por %p51, %p52
      %p54 = scmp.ne.s32.totalorder %s40, %s41
      %p55 = scmp.eq.s32.totalorder %s33, 1
      %p56 = por %p54, %p55
      %p58 = scmp.ne.s32.totalorder %s41, %s57
      %p59 = scmp.eq.s32.totalorder %s33, 0
      %p60 = por %p58, %p59
      %s62 = sadd.s32 %s61, 1
      %p65 = scmp.eq.s32.totalorder %s27, 1
      %p66 = scmp.ne.s32.totalorder %s61, %s63
      %p67 = scmp.eq.s32.totalorder %s27, 0
      %p68 = por %p66, %p67
      %p69 = scmp.ne.s32.totalorder %s61, %s63
      %p70 = scmp.eq.s32.totalorder %s32, 1
      %p71 = por %p69, %p70
      %p72 = scmp.ne.s32.totalorder %s63, %s64
      %p73 = scmp.eq.s32.totalorder %s32, 0
      %p74 = por %p72, %p73
      %p75 = scmp.ne.s32.totalorder %s63, %s64
      %p76 = scmp.eq.s32.totalorder %s33, 1
      %p77 = por %p75, %p76
      %p79 = scmp.ne.s32.totalorder %s64, %s78
      %p80 = scmp.eq.s32.totalorder %s33, 0
      %p81 = por %p79, %p80
      %s83 = sadd.s32 %s82, 1
      %p86 = scmp.eq.s32.totalorder %s27, 1
      %p87 = scmp.ne.s32.totalorder %s82, %s84
      %p88 = scmp.eq.s32.totalorder %s27, 0
      %p89 = por %p87, %p88
      %p90 = scmp.ne.s32.totalorder %s82, %s84
      %p91 = scmp.eq.s32.totalorder %s32, 1
      %p92 = por %p90, %p91
      %p93 = scmp.ne.s32.totalorder %s84, %s85
      %p94 = scmp.eq.s32.totalorder %s32, 0
      %p95 = por %p93, %p94
      %p96 = scmp.ne.s32.totalorder %s84, %s85
      %p97 = scmp.eq.s32.totalorder %s33, 1
      %p98 = por %p96, %p97
      %p100 = scmp.ne.s32.totalorder %s85, %s99
      %p101 = scmp.eq.s32.totalorder %s33, 0
      %p102 = por %p100, %p101
      %s104 = sadd.s32 %s103, 1
      %p107 = scmp.eq.s32.totalorder %s27, 1
      %p108 = scmp.ne.s32.totalorder %s103, %s105
      %p109 = scmp.eq.s32.totalorder %s27, 0
      %p110 = por %p108, %p109
      %p111 = scmp.ne.s32.totalorder %s103, %s105
      %p112 = scmp.eq.s32.totalorder %s32, 1
      %p113 = por %p111, %p112
      %p114 = scmp.ne.s32.totalorder %s105, %s106
      %p115 = scmp.eq.s32.totalorder %s32, 0
      %p116 = por %p114, %p115
      %p117 = scmp.ne.s32.totalorder %s105, %s106
      %p118 = scmp.eq.s32.totalorder %s33, 1
      %p119 = por %p117, %p118
      %p121 = scmp.ne.s32.totalorder %s106, %s120
      %p122 = scmp.eq.s32.totalorder %s33, 0
      %p123 = por %p121, %p122
      %s125 = sadd.s32 %s124, 1
      %p128 = scmp.eq.s32.totalorder %s27, 1
      %p129 = scmp.ne.s32.totalorder %s124, %s126
      %p130 = scmp.eq.s32.totalorder %s27, 0
      %p131 = por %p129, %p130
      %p132 = scmp.ne.s32.totalorder %s124, %s126
      %p133 = scmp.eq.s32.totalorder %s32, 1
      %p134 = por %p132, %p133
      %p135 = scmp.ne.s32.totalorder %s126, %s127
      %p136 = scmp.eq.s32.totalorder %s32, 0
      %p137 = por %p135, %p136
      %p138 = scmp.ne.s32.totalorder %s126, %s127
      %p139 = scmp.eq.s32.totalorder %s33, 1
      %p140 = por %p138, %p139
      %p142 = scmp.ne.s32.totalorder %s127, %s141
      %p143 = scmp.eq.s32.totalorder %s33, 0
      %p144 = por %p142, %p143
      %s146 = sadd.s32 %s145, 1
      %p149 = scmp.eq.s32.totalorder %s27, 1
      %p150 = scmp.ne.s32.totalorder %s145, %s147
      %p151 = scmp.eq.s32.totalorder %s27, 0
      %p152 = por %p150, %p151
      %p153 = scmp.ne.s32.totalorder %s145, %s147
      %p154 = scmp.eq.s32.totalorder %s32, 1
      %p155 = por %p153, %p154
      %p156 = scmp.ne.s32.totalorder %s147, %s148
      %p157 = scmp.eq.s32.totalorder %s32, 0
      %p158 = por %p156, %p157
      %p159 = scmp.ne.s32.totalorder %s147, %s148
      %p160 = scmp.eq.s32.totalorder %s33, 1
      %p161 = por %p159, %p160
      %p163 = scmp.ne.s32.totalorder %s148, %s162
      %p164 = scmp.eq.s32.totalorder %s33, 0
      %p165 = por %p163, %p164
      %s167 = sadd.s32 %s166, 1
      %p170 = scmp.eq.s32.totalorder %s27, 1
      %p171 = scmp.ne.s32.totalorder %s166, %s168
      %p172 = scmp.eq.s32.totalorder %s27, 0
      %p173 = por %p171, %p172
      %p174 = scmp.ne.s32.totalorder %s166, %s168
      %p175 = scmp.eq.s32.totalorder %s32, 1
      %p176 = por %p174, %p175
      %p177 = scmp.ne.s32.totalorder %s168, %s169
      %p178 = scmp.eq.s32.totalorder %s32, 0
      %p179 = por %p177, %p178
      %p180 = scmp.ne.s32.totalorder %s168, %s169
      %p181 = scmp.eq.s32.totalorder %s33, 1
      %p182 = por %p180, %p181
      %p184 = scmp.ne.s32.totalorder %s169, %s183
      %p185 = scmp.eq.s32.totalorder %s33, 0
      %p186 = por %p184, %p185
      %s188 = sadd.s32 %s187, 1
      %p191 = scmp.eq.s32.totalorder %s27, 1
      %p192 = scmp.ne.s32.totalorder %s187, %s189
      %p193 = scmp.eq.s32.totalorder %s27, 0
      %p194 = por %p192, %p193
      %p195 = scmp.ne.s32.totalorder %s187, %s189
      %p196 = scmp.eq.s32.totalorder %s32, 1
      %p197 = por %p195, %p196
      %p198 = scmp.ne.s32.totalorder %s189, %s190
      %p199 = scmp.eq.s32.totalorder %s32, 0
      %p200 = por %p198, %p199
      %p201 = scmp.ne.s32.totalorder %s189, %s190
      %p202 = scmp.eq.s32.totalorder %s33, 1
      %p203 = por %p201, %p202
      %p205 = scmp.ne.s32.totalorder %s190, %s204
      %p206 = scmp.eq.s32.totalorder %s33, 0
      %p207 = por %p205, %p206
      %s209 = sadd.s32 %s208, 1
      %p212 = scmp.eq.s32.totalorder %s27, 1
      %p213 = scmp.ne.s32.totalorder %s208, %s210
      %p214 = scmp.eq.s32.totalorder %s27, 0
      %p215 = por %p213, %p214
      %p216 = scmp.ne.s32.totalorder %s208, %s210
      %p217 = scmp.eq.s32.totalorder %s32, 1
      %p218 = por %p216, %p217
      %p219 = scmp.ne.s32.totalorder %s210, %s211
      %p220 = scmp.eq.s32.totalorder %s32, 0
      %p221 = por %p219, %p220
      %p222 = scmp.ne.s32.totalorder %s210, %s211
      %p223 = scmp.eq.s32.totalorder %s33, 1
      %p224 = por %p222, %p223
      %p226 = scmp.ne.s32.totalorder %s211, %s225
      %p227 = scmp.eq.s32.totalorder %s33, 0
      %p228 = por %p226, %p227
      %s230 = sadd.s32 %s229, 1
      %p233 = scmp.eq.s32.totalorder %s27, 1
      %p234 = scmp.ne.s32.totalorder %s229, %s231
      %p235 = scmp.eq.s32.totalorder %s27, 0
      %p236 = por %p234, %p235
      %p237 = scmp.ne.s32.totalorder %s229, %s231
      %p238 = scmp.eq.s32.totalorder %s32, 1
      %p239 = por %p237, %p238
      %p240 = scmp.ne.s32.totalorder %s231, %s232
      %p241 = scmp.eq.s32.totalorder %s32, 0
      %p242 = por %p240, %p241
      %p243 = scmp.ne.s32.totalorder %s231, %s232
      %p244 = scmp.eq.s32.totalorder %s33, 1
      %p245 = por %p243, %p244
      %p247 = scmp.ne.s32.totalorder %s232, %s246
      %p248 = scmp.eq.s32.totalorder %s33, 0
      %p249 = por %p247, %p248
      %s251 = sadd.s32 %s250, 1
      %p254 = scmp.eq.s32.totalorder %s27, 1
      %p255 = scmp.ne.s32.totalorder %s250, %s252
      %p256 = scmp.eq.s32.totalorder %s27, 0
      %p257 = por %p255, %p256
      %p258 = scmp.ne.s32.totalorder %s250, %s252
      %p259 = scmp.eq.s32.totalorder %s32, 1
      %p260 = por %p258, %p259
      %p261 = scmp.ne.s32.totalorder %s252, %s253
      %p262 = scmp.eq.s32.totalorder %s32, 0
      %p263 = por %p261, %p262
      %p264 = scmp.ne.s32.totalorder %s252, %s253
      %p265 = scmp.eq.s32.totalorder %s33, 1
      %p266 = por %p264, %p265
      %p268 = scmp.ne.s32.totalorder %s253, %s267
      %p269 = scmp.eq.s32.totalorder %s33, 0
      %p270 = por %p268, %p269
      %s272 = sadd.s32 %s271, 1
      %p275 = scmp.eq.s32.totalorder %s27, 1
      %p276 = scmp.ne.s32.totalorder %s271, %s273
      %p277 = scmp.eq.s32.totalorder %s27, 0
      %p278 = por %p276, %p277
      %p279 = scmp.ne.s32.totalorder %s271, %s273
      %p280 = scmp.eq.s32.totalorder %s32, 1
      %p281 = por %p279, %p280
      %p282 = scmp.ne.s32.totalorder %s273, %s274
      %p283 = scmp.eq.s32.totalorder %s32, 0
      %p284 = por %p282, %p283
      %p285 = scmp.ne.s32.totalorder %s273, %s274
      %p286 = scmp.eq.s32.totalorder %s33, 1
      %p287 = por %p285, %p286
      %p289 = scmp.ne.s32.totalorder %s274, %s288
      %p290 = scmp.eq.s32.totalorder %s33, 0
      %p291 = por %p289, %p290
      %s293 = sadd.s32 %s292, 1
      %p296 = scmp.eq.s32.totalorder %s27, 1
      %p297 = scmp.ne.s32.totalorder %s292, %s294
      %p298 = scmp.eq.s32.totalorder %s27, 0
      %p299 = por %p297, %p298
      %p300 = scmp.ne.s32.totalorder %s292, %s294
      %p301 = scmp.eq.s32.totalorder %s32, 1
      %p302 = por %p300, %p301
      %p303 = scmp.ne.s32.totalorder %s294, %s295
      %p304 = scmp.eq.s32.totalorder %s32, 0
      %p305 = por %p303, %p304
      %p306 = scmp.ne.s32.totalorder %s294, %s295
      %p307 = scmp.eq.s32.totalorder %s33, 1
      %p308 = por %p306, %p307
      %p310 = scmp.ne.s32.totalorder %s295, %s309
      %p311 = scmp.eq.s32.totalorder %s33, 0
      %p312 = por %p310, %p311
      %s314 = sadd.s32 %s313, 1
      %p317 = scmp.eq.s32.totalorder %s27, 1
      %p318 = scmp.ne.s32.totalorder %s313, %s315
      %p319 = scmp.eq.s32.totalorder %s27, 0
      %p320 = por %p318, %p319
      %p321 = scmp.ne.s32.totalorder %s313, %s315
      %p322 = scmp.eq.s32.totalorder %s32, 1
      %p323 = por %p321, %p322
      %p324 = scmp.ne.s32.totalorder %s315, %s316
      %p325 = scmp.eq.s32.totalorder %s32, 0
      %p326 = por %p324, %p325
      %p327 = scmp.ne.s32.totalorder %s315, %s316
      %p328 = scmp.eq.s32.totalorder %s33, 1
      %p329 = por %p327, %p328
      %p331 = scmp.ne.s32.totalorder %s316, %s330
      %p332 = scmp.eq.s32.totalorder %s33, 0
      %p333 = por %p331, %p332
      %s335 = sadd.s32 %s334, 1
      %p338 = scmp.eq.s32.totalorder %s27, 1
      %p339 = scmp.ne.s32.totalorder %s334, %s336
      %p340 = scmp.eq.s32.totalorder %s27, 0
      %p341 = por %p339, %p340
      %p342 = scmp.ne.s32.totalorder %s334, %s336
      %p343 = scmp.eq.s32.totalorder %s32, 1
      %p344 = por %p342, %p343
      %p345 = scmp.ne.s32.totalorder %s336, %s337
      %p346 = scmp.eq.s32.totalorder %s32, 0
      %p347 = por %p345, %p346
      %p348 = scmp.ne.s32.totalorder %s336, %s337
      %p349 = scmp.eq.s32.totalorder %s33, 1
      %p350 = por %p348, %p349
      %p352 = scmp.ne.s32.totalorder %s337, %s351
      %p353 = scmp.eq.s32.totalorder %s33, 0
      %p354 = por %p352, %p353
      %s356 = sadd.s32 %s355, 1
      %p359 = scmp.eq.s32.totalorder %s27, 1
      %p360 = scmp.ne.s32.totalorder %s355, %s357
      %p361 = scmp.eq.s32.totalorder %s27, 0
      %p362 = por %p360, %p361
      %p363 = scmp.ne.s32.totalorder %s355, %s357
      %p364 = scmp.eq.s32.totalorder %s32, 1
      %p365 = por %p363, %p364
      %p366 = scmp.ne.s32.totalorder %s357, %s358
      %p367 = scmp.eq.s32.totalorder %s32, 0
      %p368 = por %p366, %p367
      %p369 = scmp.ne.s32.totalorder %s357, %s358
      %p370 = scmp.eq.s32.totalorder %s33, 1
      %p371 = por %p369, %p370
      %p373 = scmp.ne.s32.totalorder %s358, %s372
      %p374 = scmp.eq.s32.totalorder %s33, 0
      %p375 = por %p373, %p374
      %s377 = sadd.s32 %s376, 1
      %p380 = scmp.eq.s32.totalorder %s27, 1
      %p381 = scmp.ne.s32.totalorder %s376, %s378
      %p382 = scmp.eq.s32.totalorder %s27, 0
      %p383 = por %p381, %p382
      %p384 = scmp.ne.s32.totalorder %s376, %s378
      %p385 = scmp.eq.s32.totalorder %s32, 1
      %p386 = por %p384, %p385
      %p387 = scmp.ne.s32.totalorder %s378, %s379
      %p388 = scmp.eq.s32.totalorder %s32, 0
      %p389 = por %p387, %p388
      %p390 = scmp.ne.s32.totalorder %s378, %s379
      %p391 = scmp.eq.s32.totalorder %s33, 1
      %p392 = por %p390, %p391
      %p394 = scmp.ne.s32.totalorder %s379, %s393
      %p395 = scmp.eq.s32.totalorder %s33, 0
      %p396 = por %p394, %p395
      %s397 = ssub.s32 %s27, %s34
      %p398 = scmp.eq.s32.totalorder %s397, 0
      %s400 = sadd.s32 %s399, 1
      %s401 = scalar_select %p398, %s399, %s400
      %p404 = pneg %p398
      %p405 = scmp.eq.s32.totalorder %s27, 1
      %p406 = por %p404, %p405
      %p407 = scmp.ne.s32.totalorder %s399, %s402
      %p408 = scmp.eq.s32.totalorder %s27, 0
      %p409 = por %p407, %p408
      %p410 = scmp.ne.s32.totalorder %s399, %s402
      %p411 = scmp.eq.s32.totalorder %s32, 1
      %p412 = por %p410, %p411
      %p413 = scmp.ne.s32.totalorder %s402, %s403
      %p414 = scmp.eq.s32.totalorder %s32, 0
      %p415 = por %p413, %p414
      %p416 = scmp.ne.s32.totalorder %s402, %s403
      %p417 = scmp.eq.s32.totalorder %s33, 1
      %p418 = por %p416, %p417
      %p420 = scmp.ne.s32.totalorder %s403, %s419
      %p421 = scmp.eq.s32.totalorder %s33, 0
      %p422 = por %p420, %p421
      %p423 = scmp.le.s32.totalorder 1, %s27
      %p424 = scmp.lt.s32.totalorder %s27, 3
      %p425 = pnand %p423, %p424
      %p426 = pneg %p425
      // Predicated region
      $region9: #{simba_forward.7} parent=5 // pred_check
        _
      $region10: #{simba_forward.7} parent=5 // pred_check_branch
        %428 = sbr.rel (%p425) target = $region12
      $region11: #{simba_forward.7} parent=5 // pred_region
        %s429 = ssub.s32 %s27, 1
        // Predicated region
        $region13: #{simba_forward.7} parent=11 // pred_check
          %p430 = pneg %p74
        $region14: #{simba_forward.7} parent=11 // pred_check_branch
          %432 = sbr.rel (%p430) target = $region16
        $region15: #{simba_forward.7} parent=11 // pred_region
          _
        $region16: #{simba_forward.7} parent=11 // pred_fallthru
          _
        // Predicated region
        $region17: #{simba_forward.7} parent=11 // pred_check
          %p433 = pneg %p95
        $region18: #{simba_forward.7} parent=11 // pred_check_branch
          %435 = sbr.rel (%p433) target = $region20
        $region19: #{simba_forward.7} parent=11 // pred_region
          _
        $region20: #{simba_forward.7} parent=11 // pred_fallthru
          _
        // Predicated region
        $region21: #{simba_forward.7} parent=11 // pred_check
          %p436 = pneg %p116
        $region22: #{simba_forward.7} parent=11 // pred_check_branch
          %438 = sbr.rel (%p436) target = $region24
        $region23: #{simba_forward.7} parent=11 // pred_region
          _
        $region24: #{simba_forward.7} parent=11 // pred_fallthru
          _
        // Predicated region
        $region25: #{simba_forward.7} parent=11 // pred_check
          %p439 = pneg %p137
        $region26: #{simba_forward.7} parent=11 // pred_check_branch
          %441 = sbr.rel (%p439) target = $region28
        $region27: #{simba_forward.7} parent=11 // pred_region
          _
        $region28: #{simba_forward.7} parent=11 // pred_fallthru
          _
        // Predicated region
        $region29: #{simba_forward.7} parent=11 // pred_check
          %p442 = pneg %p158
        $region30: #{simba_forward.7} parent=11 // pred_check_branch
          %444 = sbr.rel (%p442) target = $region32
        $region31: #{simba_forward.7} parent=11 // pred_region
          _
        $region32: #{simba_forward.7} parent=11 // pred_fallthru
          _
        // Predicated region
        $region33: #{simba_forward.7} parent=11 // pred_check
          %p445 = pneg %p179
        $region34: #{simba_forward.7} parent=11 // pred_check_branch
          %447 = sbr.rel (%p445) target = $region36
        $region35: #{simba_forward.7} parent=11 // pred_region
          %s449 = ssub.s32 16, 16
          %450 = vsyncadd [#allocation3], %s449
          %s452 = sshll.u32 [#allocation2], 4
          %s453 = int_to_ptr.vmem [resolvable:$true] %s452
          %455 = dma.hbm_to_vmem [thread:$0]  %s6, 16, %s453, [#allocation3]
        $region36: #{simba_forward.7} parent=11 // pred_fallthru
          _
        // Predicated region
        $region37: #{simba_forward.7} parent=11 // pred_check
          %p456 = pneg %p200
        $region38: #{simba_forward.7} parent=11 // pred_check_branch
          %458 = sbr.rel (%p456) target = $region40
        $region39: #{simba_forward.7} parent=11 // pred_region
          _
        $region40: #{simba_forward.7} parent=11 // pred_fallthru
          _
        // Predicated region
        $region41: #{simba_forward.7} parent=11 // pred_check
          %p459 = pneg %p221
        $region42: #{simba_forward.7} parent=11 // pred_check_branch
          %461 = sbr.rel (%p459) target = $region44
        $region43: #{simba_forward.7} parent=11 // pred_region
          %s463 = ssub.s32 16, 16
          %464 = vsyncadd [#allocation5], %s463
          %s466 = sshll.u32 [#allocation4], 4
          %s467 = int_to_ptr.vmem [resolvable:$true] %s466
          %469 = dma.hbm_to_vmem [thread:$0]  %s8, 16, %s467, [#allocation5]
        $region44: #{simba_forward.7} parent=11 // pred_fallthru
          _
        // Predicated region
        $region45: #{simba_forward.7} parent=11 // pred_check
          %p470 = pneg %p242
        $region46: #{simba_forward.7} parent=11 // pred_check_branch
          %472 = sbr.rel (%p470) target = $region48
        $region47: #{simba_forward.7} parent=11 // pred_region
          _
        $region48: #{simba_forward.7} parent=11 // pred_fallthru
          _
        // Predicated region
        $region49: #{simba_forward.7} parent=11 // pred_check
          %p473 = pneg %p263
        $region50: #{simba_forward.7} parent=11 // pred_check_branch
          %475 = sbr.rel (%p473) target = $region52
        $region51: #{simba_forward.7} parent=11 // pred_region
          %s477 = ssub.s32 16, 16
          %478 = vsyncadd [#allocation5], %s477
          %s480 = sshll.u32 [#allocation6], 4
          %s481 = int_to_ptr.vmem [resolvable:$true] %s480
          %483 = dma.hbm_to_vmem [thread:$0]  %s10, 16, %s481, [#allocation5]
        $region52: #{simba_forward.7} parent=11 // pred_fallthru
          _
        // Predicated region
        $region53: #{simba_forward.7} parent=11 // pred_check
          %p484 = pneg %p284
        $region54: #{simba_forward.7} parent=11 // pred_check_branch
          %486 = sbr.rel (%p484) target = $region56
        $region55: #{simba_forward.7} parent=11 // pred_region
          %s488 = ssub.s32 16, 16
          %489 = vsyncadd [#allocation8], %s488
          %s491 = sshll.u32 [#allocation7], 4
          %s492 = int_to_ptr.vmem [resolvable:$true] %s491
          %494 = dma.hbm_to_vmem [thread:$0]  %s11, 16, %s492, [#allocation8]
        $region56: #{simba_forward.7} parent=11 // pred_fallthru
          _
        // Predicated region
        $region57: #{simba_forward.7} parent=11 // pred_check
          %p495 = pneg %p305
        $region58: #{simba_forward.7} parent=11 // pred_check_branch
          %497 = sbr.rel (%p495) target = $region60
        $region59: #{simba_forward.7} parent=11 // pred_region
          %s499 = ssub.s32 16, 16
          %500 = vsyncadd [#allocation8], %s499
          %s502 = sshll.u32 [#allocation9], 4
          %s503 = int_to_ptr.vmem [resolvable:$true] %s502
          %505 = dma.hbm_to_vmem [thread:$0]  %s12, 16, %s503, [#allocation8]
        $region60: #{simba_forward.7} parent=11 // pred_fallthru
          _
        // Predicated region
        $region61: #{simba_forward.7} parent=11 // pred_check
          %p506 = pneg %p326
        $region62: #{simba_forward.7} parent=11 // pred_check_branch
          %508 = sbr.rel (%p506) target = $region64
        $region63: #{simba_forward.7} parent=11 // pred_region
          _
        $region64: #{simba_forward.7} parent=11 // pred_fallthru
          _
        // Predicated region
        $region65: #{simba_forward.7} parent=11 // pred_check
          %p509 = pneg %p347
        $region66: #{simba_forward.7} parent=11 // pred_check_branch
          %511 = sbr.rel (%p509) target = $region68
        $region67: #{simba_forward.7} parent=11 // pred_region
          %s513 = ssub.s32 16, 16
          %514 = vsyncadd [#allocation11], %s513
          %s516 = sshll.u32 [#allocation10], 4
          %s517 = int_to_ptr.vmem [resolvable:$true] %s516
          %519 = dma.hbm_to_vmem [thread:$0]  %s14, 16, %s517, [#allocation11]
        $region68: #{simba_forward.7} parent=11 // pred_fallthru
          _
        // Predicated region
        $region69: #{simba_forward.7} parent=11 // pred_check
          %p520 = pneg %p368
        $region70: #{simba_forward.7} parent=11 // pred_check_branch
          %522 = sbr.rel (%p520) target = $region72
        $region71: #{simba_forward.7} parent=11 // pred_region
          _
        $region72: #{simba_forward.7} parent=11 // pred_fallthru
          _
        // Predicated region
        $region73: #{simba_forward.7} parent=11 // pred_check
          %p523 = pneg %p389
        $region74: #{simba_forward.7} parent=11 // pred_check_branch
          %525 = sbr.rel (%p523) target = $region76
        $region75: #{simba_forward.7} parent=11 // pred_region
          %s527 = ssub.s32 16, 16
          %528 = vsyncadd [#allocation11], %s527
          %s530 = sshll.u32 [#allocation12], 4
          %s531 = int_to_ptr.vmem [resolvable:$true] %s530
          %533 = dma.hbm_to_vmem [thread:$0]  %s16, 16, %s531, [#allocation11]
        $region76: #{simba_forward.7} parent=11 // pred_fallthru
          _
      $region12: #{simba_forward.7} parent=5 // pred_fallthru
        _
      %p534 = scmp.lt.s32.totalorder %s27, 2
      // Predicated region
      $region77: #{simba_forward.7} parent=5 // pred_check
        %p535 = pneg %p534
      $region78: #{simba_forward.7} parent=5 // pred_check_branch
        %537 = sbr.rel (%p535) target = $region80
      $region79: #{simba_forward.7} parent=5 // pred_region
        // Predicated region
        $region81: #{simba_forward.7} parent=79 // pred_check
          %p538 = pneg %p47
        $region82: #{simba_forward.7} parent=79 // pred_check_branch
          %540 = sbr.rel (%p538) target = $region84
        $region83: #{simba_forward.7} parent=79 // pred_region
          %p541 = scmp.lt.s32.totalorder %s27, 1
          %s542 = scalar_select %p541, %s27, 1
          %s543 = smul.addr %s542, 4
          %s544 = scalar_lea.vmem %s0, %s543
        $region84: #{simba_forward.7} parent=79 // pred_fallthru
          _
      $region80: #{simba_forward.7} parent=5 // pred_fallthru
        _
      %p545 = scmp.le.s32.totalorder 1, %s27
      %p546 = scmp.lt.s32.totalorder %s27, 3
      %p547 = pnand %p545, %p546
      %p548 = pneg %p547
      // Predicated region
      $region85: #{simba_forward.7} parent=5 // pred_check
        _
      $region86: #{simba_forward.7} parent=5 // pred_check_branch
        %550 = sbr.rel (%p547) target = $region88
      $region87: #{simba_forward.7} parent=5 // pred_region
        %s551 = ssub.s32 %s27, 1
        // Predicated region
        $region89: #{simba_forward.7} parent=87 // pred_check
          %p552 = pneg %p179
        $region90: #{simba_forward.7} parent=87 // pred_check_branch
          %554 = sbr.rel (%p552) target = $region92
        $region91: #{simba_forward.7} parent=87 // pred_region
          %555 = dma.done [#allocation3], 16
        $region92: #{simba_forward.7} parent=87 // pred_fallthru
          _
        // Predicated region
        $region93: #{simba_forward.7} parent=87 // pred_check
          %p556 = pneg %p221
        $region94: #{simba_forward.7} parent=87 // pred_check_branch
          %558 = sbr.rel (%p556) target = $region96
        $region95: #{simba_forward.7} parent=87 // pred_region
          %559 = dma.done [#allocation5], 16
        $region96: #{simba_forward.7} parent=87 // pred_fallthru
          _
        // Predicated region
        $region97: #{simba_forward.7} parent=87 // pred_check
          %p560 = pneg %p263
        $region98: #{simba_forward.7} parent=87 // pred_check_branch
          %562 = sbr.rel (%p560) target = $region100
        $region99: #{simba_forward.7} parent=87 // pred_region
          %563 = dma.done [#allocation5], 16
        $region100: #{simba_forward.7} parent=87 // pred_fallthru
          _
        // Predicated region
        $region101: #{simba_forward.7} parent=87 // pred_check
          %p564 = pneg %p284
        $region102: #{simba_forward.7} parent=87 // pred_check_branch
          %566 = sbr.rel (%p564) target = $region104
        $region103: #{simba_forward.7} parent=87 // pred_region
          %567 = dma.done [#allocation8], 16
        $region104: #{simba_forward.7} parent=87 // pred_fallthru
          _
        // Predicated region
        $region105: #{simba_forward.7} parent=87 // pred_check
          %p568 = pneg %p305
        $region106: #{simba_forward.7} parent=87 // pred_check_branch
          %570 = sbr.rel (%p568) target = $region108
        $region107: #{simba_forward.7} parent=87 // pred_region
          %571 = dma.done [#allocation8], 16
        $region108: #{simba_forward.7} parent=87 // pred_fallthru
          _
        // Predicated region
        $region109: #{simba_forward.7} parent=87 // pred_check
          %p572 = pneg %p347
        $region110: #{simba_forward.7} parent=87 // pred_check_branch
          %574 = sbr.rel (%p572) target = $region112
        $region111: #{simba_forward.7} parent=87 // pred_region
          %575 = dma.done [#allocation11], 16
        $region112: #{simba_forward.7} parent=87 // pred_fallthru
          _
        // Predicated region
        $region113: #{simba_forward.7} parent=87 // pred_check
          %p576 = pneg %p389
        $region114: #{simba_forward.7} parent=87 // pred_check_branch
          %578 = sbr.rel (%p576) target = $region116
        $region115: #{simba_forward.7} parent=87 // pred_region
          %579 = dma.done [#allocation11], 16
        $region116: #{simba_forward.7} parent=87 // pred_fallthru
          _
        %p580 = scmp.lt.s32.totalorder %s32, 1
        %s581 = scalar_select %p580, %s32, 1
        %s582 = smul.addr %s581, 4
        %s583 = scalar_lea.vmem %s0, %s582
        %p584 = pneg %p53
        %p585 = pneg %p50
        %p586 = pneg %p74
        %p587 = pneg %p71
        %p588 = pneg %p95
        %p589 = pneg %p92
        %p590 = pneg %p116
        %p591 = pneg %p113
        %p592 = pneg %p137
        %p593 = pneg %p134
        %p594 = pneg %p158
        %p595 = pneg %p155
        %p596 = pneg %p179
        %p597 = pneg %p176
        %p598 = pneg %p200
        %p599 = pneg %p197
        %p600 = pneg %p221
        %p601 = pneg %p218
        %p602 = pneg %p242
        %p603 = pneg %p239
        %p604 = pneg %p263
        %p605 = pneg %p260
        %p606 = pneg %p284
        %p607 = pneg %p281
        %p608 = pneg %p305
        %p609 = pneg %p302
        %p610 = pneg %p326
        %p611 = pneg %p323
        %p612 = pneg %p347
        %p613 = pneg %p344
        %p614 = pneg %p368
        %p615 = pneg %p365
        %p616 = pneg %p389
        %p617 = pneg %p386
        %p618 = pneg %p415
        %p619 = pneg %p412
        %p620 = scmp.lt.s32.totalorder %s32, 1
        %s621 = scalar_select %p620, %s32, 1
        %s622 = smul.addr %s621, 4
        %s623 = scalar_lea.vmem %s17, %s622
        %p624 = scmp.lt.s32.totalorder %s32, 1
        %s625 = scalar_select %p624, %s32, 1
        %s626 = smul.addr %s625, 4
        %s627 = scalar_lea.vmem %s0, %s626
        %p628 = scmp.lt.s32.totalorder %s32, 1
        %s629 = scalar_select %p628, %s32, 1
        %s630 = smul.addr %s629, 4
        %s631 = scalar_lea.vmem %s17, %s630
        %v637 = vld [vmem:[%s627] sm:$0xf]
        %v638 = vunpack.c.l.bf16 %v637
        %v639 = vld [vmem:[%s1] sm:$0x1]
        %v640 = vld [vmem:[%s2] sm:$0x1]
        %641 = vadd.xlane.f32.xlu0 %v638
        %v642 = vpop.xlane.xlu0 %641
        %v643 = vmul.f32 %v642, 0.03125
        %v644 = vmul.f32 %v638, %v638
        %645 = vadd.xlane.f32.xlu0 %v644
        %v646 = vpop.xlane.xlu0 %645
        %v647 = vmul.f32 %v646, 0.03125
        %v648 = vmul.f32 %v643, %v643
        %v649 = vsub.f32 %v647, %v648
        %v650 = vmax.f32 %v649, 0.0
        %v651 = vsub.f32 %v638, %v643
        %v652 = vadd.f32 %v650, 1e-05
        %v653 = vrsqrt.pop %v652
        %v654 = vmul.f32 %v651, %v653
        %v656 = vlaneseq
        %v657 = vshrl.u32 %v656, 7
        %v658 = vsub.s32 0, %v657
        %v659 = vrot.slane %v639, %v658
        %v661 = vmul.f32 %v654, %v659
        %v663 = vlaneseq
        %v664 = vshrl.u32 %v663, 7
        %v665 = vsub.s32 0, %v664
        %v666 = vrot.slane %v640, %v665
        %v668 = vadd.f32 %v661, %v666
        %v669 = vpack.c.bf16 %v668, %v668
        %v670 = vld [vmem:[%s3] sm:$0xf]
        %v671 = vld [vmem:[%s3 + $0x4] sm:$0xf]
        %v672 = vld [vmem:[%s3 + $0x8] sm:$0xf]
        %v673 = vld [vmem:[%s3 + $0xc] sm:$0xf]
        %v674 = vld [vmem:[%s3 + $0x10] sm:$0xf]
        %v675 = vld [vmem:[%s3 + $0x14] sm:$0xf]
        %v676 = vld [vmem:[%s3 + $0x18] sm:$0xf]
        %v677 = vld [vmem:[%s3 + $0x1c] sm:$0xf]
        %v678 = vld [vmem:[%s3 + $0x20] sm:$0xf]
        %v679 = vld [vmem:[%s3 + $0x24] sm:$0xf]
        %v680 = vld [vmem:[%s3 + $0x28] sm:$0xf]
        %v681 = vld [vmem:[%s3 + $0x2c] sm:$0xf]
        %v682 = vld [vmem:[%s3 + $0x30] sm:$0xf]
        %v683 = vld [vmem:[%s3 + $0x34] sm:$0xf]
        %v684 = vld [vmem:[%s3 + $0x38] sm:$0xf]
        %v685 = vld [vmem:[%s3 + $0x3c] sm:$0xf]
        %v686 = vld [vmem:[%s4] sm:$0x1]
        %v688 = vlaneseq
        %v689 = vshrl.u32 %v688, 7
        %v690 = vsub.s32 0, %v689
        %v691 = vrot.slane %v686, %v690
        %v709 = vunpack.c.l.b16 %v670
        %v710 = vunpack.c.l.b16 %v671
        %v711 = vunpack.c.l.b16 %v672
        %v712 = vunpack.c.l.b16 %v673
        %v713 = vunpack.c.l.b16 %v674
        %v714 = vunpack.c.l.b16 %v675
        %v715 = vunpack.c.l.b16 %v676
        %v716 = vunpack.c.l.b16 %v677
        %v717 = vunpack.c.l.b16 %v678
        %v718 = vunpack.c.l.b16 %v679
        %v719 = vunpack.c.l.b16 %v680
        %v720 = vunpack.c.l.b16 %v681
        %v721 = vunpack.c.l.b16 %v682
        %v722 = vunpack.c.l.b16 %v683
        %v723 = vunpack.c.l.b16 %v684
        %v724 = vunpack.c.l.b16 %v685
        %v725 = vpack.c.b16 %v710, %v709
        %v726 = vpack.c.b16 %v712, %v711
        %v727 = vpack.c.b16 %v714, %v713
        %v728 = vpack.c.b16 %v716, %v715
        %v729 = vpack.c.b16 %v718, %v717
        %v730 = vpack.c.b16 %v720, %v719
        %v731 = vpack.c.b16 %v722, %v721
        %v732 = vpack.c.b16 %v724, %v723
        %741 = vmatprep.subr.bf16.mxu0 0
        %742 = vmatpush1.bf16.msra.mxu0 %v725
        %743 = vmatprep.subr.bf16.mxu0 0
        %744 = vmatpush1.bf16.msra.mxu0 %v726
        %745 = vmatprep.subr.bf16.mxu0 0
        %746 = vmatpush1.bf16.msra.mxu0 %v727
        %747 = vmatprep.subr.bf16.mxu0 0
        %748 = vmatpush1.bf16.msra.mxu0 %v728
        %749 = vmatprep.subr.bf16.mxu0 0
        %750 = vmatpush1.bf16.msra.mxu0 %v729
        %751 = vmatprep.subr.bf16.mxu0 0
        %752 = vmatpush1.bf16.msra.mxu0 %v730
        %753 = vmatprep.subr.bf16.mxu0 0
        %754 = vmatpush1.bf16.msra.mxu0 %v731
        %755 = vmatprep.subr.bf16.mxu0 0
        %756 = vmatpush1.bf16.msra.mxu0 %v732
        %757 = vmatprep.subr.bf16.mxu0 0
        %758 = vmatpush1.bf16.msra.mxu0 0
        %759 = vmatprep.subr.bf16.mxu0 0
        %760 = vmatpush1.bf16.msra.mxu0 0
        %761 = vmatprep.subr.bf16.mxu0 0
        %762 = vmatpush1.bf16.msra.mxu0 0
        %763 = vmatprep.subr.bf16.mxu0 0
        %764 = vmatpush1.bf16.msra.mxu0 0
        %765 = vmatprep.subr.bf16.mxu0 0
        %766 = vmatpush1.bf16.msra.mxu0 0
        %767 = vmatprep.subr.bf16.mxu0 0
        %768 = vmatpush1.bf16.msra.mxu0 0
        %769 = vmatprep.subr.bf16.mxu0 0
        %770 = vmatpush1.bf16.msra.mxu0 0
        %771 = vmatprep.subr.bf16.mxu0 0
        %772 = vmatpush1.bf16.msra.mxu0 0
        %773 = vmatprep.mubr.bf16.mxu0 0
        %774 = vmatmul.mubr.bf16.gmra.mrb[0].mxu0 %v669
        %v775 = vpop.f32.mrb[0].mxu0
        %v776 = vadd.f32 %v691, %v775
        %v777 = vpop.f32.mrb[0].mxu0
        %v778 = vpop.f32.mrb[0].mxu0
        %v779 = vpop.f32.mrb[0].mxu0
        %780 = vdwg.mxu0
        %v781 = vld [vmem:[%s5] sm:$0x1]
        %v782 = vld [vmem:[#allocation2] sm:$0x1]
        %783 = vadd.xlane.f32.xlu0 %v776
        %v784 = vpop.xlane.xlu0 %783
        %v785 = vmul.f32 %v784, 0.020833334
        %v786 = vmul.f32 %v776, %v776
        %787 = vadd.xlane.f32.xlu0 %v786
        %v788 = vpop.xlane.xlu0 %787
        %v789 = vmul.f32 %v788, 0.020833334
        %v790 = vmul.f32 %v785, %v785
        %v791 = vsub.f32 %v789, %v790
        %v792 = vmax.f32 %v791, 0.0
        %v793 = vsub.f32 %v776, %v785
        %v794 = vadd.f32 %v792, 1e-05
        %v795 = vrsqrt.pop %v794
        %v796 = vmul.f32 %v793, %v795
        %v798 = vlaneseq
        %v799 = vshrl.u32 %v798, 7
        %v800 = vsub.s32 0, %v799
        %v801 = vrot.slane %v781, %v800
        %v803 = vmul.f32 %v796, %v801
        %v805 = vlaneseq
        %v806 = vshrl.u32 %v805, 7
        %v807 = vsub.s32 0, %v806
        %v808 = vrot.slane %v782, %v807
        %v810 = vadd.f32 %v803, %v808
        %v811 = vpack.c.bf16 %v810, %v810
        %v812 = vld [vmem:[%s7] sm:$0xf]
        %v813 = vld [vmem:[%s7 + $0x4] sm:$0xf]
        %v814 = vld [vmem:[%s7 + $0x8] sm:$0xf]
        %v815 = vld [vmem:[%s7 + $0xc] sm:$0xf]
        %v816 = vld [vmem:[%s7 + $0x10] sm:$0xf]
        %v817 = vld [vmem:[%s7 + $0x14] sm:$0xf]
        %v818 = vld [vmem:[%s7 + $0x18] sm:$0xf]
        %v819 = vld [vmem:[%s7 + $0x1c] sm:$0xf]
        %v820 = vld [vmem:[%s7 + $0x20] sm:$0xf]
        %v821 = vld [vmem:[%s7 + $0x24] sm:$0xf]
        %v822 = vld [vmem:[%s7 + $0x28] sm:$0xf]
        %v823 = vld [vmem:[%s7 + $0x2c] sm:$0xf]
        %v824 = vld [vmem:[%s7 + $0x30] sm:$0xf]
        %v825 = vld [vmem:[%s7 + $0x34] sm:$0xf]
        %v826 = vld [vmem:[%s7 + $0x38] sm:$0xf]
        %v827 = vld [vmem:[%s7 + $0x3c] sm:$0xf]
        %v828 = vld [vmem:[#allocation4] sm:$0x1]
        %v830 = vlaneseq
        %v831 = vshrl.u32 %v830, 7
        %v832 = vsub.s32 0, %v831
        %v833 = vrot.slane %v828, %v832
        %v851 = vunpack.c.l.b16 %v812
        %v852 = vunpack.c.l.b16 %v813
        %v853 = vunpack.c.l.b16 %v814
        %v854 = vunpack.c.l.b16 %v815
        %v855 = vunpack.c.l.b16 %v816
        %v856 = vunpack.c.l.b16 %v817
        %v857 = vunpack.c.l.b16 %v818
        %v858 = vunpack.c.l.b16 %v819
        %v859 = vunpack.c.l.b16 %v820
        %v860 = vunpack.c.l.b16 %v821
        %v861 = vunpack.c.l.b16 %v822
        %v862 = vunpack.c.l.b16 %v823
        %v863 = vunpack.c.l.b16 %v824
        %v864 = vunpack.c.l.b16 %v825
        %v865 = vunpack.c.l.b16 %v826
        %v866 = vunpack.c.l.b16 %v827
        %v867 = vpack.c.b16 %v852, %v851
        %v868 = vpack.c.b16 %v854, %v853
        %v869 = vpack.c.b16 %v856, %v855
        %v870 = vpack.c.b16 %v858, %v857
        %v871 = vpack.c.b16 %v860, %v859
        %v872 = vpack.c.b16 %v862, %v861
        %v873 = vpack.c.b16 %v864, %v863
        %v874 = vpack.c.b16 %v866, %v865
        %883 = vmatprep.subr.bf16.mxu0 0
        %884 = vmatpush1.bf16.msra.mxu0 %v867
        %885 = vmatprep.subr.bf16.mxu0 0
        %886 = vmatpush1.bf16.msra.mxu0 %v868
        %887 = vmatprep.subr.bf16.mxu0 0
        %888 = vmatpush1.bf16.msra.mxu0 %v869
        %889 = vmatprep.subr.bf16.mxu0 0
        %890 = vmatpush1.bf16.msra.mxu0 %v870
        %891 = vmatprep.subr.bf16.mxu0 0
        %892 = vmatpush1.bf16.msra.mxu0 %v871
        %893 = vmatprep.subr.bf16.mxu0 0
        %894 = vmatpush1.bf16.msra.mxu0 %v872
        %895 = vmatprep.subr.bf16.mxu0 0
        %896 = vmatpush1.bf16.msra.mxu0 %v873
        %897 = vmatprep.subr.bf16.mxu0 0
        %898 = vmatpush1.bf16.msra.mxu0 %v874
        %899 = vmatprep.subr.bf16.mxu0 0
        %900 = vmatpush1.bf16.msra.mxu0 0
        %901 = vmatprep.subr.bf16.mxu0 0
        %902 = vmatpush1.bf16.msra.mxu0 0
        %903 = vmatprep.subr.bf16.mxu0 0
        %904 = vmatpush1.bf16.msra.mxu0 0
        %905 = vmatprep.subr.bf16.mxu0 0
        %906 = vmatpush1.bf16.msra.mxu0 0
        %907 = vmatprep.subr.bf16.mxu0 0
        %908 = vmatpush1.bf16.msra.mxu0 0
        %909 = vmatprep.subr.bf16.mxu0 0
        %910 = vmatpush1.bf16.msra.mxu0 0
        %911 = vmatprep.subr.bf16.mxu0 0
        %912 = vmatpush1.bf16.msra.mxu0 0
        %913 = vmatprep.subr.bf16.mxu0 0
        %914 = vmatpush1.bf16.msra.mxu0 0
        %915 = vmatprep.mubr.bf16.mxu0 0
        %916 = vmatmul.mubr.bf16.gmra.mrb[0].mxu0 %v811
        %v917 = vpop.f32.mrb[0].mxu0
        %v918 = vadd.f32 %v833, %v917
        %v919 = vpop.f32.mrb[0].mxu0
        %v920 = vpop.f32.mrb[0].mxu0
        %v921 = vpop.f32.mrb[0].mxu0
        %922 = vdwg.mxu0
        %v923 = vpack.c.bf16 %v918, %v918
        %v924 = vmul.bf16 %v923, %v923
        %v925 = vmul.bf16 %v923, %v924
        %v926 = vmul.bf16 %v925, 1027030327
        %v927 = vadd.bf16 %v923, %v926
        %v928 = vmul.bf16 %v927, 1061961548
        %v929 = vtanh.bf16.pop %v928
        %v930 = vadd.bf16 %v929, 1065369472
        %v931 = vmul.bf16 %v930, 1056980736
        %v932 = vmul.bf16 %v923, %v931
        %v933 = vld [vmem:[%s9] sm:$0xf]
        %v934 = vld [vmem:[%s9 + $0x4] sm:$0xf]
        %v935 = vld [vmem:[%s9 + $0x8] sm:$0xf]
        %v936 = vld [vmem:[%s9 + $0xc] sm:$0xf]
        %v937 = vld [vmem:[%s9 + $0x10] sm:$0xf]
        %v938 = vld [vmem:[%s9 + $0x14] sm:$0xf]
        %v939 = vld [vmem:[%s9 + $0x18] sm:$0xf]
        %v940 = vld [vmem:[%s9 + $0x1c] sm:$0xf]
        %v941 = vld [vmem:[%s9 + $0x20] sm:$0xf]
        %v942 = vld [vmem:[%s9 + $0x24] sm:$0xf]
        %v943 = vld [vmem:[%s9 + $0x28] sm:$0xf]
        %v944 = vld [vmem:[%s9 + $0x2c] sm:$0xf]
        %v945 = vld [vmem:[%s9 + $0x30] sm:$0xf]
        %v946 = vld [vmem:[%s9 + $0x34] sm:$0xf]
        %v947 = vld [vmem:[%s9 + $0x38] sm:$0xf]
        %v948 = vld [vmem:[%s9 + $0x3c] sm:$0xf]
        %v949 = vld [vmem:[#allocation6] sm:$0x1]
        %v951 = vlaneseq
        %v952 = vshrl.u32 %v951, 7
        %v953 = vsub.s32 0, %v952
        %v954 = vrot.slane %v949, %v953
        %v972 = vunpack.c.l.b16 %v933
        %v973 = vunpack.c.l.b16 %v934
        %v974 = vunpack.c.l.b16 %v935
        %v975 = vunpack.c.l.b16 %v936
        %v976 = vunpack.c.l.b16 %v937
        %v977 = vunpack.c.l.b16 %v938
        %v978 = vunpack.c.l.b16 %v939
        %v979 = vunpack.c.l.b16 %v940
        %v980 = vunpack.c.l.b16 %v941
        %v981 = vunpack.c.l.b16 %v942
        %v982 = vunpack.c.l.b16 %v943
        %v983 = vunpack.c.l.b16 %v944
        %v984 = vunpack.c.l.b16 %v945
        %v985 = vunpack.c.l.b16 %v946
        %v986 = vunpack.c.l.b16 %v947
        %v987 = vunpack.c.l.b16 %v948
        %v988 = vpack.c.b16 %v973, %v972
        %v989 = vpack.c.b16 %v975, %v974
        %v990 = vpack.c.b16 %v977, %v976
        %v991 = vpack.c.b16 %v979, %v978
        %v992 = vpack.c.b16 %v981, %v980
        %v993 = vpack.c.b16 %v983, %v982
        %v994 = vpack.c.b16 %v985, %v984
        %v995 = vpack.c.b16 %v987, %v986
        %1004 = vmatprep.subr.bf16.mxu0 0
        %1005 = vmatpush1.bf16.msra.mxu0 %v988
        %1006 = vmatprep.subr.bf16.mxu0 0
        %1007 = vmatpush1.bf16.msra.mxu0 %v989
        %1008 = vmatprep.subr.bf16.mxu0 0
        %1009 = vmatpush1.bf16.msra.mxu0 %v990
        %1010 = vmatprep.subr.bf16.mxu0 0
        %1011 = vmatpush1.bf16.msra.mxu0 %v991
        %1012 = vmatprep.subr.bf16.mxu0 0
        %1013 = vmatpush1.bf16.msra.mxu0 %v992
        %1014 = vmatprep.subr.bf16.mxu0 0
        %1015 = vmatpush1.bf16.msra.mxu0 %v993
        %1016 = vmatprep.subr.bf16.mxu0 0
        %1017 = vmatpush1.bf16.msra.mxu0 %v994
        %1018 = vmatprep.subr.bf16.mxu0 0
        %1019 = vmatpush1.bf16.msra.mxu0 %v995
        %1020 = vmatprep.subr.bf16.mxu0 0
        %1021 = vmatpush1.bf16.msra.mxu0 0
        %1022 = vmatprep.subr.bf16.mxu0 0
        %1023 = vmatpush1.bf16.msra.mxu0 0
        %1024 = vmatprep.subr.bf16.mxu0 0
        %1025 = vmatpush1.bf16.msra.mxu0 0
        %1026 = vmatprep.subr.bf16.mxu0 0
        %1027 = vmatpush1.bf16.msra.mxu0 0
        %1028 = vmatprep.subr.bf16.mxu0 0
        %1029 = vmatpush1.bf16.msra.mxu0 0
        %1030 = vmatprep.subr.bf16.mxu0 0
        %1031 = vmatpush1.bf16.msra.mxu0 0
        %1032 = vmatprep.subr.bf16.mxu0 0
        %1033 = vmatpush1.bf16.msra.mxu0 0
        %1034 = vmatprep.subr.bf16.mxu0 0
        %1035 = vmatpush1.bf16.msra.mxu0 0
        %1036 = vmatprep.mubr.bf16.mxu0 0
        %1037 = vmatmul.mubr.bf16.gmra.mrb[0].mxu0 %v932
        %v1038 = vpop.f32.mrb[0].mxu0
        %v1039 = vadd.f32 %v954, %v1038
        %v1040 = vpop.f32.mrb[0].mxu0
        %v1041 = vpop.f32.mrb[0].mxu0
        %v1042 = vpop.f32.mrb[0].mxu0
        %1043 = vdwg.mxu0
        %v1044 = vadd.f32 %v776, %v1039
        %v1045 = vld [vmem:[#allocation7] sm:$0x1]
        %v1046 = vld [vmem:[#allocation9] sm:$0x1]
        %1047 = vadd.xlane.f32.xlu0 %v1044
        %v1048 = vpop.xlane.xlu0 %1047
        %v1049 = vmul.f32 %v1048, 0.020833334
        %v1050 = vmul.f32 %v1044, %v1044
        %1051 = vadd.xlane.f32.xlu0 %v1050
        %v1052 = vpop.xlane.xlu0 %1051
        %v1053 = vmul.f32 %v1052, 0.020833334
        %v1054 = vmul.f32 %v1049, %v1049
        %v1055 = vsub.f32 %v1053, %v1054
        %v1056 = vmax.f32 %v1055, 0.0
        %v1057 = vsub.f32 %v1044, %v1049
        %v1058 = vadd.f32 %v1056, 1e-05
        %v1059 = vrsqrt.pop %v1058
        %v1060 = vmul.f32 %v1057, %v1059
        %v1062 = vlaneseq
        %v1063 = vshrl.u32 %v1062, 7
        %v1064 = vsub.s32 0, %v1063
        %v1065 = vrot.slane %v1045, %v1064
        %v1067 = vmul.f32 %v1060, %v1065
        %v1069 = vlaneseq
        %v1070 = vshrl.u32 %v1069, 7
        %v1071 = vsub.s32 0, %v1070
        %v1072 = vrot.slane %v1046, %v1071
        %v1074 = vadd.f32 %v1067, %v1072
        %v1075 = vpack.c.bf16 %v1074, %v1074
        %v1076 = vld [vmem:[%s13] sm:$0xf]
        %v1077 = vld [vmem:[%s13 + $0x4] sm:$0xf]
        %v1078 = vld [vmem:[%s13 + $0x8] sm:$0xf]
        %v1079 = vld [vmem:[%s13 + $0xc] sm:$0xf]
        %v1080 = vld [vmem:[%s13 + $0x10] sm:$0xf]
        %v1081 = vld [vmem:[%s13 + $0x14] sm:$0xf]
        %v1082 = vld [vmem:[%s13 + $0x18] sm:$0xf]
        %v1083 = vld [vmem:[%s13 + $0x1c] sm:$0xf]
        %v1084 = vld [vmem:[%s13 + $0x20] sm:$0xf]
        %v1085 = vld [vmem:[%s13 + $0x24] sm:$0xf]
        %v1086 = vld [vmem:[%s13 + $0x28] sm:$0xf]
        %v1087 = vld [vmem:[%s13 + $0x2c] sm:$0xf]
        %v1088 = vld [vmem:[%s13 + $0x30] sm:$0xf]
        %v1089 = vld [vmem:[%s13 + $0x34] sm:$0xf]
        %v1090 = vld [vmem:[%s13 + $0x38] sm:$0xf]
        %v1091 = vld [vmem:[%s13 + $0x3c] sm:$0xf]
        %v1092 = vld [vmem:[#allocation10] sm:$0x1]
        %v1094 = vlaneseq
        %v1095 = vshrl.u32 %v1094, 7
        %v1096 = vsub.s32 0, %v1095
        %v1097 = vrot.slane %v1092, %v1096
        %v1115 = vunpack.c.l.b16 %v1076
        %v1116 = vunpack.c.l.b16 %v1077
        %v1117 = vunpack.c.l.b16 %v1078
        %v1118 = vunpack.c.l.b16 %v1079
        %v1119 = vunpack.c.l.b16 %v1080
        %v1120 = vunpack.c.l.b16 %v1081
        %v1121 = vunpack.c.l.b16 %v1082
        %v1122 = vunpack.c.l.b16 %v1083
        %v1123 = vunpack.c.l.b16 %v1084
        %v1124 = vunpack.c.l.b16 %v1085
        %v1125 = vunpack.c.l.b16 %v1086
        %v1126 = vunpack.c.l.b16 %v1087
        %v1127 = vunpack.c.l.b16 %v1088
        %v1128 = vunpack.c.l.b16 %v1089
        %v1129 = vunpack.c.l.b16 %v1090
        %v1130 = vunpack.c.l.b16 %v1091
        %v1131 = vpack.c.b16 %v1116, %v1115
        %v1132 = vpack.c.b16 %v1118, %v1117
        %v1133 = vpack.c.b16 %v1120, %v1119
        %v1134 = vpack.c.b16 %v1122, %v1121
        %v1135 = vpack.c.b16 %v1124, %v1123
        %v1136 = vpack.c.b16 %v1126, %v1125
        %v1137 = vpack.c.b16 %v1128, %v1127
        %v1138 = vpack.c.b16 %v1130, %v1129
        %1147 = vmatprep.subr.bf16.mxu0 0
        %1148 = vmatpush1.bf16.msra.mxu0 %v1131
        %1149 = vmatprep.subr.bf16.mxu0 0
        %1150 = vmatpush1.bf16.msra.mxu0 %v1132
        %1151 = vmatprep.subr.bf16.mxu0 0
        %1152 = vmatpush1.bf16.msra.mxu0 %v1133
        %1153 = vmatprep.subr.bf16.mxu0 0
        %1154 = vmatpush1.bf16.msra.mxu0 %v1134
        %1155 = vmatprep.subr.bf16.mxu0 0
        %1156 = vmatpush1.bf16.msra.mxu0 %v1135
        %1157 = vmatprep.subr.bf16.mxu0 0
        %1158 = vmatpush1.bf16.msra.mxu0 %v1136
        %1159 = vmatprep.subr.bf16.mxu0 0
        %1160 = vmatpush1.bf16.msra.mxu0 %v1137
        %1161 = vmatprep.subr.bf16.mxu0 0
        %1162 = vmatpush1.bf16.msra.mxu0 %v1138
        %1163 = vmatprep.subr.bf16.mxu0 0
        %1164 = vmatpush1.bf16.msra.mxu0 0
        %1165 = vmatprep.subr.bf16.mxu0 0
        %1166 = vmatpush1.bf16.msra.mxu0 0
        %1167 = vmatprep.subr.bf16.mxu0 0
        %1168 = vmatpush1.bf16.msra.mxu0 0
        %1169 = vmatprep.subr.bf16.mxu0 0
        %1170 = vmatpush1.bf16.msra.mxu0 0
        %1171 = vmatprep.subr.bf16.mxu0 0
        %1172 = vmatpush1.bf16.msra.mxu0 0
        %1173 = vmatprep.subr.bf16.mxu0 0
        %1174 = vmatpush1.bf16.msra.mxu0 0
        %1175 = vmatprep.subr.bf16.mxu0 0
        %1176 = vmatpush1.bf16.msra.mxu0 0
        %1177 = vmatprep.subr.bf16.mxu0 0
        %1178 = vmatpush1.bf16.msra.mxu0 0
        %1179 = vmatprep.mubr.bf16.mxu0 0
        %1180 = vmatmul.mubr.bf16.gmra.mrb[0].mxu0 %v1075
        %v1181 = vpop.f32.mrb[0].mxu0
        %v1182 = vadd.f32 %v1097, %v1181
        %v1183 = vpop.f32.mrb[0].mxu0
        %v1184 = vpop.f32.mrb[0].mxu0
        %v1185 = vpop.f32.mrb[0].mxu0
        %1186 = vdwg.mxu0
        %v1187 = vpack.c.bf16 %v1182, %v1182
        %v1188 = vmul.bf16 %v1187, %v1187
        %v1189 = vmul.bf16 %v1187, %v1188
        %v1190 = vmul.bf16 %v1189, 1027030327
        %v1191 = vadd.bf16 %v1187, %v1190
        %v1192 = vmul.bf16 %v1191, 1061961548
        %v1193 = vtanh.bf16.pop %v1192
        %v1194 = vadd.bf16 %v1193, 1065369472
        %v1195 = vmul.bf16 %v1194, 1056980736
        %v1196 = vmul.bf16 %v1187, %v1195
        %v1197 = vld [vmem:[%s15] sm:$0xf]
        %v1198 = vld [vmem:[%s15 + $0x4] sm:$0xf]
        %v1199 = vld [vmem:[%s15 + $0x8] sm:$0xf]
        %v1200 = vld [vmem:[%s15 + $0xc] sm:$0xf]
        %v1201 = vld [vmem:[%s15 + $0x10] sm:$0xf]
        %v1202 = vld [vmem:[%s15 + $0x14] sm:$0xf]
        %v1203 = vld [vmem:[%s15 + $0x18] sm:$0xf]
        %v1204 = vld [vmem:[%s15 + $0x1c] sm:$0xf]
        %v1205 = vld [vmem:[%s15 + $0x20] sm:$0xf]
        %v1206 = vld [vmem:[%s15 + $0x24] sm:$0xf]
        %v1207 = vld [vmem:[%s15 + $0x28] sm:$0xf]
        %v1208 = vld [vmem:[%s15 + $0x2c] sm:$0xf]
        %v1209 = vld [vmem:[%s15 + $0x30] sm:$0xf]
        %v1210 = vld [vmem:[%s15 + $0x34] sm:$0xf]
        %v1211 = vld [vmem:[%s15 + $0x38] sm:$0xf]
        %v1212 = vld [vmem:[%s15 + $0x3c] sm:$0xf]
        %v1213 = vld [vmem:[#allocation12] sm:$0x1]
        %v1215 = vlaneseq
        %v1216 = vshrl.u32 %v1215, 7
        %v1217 = vsub.s32 0, %v1216
        %v1218 = vrot.slane %v1213, %v1217
        %v1236 = vunpack.c.l.b16 %v1197
        %v1237 = vunpack.c.l.b16 %v1198
        %v1238 = vunpack.c.l.b16 %v1199
        %v1239 = vunpack.c.l.b16 %v1200
        %v1240 = vunpack.c.l.b16 %v1201
        %v1241 = vunpack.c.l.b16 %v1202
        %v1242 = vunpack.c.l.b16 %v1203
        %v1243 = vunpack.c.l.b16 %v1204
        %v1244 = vunpack.c.l.b16 %v1205
        %v1245 = vunpack.c.l.b16 %v1206
        %v1246 = vunpack.c.l.b16 %v1207
        %v1247 = vunpack.c.l.b16 %v1208
        %v1248 = vunpack.c.l.b16 %v1209
        %v1249 = vunpack.c.l.b16 %v1210
        %v1250 = vunpack.c.l.b16 %v1211
        %v1251 = vunpack.c.l.b16 %v1212
        %v1252 = vpack.c.b16 %v1237, %v1236
        %v1253 = vpack.c.b16 %v1239, %v1238
        %v1254 = vpack.c.b16 %v1241, %v1240
        %v1255 = vpack.c.b16 %v1243, %v1242
        %v1256 = vpack.c.b16 %v1245, %v1244
        %v1257 = vpack.c.b16 %v1247, %v1246
        %v1258 = vpack.c.b16 %v1249, %v1248
        %v1259 = vpack.c.b16 %v1251, %v1250
        %1268 = vmatprep.subr.bf16.mxu0 0
        %1269 = vmatpush1.bf16.msra.mxu0 %v1252
        %1270 = vmatprep.subr.bf16.mxu0 0
        %1271 = vmatpush1.bf16.msra.mxu0 %v1253
        %1272 = vmatprep.subr.bf16.mxu0 0
        %1273 = vmatpush1.bf16.msra.mxu0 %v1254
        %1274 = vmatprep.subr.bf16.mxu0 0
        %1275 = vmatpush1.bf16.msra.mxu0 %v1255
        %1276 = vmatprep.subr.bf16.mxu0 0
        %1277 = vmatpush1.bf16.msra.mxu0 %v1256
        %1278 = vmatprep.subr.bf16.mxu0 0
        %1279 = vmatpush1.bf16.msra.mxu0 %v1257
        %1280 = vmatprep.subr.bf16.mxu0 0
        %1281 = vmatpush1.bf16.msra.mxu0 %v1258
        %1282 = vmatprep.subr.bf16.mxu0 0
        %1283 = vmatpush1.bf16.msra.mxu0 %v1259
        %1284 = vmatprep.subr.bf16.mxu0 0
        %1285 = vmatpush1.bf16.msra.mxu0 0
        %1286 = vmatprep.subr.bf16.mxu0 0
        %1287 = vmatpush1.bf16.msra.mxu0 0
        %1288 = vmatprep.subr.bf16.mxu0 0
        %1289 = vmatpush1.bf16.msra.mxu0 0
        %1290 = vmatprep.subr.bf16.mxu0 0
        %1291 = vmatpush1.bf16.msra.mxu0 0
        %1292 = vmatprep.subr.bf16.mxu0 0
        %1293 = vmatpush1.bf16.msra.mxu0 0
        %1294 = vmatprep.subr.bf16.mxu0 0
        %1295 = vmatpush1.bf16.msra.mxu0 0
        %1296 = vmatprep.subr.bf16.mxu0 0
        %1297 = vmatpush1.bf16.msra.mxu0 0
        %1298 = vmatprep.subr.bf16.mxu0 0
        %1299 = vmatpush1.bf16.msra.mxu0 0
        %1300 = vmatprep.mubr.bf16.mxu0 0
        %1301 = vmatmul.mubr.bf16.gmra.mrb[0].mxu0 %v1196
        %v1302 = vpop.f32.mrb[0].mxu0
        %v1303 = vadd.f32 %v1218, %v1302
        %v1304 = vpop.f32.mrb[0].mxu0
        %v1305 = vpop.f32.mrb[0].mxu0
        %v1306 = vpop.f32.mrb[0].mxu0
        %1307 = vdwg.mxu0
        %v1308 = vadd.f32 %v1044, %v1303
        %v1309 = vpack.c.bf16 %v1308, %v1308
        %1310 = vst [vmem:[%s631] sm:$0xf] %v1309
        %p1311 = scmp.lt.s32.totalorder %s32, 1
        %s1312 = scalar_select %p1311, %s32, 1
        %s1313 = smul.addr %s1312, 4
        %s1314 = scalar_lea.vmem %s17, %s1313
        // Predicated region
        $region117: #{simba_forward.7} parent=87 // pred_check
          %p1315 = pneg %p412
        $region118: #{simba_forward.7} parent=87 // pred_check_branch
          %1317 = sbr.rel (%p1315) target = $region120
        $region119: #{simba_forward.7} parent=87 // pred_region
          _
        $region120: #{simba_forward.7} parent=87 // pred_fallthru
          _
      $region88: #{simba_forward.7} parent=5 // pred_fallthru
        _
      %p1318 = scmp.le.s32.totalorder 2, %s27
      // Predicated region
      $region121: #{simba_forward.7} parent=5 // pred_check
        %p1319 = pneg %p1318
      $region122: #{simba_forward.7} parent=5 // pred_check_branch
        %1321 = sbr.rel (%p1319) target = $region124
      $region123: #{simba_forward.7} parent=5 // pred_region
        %s1322 = ssub.s32 %s27, 2
        // Predicated region
        $region125: #{simba_forward.7} parent=123 // pred_check
          %p1323 = pneg %p418
        $region126: #{simba_forward.7} parent=123 // pred_check_branch
          %1325 = sbr.rel (%p1323) target = $region128
        $region127: #{simba_forward.7} parent=123 // pred_region
          %p1326 = scmp.lt.s32.totalorder %s33, 1
          %s1327 = scalar_select %p1326, %s33, 1
          %s1328 = smul.addr %s1327, 4
          %s1329 = scalar_lea.vmem %s17, %s1328
        $region128: #{simba_forward.7} parent=123 // pred_fallthru
          _
      $region124: #{simba_forward.7} parent=5 // pred_fallthru
        _
    $region6: #{simba_forward.7} parent=1 // loop_footer
      %s31 = sadd.s32 1, %s27
    $region7: #{simba_forward.7} parent=1 // loop_footer_branch
      %26 = sbr.rel target = $region3
    $region8: #{simba_forward.7} parent=1 // loop_exit
      _
    %1330 = vsyncpa [#allocation3], 1
    %s1331 = scalar_lea.sflag [#allocation3], 1
    %1332 = vsyncpa %s1331, 1
    %1333 = vsyncpa [#allocation5], 1
    %1334 = vsyncpa [#allocation8], 1
    %1335 = vsyncpa [#allocation11], 1

// kernel: simba_forward.6
$region0: #{simba_forward.6}
  #allocation0 [shape = 'u32[]', space=smem, size = 0x4, offset = 0x4, fixed_abs, tag = 'smem constant byte address 0x4 - core index']
  #allocation1 [shape = 'u32[144,128]{1,0:T(1,128)}', space=vmem, size = 0x12000, scoped, tag = 'internal scratch']
  %s0 = inlined_call_operand.vmem [shape: bf16[16,128], index: 0, kind: input, shape index: {}, may-alias: {0,17}]
  %s1 = inlined_call_operand.vmem [shape: f32[1,128], index: 1, kind: input, shape index: {}]
  %s2 = inlined_call_operand.vmem [shape: f32[1,128], index: 2, kind: input, shape index: {}]
  %s3 = inlined_call_operand.vmem [shape: bf16[128,128], index: 3, kind: input, shape index: {}]
  %s4 = inlined_call_operand.vmem [shape: f32[1,128], index: 4, kind: input, shape index: {}]
  %s5 = inlined_call_operand.vmem [shape: f32[1,128], index: 5, kind: input, shape index: {}]
  %s6 = inlined_call_operand.vmem [shape: f32[1,128], index: 6, kind: input, shape index: {}]
  %s7 = inlined_call_operand.vmem [shape: bf16[128,128], index: 7, kind: input, shape index: {}]
  %s8 = inlined_call_operand.vmem [shape: f32[1,128], index: 8, kind: input, shape index: {}]
  %s9 = inlined_call_operand.vmem [shape: bf16[128,128], index: 9, kind: input, shape index: {}]
  %s10 = inlined_call_operand.vmem [shape: f32[1,128], index: 10, kind: input, shape index: {}]
  %s11 = inlined_call_operand.vmem [shape: f32[1,128], index: 11, kind: input, shape index: {}]
  %s12 = inlined_call_operand.vmem [shape: f32[1,128], index: 12, kind: input, shape index: {}]
  %s13 = inlined_call_operand.vmem [shape: bf16[128,128], index: 13, kind: input, shape index: {}]
  %s14 = inlined_call_operand.vmem [shape: f32[1,128], index: 14, kind: input, shape index: {}]
  %s15 = inlined_call_operand.vmem [shape: bf16[128,128], index: 15, kind: input, shape index: {}]
  %s16 = inlined_call_operand.vmem [shape: f32[1,128], index: 16, kind: input, shape index: {}]
  %s17 = inlined_call_operand.vmem [shape: bf16[16,128], index: 17, kind: output, shape index: {}, may-alias: {0,17}]
  %s18 = sld [smem:[#allocation0]]
  $region101: #{simba_forward.6} parent=0
    _
  %s20 = ssub.s32 1, %s18
  %s21 = scalar_select 0, %s20, %s18
  loop: start=0, step=1, limit=4
  $region2: #{simba_forward.6} parent=0 // loop_pre_header
    _
  $region3: #{simba_forward.6} parent=0 // loop_header
    %s23 = sphi 0, %s27
    %p24 = scmp.ge.s32.totalorder %s23, 4
    %s33 = sphi 0, %s35
    %s36 = sphi 0, %s33
    %s37 = sphi 0, %s36
    %s53 = sphi 0, %s37
    %s57 = sphi 0, %s57
    %s59 = sphi 0, %s57
    %s60 = sphi 0, %s59
    %s74 = sphi 0, %s60
    %s78 = sphi 0, %s78
    %s80 = sphi 0, %s78
    %s81 = sphi 0, %s80
    %s95 = sphi 0, %s81
    %s99 = sphi 0, %s99
    %s101 = sphi 0, %s99
    %s102 = sphi 0, %s101
    %s116 = sphi 0, %s102
    %s120 = sphi 0, %s120
    %s122 = sphi 0, %s120
    %s123 = sphi 0, %s122
    %s137 = sphi 0, %s123
    %s141 = sphi 0, %s141
    %s143 = sphi 0, %s141
    %s144 = sphi 0, %s143
    %s158 = sphi 0, %s144
    %s162 = sphi 0, %s162
    %s164 = sphi 0, %s162
    %s165 = sphi 0, %s164
    %s179 = sphi 0, %s165
    %s183 = sphi 0, %s183
    %s185 = sphi 0, %s183
    %s186 = sphi 0, %s185
    %s200 = sphi 0, %s186
    %s204 = sphi 0, %s204
    %s206 = sphi 0, %s204
    %s207 = sphi 0, %s206
    %s221 = sphi 0, %s207
    %s225 = sphi 0, %s225
    %s227 = sphi 0, %s225
    %s228 = sphi 0, %s227
    %s242 = sphi 0, %s228
    %s246 = sphi 0, %s246
    %s248 = sphi 0, %s246
    %s249 = sphi 0, %s248
    %s263 = sphi 0, %s249
    %s267 = sphi 0, %s267
    %s269 = sphi 0, %s267
    %s270 = sphi 0, %s269
    %s284 = sphi 0, %s270
    %s288 = sphi 0, %s288
    %s290 = sphi 0, %s288
    %s291 = sphi 0, %s290
    %s305 = sphi 0, %s291
    %s309 = sphi 0, %s309
    %s311 = sphi 0, %s309
    %s312 = sphi 0, %s311
    %s326 = sphi 0, %s312
    %s330 = sphi 0, %s330
    %s332 = sphi 0, %s330
    %s333 = sphi 0, %s332
    %s347 = sphi 0, %s333
    %s351 = sphi 0, %s351
    %s353 = sphi 0, %s351
    %s354 = sphi 0, %s353
    %s368 = sphi 0, %s354
    %s372 = sphi 0, %s372
    %s374 = sphi 0, %s372
    %s375 = sphi 0, %s374
    %s389 = sphi 0, %s375
    %s395 = sphi 0, %s397
    %s398 = sphi 0, %s395
    %s399 = sphi 0, %s398
    %s415 = sphi 0, %s399
  $region4: #{simba_forward.6} parent=0 // loop_header_branch
    %26 = sbr.rel (%p24) target = $region8
  $region5: #{simba_forward.6} parent=0 // loop_body
    %s28 = ssub.s32 %s23, 1
    %s29 = ssub.s32 %s23, 2
    %s30 = sadd.s32 %s23, 1
    %s31 = ssub.s32 %s23, %s30
    %p32 = scmp.eq.s32.totalorder %s31, 0
    %s34 = sadd.s32 %s33, 1
    %s35 = scalar_select %p32, %s33, %s34
    %p38 = pneg %p32
    %p39 = scmp.eq.s32.totalorder %s23, 1
    %p40 = por %p38, %p39
    %p41 = scmp.ne.s32.totalorder %s33, %s36
    %p42 = scmp.eq.s32.totalorder %s23, 0
    %p43 = por %p41, %p42
    %p44 = scmp.ne.s32.totalorder %s33, %s36
    %p45 = scmp.eq.s32.totalorder %s28, 1
    %p46 = por %p44, %p45
    %p47 = scmp.ne.s32.totalorder %s36, %s37
    %p48 = scmp.eq.s32.totalorder %s28, 0
    %p49 = por %p47, %p48
    %p50 = scmp.ne.s32.totalorder %s36, %s37
    %p51 = scmp.eq.s32.totalorder %s29, 1
    %p52 = por %p50, %p51
    %p54 = scmp.ne.s32.totalorder %s37, %s53
    %p55 = scmp.eq.s32.totalorder %s29, 0
    %p56 = por %p54, %p55
    %s58 = sadd.s32 %s57, 1
    %p61 = scmp.eq.s32.totalorder %s23, 1
    %p62 = scmp.ne.s32.totalorder %s57, %s59
    %p63 = scmp.eq.s32.totalorder %s23, 0
    %p64 = por %p62, %p63
    %p65 = scmp.ne.s32.totalorder %s57, %s59
    %p66 = scmp.eq.s32.totalorder %s28, 1
    %p67 = por %p65, %p66
    %p68 = scmp.ne.s32.totalorder %s59, %s60
    %p69 = scmp.eq.s32.totalorder %s28, 0
    %p70 = por %p68, %p69
    %p71 = scmp.ne.s32.totalorder %s59, %s60
    %p72 = scmp.eq.s32.totalorder %s29, 1
    %p73 = por %p71, %p72
    %p75 = scmp.ne.s32.totalorder %s60, %s74
    %p76 = scmp.eq.s32.totalorder %s29, 0
    %p77 = por %p75, %p76
    %s79 = sadd.s32 %s78, 1
    %p82 = scmp.eq.s32.totalorder %s23, 1
    %p83 = scmp.ne.s32.totalorder %s78, %s80
    %p84 = scmp.eq.s32.totalorder %s23, 0
    %p85 = por %p83, %p84
    %p86 = scmp.ne.s32.totalorder %s78, %s80
    %p87 = scmp.eq.s32.totalorder %s28, 1
    %p88 = por %p86, %p87
    %p89 = scmp.ne.s32.totalorder %s80, %s81
    %p90 = scmp.eq.s32.totalorder %s28, 0
    %p91 = por %p89, %p90
    %p92 = scmp.ne.s32.totalorder %s80, %s81
    %p93 = scmp.eq.s32.totalorder %s29, 1
    %p94 = por %p92, %p93
    %p96 = scmp.ne.s32.totalorder %s81, %s95
    %p97 = scmp.eq.s32.totalorder %s29, 0
    %p98 = por %p96, %p97
    %s100 = sadd.s32 %s99, 1
    %p103 = scmp.eq.s32.totalorder %s23, 1
    %p104 = scmp.ne.s32.totalorder %s99, %s101
    %p105 = scmp.eq.s32.totalorder %s23, 0
    %p106 = por %p104, %p105
    %p107 = scmp.ne.s32.totalorder %s99, %s101
    %p108 = scmp.eq.s32.totalorder %s28, 1
    %p109 = por %p107, %p108
    %p110 = scmp.ne.s32.totalorder %s101, %s102
    %p111 = scmp.eq.s32.totalorder %s28, 0
    %p112 = por %p110, %p111
    %p113 = scmp.ne.s32.totalorder %s101, %s102
    %p114 = scmp.eq.s32.totalorder %s29, 1
    %p115 = por %p113, %p114
    %p117 = scmp.ne.s32.totalorder %s102, %s116
    %p118 = scmp.eq.s32.totalorder %s29, 0
    %p119 = por %p117, %p118
    %s121 = sadd.s32 %s120, 1
    %p124 = scmp.eq.s32.totalorder %s23, 1
    %p125 = scmp.ne.s32.totalorder %s120, %s122
    %p126 = scmp.eq.s32.totalorder %s23, 0
    %p127 = por %p125, %p126
    %p128 = scmp.ne.s32.totalorder %s120, %s122
    %p129 = scmp.eq.s32.totalorder %s28, 1
    %p130 = por %p128, %p129
    %p131 = scmp.ne.s32.totalorder %s122, %s123
    %p132 = scmp.eq.s32.totalorder %s28, 0
    %p133 = por %p131, %p132
    %p134 = scmp.ne.s32.totalorder %s122, %s123
    %p135 = scmp.eq.s32.totalorder %s29, 1
    %p136 = por %p134, %p135
    %p138 = scmp.ne.s32.totalorder %s123, %s137
    %p139 = scmp.eq.s32.totalorder %s29, 0
    %p140 = por %p138, %p139
    %s142 = sadd.s32 %s141, 1
    %p145 = scmp.eq.s32.totalorder %s23, 1
    %p146 = scmp.ne.s32.totalorder %s141, %s143
    %p147 = scmp.eq.s32.totalorder %s23, 0
    %p148 = por %p146, %p147
    %p149 = scmp.ne.s32.totalorder %s141, %s143
    %p150 = scmp.eq.s32.totalorder %s28, 1
    %p151 = por %p149, %p150
    %p152 = scmp.ne.s32.totalorder %s143, %s144
    %p153 = scmp.eq.s32.totalorder %s28, 0
    %p154 = por %p152, %p153
    %p155 = scmp.ne.s32.totalorder %s143, %s144
    %p156 = scmp.eq.s32.totalorder %s29, 1
    %p157 = por %p155, %p156
    %p159 = scmp.ne.s32.totalorder %s144, %s158
    %p160 = scmp.eq.s32.totalorder %s29, 0
    %p161 = por %p159, %p160
    %s163 = sadd.s32 %s162, 1
    %p166 = scmp.eq.s32.totalorder %s23, 1
    %p167 = scmp.ne.s32.totalorder %s162, %s164
    %p168 = scmp.eq.s32.totalorder %s23, 0
    %p169 = por %p167, %p168
    %p170 = scmp.ne.s32.totalorder %s162, %s164
    %p171 = scmp.eq.s32.totalorder %s28, 1
    %p172 = por %p170, %p171
    %p173 = scmp.ne.s32.totalorder %s164, %s165
    %p174 = scmp.eq.s32.totalorder %s28, 0
    %p175 = por %p173, %p174
    %p176 = scmp.ne.s32.totalorder %s164, %s165
    %p177 = scmp.eq.s32.totalorder %s29, 1
    %p178 = por %p176, %p177
    %p180 = scmp.ne.s32.totalorder %s165, %s179
    %p181 = scmp.eq.s32.totalorder %s29, 0
    %p182 = por %p180, %p181
    %s184 = sadd.s32 %s183, 1
    %p187 = scmp.eq.s32.totalorder %s23, 1
    %p188 = scmp.ne.s32.totalorder %s183, %s185
    %p189 = scmp.eq.s32.totalorder %s23, 0
    %p190 = por %p188, %p189
    %p191 = scmp.ne.s32.totalorder %s183, %s185
    %p192 = scmp.eq.s32.totalorder %s28, 1
    %p193 = por %p191, %p192
    %p194 = scmp.ne.s32.totalorder %s185, %s186
    %p195 = scmp.eq.s32.totalorder %s28, 0
    %p196 = por %p194, %p195
    %p197 = scmp.ne.s32.totalorder %s185, %s186
    %p198 = scmp.eq.s32.totalorder %s29, 1
    %p199 = por %p197, %p198
    %p201 = scmp.ne.s32.totalorder %s186, %s200
    %p202 = scmp.eq.s32.totalorder %s29, 0
    %p203 = por %p201, %p202
    %s205 = sadd.s32 %s204, 1
    %p208 = scmp.eq.s32.totalorder %s23, 1
    %p209 = scmp.ne.s32.totalorder %s204, %s206
    %p210 = scmp.eq.s32.totalorder %s23, 0
    %p211 = por %p209, %p210
    %p212 = scmp.ne.s32.totalorder %s204, %s206
    %p213 = scmp.eq.s32.totalorder %s28, 1
    %p214 = por %p212, %p213
    %p215 = scmp.ne.s32.totalorder %s206, %s207
    %p216 = scmp.eq.s32.totalorder %s28, 0
    %p217 = por %p215, %p216
    %p218 = scmp.ne.s32.totalorder %s206, %s207
    %p219 = scmp.eq.s32.totalorder %s29, 1
    %p220 = por %p218, %p219
    %p222 = scmp.ne.s32.totalorder %s207, %s221
    %p223 = scmp.eq.s32.totalorder %s29, 0
    %p224 = por %p222, %p223
    %s226 = sadd.s32 %s225, 1
    %p229 = scmp.eq.s32.totalorder %s23, 1
    %p230 = scmp.ne.s32.totalorder %s225, %s227
    %p231 = scmp.eq.s32.totalorder %s23, 0
    %p232 = por %p230, %p231
    %p233 = scmp.ne.s32.totalorder %s225, %s227
    %p234 = scmp.eq.s32.totalorder %s28, 1
    %p235 = por %p233, %p234
    %p236 = scmp.ne.s32.totalorder %s227, %s228
    %p237 = scmp.eq.s32.totalorder %s28, 0
    %p238 = por %p236, %p237
    %p239 = scmp.ne.s32.totalorder %s227, %s228
    %p240 = scmp.eq.s32.totalorder %s29, 1
    %p241 = por %p239, %p240
    %p243 = scmp.ne.s32.totalorder %s228, %s242
    %p244 = scmp.eq.s32.totalorder %s29, 0
    %p245 = por %p243, %p244
    %s247 = sadd.s32 %s246, 1
    %p250 = scmp.eq.s32.totalorder %s23, 1
    %p251 = scmp.ne.s32.totalorder %s246, %s248
    %p252 = scmp.eq.s32.totalorder %s23, 0
    %p253 = por %p251, %p252
    %p254 = scmp.ne.s32.totalorder %s246, %s248
    %p255 = scmp.eq.s32.totalorder %s28, 1
    %p256 = por %p254, %p255
    %p257 = scmp.ne.s32.totalorder %s248, %s249
    %p258 = scmp.eq.s32.totalorder %s28, 0
    %p259 = por %p257, %p258
    %p260 = scmp.ne.s32.totalorder %s248, %s249
    %p261 = scmp.eq.s32.totalorder %s29, 1
    %p262 = por %p260, %p261
    %p264 = scmp.ne.s32.totalorder %s249, %s263
    %p265 = scmp.eq.s32.totalorder %s29, 0
    %p266 = por %p264, %p265
    %s268 = sadd.s32 %s267, 1
    %p271 = scmp.eq.s32.totalorder %s23, 1
    %p272 = scmp.ne.s32.totalorder %s267, %s269
    %p273 = scmp.eq.s32.totalorder %s23, 0
    %p274 = por %p272, %p273
    %p275 = scmp.ne.s32.totalorder %s267, %s269
    %p276 = scmp.eq.s32.totalorder %s28, 1
    %p277 = por %p275, %p276
    %p278 = scmp.ne.s32.totalorder %s269, %s270
    %p279 = scmp.eq.s32.totalorder %s28, 0
    %p280 = por %p278, %p279
    %p281 = scmp.ne.s32.totalorder %s269, %s270
    %p282 = scmp.eq.s32.totalorder %s29, 1
    %p283 = por %p281, %p282
    %p285 = scmp.ne.s32.totalorder %s270, %s284
    %p286 = scmp.eq.s32.totalorder %s29, 0
    %p287 = por %p285, %p286
    %s289 = sadd.s32 %s288, 1
    %p292 = scmp.eq.s32.totalorder %s23, 1
    %p293 = scmp.ne.s32.totalorder %s288, %s290
    %p294 = scmp.eq.s32.totalorder %s23, 0
    %p295 = por %p293, %p294
    %p296 = scmp.ne.s32.totalorder %s288, %s290
    %p297 = scmp.eq.s32.totalorder %s28, 1
    %p298 = por %p296, %p297
    %p299 = scmp.ne.s32.totalorder %s290, %s291
    %p300 = scmp.eq.s32.totalorder %s28, 0
    %p301 = por %p299, %p300
    %p302 = scmp.ne.s32.totalorder %s290, %s291
    %p303 = scmp.eq.s32.totalorder %s29, 1
    %p304 = por %p302, %p303
    %p306 = scmp.ne.s32.totalorder %s291, %s305
    %p307 = scmp.eq.s32.totalorder %s29, 0
    %p308 = por %p306, %p307
    %s310 = sadd.s32 %s309, 1
    %p313 = scmp.eq.s32.totalorder %s23, 1
    %p314 = scmp.ne.s32.totalorder %s309, %s311
    %p315 = scmp.eq.s32.totalorder %s23, 0
    %p316 = por %p314, %p315
    %p317 = scmp.ne.s32.totalorder %s309, %s311
    %p318 = scmp.eq.s32.totalorder %s28, 1
    %p319 = por %p317, %p318
    %p320 = scmp.ne.s32.totalorder %s311, %s312
    %p321 = scmp.eq.s32.totalorder %s28, 0
    %p322 = por %p320, %p321
    %p323 = scmp.ne.s32.totalorder %s311, %s312
    %p324 = scmp.eq.s32.totalorder %s29, 1
    %p325 = por %p323, %p324
    %p327 = scmp.ne.s32.totalorder %s312, %s326
    %p328 = scmp.eq.s32.totalorder %s29, 0
    %p329 = por %p327, %p328
    %s331 = sadd.s32 %s330, 1
    %p334 = scmp.eq.s32.totalorder %s23, 1
    %p335 = scmp.ne.s32.totalorder %s330, %s332
    %p336 = scmp.eq.s32.totalorder %s23, 0
    %p337 = por %p335, %p336
    %p338 = scmp.ne.s32.totalorder %s330, %s332
    %p339 = scmp.eq.s32.totalorder %s28, 1
    %p340 = por %p338, %p339
    %p341 = scmp.ne.s32.totalorder %s332, %s333
    %p342 = scmp.eq.s32.totalorder %s28, 0
    %p343 = por %p341, %p342
    %p344 = scmp.ne.s32.totalorder %s332, %s333
    %p345 = scmp.eq.s32.totalorder %s29, 1
    %p346 = por %p344, %p345
    %p348 = scmp.ne.s32.totalorder %s333, %s347
    %p349 = scmp.eq.s32.totalorder %s29, 0
    %p350 = por %p348, %p349
    %s352 = sadd.s32 %s351, 1
    %p355 = scmp.eq.s32.totalorder %s23, 1
    %p356 = scmp.ne.s32.totalorder %s351, %s353
    %p357 = scmp.eq.s32.totalorder %s23, 0
    %p358 = por %p356, %p357
    %p359 = scmp.ne.s32.totalorder %s351, %s353
    %p360 = scmp.eq.s32.totalorder %s28, 1
    %p361 = por %p359, %p360
    %p362 = scmp.ne.s32.totalorder %s353, %s354
    %p363 = scmp.eq.s32.totalorder %s28, 0
    %p364 = por %p362, %p363
    %p365 = scmp.ne.s32.totalorder %s353, %s354
    %p366 = scmp.eq.s32.totalorder %s29, 1
    %p367 = por %p365, %p366
    %p369 = scmp.ne.s32.totalorder %s354, %s368
    %p370 = scmp.eq.s32.totalorder %s29, 0
    %p371 = por %p369, %p370
    %s373 = sadd.s32 %s372, 1
    %p376 = scmp.eq.s32.totalorder %s23, 1
    %p377 = scmp.ne.s32.totalorder %s372, %s374
    %p378 = scmp.eq.s32.totalorder %s23, 0
    %p379 = por %p377, %p378
    %p380 = scmp.ne.s32.totalorder %s372, %s374
    %p381 = scmp.eq.s32.totalorder %s28, 1
    %p382 = por %p380, %p381
    %p383 = scmp.ne.s32.totalorder %s374, %s375
    %p384 = scmp.eq.s32.totalorder %s28, 0
    %p385 = por %p383, %p384
    %p386 = scmp.ne.s32.totalorder %s374, %s375
    %p387 = scmp.eq.s32.totalorder %s29, 1
    %p388 = por %p386, %p387
    %p390 = scmp.ne.s32.totalorder %s375, %s389
    %p391 = scmp.eq.s32.totalorder %s29, 0
    %p392 = por %p390, %p391
    %s393 = ssub.s32 %s23, %s30
    %p394 = scmp.eq.s32.totalorder %s393, 0
    %s396 = sadd.s32 %s395, 1
    %s397 = scalar_select %p394, %s395, %s396
    %p400 = pneg %p394
    %p401 = scmp.eq.s32.totalorder %s23, 1
    %p402 = por %p400, %p401
    %p403 = scmp.ne.s32.totalorder %s395, %s398
    %p404 = scmp.eq.s32.totalorder %s23, 0
    %p405 = por %p403, %p404
    %p406 = scmp.ne.s32.totalorder %s395, %s398
    %p407 = scmp.eq.s32.totalorder %s28, 1
    %p408 = por %p406, %p407
    %p409 = scmp.ne.s32.totalorder %s398, %s399
    %p410 = scmp.eq.s32.totalorder %s28, 0
    %p411 = por %p409, %p410
    %p412 = scmp.ne.s32.totalorder %s398, %s399
    %p413 = scmp.eq.s32.totalorder %s29, 1
    %p414 = por %p412, %p413
    %p416 = scmp.ne.s32.totalorder %s399, %s415
    %p417 = scmp.eq.s32.totalorder %s29, 0
    %p418 = por %p416, %p417
    %p419 = scmp.le.s32.totalorder 1, %s23
    %p420 = scmp.lt.s32.totalorder %s23, 3
    %p421 = pnand %p419, %p420
    %p422 = pneg %p421
    // Predicated region
    $region9: #{simba_forward.6} parent=5 // pred_check
      _
    $region10: #{simba_forward.6} parent=5 // pred_check_branch
      %424 = sbr.rel (%p421) target = $region12
    $region11: #{simba_forward.6} parent=5 // pred_region
      %s425 = ssub.s32 %s23, 1
      // Predicated region
      $region13: #{simba_forward.6} parent=11 // pred_check
        %p426 = pneg %p70
      $region14: #{simba_forward.6} parent=11 // pred_check_branch
        %428 = sbr.rel (%p426) target = $region16
      $region15: #{simba_forward.6} parent=11 // pred_region
        _
      $region16: #{simba_forward.6} parent=11 // pred_fallthru
        _
      // Predicated region
      $region17: #{simba_forward.6} parent=11 // pred_check
        %p429 = pneg %p91
      $region18: #{simba_forward.6} parent=11 // pred_check_branch
        %431 = sbr.rel (%p429) target = $region20
      $region19: #{simba_forward.6} parent=11 // pred_region
        _
      $region20: #{simba_forward.6} parent=11 // pred_fallthru
        _
      // Predicated region
      $region21: #{simba_forward.6} parent=11 // pred_check
        %p432 = pneg %p112
      $region22: #{simba_forward.6} parent=11 // pred_check_branch
        %434 = sbr.rel (%p432) target = $region24
      $region23: #{simba_forward.6} parent=11 // pred_region
        _
      $region24: #{simba_forward.6} parent=11 // pred_fallthru
        _
      // Predicated region
      $region25: #{simba_forward.6} parent=11 // pred_check
        %p435 = pneg %p133
      $region26: #{simba_forward.6} parent=11 // pred_check_branch
        %437 = sbr.rel (%p435) target = $region28
      $region27: #{simba_forward.6} parent=11 // pred_region
        _
      $region28: #{simba_forward.6} parent=11 // pred_fallthru
        _
      // Predicated region
      $region29: #{simba_forward.6} parent=11 // pred_check
        %p438 = pneg %p154
      $region30: #{simba_forward.6} parent=11 // pred_check_branch
        %440 = sbr.rel (%p438) target = $region32
      $region31: #{simba_forward.6} parent=11 // pred_region
        _
      $region32: #{simba_forward.6} parent=11 // pred_fallthru
        _
      // Predicated region
      $region33: #{simba_forward.6} parent=11 // pred_check
        %p441 = pneg %p175
      $region34: #{simba_forward.6} parent=11 // pred_check_branch
        %443 = sbr.rel (%p441) target = $region36
      $region35: #{simba_forward.6} parent=11 // pred_region
        _
      $region36: #{simba_forward.6} parent=11 // pred_fallthru
        _
      // Predicated region
      $region37: #{simba_forward.6} parent=11 // pred_check
        %p444 = pneg %p196
      $region38: #{simba_forward.6} parent=11 // pred_check_branch
        %446 = sbr.rel (%p444) target = $region40
      $region39: #{simba_forward.6} parent=11 // pred_region
        _
      $region40: #{simba_forward.6} parent=11 // pred_fallthru
        _
      // Predicated region
      $region41: #{simba_forward.6} parent=11 // pred_check
        %p447 = pneg %p217
      $region42: #{simba_forward.6} parent=11 // pred_check_branch
        %449 = sbr.rel (%p447) target = $region44
      $region43: #{simba_forward.6} parent=11 // pred_region
        _
      $region44: #{simba_forward.6} parent=11 // pred_fallthru
        _
      // Predicated region
      $region45: #{simba_forward.6} parent=11 // pred_check
        %p450 = pneg %p238
      $region46: #{simba_forward.6} parent=11 // pred_check_branch
        %452 = sbr.rel (%p450) target = $region48
      $region47: #{simba_forward.6} parent=11 // pred_region
        _
      $region48: #{simba_forward.6} parent=11 // pred_fallthru
        _
      // Predicated region
      $region49: #{simba_forward.6} parent=11 // pred_check
        %p453 = pneg %p259
      $region50: #{simba_forward.6} parent=11 // pred_check_branch
        %455 = sbr.rel (%p453) target = $region52
      $region51: #{simba_forward.6} parent=11 // pred_region
        _
      $region52: #{simba_forward.6} parent=11 // pred_fallthru
        _
      // Predicated region
      $region53: #{simba_forward.6} parent=11 // pred_check
        %p456 = pneg %p280
      $region54: #{simba_forward.6} parent=11 // pred_check_branch
        %458 = sbr.rel (%p456) target = $region56
      $region55: #{simba_forward.6} parent=11 // pred_region
        _
      $region56: #{simba_forward.6} parent=11 // pred_fallthru
        _
      // Predicated region
      $region57: #{simba_forward.6} parent=11 // pred_check
        %p459 = pneg %p301
      $region58: #{simba_forward.6} parent=11 // pred_check_branch
        %461 = sbr.rel (%p459) target = $region60
      $region59: #{simba_forward.6} parent=11 // pred_region
        _
      $region60: #{simba_forward.6} parent=11 // pred_fallthru
        _
      // Predicated region
      $region61: #{simba_forward.6} parent=11 // pred_check
        %p462 = pneg %p322
      $region62: #{simba_forward.6} parent=11 // pred_check_branch
        %464 = sbr.rel (%p462) target = $region64
      $region63: #{simba_forward.6} parent=11 // pred_region
        _
      $region64: #{simba_forward.6} parent=11 // pred_fallthru
        _
      // Predicated region
      $region65: #{simba_forward.6} parent=11 // pred_check
        %p465 = pneg %p343
      $region66: #{simba_forward.6} parent=11 // pred_check_branch
        %467 = sbr.rel (%p465) target = $region68
      $region67: #{simba_forward.6} parent=11 // pred_region
        _
      $region68: #{simba_forward.6} parent=11 // pred_fallthru
        _
      // Predicated region
      $region69: #{simba_forward.6} parent=11 // pred_check
        %p468 = pneg %p364
      $region70: #{simba_forward.6} parent=11 // pred_check_branch
        %470 = sbr.rel (%p468) target = $region72
      $region71: #{simba_forward.6} parent=11 // pred_region
        _
      $region72: #{simba_forward.6} parent=11 // pred_fallthru
        _
      // Predicated region
      $region73: #{simba_forward.6} parent=11 // pred_check
        %p471 = pneg %p385
      $region74: #{simba_forward.6} parent=11 // pred_check_branch
        %473 = sbr.rel (%p471) target = $region76
      $region75: #{simba_forward.6} parent=11 // pred_region
        _
      $region76: #{simba_forward.6} parent=11 // pred_fallthru
        _
    $region12: #{simba_forward.6} parent=5 // pred_fallthru
      _
    %p474 = scmp.lt.s32.totalorder %s23, 2
    // Predicated region
    $region77: #{simba_forward.6} parent=5 // pred_check
      %p475 = pneg %p474
    $region78: #{simba_forward.6} parent=5 // pred_check_branch
      %477 = sbr.rel (%p475) target = $region80
    $region79: #{simba_forward.6} parent=5 // pred_region
      // Predicated region
      $region81: #{simba_forward.6} parent=79 // pred_check
        %p478 = pneg %p43
      $region82: #{simba_forward.6} parent=79 // pred_check_branch
        %480 = sbr.rel (%p478) target = $region84
      $region83: #{simba_forward.6} parent=79 // pred_region
        %p481 = scmp.lt.s32.totalorder %s23, 1
        %s482 = scalar_select %p481, %s23, 1
        %s483 = smul.addr %s482, 4
        %s484 = scalar_lea.vmem %s0, %s483
      $region84: #{simba_forward.6} parent=79 // pred_fallthru
        _
    $region80: #{simba_forward.6} parent=5 // pred_fallthru
      _
    %p485 = scmp.le.s32.totalorder 1, %s23
    %p486 = scmp.lt.s32.totalorder %s23, 3
    %p487 = pnand %p485, %p486
    %p488 = pneg %p487
    // Predicated region
    $region85: #{simba_forward.6} parent=5 // pred_check
      _
    $region86: #{simba_forward.6} parent=5 // pred_check_branch
      %490 = sbr.rel (%p487) target = $region88
    $region87: #{simba_forward.6} parent=5 // pred_region
      %s491 = ssub.s32 %s23, 1
      %p492 = scmp.lt.s32.totalorder %s28, 1
      %s493 = scalar_select %p492, %s28, 1
      %s494 = smul.addr %s493, 4
      %s495 = scalar_lea.vmem %s0, %s494
      %p496 = pneg %p49
      %p497 = pneg %p46
      %p498 = pneg %p70
      %p499 = pneg %p67
      %p500 = pneg %p91
      %p501 = pneg %p88
      %p502 = pneg %p112
      %p503 = pneg %p109
      %p504 = pneg %p133
      %p505 = pneg %p130
      %p506 = pneg %p154
      %p507 = pneg %p151
      %p508 = pneg %p175
      %p509 = pneg %p172
      %p510 = pneg %p196
      %p511 = pneg %p193
      %p512 = pneg %p217
      %p513 = pneg %p214
      %p514 = pneg %p238
      %p515 = pneg %p235
      %p516 = pneg %p259
      %p517 = pneg %p256
      %p518 = pneg %p280
      %p519 = pneg %p277
      %p520 = pneg %p301
      %p521 = pneg %p298
      %p522 = pneg %p322
      %p523 = pneg %p319
      %p524 = pneg %p343
      %p525 = pneg %p340
      %p526 = pneg %p364
      %p527 = pneg %p361
      %p528 = pneg %p385
      %p529 = pneg %p382
      %p530 = pneg %p411
      %p531 = pneg %p408
      %p532 = scmp.lt.s32.totalorder %s28, 1
      %s533 = scalar_select %p532, %s28, 1
      %s534 = smul.addr %s533, 4
      %s535 = scalar_lea.vmem %s17, %s534
      %p536 = scmp.lt.s32.totalorder %s28, 1
      %s537 = scalar_select %p536, %s28, 1
      %s538 = smul.addr %s537, 4
      %s539 = scalar_lea.vmem %s0, %s538
      %p540 = scmp.lt.s32.totalorder %s28, 1
      %s541 = scalar_select %p540, %s28, 1
      %s542 = smul.addr %s541, 4
      %s543 = scalar_lea.vmem %s17, %s542
      %v549 = vld [vmem:[%s539] sm:$0xf]
      %v550 = vunpack.c.l.bf16 %v549
      %v551 = vld [vmem:[%s1] sm:$0x1]
      %v552 = vld [vmem:[%s2] sm:$0x1]
      %553 = vadd.xlane.f32.xlu0 %v550
      %v554 = vpop.xlane.xlu0 %553
      %v555 = vmul.f32 %v554, 0.0625
      %v556 = vmul.f32 %v550, %v550
      %557 = vadd.xlane.f32.xlu0 %v556
      %v558 = vpop.xlane.xlu0 %557
      %v559 = vmul.f32 %v558, 0.0625
      %v560 = vmul.f32 %v555, %v555
      %v561 = vsub.f32 %v559, %v560
      %v562 = vmax.f32 %v561, 0.0
      %v563 = vsub.f32 %v550, %v555
      %v564 = vadd.f32 %v562, 1e-05
      %v565 = vrsqrt.pop %v564
      %v566 = vmul.f32 %v563, %v565
      %v568 = vlaneseq
      %v569 = vshrl.u32 %v568, 7
      %v570 = vsub.s32 0, %v569
      %v571 = vrot.slane %v551, %v570
      %v573 = vmul.f32 %v566, %v571
      %v575 = vlaneseq
      %v576 = vshrl.u32 %v575, 7
      %v577 = vsub.s32 0, %v576
      %v578 = vrot.slane %v552, %v577
      %v580 = vadd.f32 %v573, %v578
      %v581 = vpack.c.bf16 %v580, %v580
      %v582 = vld [vmem:[%s3] sm:$0xf]
      %v583 = vld [vmem:[%s3 + $0x4] sm:$0xf]
      %v584 = vld [vmem:[%s3 + $0x8] sm:$0xf]
      %v585 = vld [vmem:[%s3 + $0xc] sm:$0xf]
      %v586 = vld [vmem:[%s3 + $0x10] sm:$0xf]
      %v587 = vld [vmem:[%s3 + $0x14] sm:$0xf]
      %v588 = vld [vmem:[%s3 + $0x18] sm:$0xf]
      %v589 = vld [vmem:[%s3 + $0x1c] sm:$0xf]
      %v590 = vld [vmem:[%s3 + $0x20] sm:$0xf]
      %v591 = vld [vmem:[%s3 + $0x24] sm:$0xf]
      %v592 = vld [vmem:[%s3 + $0x28] sm:$0xf]
      %v593 = vld [vmem:[%s3 + $0x2c] sm:$0xf]
      %v594 = vld [vmem:[%s3 + $0x30] sm:$0xf]
      %v595 = vld [vmem:[%s3 + $0x34] sm:$0xf]
      %v596 = vld [vmem:[%s3 + $0x38] sm:$0xf]
      %v597 = vld [vmem:[%s3 + $0x3c] sm:$0xf]
      %v598 = vld [vmem:[%s4] sm:$0x1]
      %v600 = vlaneseq
      %v601 = vshrl.u32 %v600, 7
      %v602 = vsub.s32 0, %v601
      %v603 = vrot.slane %v598, %v602
      %v621 = vunpack.c.l.b16 %v582
      %v622 = vunpack.c.l.b16 %v583
      %v623 = vunpack.c.l.b16 %v584
      %v624 = vunpack.c.l.b16 %v585
      %v625 = vunpack.c.l.b16 %v586
      %v626 = vunpack.c.l.b16 %v587
      %v627 = vunpack.c.l.b16 %v588
      %v628 = vunpack.c.l.b16 %v589
      %v629 = vunpack.c.l.b16 %v590
      %v630 = vunpack.c.l.b16 %v591
      %v631 = vunpack.c.l.b16 %v592
      %v632 = vunpack.c.l.b16 %v593
      %v633 = vunpack.c.l.b16 %v594
      %v634 = vunpack.c.l.b16 %v595
      %v635 = vunpack.c.l.b16 %v596
      %v636 = vunpack.c.l.b16 %v597
      %v637 = vpack.c.b16 %v622, %v621
      %v638 = vpack.c.b16 %v624, %v623
      %v639 = vpack.c.b16 %v626, %v625
      %v640 = vpack.c.b16 %v628, %v627
      %v641 = vpack.c.b16 %v630, %v629
      %v642 = vpack.c.b16 %v632, %v631
      %v643 = vpack.c.b16 %v634, %v633
      %v644 = vpack.c.b16 %v636, %v635
      %653 = vmatprep.subr.bf16.mxu0 0
      %654 = vmatpush1.bf16.msra.mxu0 %v637
      %655 = vmatprep.subr.bf16.mxu0 0
      %656 = vmatpush1.bf16.msra.mxu0 %v638
      %657 = vmatprep.subr.bf16.mxu0 0
      %658 = vmatpush1.bf16.msra.mxu0 %v639
      %659 = vmatprep.subr.bf16.mxu0 0
      %660 = vmatpush1.bf16.msra.mxu0 %v640
      %661 = vmatprep.subr.bf16.mxu0 0
      %662 = vmatpush1.bf16.msra.mxu0 %v641
      %663 = vmatprep.subr.bf16.mxu0 0
      %664 = vmatpush1.bf16.msra.mxu0 %v642
      %665 = vmatprep.subr.bf16.mxu0 0
      %666 = vmatpush1.bf16.msra.mxu0 %v643
      %667 = vmatprep.subr.bf16.mxu0 0
      %668 = vmatpush1.bf16.msra.mxu0 %v644
      %669 = vmatprep.subr.bf16.mxu0 0
      %670 = vmatpush1.bf16.msra.mxu0 0
      %671 = vmatprep.subr.bf16.mxu0 0
      %672 = vmatpush1.bf16.msra.mxu0 0
      %673 = vmatprep.subr.bf16.mxu0 0
      %674 = vmatpush1.bf16.msra.mxu0 0
      %675 = vmatprep.subr.bf16.mxu0 0
      %676 = vmatpush1.bf16.msra.mxu0 0
      %677 = vmatprep.subr.bf16.mxu0 0
      %678 = vmatpush1.bf16.msra.mxu0 0
      %679 = vmatprep.subr.bf16.mxu0 0
      %680 = vmatpush1.bf16.msra.mxu0 0
      %681 = vmatprep.subr.bf16.mxu0 0
      %682 = vmatpush1.bf16.msra.mxu0 0
      %683 = vmatprep.subr.bf16.mxu0 0
      %684 = vmatpush1.bf16.msra.mxu0 0
      %685 = vmatprep.mubr.bf16.mxu0 0
      %686 = vmatmul.mubr.bf16.gmra.mrb[0].mxu0 %v581
      %v687 = vpop.f32.mrb[0].mxu0
      %v688 = vadd.f32 %v603, %v687
      %v689 = vpop.f32.mrb[0].mxu0
      %v690 = vpop.f32.mrb[0].mxu0
      %v691 = vpop.f32.mrb[0].mxu0
      %692 = vdwg.mxu0
      %v693 = vld [vmem:[%s5] sm:$0x1]
      %v694 = vld [vmem:[%s6] sm:$0x1]
      %695 = vadd.xlane.f32.xlu0 %v688
      %v696 = vpop.xlane.xlu0 %695
      %v697 = vmul.f32 %v696, 0.03125
      %v698 = vmul.f32 %v688, %v688
      %699 = vadd.xlane.f32.xlu0 %v698
      %v700 = vpop.xlane.xlu0 %699
      %v701 = vmul.f32 %v700, 0.03125
      %v702 = vmul.f32 %v697, %v697
      %v703 = vsub.f32 %v701, %v702
      %v704 = vmax.f32 %v703, 0.0
      %v705 = vsub.f32 %v688, %v697
      %v706 = vadd.f32 %v704, 1e-05
      %v707 = vrsqrt.pop %v706
      %v708 = vmul.f32 %v705, %v707
      %v710 = vlaneseq
      %v711 = vshrl.u32 %v710, 7
      %v712 = vsub.s32 0, %v711
      %v713 = vrot.slane %v693, %v712
      %v715 = vmul.f32 %v708, %v713
      %v717 = vlaneseq
      %v718 = vshrl.u32 %v717, 7
      %v719 = vsub.s32 0, %v718
      %v720 = vrot.slane %v694, %v719
      %v722 = vadd.f32 %v715, %v720
      %v723 = vpack.c.bf16 %v722, %v722
      %v724 = vld [vmem:[%s7] sm:$0xf]
      %v725 = vld [vmem:[%s7 + $0x4] sm:$0xf]
      %v726 = vld [vmem:[%s7 + $0x8] sm:$0xf]
      %v727 = vld [vmem:[%s7 + $0xc] sm:$0xf]
      %v728 = vld [vmem:[%s7 + $0x10] sm:$0xf]
      %v729 = vld [vmem:[%s7 + $0x14] sm:$0xf]
      %v730 = vld [vmem:[%s7 + $0x18] sm:$0xf]
      %v731 = vld [vmem:[%s7 + $0x1c] sm:$0xf]
      %v732 = vld [vmem:[%s7 + $0x20] sm:$0xf]
      %v733 = vld [vmem:[%s7 + $0x24] sm:$0xf]
      %v734 = vld [vmem:[%s7 + $0x28] sm:$0xf]
      %v735 = vld [vmem:[%s7 + $0x2c] sm:$0xf]
      %v736 = vld [vmem:[%s7 + $0x30] sm:$0xf]
      %v737 = vld [vmem:[%s7 + $0x34] sm:$0xf]
      %v738 = vld [vmem:[%s7 + $0x38] sm:$0xf]
      %v739 = vld [vmem:[%s7 + $0x3c] sm:$0xf]
      %v740 = vld [vmem:[%s8] sm:$0x1]
      %v742 = vlaneseq
      %v743 = vshrl.u32 %v742, 7
      %v744 = vsub.s32 0, %v743
      %v745 = vrot.slane %v740, %v744
      %v763 = vunpack.c.l.b16 %v724
      %v764 = vunpack.c.l.b16 %v725
      %v765 = vunpack.c.l.b16 %v726
      %v766 = vunpack.c.l.b16 %v727
      %v767 = vunpack.c.l.b16 %v728
      %v768 = vunpack.c.l.b16 %v729
      %v769 = vunpack.c.l.b16 %v730
      %v770 = vunpack.c.l.b16 %v731
      %v771 = vunpack.c.l.b16 %v732
      %v772 = vunpack.c.l.b16 %v733
      %v773 = vunpack.c.l.b16 %v734
      %v774 = vunpack.c.l.b16 %v735
      %v775 = vunpack.c.l.b16 %v736
      %v776 = vunpack.c.l.b16 %v737
      %v777 = vunpack.c.l.b16 %v738
      %v778 = vunpack.c.l.b16 %v739
      %v779 = vpack.c.b16 %v764, %v763
      %v780 = vpack.c.b16 %v766, %v765
      %v781 = vpack.c.b16 %v768, %v767
      %v782 = vpack.c.b16 %v770, %v769
      %v783 = vpack.c.b16 %v772, %v771
      %v784 = vpack.c.b16 %v774, %v773
      %v785 = vpack.c.b16 %v776, %v775
      %v786 = vpack.c.b16 %v778, %v777
      %795 = vmatprep.subr.bf16.mxu0 0
      %796 = vmatpush1.bf16.msra.mxu0 %v779
      %797 = vmatprep.subr.bf16.mxu0 0
      %798 = vmatpush1.bf16.msra.mxu0 %v780
      %799 = vmatprep.subr.bf16.mxu0 0
      %800 = vmatpush1.bf16.msra.mxu0 %v781
      %801 = vmatprep.subr.bf16.mxu0 0
      %802 = vmatpush1.bf16.msra.mxu0 %v782
      %803 = vmatprep.subr.bf16.mxu0 0
      %804 = vmatpush1.bf16.msra.mxu0 %v783
      %805 = vmatprep.subr.bf16.mxu0 0
      %806 = vmatpush1.bf16.msra.mxu0 %v784
      %807 = vmatprep.subr.bf16.mxu0 0
      %808 = vmatpush1.bf16.msra.mxu0 %v785
      %809 = vmatprep.subr.bf16.mxu0 0
      %810 = vmatpush1.bf16.msra.mxu0 %v786
      %811 = vmatprep.subr.bf16.mxu0 0
      %812 = vmatpush1.bf16.msra.mxu0 0
      %813 = vmatprep.subr.bf16.mxu0 0
      %814 = vmatpush1.bf16.msra.mxu0 0
      %815 = vmatprep.subr.bf16.mxu0 0
      %816 = vmatpush1.bf16.msra.mxu0 0
      %817 = vmatprep.subr.bf16.mxu0 0
      %818 = vmatpush1.bf16.msra.mxu0 0
      %819 = vmatprep.subr.bf16.mxu0 0
      %820 = vmatpush1.bf16.msra.mxu0 0
      %821 = vmatprep.subr.bf16.mxu0 0
      %822 = vmatpush1.bf16.msra.mxu0 0
      %823 = vmatprep.subr.bf16.mxu0 0
      %824 = vmatpush1.bf16.msra.mxu0 0
      %825 = vmatprep.subr.bf16.mxu0 0
      %826 = vmatpush1.bf16.msra.mxu0 0
      %827 = vmatprep.mubr.bf16.mxu0 0
      %828 = vmatmul.mubr.bf16.gmra.mrb[0].mxu0 %v723
      %v829 = vpop.f32.mrb[0].mxu0
      %v830 = vadd.f32 %v745, %v829
      %v831 = vpop.f32.mrb[0].mxu0
      %v832 = vpop.f32.mrb[0].mxu0
      %v833 = vpop.f32.mrb[0].mxu0
      %834 = vdwg.mxu0
      %v835 = vpack.c.bf16 %v830, %v830
      %v836 = vmul.bf16 %v835, %v835
      %v837 = vmul.bf16 %v835, %v836
      %v838 = vmul.bf16 %v837, 1027030327
      %v839 = vadd.bf16 %v835, %v838
      %v840 = vmul.bf16 %v839, 1061961548
      %v841 = vtanh.bf16.pop %v840
      %v842 = vadd.bf16 %v841, 1065369472
      %v843 = vmul.bf16 %v842, 1056980736
      %v844 = vmul.bf16 %v835, %v843
      %v845 = vld [vmem:[%s9] sm:$0xf]
      %v846 = vld [vmem:[%s9 + $0x4] sm:$0xf]
      %v847 = vld [vmem:[%s9 + $0x8] sm:$0xf]
      %v848 = vld [vmem:[%s9 + $0xc] sm:$0xf]
      %v849 = vld [vmem:[%s9 + $0x10] sm:$0xf]
      %v850 = vld [vmem:[%s9 + $0x14] sm:$0xf]
      %v851 = vld [vmem:[%s9 + $0x18] sm:$0xf]
      %v852 = vld [vmem:[%s9 + $0x1c] sm:$0xf]
      %v853 = vld [vmem:[%s9 + $0x20] sm:$0xf]
      %v854 = vld [vmem:[%s9 + $0x24] sm:$0xf]
      %v855 = vld [vmem:[%s9 + $0x28] sm:$0xf]
      %v856 = vld [vmem:[%s9 + $0x2c] sm:$0xf]
      %v857 = vld [vmem:[%s9 + $0x30] sm:$0xf]
      %v858 = vld [vmem:[%s9 + $0x34] sm:$0xf]
      %v859 = vld [vmem:[%s9 + $0x38] sm:$0xf]
      %v860 = vld [vmem:[%s9 + $0x3c] sm:$0xf]
      %v861 = vld [vmem:[%s10] sm:$0x1]
      %v863 = vlaneseq
      %v864 = vshrl.u32 %v863, 7
      %v865 = vsub.s32 0, %v864
      %v866 = vrot.slane %v861, %v865
      %v884 = vunpack.c.l.b16 %v845
      %v885 = vunpack.c.l.b16 %v846
      %v886 = vunpack.c.l.b16 %v847
      %v887 = vunpack.c.l.b16 %v848
      %v888 = vunpack.c.l.b16 %v849
      %v889 = vunpack.c.l.b16 %v850
      %v890 = vunpack.c.l.b16 %v851
      %v891 = vunpack.c.l.b16 %v852
      %v892 = vunpack.c.l.b16 %v853
      %v893 = vunpack.c.l.b16 %v854
      %v894 = vunpack.c.l.b16 %v855
      %v895 = vunpack.c.l.b16 %v856
      %v896 = vunpack.c.l.b16 %v857
      %v897 = vunpack.c.l.b16 %v858
      %v898 = vunpack.c.l.b16 %v859
      %v899 = vunpack.c.l.b16 %v860
      %v900 = vpack.c.b16 %v885, %v884
      %v901 = vpack.c.b16 %v887, %v886
      %v902 = vpack.c.b16 %v889, %v888
      %v903 = vpack.c.b16 %v891, %v890
      %v904 = vpack.c.b16 %v893, %v892
      %v905 = vpack.c.b16 %v895, %v894
      %v906 = vpack.c.b16 %v897, %v896
      %v907 = vpack.c.b16 %v899, %v898
      %916 = vmatprep.subr.bf16.mxu0 0
      %917 = vmatpush1.bf16.msra.mxu0 %v900
      %918 = vmatprep.subr.bf16.mxu0 0
      %919 = vmatpush1.bf16.msra.mxu0 %v901
      %920 = vmatprep.subr.bf16.mxu0 0
      %921 = vmatpush1.bf16.msra.mxu0 %v902
      %922 = vmatprep.subr.bf16.mxu0 0
      %923 = vmatpush1.bf16.msra.mxu0 %v903
      %924 = vmatprep.subr.bf16.mxu0 0
      %925 = vmatpush1.bf16.msra.mxu0 %v904
      %926 = vmatprep.subr.bf16.mxu0 0
      %927 = vmatpush1.bf16.msra.mxu0 %v905
      %928 = vmatprep.subr.bf16.mxu0 0
      %929 = vmatpush1.bf16.msra.mxu0 %v906
      %930 = vmatprep.subr.bf16.mxu0 0
      %931 = vmatpush1.bf16.msra.mxu0 %v907
      %932 = vmatprep.subr.bf16.mxu0 0
      %933 = vmatpush1.bf16.msra.mxu0 0
      %934 = vmatprep.subr.bf16.mxu0 0
      %935 = vmatpush1.bf16.msra.mxu0 0
      %936 = vmatprep.subr.bf16.mxu0 0
      %937 = vmatpush1.bf16.msra.mxu0 0
      %938 = vmatprep.subr.bf16.mxu0 0
      %939 = vmatpush1.bf16.msra.mxu0 0
      %940 = vmatprep.subr.bf16.mxu0 0
      %941 = vmatpush1.bf16.msra.mxu0 0
      %942 = vmatprep.subr.bf16.mxu0 0
      %943 = vmatpush1.bf16.msra.mxu0 0
      %944 = vmatprep.subr.bf16.mxu0 0
      %945 = vmatpush1.bf16.msra.mxu0 0
      %946 = vmatprep.subr.bf16.mxu0 0
      %947 = vmatpush1.bf16.msra.mxu0 0
      %948 = vmatprep.mubr.bf16.mxu0 0
      %949 = vmatmul.mubr.bf16.gmra.mrb[0].mxu0 %v844
      %v950 = vpop.f32.mrb[0].mxu0
      %v951 = vadd.f32 %v866, %v950
      %v952 = vpop.f32.mrb[0].mxu0
      %v953 = vpop.f32.mrb[0].mxu0
      %v954 = vpop.f32.mrb[0].mxu0
      %955 = vdwg.mxu0
      %v956 = vadd.f32 %v688, %v951
      %v957 = vld [vmem:[%s11] sm:$0x1]
      %v958 = vld [vmem:[%s12] sm:$0x1]
      %959 = vadd.xlane.f32.xlu0 %v956
      %v960 = vpop.xlane.xlu0 %959
      %v961 = vmul.f32 %v960, 0.03125
      %v962 = vmul.f32 %v956, %v956
      %963 = vadd.xlane.f32.xlu0 %v962
      %v964 = vpop.xlane.xlu0 %963
      %v965 = vmul.f32 %v964, 0.03125
      %v966 = vmul.f32 %v961, %v961
      %v967 = vsub.f32 %v965, %v966
      %v968 = vmax.f32 %v967, 0.0
      %v969 = vsub.f32 %v956, %v961
      %v970 = vadd.f32 %v968, 1e-05
      %v971 = vrsqrt.pop %v970
      %v972 = vmul.f32 %v969, %v971
      %v974 = vlaneseq
      %v975 = vshrl.u32 %v974, 7
      %v976 = vsub.s32 0, %v975
      %v977 = vrot.slane %v957, %v976
      %v979 = vmul.f32 %v972, %v977
      %v981 = vlaneseq
      %v982 = vshrl.u32 %v981, 7
      %v983 = vsub.s32 0, %v982
      %v984 = vrot.slane %v958, %v983
      %v986 = vadd.f32 %v979, %v984
      %v987 = vpack.c.bf16 %v986, %v986
      %v988 = vld [vmem:[%s13] sm:$0xf]
      %v989 = vld [vmem:[%s13 + $0x4] sm:$0xf]
      %v990 = vld [vmem:[%s13 + $0x8] sm:$0xf]
      %v991 = vld [vmem:[%s13 + $0xc] sm:$0xf]
      %v992 = vld [vmem:[%s13 + $0x10] sm:$0xf]
      %v993 = vld [vmem:[%s13 + $0x14] sm:$0xf]
      %v994 = vld [vmem:[%s13 + $0x18] sm:$0xf]
      %v995 = vld [vmem:[%s13 + $0x1c] sm:$0xf]
      %v996 = vld [vmem:[%s13 + $0x20] sm:$0xf]
      %v997 = vld [vmem:[%s13 + $0x24] sm:$0xf]
      %v998 = vld [vmem:[%s13 + $0x28] sm:$0xf]
      %v999 = vld [vmem:[%s13 + $0x2c] sm:$0xf]
      %v1000 = vld [vmem:[%s13 + $0x30] sm:$0xf]
      %v1001 = vld [vmem:[%s13 + $0x34] sm:$0xf]
      %v1002 = vld [vmem:[%s13 + $0x38] sm:$0xf]
      %v1003 = vld [vmem:[%s13 + $0x3c] sm:$0xf]
      %v1004 = vld [vmem:[%s14] sm:$0x1]
      %v1006 = vlaneseq
      %v1007 = vshrl.u32 %v1006, 7
      %v1008 = vsub.s32 0, %v1007
      %v1009 = vrot.slane %v1004, %v1008
      %v1027 = vunpack.c.l.b16 %v988
      %v1028 = vunpack.c.l.b16 %v989
      %v1029 = vunpack.c.l.b16 %v990
      %v1030 = vunpack.c.l.b16 %v991
      %v1031 = vunpack.c.l.b16 %v992
      %v1032 = vunpack.c.l.b16 %v993
      %v1033 = vunpack.c.l.b16 %v994
      %v1034 = vunpack.c.l.b16 %v995
      %v1035 = vunpack.c.l.b16 %v996
      %v1036 = vunpack.c.l.b16 %v997
      %v1037 = vunpack.c.l.b16 %v998
      %v1038 = vunpack.c.l.b16 %v999
      %v1039 = vunpack.c.l.b16 %v1000
      %v1040 = vunpack.c.l.b16 %v1001
      %v1041 = vunpack.c.l.b16 %v1002
      %v1042 = vunpack.c.l.b16 %v1003
      %v1043 = vpack.c.b16 %v1028, %v1027
      %v1044 = vpack.c.b16 %v1030, %v1029
      %v1045 = vpack.c.b16 %v1032, %v1031
      %v1046 = vpack.c.b16 %v1034, %v1033
      %v1047 = vpack.c.b16 %v1036, %v1035
      %v1048 = vpack.c.b16 %v1038, %v1037
      %v1049 = vpack.c.b16 %v1040, %v1039
      %v1050 = vpack.c.b16 %v1042, %v1041
      %1059 = vmatprep.subr.bf16.mxu0 0
      %1060 = vmatpush1.bf16.msra.mxu0 %v1043
      %1061 = vmatprep.subr.bf16.mxu0 0
      %1062 = vmatpush1.bf16.msra.mxu0 %v1044
      %1063 = vmatprep.subr.bf16.mxu0 0
      %1064 = vmatpush1.bf16.msra.mxu0 %v1045
      %1065 = vmatprep.subr.bf16.mxu0 0
      %1066 = vmatpush1.bf16.msra.mxu0 %v1046
      %1067 = vmatprep.subr.bf16.mxu0 0
      %1068 = vmatpush1.bf16.msra.mxu0 %v1047
      %1069 = vmatprep.subr.bf16.mxu0 0
      %1070 = vmatpush1.bf16.msra.mxu0 %v1048
      %1071 = vmatprep.subr.bf16.mxu0 0
      %1072 = vmatpush1.bf16.msra.mxu0 %v1049
      %1073 = vmatprep.subr.bf16.mxu0 0
      %1074 = vmatpush1.bf16.msra.mxu0 %v1050
      %1075 = vmatprep.subr.bf16.mxu0 0
      %1076 = vmatpush1.bf16.msra.mxu0 0
      %1077 = vmatprep.subr.bf16.mxu0 0
      %1078 = vmatpush1.bf16.msra.mxu0 0
      %1079 = vmatprep.subr.bf16.mxu0 0
      %1080 = vmatpush1.bf16.msra.mxu0 0
      %1081 = vmatprep.subr.bf16.mxu0 0
      %1082 = vmatpush1.bf16.msra.mxu0 0
      %1083 = vmatprep.subr.bf16.mxu0 0
      %1084 = vmatpush1.bf16.msra.mxu0 0
      %1085 = vmatprep.subr.bf16.mxu0 0
      %1086 = vmatpush1.bf16.msra.mxu0 0
      %1087 = vmatprep.subr.bf16.mxu0 0
      %1088 = vmatpush1.bf16.msra.mxu0 0
      %1089 = vmatprep.subr.bf16.mxu0 0
      %1090 = vmatpush1.bf16.msra.mxu0 0
      %1091 = vmatprep.mubr.bf16.mxu0 0
      %1092 = vmatmul.mubr.bf16.gmra.mrb[0].mxu0 %v987
      %v1093 = vpop.f32.mrb[0].mxu0
      %v1094 = vadd.f32 %v1009, %v1093
      %v1095 = vpop.f32.mrb[0].mxu0
      %v1096 = vpop.f32.mrb[0].mxu0
      %v1097 = vpop.f32.mrb[0].mxu0
      %1098 = vdwg.mxu0
      %v1099 = vpack.c.bf16 %v1094, %v1094
      %v1100 = vmul.bf16 %v1099, %v1099
      %v1101 = vmul.bf16 %v1099, %v1100
      %v1102 = vmul.bf16 %v1101, 1027030327
      %v1103 = vadd.bf16 %v1099, %v1102
      %v1104 = vmul.bf16 %v1103, 1061961548
      %v1105 = vtanh.bf16.pop %v1104
      %v1106 = vadd.bf16 %v1105, 1065369472
      %v1107 = vmul.bf16 %v1106, 1056980736
      %v1108 = vmul.bf16 %v1099, %v1107
      %v1109 = vld [vmem:[%s15] sm:$0xf]
      %v1110 = vld [vmem:[%s15 + $0x4] sm:$0xf]
      %v1111 = vld [vmem:[%s15 + $0x8] sm:$0xf]
      %v1112 = vld [vmem:[%s15 + $0xc] sm:$0xf]
      %v1113 = vld [vmem:[%s15 + $0x10] sm:$0xf]
      %v1114 = vld [vmem:[%s15 + $0x14] sm:$0xf]
      %v1115 = vld [vmem:[%s15 + $0x18] sm:$0xf]
      %v1116 = vld [vmem:[%s15 + $0x1c] sm:$0xf]
      %v1117 = vld [vmem:[%s15 + $0x20] sm:$0xf]
      %v1118 = vld [vmem:[%s15 + $0x24] sm:$0xf]
      %v1119 = vld [vmem:[%s15 + $0x28] sm:$0xf]
      %v1120 = vld [vmem:[%s15 + $0x2c] sm:$0xf]
      %v1121 = vld [vmem:[%s15 + $0x30] sm:$0xf]
      %v1122 = vld [vmem:[%s15 + $0x34] sm:$0xf]
      %v1123 = vld [vmem:[%s15 + $0x38] sm:$0xf]
      %v1124 = vld [vmem:[%s15 + $0x3c] sm:$0xf]
      %v1125 = vld [vmem:[%s16] sm:$0x1]
      %v1127 = vlaneseq
      %v1128 = vshrl.u32 %v1127, 7
      %v1129 = vsub.s32 0, %v1128
      %v1130 = vrot.slane %v1125, %v1129
      %v1148 = vunpack.c.l.b16 %v1109
      %v1149 = vunpack.c.l.b16 %v1110
      %v1150 = vunpack.c.l.b16 %v1111
      %v1151 = vunpack.c.l.b16 %v1112
      %v1152 = vunpack.c.l.b16 %v1113
      %v1153 = vunpack.c.l.b16 %v1114
      %v1154 = vunpack.c.l.b16 %v1115
      %v1155 = vunpack.c.l.b16 %v1116
      %v1156 = vunpack.c.l.b16 %v1117
      %v1157 = vunpack.c.l.b16 %v1118
      %v1158 = vunpack.c.l.b16 %v1119
      %v1159 = vunpack.c.l.b16 %v1120
      %v1160 = vunpack.c.l.b16 %v1121
      %v1161 = vunpack.c.l.b16 %v1122
      %v1162 = vunpack.c.l.b16 %v1123
      %v1163 = vunpack.c.l.b16 %v1124
      %v1164 = vpack.c.b16 %v1149, %v1148
      %v1165 = vpack.c.b16 %v1151, %v1150
      %v1166 = vpack.c.b16 %v1153, %v1152
      %v1167 = vpack.c.b16 %v1155, %v1154
      %v1168 = vpack.c.b16 %v1157, %v1156
      %v1169 = vpack.c.b16 %v1159, %v1158
      %v1170 = vpack.c.b16 %v1161, %v1160
      %v1171 = vpack.c.b16 %v1163, %v1162
      %1180 = vmatprep.subr.bf16.mxu0 0
      %1181 = vmatpush1.bf16.msra.mxu0 %v1164
      %1182 = vmatprep.subr.bf16.mxu0 0
      %1183 = vmatpush1.bf16.msra.mxu0 %v1165
      %1184 = vmatprep.subr.bf16.mxu0 0
      %1185 = vmatpush1.bf16.msra.mxu0 %v1166
      %1186 = vmatprep.subr.bf16.mxu0 0
      %1187 = vmatpush1.bf16.msra.mxu0 %v1167
      %1188 = vmatprep.subr.bf16.mxu0 0
      %1189 = vmatpush1.bf16.msra.mxu0 %v1168
      %1190 = vmatprep.subr.bf16.mxu0 0
      %1191 = vmatpush1.bf16.msra.mxu0 %v1169
      %1192 = vmatprep.subr.bf16.mxu0 0
      %1193 = vmatpush1.bf16.msra.mxu0 %v1170
      %1194 = vmatprep.subr.bf16.mxu0 0
      %1195 = vmatpush1.bf16.msra.mxu0 %v1171
      %1196 = vmatprep.subr.bf16.mxu0 0
      %1197 = vmatpush1.bf16.msra.mxu0 0
      %1198 = vmatprep.subr.bf16.mxu0 0
      %1199 = vmatpush1.bf16.msra.mxu0 0
      %1200 = vmatprep.subr.bf16.mxu0 0
      %1201 = vmatpush1.bf16.msra.mxu0 0
      %1202 = vmatprep.subr.bf16.mxu0 0
      %1203 = vmatpush1.bf16.msra.mxu0 0
      %1204 = vmatprep.subr.bf16.mxu0 0
      %1205 = vmatpush1.bf16.msra.mxu0 0
      %1206 = vmatprep.subr.bf16.mxu0 0
      %1207 = vmatpush1.bf16.msra.mxu0 0
      %1208 = vmatprep.subr.bf16.mxu0 0
      %1209 = vmatpush1.bf16.msra.mxu0 0
      %1210 = vmatprep.subr.bf16.mxu0 0
      %1211 = vmatpush1.bf16.msra.mxu0 0
      %1212 = vmatprep.mubr.bf16.mxu0 0
      %1213 = vmatmul.mubr.bf16.gmra.mrb[0].mxu0 %v1108
      %v1214 = vpop.f32.mrb[0].mxu0
      %v1215 = vadd.f32 %v1130, %v1214
      %v1216 = vpop.f32.mrb[0].mxu0
      %v1217 = vpop.f32.mrb[0].mxu0
      %v1218 = vpop.f32.mrb[0].mxu0
      %1219 = vdwg.mxu0
      %v1220 = vadd.f32 %v956, %v1215
      %v1221 = vpack.c.bf16 %v1220, %v1220
      %1222 = vst [vmem:[%s543] sm:$0xf] %v1221
      %p1223 = scmp.lt.s32.totalorder %s28, 1
      %s1224 = scalar_select %p1223, %s28, 1
      %s1225 = smul.addr %s1224, 4
      %s1226 = scalar_lea.vmem %s17, %s1225
      // Predicated region
      $region89: #{simba_forward.6} parent=87 // pred_check
        %p1227 = pneg %p408
      $region90: #{simba_forward.6} parent=87 // pred_check_branch
        %1229 = sbr.rel (%p1227) target = $region92
      $region91: #{simba_forward.6} parent=87 // pred_region
        _
      $region92: #{simba_forward.6} parent=87 // pred_fallthru
        _
    $region88: #{simba_forward.6} parent=5 // pred_fallthru
      _
    %p1230 = scmp.le.s32.totalorder 2, %s23
    // Predicated region
    $region93: #{simba_forward.6} parent=5 // pred_check
      %p1231 = pneg %p1230
    $region94: #{simba_forward.6} parent=5 // pred_check_branch
      %1233 = sbr.rel (%p1231) target = $region96
    $region95: #{simba_forward.6} parent=5 // pred_region
      %s1234 = ssub.s32 %s23, 2
      // Predicated region
      $region97: #{simba_forward.6} parent=95 // pred_check
        %p1235 = pneg %p414
      $region98: #{simba_forward.6} parent=95 // pred_check_branch
        %1237 = sbr.rel (%p1235) target = $region100
      $region99: #{simba_forward.6} parent=95 // pred_region
        %p1238 = scmp.lt.s32.totalorder %s29, 1
        %s1239 = scalar_select %p1238, %s29, 1
        %s1240 = smul.addr %s1239, 4
        %s1241 = scalar_lea.vmem %s17, %s1240
      $region100: #{simba_forward.6} parent=95 // pred_fallthru
        _
    $region96: #{simba_forward.6} parent=5 // pred_fallthru
      _
  $region6: #{simba_forward.6} parent=0 // loop_footer
    %s27 = sadd.s32 1, %s23
  $region7: #{simba_forward.6} parent=0 // loop_footer_branch
    %22 = sbr.rel target = $region3
  $region8: #{simba_forward.6} parent=0 // loop_exit
    _

// kernel: simba_forward.8
$region0: #{simba_forward.8}
  #allocation0 [shape = 'u32[]', space=smem, size = 0x4, offset = 0x4, fixed_abs, tag = 'smem constant byte address 0x4 - core index']
  #allocation1 [shape = 'u32[144,128]{1,0:T(1,128)}', space=vmem, size = 0x12000, scoped, tag = 'internal scratch']
  %s0 = inlined_call_operand.vmem [shape: bf16[16,128], index: 0, kind: input, shape index: {}, may-alias: {0,17}]
  %s1 = inlined_call_operand.vmem [shape: f32[1,128], index: 1, kind: input, shape index: {}]
  %s2 = inlined_call_operand.vmem [shape: f32[1,128], index: 2, kind: input, shape index: {}]
  %s3 = inlined_call_operand.vmem [shape: bf16[128,128], index: 3, kind: input, shape index: {}]
  %s4 = inlined_call_operand.vmem [shape: f32[1,128], index: 4, kind: input, shape index: {}]
  %s5 = inlined_call_operand.vmem [shape: f32[1,128], index: 5, kind: input, shape index: {}]
  %s6 = inlined_call_operand.vmem [shape: f32[1,128], index: 6, kind: input, shape index: {}]
  %s7 = inlined_call_operand.vmem [shape: bf16[128,128], index: 7, kind: input, shape index: {}]
  %s8 = inlined_call_operand.vmem [shape: f32[1,128], index: 8, kind: input, shape index: {}]
  %s9 = inlined_call_operand.vmem [shape: bf16[128,128], index: 9, kind: input, shape index: {}]
  %s10 = inlined_call_operand.vmem [shape: f32[1,128], index: 10, kind: input, shape index: {}]
  %s11 = inlined_call_operand.hbm [shape: f32[1,128], index: 11, kind: input, shape index: {}]
  %s12 = inlined_call_operand.hbm [shape: f32[1,128], index: 12, kind: input, shape index: {}]
  %s13 = inlined_call_operand.vmem [shape: bf16[128,128], index: 13, kind: input, shape index: {}]
  %s14 = inlined_call_operand.hbm [shape: f32[1,128], index: 14, kind: input, shape index: {}]
  %s15 = inlined_call_operand.vmem [shape: bf16[128,128], index: 15, kind: input, shape index: {}]
  %s16 = inlined_call_operand.hbm [shape: f32[1,128], index: 16, kind: input, shape index: {}]
  %s17 = inlined_call_operand.vmem [shape: bf16[16,128], index: 17, kind: output, shape index: {}, may-alias: {0,17}]
  %s18 = sld [smem:[#allocation0]]
  $region117: #{simba_forward.8} parent=0
    _
  %s20 = ssub.s32 1, %s18
  %s21 = scalar_select 0, %s20, %s18
  $region1: #{simba_forward.8} parent=0
    #allocation2 [shape = 'u8[512]{0}', space=vmem, size = 0x400, scoped, tag = 'input window, operand 11, single buffered']
    #allocation3 [shape = 's32[2]{0}', space=sflag, size = 0x8, scoped, tag = 'scoped memory for simba_forward.8']
    #allocation4 [shape = 'u8[512]{0}', space=vmem, size = 0x400, scoped, tag = 'input window, operand 12, single buffered']
    #allocation5 [shape = 's32[1]{0}', space=sflag, size = 0x4, scoped, tag = 'scoped memory for simba_forward.8']
    #allocation6 [shape = 'u8[512]{0}', space=vmem, size = 0x400, scoped, tag = 'input window, operand 14, single buffered']
    #allocation7 [shape = 'u8[512]{0}', space=vmem, size = 0x400, scoped, tag = 'input window, operand 16, single buffered']
    #allocation8 [shape = 's32[1]{0}', space=sflag, size = 0x4, scoped, tag = 'scoped memory for simba_forward.8']
    %22 = vsyncpa [#allocation3], 0
    %23 = vsyncpa [#allocation5], 0
    %24 = vsyncpa [#allocation8], 0
    loop: start=0, step=1, limit=4
    $region2: #{simba_forward.8} parent=1 // loop_pre_header
      _
    $region3: #{simba_forward.8} parent=1 // loop_header
      %s26 = sphi 0, %s30
      %p27 = scmp.ge.s32.totalorder %s26, 4
      %s36 = sphi 0, %s38
      %s39 = sphi 0, %s36
      %s40 = sphi 0, %s39
      %s56 = sphi 0, %s40
      %s60 = sphi 0, %s60
      %s62 = sphi 0, %s60
      %s63 = sphi 0, %s62
      %s77 = sphi 0, %s63
      %s81 = sphi 0, %s81
      %s83 = sphi 0, %s81
      %s84 = sphi 0, %s83
      %s98 = sphi 0, %s84
      %s102 = sphi 0, %s102
      %s104 = sphi 0, %s102
      %s105 = sphi 0, %s104
      %s119 = sphi 0, %s105
      %s123 = sphi 0, %s123
      %s125 = sphi 0, %s123
      %s126 = sphi 0, %s125
      %s140 = sphi 0, %s126
      %s144 = sphi 0, %s144
      %s146 = sphi 0, %s144
      %s147 = sphi 0, %s146
      %s161 = sphi 0, %s147
      %s165 = sphi 0, %s165
      %s167 = sphi 0, %s165
      %s168 = sphi 0, %s167
      %s182 = sphi 0, %s168
      %s186 = sphi 0, %s186
      %s188 = sphi 0, %s186
      %s189 = sphi 0, %s188
      %s203 = sphi 0, %s189
      %s207 = sphi 0, %s207
      %s209 = sphi 0, %s207
      %s210 = sphi 0, %s209
      %s224 = sphi 0, %s210
      %s228 = sphi 0, %s228
      %s230 = sphi 0, %s228
      %s231 = sphi 0, %s230
      %s245 = sphi 0, %s231
      %s249 = sphi 0, %s249
      %s251 = sphi 0, %s249
      %s252 = sphi 0, %s251
      %s266 = sphi 0, %s252
      %s270 = sphi 0, %s270
      %s272 = sphi 0, %s270
      %s273 = sphi 0, %s272
      %s287 = sphi 0, %s273
      %s291 = sphi 0, %s291
      %s293 = sphi 0, %s291
      %s294 = sphi 0, %s293
      %s308 = sphi 0, %s294
      %s312 = sphi 0, %s312
      %s314 = sphi 0, %s312
      %s315 = sphi 0, %s314
      %s329 = sphi 0, %s315
      %s333 = sphi 0, %s333
      %s335 = sphi 0, %s333
      %s336 = sphi 0, %s335
      %s350 = sphi 0, %s336
      %s354 = sphi 0, %s354
      %s356 = sphi 0, %s354
      %s357 = sphi 0, %s356
      %s371 = sphi 0, %s357
      %s375 = sphi 0, %s375
      %s377 = sphi 0, %s375
      %s378 = sphi 0, %s377
      %s392 = sphi 0, %s378
      %s398 = sphi 0, %s400
      %s401 = sphi 0, %s398
      %s402 = sphi 0, %s401
      %s418 = sphi 0, %s402
    $region4: #{simba_forward.8} parent=1 // loop_header_branch
      %29 = sbr.rel (%p27) target = $region8
    $region5: #{simba_forward.8} parent=1 // loop_body
      %s31 = ssub.s32 %s26, 1
      %s32 = ssub.s32 %s26, 2
      %s33 = sadd.s32 %s26, 1
      %s34 = ssub.s32 %s26, %s33
      %p35 = scmp.eq.s32.totalorder %s34, 0
      %s37 = sadd.s32 %s36, 1
      %s38 = scalar_select %p35, %s36, %s37
      %p41 = pneg %p35
      %p42 = scmp.eq.s32.totalorder %s26, 1
      %p43 = por %p41, %p42
      %p44 = scmp.ne.s32.totalorder %s36, %s39
      %p45 = scmp.eq.s32.totalorder %s26, 0
      %p46 = por %p44, %p45
      %p47 = scmp.ne.s32.totalorder %s36, %s39
      %p48 = scmp.eq.s32.totalorder %s31, 1
      %p49 = por %p47, %p48
      %p50 = scmp.ne.s32.totalorder %s39, %s40
      %p51 = scmp.eq.s32.totalorder %s31, 0
      %p52 = por %p50, %p51
      %p53 = scmp.ne.s32.totalorder %s39, %s40
      %p54 = scmp.eq.s32.totalorder %s32, 1
      %p55 = por %p53, %p54
      %p57 = scmp.ne.s32.totalorder %s40, %s56
      %p58 = scmp.eq.s32.totalorder %s32, 0
      %p59 = por %p57, %p58
      %s61 = sadd.s32 %s60, 1
      %p64 = scmp.eq.s32.totalorder %s26, 1
      %p65 = scmp.ne.s32.totalorder %s60, %s62
      %p66 = scmp.eq.s32.totalorder %s26, 0
      %p67 = por %p65, %p66
      %p68 = scmp.ne.s32.totalorder %s60, %s62
      %p69 = scmp.eq.s32.totalorder %s31, 1
      %p70 = por %p68, %p69
      %p71 = scmp.ne.s32.totalorder %s62, %s63
      %p72 = scmp.eq.s32.totalorder %s31, 0
      %p73 = por %p71, %p72
      %p74 = scmp.ne.s32.totalorder %s62, %s63
      %p75 = scmp.eq.s32.totalorder %s32, 1
      %p76 = por %p74, %p75
      %p78 = scmp.ne.s32.totalorder %s63, %s77
      %p79 = scmp.eq.s32.totalorder %s32, 0
      %p80 = por %p78, %p79
      %s82 = sadd.s32 %s81, 1
      %p85 = scmp.eq.s32.totalorder %s26, 1
      %p86 = scmp.ne.s32.totalorder %s81, %s83
      %p87 = scmp.eq.s32.totalorder %s26, 0
      %p88 = por %p86, %p87
      %p89 = scmp.ne.s32.totalorder %s81, %s83
      %p90 = scmp.eq.s32.totalorder %s31, 1
      %p91 = por %p89, %p90
      %p92 = scmp.ne.s32.totalorder %s83, %s84
      %p93 = scmp.eq.s32.totalorder %s31, 0
      %p94 = por %p92, %p93
      %p95 = scmp.ne.s32.totalorder %s83, %s84
      %p96 = scmp.eq.s32.totalorder %s32, 1
      %p97 = por %p95, %p96
      %p99 = scmp.ne.s32.totalorder %s84, %s98
      %p100 = scmp.eq.s32.totalorder %s32, 0
      %p101 = por %p99, %p100
      %s103 = sadd.s32 %s102, 1
      %p106 = scmp.eq.s32.totalorder %s26, 1
      %p107 = scmp.ne.s32.totalorder %s102, %s104
      %p108 = scmp.eq.s32.totalorder %s26, 0
      %p109 = por %p107, %p108
      %p110 = scmp.ne.s32.totalorder %s102, %s104
      %p111 = scmp.eq.s32.totalorder %s31, 1
      %p112 = por %p110, %p111
      %p113 = scmp.ne.s32.totalorder %s104, %s105
      %p114 = scmp.eq.s32.totalorder %s31, 0
      %p115 = por %p113, %p114
      %p116 = scmp.ne.s32.totalorder %s104, %s105
      %p117 = scmp.eq.s32.totalorder %s32, 1
      %p118 = por %p116, %p117
      %p120 = scmp.ne.s32.totalorder %s105, %s119
      %p121 = scmp.eq.s32.totalorder %s32, 0
      %p122 = por %p120, %p121
      %s124 = sadd.s32 %s123, 1
      %p127 = scmp.eq.s32.totalorder %s26, 1
      %p128 = scmp.ne.s32.totalorder %s123, %s125
      %p129 = scmp.eq.s32.totalorder %s26, 0
      %p130 = por %p128, %p129
      %p131 = scmp.ne.s32.totalorder %s123, %s125
      %p132 = scmp.eq.s32.totalorder %s31, 1
      %p133 = por %p131, %p132
      %p134 = scmp.ne.s32.totalorder %s125, %s126
      %p135 = scmp.eq.s32.totalorder %s31, 0
      %p136 = por %p134, %p135
      %p137 = scmp.ne.s32.totalorder %s125, %s126
      %p138 = scmp.eq.s32.totalorder %s32, 1
      %p139 = por %p137, %p138
      %p141 = scmp.ne.s32.totalorder %s126, %s140
      %p142 = scmp.eq.s32.totalorder %s32, 0
      %p143 = por %p141, %p142
      %s145 = sadd.s32 %s144, 1
      %p148 = scmp.eq.s32.totalorder %s26, 1
      %p149 = scmp.ne.s32.totalorder %s144, %s146
      %p150 = scmp.eq.s32.totalorder %s26, 0
      %p151 = por %p149, %p150
      %p152 = scmp.ne.s32.totalorder %s144, %s146
      %p153 = scmp.eq.s32.totalorder %s31, 1
      %p154 = por %p152, %p153
      %p155 = scmp.ne.s32.totalorder %s146, %s147
      %p156 = scmp.eq.s32.totalorder %s31, 0
      %p157 = por %p155, %p156
      %p158 = scmp.ne.s32.totalorder %s146, %s147
      %p159 = scmp.eq.s32.totalorder %s32, 1
      %p160 = por %p158, %p159
      %p162 = scmp.ne.s32.totalorder %s147, %s161
      %p163 = scmp.eq.s32.totalorder %s32, 0
      %p164 = por %p162, %p163
      %s166 = sadd.s32 %s165, 1
      %p169 = scmp.eq.s32.totalorder %s26, 1
      %p170 = scmp.ne.s32.totalorder %s165, %s167
      %p171 = scmp.eq.s32.totalorder %s26, 0
      %p172 = por %p170, %p171
      %p173 = scmp.ne.s32.totalorder %s165, %s167
      %p174 = scmp.eq.s32.totalorder %s31, 1
      %p175 = por %p173, %p174
      %p176 = scmp.ne.s32.totalorder %s167, %s168
      %p177 = scmp.eq.s32.totalorder %s31, 0
      %p178 = por %p176, %p177
      %p179 = scmp.ne.s32.totalorder %s167, %s168
      %p180 = scmp.eq.s32.totalorder %s32, 1
      %p181 = por %p179, %p180
      %p183 = scmp.ne.s32.totalorder %s168, %s182
      %p184 = scmp.eq.s32.totalorder %s32, 0
      %p185 = por %p183, %p184
      %s187 = sadd.s32 %s186, 1
      %p190 = scmp.eq.s32.totalorder %s26, 1
      %p191 = scmp.ne.s32.totalorder %s186, %s188
      %p192 = scmp.eq.s32.totalorder %s26, 0
      %p193 = por %p191, %p192
      %p194 = scmp.ne.s32.totalorder %s186, %s188
      %p195 = scmp.eq.s32.totalorder %s31, 1
      %p196 = por %p194, %p195
      %p197 = scmp.ne.s32.totalorder %s188, %s189
      %p198 = scmp.eq.s32.totalorder %s31, 0
      %p199 = por %p197, %p198
      %p200 = scmp.ne.s32.totalorder %s188, %s189
      %p201 = scmp.eq.s32.totalorder %s32, 1
      %p202 = por %p200, %p201
      %p204 = scmp.ne.s32.totalorder %s189, %s203
      %p205 = scmp.eq.s32.totalorder %s32, 0
      %p206 = por %p204, %p205
      %s208 = sadd.s32 %s207, 1
      %p211 = scmp.eq.s32.totalorder %s26, 1
      %p212 = scmp.ne.s32.totalorder %s207, %s209
      %p213 = scmp.eq.s32.totalorder %s26, 0
      %p214 = por %p212, %p213
      %p215 = scmp.ne.s32.totalorder %s207, %s209
      %p216 = scmp.eq.s32.totalorder %s31, 1
      %p217 = por %p215, %p216
      %p218 = scmp.ne.s32.totalorder %s209, %s210
      %p219 = scmp.eq.s32.totalorder %s31, 0
      %p220 = por %p218, %p219
      %p221 = scmp.ne.s32.totalorder %s209, %s210
      %p222 = scmp.eq.s32.totalorder %s32, 1
      %p223 = por %p221, %p222
      %p225 = scmp.ne.s32.totalorder %s210, %s224
      %p226 = scmp.eq.s32.totalorder %s32, 0
      %p227 = por %p225, %p226
      %s229 = sadd.s32 %s228, 1
      %p232 = scmp.eq.s32.totalorder %s26, 1
      %p233 = scmp.ne.s32.totalorder %s228, %s230
      %p234 = scmp.eq.s32.totalorder %s26, 0
      %p235 = por %p233, %p234
      %p236 = scmp.ne.s32.totalorder %s228, %s230
      %p237 = scmp.eq.s32.totalorder %s31, 1
      %p238 = por %p236, %p237
      %p239 = scmp.ne.s32.totalorder %s230, %s231
      %p240 = scmp.eq.s32.totalorder %s31, 0
      %p241 = por %p239, %p240
      %p242 = scmp.ne.s32.totalorder %s230, %s231
      %p243 = scmp.eq.s32.totalorder %s32, 1
      %p244 = por %p242, %p243
      %p246 = scmp.ne.s32.totalorder %s231, %s245
      %p247 = scmp.eq.s32.totalorder %s32, 0
      %p248 = por %p246, %p247
      %s250 = sadd.s32 %s249, 1
      %p253 = scmp.eq.s32.totalorder %s26, 1
      %p254 = scmp.ne.s32.totalorder %s249, %s251
      %p255 = scmp.eq.s32.totalorder %s26, 0
      %p256 = por %p254, %p255
      %p257 = scmp.ne.s32.totalorder %s249, %s251
      %p258 = scmp.eq.s32.totalorder %s31, 1
      %p259 = por %p257, %p258
      %p260 = scmp.ne.s32.totalorder %s251, %s252
      %p261 = scmp.eq.s32.totalorder %s31, 0
      %p262 = por %p260, %p261
      %p263 = scmp.ne.s32.totalorder %s251, %s252
      %p264 = scmp.eq.s32.totalorder %s32, 1
      %p265 = por %p263, %p264
      %p267 = scmp.ne.s32.totalorder %s252, %s266
      %p268 = scmp.eq.s32.totalorder %s32, 0
      %p269 = por %p267, %p268
      %s271 = sadd.s32 %s270, 1
      %p274 = scmp.eq.s32.totalorder %s26, 1
      %p275 = scmp.ne.s32.totalorder %s270, %s272
      %p276 = scmp.eq.s32.totalorder %s26, 0
      %p277 = por %p275, %p276
      %p278 = scmp.ne.s32.totalorder %s270, %s272
      %p279 = scmp.eq.s32.totalorder %s31, 1
      %p280 = por %p278, %p279
      %p281 = scmp.ne.s32.totalorder %s272, %s273
      %p282 = scmp.eq.s32.totalorder %s31, 0
      %p283 = por %p281, %p282
      %p284 = scmp.ne.s32.totalorder %s272, %s273
      %p285 = scmp.eq.s32.totalorder %s32, 1
      %p286 = por %p284, %p285
      %p288 = scmp.ne.s32.totalorder %s273, %s287
      %p289 = scmp.eq.s32.totalorder %s32, 0
      %p290 = por %p288, %p289
      %s292 = sadd.s32 %s291, 1
      %p295 = scmp.eq.s32.totalorder %s26, 1
      %p296 = scmp.ne.s32.totalorder %s291, %s293
      %p297 = scmp.eq.s32.totalorder %s26, 0
      %p298 = por %p296, %p297
      %p299 = scmp.ne.s32.totalorder %s291, %s293
      %p300 = scmp.eq.s32.totalorder %s31, 1
      %p301 = por %p299, %p300
      %p302 = scmp.ne.s32.totalorder %s293, %s294
      %p303 = scmp.eq.s32.totalorder %s31, 0
      %p304 = por %p302, %p303
      %p305 = scmp.ne.s32.totalorder %s293, %s294
      %p306 = scmp.eq.s32.totalorder %s32, 1
      %p307 = por %p305, %p306
      %p309 = scmp.ne.s32.totalorder %s294, %s308
      %p310 = scmp.eq.s32.totalorder %s32, 0
      %p311 = por %p309, %p310
      %s313 = sadd.s32 %s312, 1
      %p316 = scmp.eq.s32.totalorder %s26, 1
      %p317 = scmp.ne.s32.totalorder %s312, %s314
      %p318 = scmp.eq.s32.totalorder %s26, 0
      %p319 = por %p317, %p318
      %p320 = scmp.ne.s32.totalorder %s312, %s314
      %p321 = scmp.eq.s32.totalorder %s31, 1
      %p322 = por %p320, %p321
      %p323 = scmp.ne.s32.totalorder %s314, %s315
      %p324 = scmp.eq.s32.totalorder %s31, 0
      %p325 = por %p323, %p324
      %p326 = scmp.ne.s32.totalorder %s314, %s315
      %p327 = scmp.eq.s32.totalorder %s32, 1
      %p328 = por %p326, %p327
      %p330 = scmp.ne.s32.totalorder %s315, %s329
      %p331 = scmp.eq.s32.totalorder %s32, 0
      %p332 = por %p330, %p331
      %s334 = sadd.s32 %s333, 1
      %p337 = scmp.eq.s32.totalorder %s26, 1
      %p338 = scmp.ne.s32.totalorder %s333, %s335
      %p339 = scmp.eq.s32.totalorder %s26, 0
      %p340 = por %p338, %p339
      %p341 = scmp.ne.s32.totalorder %s333, %s335
      %p342 = scmp.eq.s32.totalorder %s31, 1
      %p343 = por %p341, %p342
      %p344 = scmp.ne.s32.totalorder %s335, %s336
      %p345 = scmp.eq.s32.totalorder %s31, 0
      %p346 = por %p344, %p345
      %p347 = scmp.ne.s32.totalorder %s335, %s336
      %p348 = scmp.eq.s32.totalorder %s32, 1
      %p349 = por %p347, %p348
      %p351 = scmp.ne.s32.totalorder %s336, %s350
      %p352 = scmp.eq.s32.totalorder %s32, 0
      %p353 = por %p351, %p352
      %s355 = sadd.s32 %s354, 1
      %p358 = scmp.eq.s32.totalorder %s26, 1
      %p359 = scmp.ne.s32.totalorder %s354, %s356
      %p360 = scmp.eq.s32.totalorder %s26, 0
      %p361 = por %p359, %p360
      %p362 = scmp.ne.s32.totalorder %s354, %s356
      %p363 = scmp.eq.s32.totalorder %s31, 1
      %p364 = por %p362, %p363
      %p365 = scmp.ne.s32.totalorder %s356, %s357
      %p366 = scmp.eq.s32.totalorder %s31, 0
      %p367 = por %p365, %p366
      %p368 = scmp.ne.s32.totalorder %s356, %s357
      %p369 = scmp.eq.s32.totalorder %s32, 1
      %p370 = por %p368, %p369
      %p372 = scmp.ne.s32.totalorder %s357, %s371
      %p373 = scmp.eq.s32.totalorder %s32, 0
      %p374 = por %p372, %p373
      %s376 = sadd.s32 %s375, 1
      %p379 = scmp.eq.s32.totalorder %s26, 1
      %p380 = scmp.ne.s32.totalorder %s375, %s377
      %p381 = scmp.eq.s32.totalorder %s26, 0
      %p382 = por %p380, %p381
      %p383 = scmp.ne.s32.totalorder %s375, %s377
      %p384 = scmp.eq.s32.totalorder %s31, 1
      %p385 = por %p383, %p384
      %p386 = scmp.ne.s32.totalorder %s377, %s378
      %p387 = scmp.eq.s32.totalorder %s31, 0
      %p388 = por %p386, %p387
      %p389 = scmp.ne.s32.totalorder %s377, %s378
      %p390 = scmp.eq.s32.totalorder %s32, 1
      %p391 = por %p389, %p390
      %p393 = scmp.ne.s32.totalorder %s378, %s392
      %p394 = scmp.eq.s32.totalorder %s32, 0
      %p395 = por %p393, %p394
      %s396 = ssub.s32 %s26, %s33
      %p397 = scmp.eq.s32.totalorder %s396, 0
      %s399 = sadd.s32 %s398, 1
      %s400 = scalar_select %p397, %s398, %s399
      %p403 = pneg %p397
      %p404 = scmp.eq.s32.totalorder %s26, 1
      %p405 = por %p403, %p404
      %p406 = scmp.ne.s32.totalorder %s398, %s401
      %p407 = scmp.eq.s32.totalorder %s26, 0
      %p408 = por %p406, %p407
      %p409 = scmp.ne.s32.totalorder %s398, %s401
      %p410 = scmp.eq.s32.totalorder %s31, 1
      %p411 = por %p409, %p410
      %p412 = scmp.ne.s32.totalorder %s401, %s402
      %p413 = scmp.eq.s32.totalorder %s31, 0
      %p414 = por %p412, %p413
      %p415 = scmp.ne.s32.totalorder %s401, %s402
      %p416 = scmp.eq.s32.totalorder %s32, 1
      %p417 = por %p415, %p416
      %p419 = scmp.ne.s32.totalorder %s402, %s418
      %p420 = scmp.eq.s32.totalorder %s32, 0
      %p421 = por %p419, %p420
      %p422 = scmp.le.s32.totalorder 1, %s26
      %p423 = scmp.lt.s32.totalorder %s26, 3
      %p424 = pnand %p422, %p423
      %p425 = pneg %p424
      // Predicated region
      $region9: #{simba_forward.8} parent=5 // pred_check
        _
      $region10: #{simba_forward.8} parent=5 // pred_check_branch
        %427 = sbr.rel (%p424) target = $region12
      $region11: #{simba_forward.8} parent=5 // pred_region
        %s428 = ssub.s32 %s26, 1
        // Predicated region
        $region13: #{simba_forward.8} parent=11 // pred_check
          %p429 = pneg %p73
        $region14: #{simba_forward.8} parent=11 // pred_check_branch
          %431 = sbr.rel (%p429) target = $region16
        $region15: #{simba_forward.8} parent=11 // pred_region
          _
        $region16: #{simba_forward.8} parent=11 // pred_fallthru
          _
        // Predicated region
        $region17: #{simba_forward.8} parent=11 // pred_check
          %p432 = pneg %p94
        $region18: #{simba_forward.8} parent=11 // pred_check_branch
          %434 = sbr.rel (%p432) target = $region20
        $region19: #{simba_forward.8} parent=11 // pred_region
          _
        $region20: #{simba_forward.8} parent=11 // pred_fallthru
          _
        // Predicated region
        $region21: #{simba_forward.8} parent=11 // pred_check
          %p435 = pneg %p115
        $region22: #{simba_forward.8} parent=11 // pred_check_branch
          %437 = sbr.rel (%p435) target = $region24
        $region23: #{simba_forward.8} parent=11 // pred_region
          _
        $region24: #{simba_forward.8} parent=11 // pred_fallthru
          _
        // Predicated region
        $region25: #{simba_forward.8} parent=11 // pred_check
          %p438 = pneg %p136
        $region26: #{simba_forward.8} parent=11 // pred_check_branch
          %440 = sbr.rel (%p438) target = $region28
        $region27: #{simba_forward.8} parent=11 // pred_region
          _
        $region28: #{simba_forward.8} parent=11 // pred_fallthru
          _
        // Predicated region
        $region29: #{simba_forward.8} parent=11 // pred_check
          %p441 = pneg %p157
        $region30: #{simba_forward.8} parent=11 // pred_check_branch
          %443 = sbr.rel (%p441) target = $region32
        $region31: #{simba_forward.8} parent=11 // pred_region
          _
        $region32: #{simba_forward.8} parent=11 // pred_fallthru
          _
        // Predicated region
        $region33: #{simba_forward.8} parent=11 // pred_check
          %p444 = pneg %p178
        $region34: #{simba_forward.8} parent=11 // pred_check_branch
          %446 = sbr.rel (%p444) target = $region36
        $region35: #{simba_forward.8} parent=11 // pred_region
          _
        $region36: #{simba_forward.8} parent=11 // pred_fallthru
          _
        // Predicated region
        $region37: #{simba_forward.8} parent=11 // pred_check
          %p447 = pneg %p199
        $region38: #{simba_forward.8} parent=11 // pred_check_branch
          %449 = sbr.rel (%p447) target = $region40
        $region39: #{simba_forward.8} parent=11 // pred_region
          _
        $region40: #{simba_forward.8} parent=11 // pred_fallthru
          _
        // Predicated region
        $region41: #{simba_forward.8} parent=11 // pred_check
          %p450 = pneg %p220
        $region42: #{simba_forward.8} parent=11 // pred_check_branch
          %452 = sbr.rel (%p450) target = $region44
        $region43: #{simba_forward.8} parent=11 // pred_region
          _
        $region44: #{simba_forward.8} parent=11 // pred_fallthru
          _
        // Predicated region
        $region45: #{simba_forward.8} parent=11 // pred_check
          %p453 = pneg %p241
        $region46: #{simba_forward.8} parent=11 // pred_check_branch
          %455 = sbr.rel (%p453) target = $region48
        $region47: #{simba_forward.8} parent=11 // pred_region
          _
        $region48: #{simba_forward.8} parent=11 // pred_fallthru
          _
        // Predicated region
        $region49: #{simba_forward.8} parent=11 // pred_check
          %p456 = pneg %p262
        $region50: #{simba_forward.8} parent=11 // pred_check_branch
          %458 = sbr.rel (%p456) target = $region52
        $region51: #{simba_forward.8} parent=11 // pred_region
          _
        $region52: #{simba_forward.8} parent=11 // pred_fallthru
          _
        // Predicated region
        $region53: #{simba_forward.8} parent=11 // pred_check
          %p459 = pneg %p283
        $region54: #{simba_forward.8} parent=11 // pred_check_branch
          %461 = sbr.rel (%p459) target = $region56
        $region55: #{simba_forward.8} parent=11 // pred_region
          %s463 = ssub.s32 16, 16
          %464 = vsyncadd [#allocation3], %s463
          %s466 = sshll.u32 [#allocation2], 4
          %s467 = int_to_ptr.vmem [resolvable:$true] %s466
          %469 = dma.hbm_to_vmem [thread:$0]  %s11, 16, %s467, [#allocation3]
        $region56: #{simba_forward.8} parent=11 // pred_fallthru
          _
        // Predicated region
        $region57: #{simba_forward.8} parent=11 // pred_check
          %p470 = pneg %p304
        $region58: #{simba_forward.8} parent=11 // pred_check_branch
          %472 = sbr.rel (%p470) target = $region60
        $region59: #{simba_forward.8} parent=11 // pred_region
          %s474 = ssub.s32 16, 16
          %475 = vsyncadd [#allocation5], %s474
          %s477 = sshll.u32 [#allocation4], 4
          %s478 = int_to_ptr.vmem [resolvable:$true] %s477
          %480 = dma.hbm_to_vmem [thread:$0]  %s12, 16, %s478, [#allocation5]
        $region60: #{simba_forward.8} parent=11 // pred_fallthru
          _
        // Predicated region
        $region61: #{simba_forward.8} parent=11 // pred_check
          %p481 = pneg %p325
        $region62: #{simba_forward.8} parent=11 // pred_check_branch
          %483 = sbr.rel (%p481) target = $region64
        $region63: #{simba_forward.8} parent=11 // pred_region
          _
        $region64: #{simba_forward.8} parent=11 // pred_fallthru
          _
        // Predicated region
        $region65: #{simba_forward.8} parent=11 // pred_check
          %p484 = pneg %p346
        $region66: #{simba_forward.8} parent=11 // pred_check_branch
          %486 = sbr.rel (%p484) target = $region68
        $region67: #{simba_forward.8} parent=11 // pred_region
          %s488 = ssub.s32 16, 16
          %489 = vsyncadd [#allocation5], %s488
          %s491 = sshll.u32 [#allocation6], 4
          %s492 = int_to_ptr.vmem [resolvable:$true] %s491
          %494 = dma.hbm_to_vmem [thread:$0]  %s14, 16, %s492, [#allocation5]
        $region68: #{simba_forward.8} parent=11 // pred_fallthru
          _
        // Predicated region
        $region69: #{simba_forward.8} parent=11 // pred_check
          %p495 = pneg %p367
        $region70: #{simba_forward.8} parent=11 // pred_check_branch
          %497 = sbr.rel (%p495) target = $region72
        $region71: #{simba_forward.8} parent=11 // pred_region
          _
        $region72: #{simba_forward.8} parent=11 // pred_fallthru
          _
        // Predicated region
        $region73: #{simba_forward.8} parent=11 // pred_check
          %p498 = pneg %p388
        $region74: #{simba_forward.8} parent=11 // pred_check_branch
          %500 = sbr.rel (%p498) target = $region76
        $region75: #{simba_forward.8} parent=11 // pred_region
          %s502 = ssub.s32 16, 16
          %503 = vsyncadd [#allocation8], %s502
          %s505 = sshll.u32 [#allocation7], 4
          %s506 = int_to_ptr.vmem [resolvable:$true] %s505
          %508 = dma.hbm_to_vmem [thread:$0]  %s16, 16, %s506, [#allocation8]
        $region76: #{simba_forward.8} parent=11 // pred_fallthru
          _
      $region12: #{simba_forward.8} parent=5 // pred_fallthru
        _
      %p509 = scmp.lt.s32.totalorder %s26, 2
      // Predicated region
      $region77: #{simba_forward.8} parent=5 // pred_check
        %p510 = pneg %p509
      $region78: #{simba_forward.8} parent=5 // pred_check_branch
        %512 = sbr.rel (%p510) target = $region80
      $region79: #{simba_forward.8} parent=5 // pred_region
        // Predicated region
        $region81: #{simba_forward.8} parent=79 // pred_check
          %p513 = pneg %p46
        $region82: #{simba_forward.8} parent=79 // pred_check_branch
          %515 = sbr.rel (%p513) target = $region84
        $region83: #{simba_forward.8} parent=79 // pred_region
          %p516 = scmp.lt.s32.totalorder %s26, 1
          %s517 = scalar_select %p516, %s26, 1
          %s518 = smul.addr %s517, 4
          %s519 = scalar_lea.vmem %s0, %s518
        $region84: #{simba_forward.8} parent=79 // pred_fallthru
          _
      $region80: #{simba_forward.8} parent=5 // pred_fallthru
        _
      %p520 = scmp.le.s32.totalorder 1, %s26
      %p521 = scmp.lt.s32.totalorder %s26, 3
      %p522 = pnand %p520, %p521
      %p523 = pneg %p522
      // Predicated region
      $region85: #{simba_forward.8} parent=5 // pred_check
        _
      $region86: #{simba_forward.8} parent=5 // pred_check_branch
        %525 = sbr.rel (%p522) target = $region88
      $region87: #{simba_forward.8} parent=5 // pred_region
        %s526 = ssub.s32 %s26, 1
        // Predicated region
        $region89: #{simba_forward.8} parent=87 // pred_check
          %p527 = pneg %p283
        $region90: #{simba_forward.8} parent=87 // pred_check_branch
          %529 = sbr.rel (%p527) target = $region92
        $region91: #{simba_forward.8} parent=87 // pred_region
          %530 = dma.done [#allocation3], 16
        $region92: #{simba_forward.8} parent=87 // pred_fallthru
          _
        // Predicated region
        $region93: #{simba_forward.8} parent=87 // pred_check
          %p531 = pneg %p304
        $region94: #{simba_forward.8} parent=87 // pred_check_branch
          %533 = sbr.rel (%p531) target = $region96
        $region95: #{simba_forward.8} parent=87 // pred_region
          %534 = dma.done [#allocation5], 16
        $region96: #{simba_forward.8} parent=87 // pred_fallthru
          _
        // Predicated region
        $region97: #{simba_forward.8} parent=87 // pred_check
          %p535 = pneg %p346
        $region98: #{simba_forward.8} parent=87 // pred_check_branch
          %537 = sbr.rel (%p535) target = $region100
        $region99: #{simba_forward.8} parent=87 // pred_region
          %538 = dma.done [#allocation5], 16
        $region100: #{simba_forward.8} parent=87 // pred_fallthru
          _
        // Predicated region
        $region101: #{simba_forward.8} parent=87 // pred_check
          %p539 = pneg %p388
        $region102: #{simba_forward.8} parent=87 // pred_check_branch
          %541 = sbr.rel (%p539) target = $region104
        $region103: #{simba_forward.8} parent=87 // pred_region
          %542 = dma.done [#allocation8], 16
        $region104: #{simba_forward.8} parent=87 // pred_fallthru
          _
        %p543 = scmp.lt.s32.totalorder %s31, 1
        %s544 = scalar_select %p543, %s31, 1
        %s545 = smul.addr %s544, 4
        %s546 = scalar_lea.vmem %s0, %s545
        %p547 = pneg %p52
        %p548 = pneg %p49
        %p549 = pneg %p73
        %p550 = pneg %p70
        %p551 = pneg %p94
        %p552 = pneg %p91
        %p553 = pneg %p115
        %p554 = pneg %p112
        %p555 = pneg %p136
        %p556 = pneg %p133
        %p557 = pneg %p157
        %p558 = pneg %p154
        %p559 = pneg %p178
        %p560 = pneg %p175
        %p561 = pneg %p199
        %p562 = pneg %p196
        %p563 = pneg %p220
        %p564 = pneg %p217
        %p565 = pneg %p241
        %p566 = pneg %p238
        %p567 = pneg %p262
        %p568 = pneg %p259
        %p569 = pneg %p283
        %p570 = pneg %p280
        %p571 = pneg %p304
        %p572 = pneg %p301
        %p573 = pneg %p325
        %p574 = pneg %p322
        %p575 = pneg %p346
        %p576 = pneg %p343
        %p577 = pneg %p367
        %p578 = pneg %p364
        %p579 = pneg %p388
        %p580 = pneg %p385
        %p581 = pneg %p414
        %p582 = pneg %p411
        %p583 = scmp.lt.s32.totalorder %s31, 1
        %s584 = scalar_select %p583, %s31, 1
        %s585 = smul.addr %s584, 4
        %s586 = scalar_lea.vmem %s17, %s585
        %p587 = scmp.lt.s32.totalorder %s31, 1
        %s588 = scalar_select %p587, %s31, 1
        %s589 = smul.addr %s588, 4
        %s590 = scalar_lea.vmem %s0, %s589
        %p591 = scmp.lt.s32.totalorder %s31, 1
        %s592 = scalar_select %p591, %s31, 1
        %s593 = smul.addr %s592, 4
        %s594 = scalar_lea.vmem %s17, %s593
        %v600 = vld [vmem:[%s590] sm:$0xf]
        %v601 = vunpack.c.l.bf16 %v600
        %v602 = vld [vmem:[%s1] sm:$0x1]
        %v603 = vld [vmem:[%s2] sm:$0x1]
        %604 = vadd.xlane.f32.xlu0 %v601
        %v605 = vpop.xlane.xlu0 %604
        %v606 = vmul.f32 %v605, 0.020833334
        %v607 = vmul.f32 %v601, %v601
        %608 = vadd.xlane.f32.xlu0 %v607
        %v609 = vpop.xlane.xlu0 %608
        %v610 = vmul.f32 %v609, 0.020833334
        %v611 = vmul.f32 %v606, %v606
        %v612 = vsub.f32 %v610, %v611
        %v613 = vmax.f32 %v612, 0.0
        %v614 = vsub.f32 %v601, %v606
        %v615 = vadd.f32 %v613, 1e-05
        %v616 = vrsqrt.pop %v615
        %v617 = vmul.f32 %v614, %v616
        %v619 = vlaneseq
        %v620 = vshrl.u32 %v619, 7
        %v621 = vsub.s32 0, %v620
        %v622 = vrot.slane %v602, %v621
        %v624 = vmul.f32 %v617, %v622
        %v626 = vlaneseq
        %v627 = vshrl.u32 %v626, 7
        %v628 = vsub.s32 0, %v627
        %v629 = vrot.slane %v603, %v628
        %v631 = vadd.f32 %v624, %v629
        %v632 = vpack.c.bf16 %v631, %v631
        %v633 = vld [vmem:[%s3] sm:$0xf]
        %v634 = vld [vmem:[%s3 + $0x4] sm:$0xf]
        %v635 = vld [vmem:[%s3 + $0x8] sm:$0xf]
        %v636 = vld [vmem:[%s3 + $0xc] sm:$0xf]
        %v637 = vld [vmem:[%s3 + $0x10] sm:$0xf]
        %v638 = vld [vmem:[%s3 + $0x14] sm:$0xf]
        %v639 = vld [vmem:[%s3 + $0x18] sm:$0xf]
        %v640 = vld [vmem:[%s3 + $0x1c] sm:$0xf]
        %v641 = vld [vmem:[%s3 + $0x20] sm:$0xf]
        %v642 = vld [vmem:[%s3 + $0x24] sm:$0xf]
        %v643 = vld [vmem:[%s3 + $0x28] sm:$0xf]
        %v644 = vld [vmem:[%s3 + $0x2c] sm:$0xf]
        %v645 = vld [vmem:[%s3 + $0x30] sm:$0xf]
        %v646 = vld [vmem:[%s3 + $0x34] sm:$0xf]
        %v647 = vld [vmem:[%s3 + $0x38] sm:$0xf]
        %v648 = vld [vmem:[%s3 + $0x3c] sm:$0xf]
        %v649 = vld [vmem:[%s4] sm:$0x1]
        %v651 = vlaneseq
        %v652 = vshrl.u32 %v651, 7
        %v653 = vsub.s32 0, %v652
        %v654 = vrot.slane %v649, %v653
        %v672 = vunpack.c.l.b16 %v633
        %v673 = vunpack.c.l.b16 %v634
        %v674 = vunpack.c.l.b16 %v635
        %v675 = vunpack.c.l.b16 %v636
        %v676 = vunpack.c.l.b16 %v637
        %v677 = vunpack.c.l.b16 %v638
        %v678 = vunpack.c.l.b16 %v639
        %v679 = vunpack.c.l.b16 %v640
        %v680 = vunpack.c.l.b16 %v641
        %v681 = vunpack.c.l.b16 %v642
        %v682 = vunpack.c.l.b16 %v643
        %v683 = vunpack.c.l.b16 %v644
        %v684 = vunpack.c.l.b16 %v645
        %v685 = vunpack.c.l.b16 %v646
        %v686 = vunpack.c.l.b16 %v647
        %v687 = vunpack.c.l.b16 %v648
        %v688 = vpack.c.b16 %v673, %v672
        %v689 = vpack.c.b16 %v675, %v674
        %v690 = vpack.c.b16 %v677, %v676
        %v691 = vpack.c.b16 %v679, %v678
        %v692 = vpack.c.b16 %v681, %v680
        %v693 = vpack.c.b16 %v683, %v682
        %v694 = vpack.c.b16 %v685, %v684
        %v695 = vpack.c.b16 %v687, %v686
        %704 = vmatprep.subr.bf16.mxu0 0
        %705 = vmatpush1.bf16.msra.mxu0 %v688
        %706 = vmatprep.subr.bf16.mxu0 0
        %707 = vmatpush1.bf16.msra.mxu0 %v689
        %708 = vmatprep.subr.bf16.mxu0 0
        %709 = vmatpush1.bf16.msra.mxu0 %v690
        %710 = vmatprep.subr.bf16.mxu0 0
        %711 = vmatpush1.bf16.msra.mxu0 %v691
        %712 = vmatprep.subr.bf16.mxu0 0
        %713 = vmatpush1.bf16.msra.mxu0 %v692
        %714 = vmatprep.subr.bf16.mxu0 0
        %715 = vmatpush1.bf16.msra.mxu0 %v693
        %716 = vmatprep.subr.bf16.mxu0 0
        %717 = vmatpush1.bf16.msra.mxu0 %v694
        %718 = vmatprep.subr.bf16.mxu0 0
        %719 = vmatpush1.bf16.msra.mxu0 %v695
        %720 = vmatprep.subr.bf16.mxu0 0
        %721 = vmatpush1.bf16.msra.mxu0 0
        %722 = vmatprep.subr.bf16.mxu0 0
        %723 = vmatpush1.bf16.msra.mxu0 0
        %724 = vmatprep.subr.bf16.mxu0 0
        %725 = vmatpush1.bf16.msra.mxu0 0
        %726 = vmatprep.subr.bf16.mxu0 0
        %727 = vmatpush1.bf16.msra.mxu0 0
        %728 = vmatprep.subr.bf16.mxu0 0
        %729 = vmatpush1.bf16.msra.mxu0 0
        %730 = vmatprep.subr.bf16.mxu0 0
        %731 = vmatpush1.bf16.msra.mxu0 0
        %732 = vmatprep.subr.bf16.mxu0 0
        %733 = vmatpush1.bf16.msra.mxu0 0
        %734 = vmatprep.subr.bf16.mxu0 0
        %735 = vmatpush1.bf16.msra.mxu0 0
        %736 = vmatprep.mubr.bf16.mxu0 0
        %737 = vmatmul.mubr.bf16.gmra.mrb[0].mxu0 %v632
        %v738 = vpop.f32.mrb[0].mxu0
        %v739 = vadd.f32 %v654, %v738
        %v740 = vpop.f32.mrb[0].mxu0
        %v741 = vpop.f32.mrb[0].mxu0
        %v742 = vpop.f32.mrb[0].mxu0
        %743 = vdwg.mxu0
        %v744 = vld [vmem:[%s5] sm:$0x1]
        %v745 = vld [vmem:[%s6] sm:$0x1]
        %746 = vadd.xlane.f32.xlu0 %v739
        %v747 = vpop.xlane.xlu0 %746
        %v748 = vmul.f32 %v747, 0.015625
        %v749 = vmul.f32 %v739, %v739
        %750 = vadd.xlane.f32.xlu0 %v749
        %v751 = vpop.xlane.xlu0 %750
        %v752 = vmul.f32 %v751, 0.015625
        %v753 = vmul.f32 %v748, %v748
        %v754 = vsub.f32 %v752, %v753
        %v755 = vmax.f32 %v754, 0.0
        %v756 = vsub.f32 %v739, %v748
        %v757 = vadd.f32 %v755, 1e-05
        %v758 = vrsqrt.pop %v757
        %v759 = vmul.f32 %v756, %v758
        %v761 = vlaneseq
        %v762 = vshrl.u32 %v761, 7
        %v763 = vsub.s32 0, %v762
        %v764 = vrot.slane %v744, %v763
        %v766 = vmul.f32 %v759, %v764
        %v768 = vlaneseq
        %v769 = vshrl.u32 %v768, 7
        %v770 = vsub.s32 0, %v769
        %v771 = vrot.slane %v745, %v770
        %v773 = vadd.f32 %v766, %v771
        %v774 = vpack.c.bf16 %v773, %v773
        %v775 = vld [vmem:[%s7] sm:$0xf]
        %v776 = vld [vmem:[%s7 + $0x4] sm:$0xf]
        %v777 = vld [vmem:[%s7 + $0x8] sm:$0xf]
        %v778 = vld [vmem:[%s7 + $0xc] sm:$0xf]
        %v779 = vld [vmem:[%s7 + $0x10] sm:$0xf]
        %v780 = vld [vmem:[%s7 + $0x14] sm:$0xf]
        %v781 = vld [vmem:[%s7 + $0x18] sm:$0xf]
        %v782 = vld [vmem:[%s7 + $0x1c] sm:$0xf]
        %v783 = vld [vmem:[%s7 + $0x20] sm:$0xf]
        %v784 = vld [vmem:[%s7 + $0x24] sm:$0xf]
        %v785 = vld [vmem:[%s7 + $0x28] sm:$0xf]
        %v786 = vld [vmem:[%s7 + $0x2c] sm:$0xf]
        %v787 = vld [vmem:[%s7 + $0x30] sm:$0xf]
        %v788 = vld [vmem:[%s7 + $0x34] sm:$0xf]
        %v789 = vld [vmem:[%s7 + $0x38] sm:$0xf]
        %v790 = vld [vmem:[%s7 + $0x3c] sm:$0xf]
        %v791 = vld [vmem:[%s8] sm:$0x1]
        %v793 = vlaneseq
        %v794 = vshrl.u32 %v793, 7
        %v795 = vsub.s32 0, %v794
        %v796 = vrot.slane %v791, %v795
        %v814 = vunpack.c.l.b16 %v775
        %v815 = vunpack.c.l.b16 %v776
        %v816 = vunpack.c.l.b16 %v777
        %v817 = vunpack.c.l.b16 %v778
        %v818 = vunpack.c.l.b16 %v779
        %v819 = vunpack.c.l.b16 %v780
        %v820 = vunpack.c.l.b16 %v781
        %v821 = vunpack.c.l.b16 %v782
        %v822 = vunpack.c.l.b16 %v783
        %v823 = vunpack.c.l.b16 %v784
        %v824 = vunpack.c.l.b16 %v785
        %v825 = vunpack.c.l.b16 %v786
        %v826 = vunpack.c.l.b16 %v787
        %v827 = vunpack.c.l.b16 %v788
        %v828 = vunpack.c.l.b16 %v789
        %v829 = vunpack.c.l.b16 %v790
        %v830 = vpack.c.b16 %v815, %v814
        %v831 = vpack.c.b16 %v817, %v816
        %v832 = vpack.c.b16 %v819, %v818
        %v833 = vpack.c.b16 %v821, %v820
        %v834 = vpack.c.b16 %v823, %v822
        %v835 = vpack.c.b16 %v825, %v824
        %v836 = vpack.c.b16 %v827, %v826
        %v837 = vpack.c.b16 %v829, %v828
        %846 = vmatprep.subr.bf16.mxu0 0
        %847 = vmatpush1.bf16.msra.mxu0 %v830
        %848 = vmatprep.subr.bf16.mxu0 0
        %849 = vmatpush1.bf16.msra.mxu0 %v831
        %850 = vmatprep.subr.bf16.mxu0 0
        %851 = vmatpush1.bf16.msra.mxu0 %v832
        %852 = vmatprep.subr.bf16.mxu0 0
        %853 = vmatpush1.bf16.msra.mxu0 %v833
        %854 = vmatprep.subr.bf16.mxu0 0
        %855 = vmatpush1.bf16.msra.mxu0 %v834
        %856 = vmatprep.subr.bf16.mxu0 0
        %857 = vmatpush1.bf16.msra.mxu0 %v835
        %858 = vmatprep.subr.bf16.mxu0 0
        %859 = vmatpush1.bf16.msra.mxu0 %v836
        %860 = vmatprep.subr.bf16.mxu0 0
        %861 = vmatpush1.bf16.msra.mxu0 %v837
        %862 = vmatprep.subr.bf16.mxu0 0
        %863 = vmatpush1.bf16.msra.mxu0 0
        %864 = vmatprep.subr.bf16.mxu0 0
        %865 = vmatpush1.bf16.msra.mxu0 0
        %866 = vmatprep.subr.bf16.mxu0 0
        %867 = vmatpush1.bf16.msra.mxu0 0
        %868 = vmatprep.subr.bf16.mxu0 0
        %869 = vmatpush1.bf16.msra.mxu0 0
        %870 = vmatprep.subr.bf16.mxu0 0
        %871 = vmatpush1.bf16.msra.mxu0 0
        %872 = vmatprep.subr.bf16.mxu0 0
        %873 = vmatpush1.bf16.msra.mxu0 0
        %874 = vmatprep.subr.bf16.mxu0 0
        %875 = vmatpush1.bf16.msra.mxu0 0
        %876 = vmatprep.subr.bf16.mxu0 0
        %877 = vmatpush1.bf16.msra.mxu0 0
        %878 = vmatprep.mubr.bf16.mxu0 0
        %879 = vmatmul.mubr.bf16.gmra.mrb[0].mxu0 %v774
        %v880 = vpop.f32.mrb[0].mxu0
        %v881 = vadd.f32 %v796, %v880
        %v882 = vpop.f32.mrb[0].mxu0
        %v883 = vpop.f32.mrb[0].mxu0
        %v884 = vpop.f32.mrb[0].mxu0
        %885 = vdwg.mxu0
        %v886 = vpack.c.bf16 %v881, %v881
        %v887 = vmul.bf16 %v886, %v886
        %v888 = vmul.bf16 %v886, %v887
        %v889 = vmul.bf16 %v888, 1027030327
        %v890 = vadd.bf16 %v886, %v889
        %v891 = vmul.bf16 %v890, 1061961548
        %v892 = vtanh.bf16.pop %v891
        %v893 = vadd.bf16 %v892, 1065369472
        %v894 = vmul.bf16 %v893, 1056980736
        %v895 = vmul.bf16 %v886, %v894
        %v896 = vld [vmem:[%s9] sm:$0xf]
        %v897 = vld [vmem:[%s9 + $0x4] sm:$0xf]
        %v898 = vld [vmem:[%s9 + $0x8] sm:$0xf]
        %v899 = vld [vmem:[%s9 + $0xc] sm:$0xf]
        %v900 = vld [vmem:[%s9 + $0x10] sm:$0xf]
        %v901 = vld [vmem:[%s9 + $0x14] sm:$0xf]
        %v902 = vld [vmem:[%s9 + $0x18] sm:$0xf]
        %v903 = vld [vmem:[%s9 + $0x1c] sm:$0xf]
        %v904 = vld [vmem:[%s9 + $0x20] sm:$0xf]
        %v905 = vld [vmem:[%s9 + $0x24] sm:$0xf]
        %v906 = vld [vmem:[%s9 + $0x28] sm:$0xf]
        %v907 = vld [vmem:[%s9 + $0x2c] sm:$0xf]
        %v908 = vld [vmem:[%s9 + $0x30] sm:$0xf]
        %v909 = vld [vmem:[%s9 + $0x34] sm:$0xf]
        %v910 = vld [vmem:[%s9 + $0x38] sm:$0xf]
        %v911 = vld [vmem:[%s9 + $0x3c] sm:$0xf]
        %v912 = vld [vmem:[%s10] sm:$0x1]
        %v914 = vlaneseq
        %v915 = vshrl.u32 %v914, 7
        %v916 = vsub.s32 0, %v915
        %v917 = vrot.slane %v912, %v916
        %v935 = vunpack.c.l.b16 %v896
        %v936 = vunpack.c.l.b16 %v897
        %v937 = vunpack.c.l.b16 %v898
        %v938 = vunpack.c.l.b16 %v899
        %v939 = vunpack.c.l.b16 %v900
        %v940 = vunpack.c.l.b16 %v901
        %v941 = vunpack.c.l.b16 %v902
        %v942 = vunpack.c.l.b16 %v903
        %v943 = vunpack.c.l.b16 %v904
        %v944 = vunpack.c.l.b16 %v905
        %v945 = vunpack.c.l.b16 %v906
        %v946 = vunpack.c.l.b16 %v907
        %v947 = vunpack.c.l.b16 %v908
        %v948 = vunpack.c.l.b16 %v909
        %v949 = vunpack.c.l.b16 %v910
        %v950 = vunpack.c.l.b16 %v911
        %v951 = vpack.c.b16 %v936, %v935
        %v952 = vpack.c.b16 %v938, %v937
        %v953 = vpack.c.b16 %v940, %v939
        %v954 = vpack.c.b16 %v942, %v941
        %v955 = vpack.c.b16 %v944, %v943
        %v956 = vpack.c.b16 %v946, %v945
        %v957 = vpack.c.b16 %v948, %v947
        %v958 = vpack.c.b16 %v950, %v949
        %967 = vmatprep.subr.bf16.mxu0 0
        %968 = vmatpush1.bf16.msra.mxu0 %v951
        %969 = vmatprep.subr.bf16.mxu0 0
        %970 = vmatpush1.bf16.msra.mxu0 %v952
        %971 = vmatprep.subr.bf16.mxu0 0
        %972 = vmatpush1.bf16.msra.mxu0 %v953
        %973 = vmatprep.subr.bf16.mxu0 0
        %974 = vmatpush1.bf16.msra.mxu0 %v954
        %975 = vmatprep.subr.bf16.mxu0 0
        %976 = vmatpush1.bf16.msra.mxu0 %v955
        %977 = vmatprep.subr.bf16.mxu0 0
        %978 = vmatpush1.bf16.msra.mxu0 %v956
        %979 = vmatprep.subr.bf16.mxu0 0
        %980 = vmatpush1.bf16.msra.mxu0 %v957
        %981 = vmatprep.subr.bf16.mxu0 0
        %982 = vmatpush1.bf16.msra.mxu0 %v958
        %983 = vmatprep.subr.bf16.mxu0 0
        %984 = vmatpush1.bf16.msra.mxu0 0
        %985 = vmatprep.subr.bf16.mxu0 0
        %986 = vmatpush1.bf16.msra.mxu0 0
        %987 = vmatprep.subr.bf16.mxu0 0
        %988 = vmatpush1.bf16.msra.mxu0 0
        %989 = vmatprep.subr.bf16.mxu0 0
        %990 = vmatpush1.bf16.msra.mxu0 0
        %991 = vmatprep.subr.bf16.mxu0 0
        %992 = vmatpush1.bf16.msra.mxu0 0
        %993 = vmatprep.subr.bf16.mxu0 0
        %994 = vmatpush1.bf16.msra.mxu0 0
        %995 = vmatprep.subr.bf16.mxu0 0
        %996 = vmatpush1.bf16.msra.mxu0 0
        %997 = vmatprep.subr.bf16.mxu0 0
        %998 = vmatpush1.bf16.msra.mxu0 0
        %999 = vmatprep.mubr.bf16.mxu0 0
        %1000 = vmatmul.mubr.bf16.gmra.mrb[0].mxu0 %v895
        %v1001 = vpop.f32.mrb[0].mxu0
        %v1002 = vadd.f32 %v917, %v1001
        %v1003 = vpop.f32.mrb[0].mxu0
        %v1004 = vpop.f32.mrb[0].mxu0
        %v1005 = vpop.f32.mrb[0].mxu0
        %1006 = vdwg.mxu0
        %v1007 = vadd.f32 %v739, %v1002
        %v1008 = vld [vmem:[#allocation2] sm:$0x1]
        %v1009 = vld [vmem:[#allocation4] sm:$0x1]
        %1010 = vadd.xlane.f32.xlu0 %v1007
        %v1011 = vpop.xlane.xlu0 %1010
        %v1012 = vmul.f32 %v1011, 0.015625
        %v1013 = vmul.f32 %v1007, %v1007
        %1014 = vadd.xlane.f32.xlu0 %v1013
        %v1015 = vpop.xlane.xlu0 %1014
        %v1016 = vmul.f32 %v1015, 0.015625
        %v1017 = vmul.f32 %v1012, %v1012
        %v1018 = vsub.f32 %v1016, %v1017
        %v1019 = vmax.f32 %v1018, 0.0
        %v1020 = vsub.f32 %v1007, %v1012
        %v1021 = vadd.f32 %v1019, 1e-05
        %v1022 = vrsqrt.pop %v1021
        %v1023 = vmul.f32 %v1020, %v1022
        %v1025 = vlaneseq
        %v1026 = vshrl.u32 %v1025, 7
        %v1027 = vsub.s32 0, %v1026
        %v1028 = vrot.slane %v1008, %v1027
        %v1030 = vmul.f32 %v1023, %v1028
        %v1032 = vlaneseq
        %v1033 = vshrl.u32 %v1032, 7
        %v1034 = vsub.s32 0, %v1033
        %v1035 = vrot.slane %v1009, %v1034
        %v1037 = vadd.f32 %v1030, %v1035
        %v1038 = vpack.c.bf16 %v1037, %v1037
        %v1039 = vld [vmem:[%s13] sm:$0xf]
        %v1040 = vld [vmem:[%s13 + $0x4] sm:$0xf]
        %v1041 = vld [vmem:[%s13 + $0x8] sm:$0xf]
        %v1042 = vld [vmem:[%s13 + $0xc] sm:$0xf]
        %v1043 = vld [vmem:[%s13 + $0x10] sm:$0xf]
        %v1044 = vld [vmem:[%s13 + $0x14] sm:$0xf]
        %v1045 = vld [vmem:[%s13 + $0x18] sm:$0xf]
        %v1046 = vld [vmem:[%s13 + $0x1c] sm:$0xf]
        %v1047 = vld [vmem:[%s13 + $0x20] sm:$0xf]
        %v1048 = vld [vmem:[%s13 + $0x24] sm:$0xf]
        %v1049 = vld [vmem:[%s13 + $0x28] sm:$0xf]
        %v1050 = vld [vmem:[%s13 + $0x2c] sm:$0xf]
        %v1051 = vld [vmem:[%s13 + $0x30] sm:$0xf]
        %v1052 = vld [vmem:[%s13 + $0x34] sm:$0xf]
        %v1053 = vld [vmem:[%s13 + $0x38] sm:$0xf]
        %v1054 = vld [vmem:[%s13 + $0x3c] sm:$0xf]
        %v1055 = vld [vmem:[#allocation6] sm:$0x1]
        %v1057 = vlaneseq
        %v1058 = vshrl.u32 %v1057, 7
        %v1059 = vsub.s32 0, %v1058
        %v1060 = vrot.slane %v1055, %v1059
        %v1078 = vunpack.c.l.b16 %v1039
        %v1079 = vunpack.c.l.b16 %v1040
        %v1080 = vunpack.c.l.b16 %v1041
        %v1081 = vunpack.c.l.b16 %v1042
        %v1082 = vunpack.c.l.b16 %v1043
        %v1083 = vunpack.c.l.b16 %v1044
        %v1084 = vunpack.c.l.b16 %v1045
        %v1085 = vunpack.c.l.b16 %v1046
        %v1086 = vunpack.c.l.b16 %v1047
        %v1087 = vunpack.c.l.b16 %v1048
        %v1088 = vunpack.c.l.b16 %v1049
        %v1089 = vunpack.c.l.b16 %v1050
        %v1090 = vunpack.c.l.b16 %v1051
        %v1091 = vunpack.c.l.b16 %v1052
        %v1092 = vunpack.c.l.b16 %v1053
        %v1093 = vunpack.c.l.b16 %v1054
        %v1094 = vpack.c.b16 %v1079, %v1078
        %v1095 = vpack.c.b16 %v1081, %v1080
        %v1096 = vpack.c.b16 %v1083, %v1082
        %v1097 = vpack.c.b16 %v1085, %v1084
        %v1098 = vpack.c.b16 %v1087, %v1086
        %v1099 = vpack.c.b16 %v1089, %v1088
        %v1100 = vpack.c.b16 %v1091, %v1090
        %v1101 = vpack.c.b16 %v1093, %v1092
        %1110 = vmatprep.subr.bf16.mxu0 0
        %1111 = vmatpush1.bf16.msra.mxu0 %v1094
        %1112 = vmatprep.subr.bf16.mxu0 0
        %1113 = vmatpush1.bf16.msra.mxu0 %v1095
        %1114 = vmatprep.subr.bf16.mxu0 0
        %1115 = vmatpush1.bf16.msra.mxu0 %v1096
        %1116 = vmatprep.subr.bf16.mxu0 0
        %1117 = vmatpush1.bf16.msra.mxu0 %v1097
        %1118 = vmatprep.subr.bf16.mxu0 0
        %1119 = vmatpush1.bf16.msra.mxu0 %v1098
        %1120 = vmatprep.subr.bf16.mxu0 0
        %1121 = vmatpush1.bf16.msra.mxu0 %v1099
        %1122 = vmatprep.subr.bf16.mxu0 0
        %1123 = vmatpush1.bf16.msra.mxu0 %v1100
        %1124 = vmatprep.subr.bf16.mxu0 0
        %1125 = vmatpush1.bf16.msra.mxu0 %v1101
        %1126 = vmatprep.subr.bf16.mxu0 0
        %1127 = vmatpush1.bf16.msra.mxu0 0
        %1128 = vmatprep.subr.bf16.mxu0 0
        %1129 = vmatpush1.bf16.msra.mxu0 0
        %1130 = vmatprep.subr.bf16.mxu0 0
        %1131 = vmatpush1.bf16.msra.mxu0 0
        %1132 = vmatprep.subr.bf16.mxu0 0
        %1133 = vmatpush1.bf16.msra.mxu0 0
        %1134 = vmatprep.subr.bf16.mxu0 0
        %1135 = vmatpush1.bf16.msra.mxu0 0
        %1136 = vmatprep.subr.bf16.mxu0 0
        %1137 = vmatpush1.bf16.msra.mxu0 0
        %1138 = vmatprep.subr.bf16.mxu0 0
        %1139 = vmatpush1.bf16.msra.mxu0 0
        %1140 = vmatprep.subr.bf16.mxu0 0
        %1141 = vmatpush1.bf16.msra.mxu0 0
        %1142 = vmatprep.mubr.bf16.mxu0 0
        %1143 = vmatmul.mubr.bf16.gmra.mrb[0].mxu0 %v1038
        %v1144 = vpop.f32.mrb[0].mxu0
        %v1145 = vadd.f32 %v1060, %v1144
        %v1146 = vpop.f32.mrb[0].mxu0
        %v1147 = vpop.f32.mrb[0].mxu0
        %v1148 = vpop.f32.mrb[0].mxu0
        %1149 = vdwg.mxu0
        %v1150 = vpack.c.bf16 %v1145, %v1145
        %v1151 = vmul.bf16 %v1150, %v1150
        %v1152 = vmul.bf16 %v1150, %v1151
        %v1153 = vmul.bf16 %v1152, 1027030327
        %v1154 = vadd.bf16 %v1150, %v1153
        %v1155 = vmul.bf16 %v1154, 1061961548
        %v1156 = vtanh.bf16.pop %v1155
        %v1157 = vadd.bf16 %v1156, 1065369472
        %v1158 = vmul.bf16 %v1157, 1056980736
        %v1159 = vmul.bf16 %v1150, %v1158
        %v1160 = vld [vmem:[%s15] sm:$0xf]
        %v1161 = vld [vmem:[%s15 + $0x4] sm:$0xf]
        %v1162 = vld [vmem:[%s15 + $0x8] sm:$0xf]
        %v1163 = vld [vmem:[%s15 + $0xc] sm:$0xf]
        %v1164 = vld [vmem:[%s15 + $0x10] sm:$0xf]
        %v1165 = vld [vmem:[%s15 + $0x14] sm:$0xf]
        %v1166 = vld [vmem:[%s15 + $0x18] sm:$0xf]
        %v1167 = vld [vmem:[%s15 + $0x1c] sm:$0xf]
        %v1168 = vld [vmem:[%s15 + $0x20] sm:$0xf]
        %v1169 = vld [vmem:[%s15 + $0x24] sm:$0xf]
        %v1170 = vld [vmem:[%s15 + $0x28] sm:$0xf]
        %v1171 = vld [vmem:[%s15 + $0x2c] sm:$0xf]
        %v1172 = vld [vmem:[%s15 + $0x30] sm:$0xf]
        %v1173 = vld [vmem:[%s15 + $0x34] sm:$0xf]
        %v1174 = vld [vmem:[%s15 + $0x38] sm:$0xf]
        %v1175 = vld [vmem:[%s15 + $0x3c] sm:$0xf]
        %v1176 = vld [vmem:[#allocation7] sm:$0x1]
        %v1178 = vlaneseq
        %v1179 = vshrl.u32 %v1178, 7
        %v1180 = vsub.s32 0, %v1179
        %v1181 = vrot.slane %v1176, %v1180
        %v1199 = vunpack.c.l.b16 %v1160
        %v1200 = vunpack.c.l.b16 %v1161
        %v1201 = vunpack.c.l.b16 %v1162
        %v1202 = vunpack.c.l.b16 %v1163
        %v1203 = vunpack.c.l.b16 %v1164
        %v1204 = vunpack.c.l.b16 %v1165
        %v1205 = vunpack.c.l.b16 %v1166
        %v1206 = vunpack.c.l.b16 %v1167
        %v1207 = vunpack.c.l.b16 %v1168
        %v1208 = vunpack.c.l.b16 %v1169
        %v1209 = vunpack.c.l.b16 %v1170
        %v1210 = vunpack.c.l.b16 %v1171
        %v1211 = vunpack.c.l.b16 %v1172
        %v1212 = vunpack.c.l.b16 %v1173
        %v1213 = vunpack.c.l.b16 %v1174
        %v1214 = vunpack.c.l.b16 %v1175
        %v1215 = vpack.c.b16 %v1200, %v1199
        %v1216 = vpack.c.b16 %v1202, %v1201
        %v1217 = vpack.c.b16 %v1204, %v1203
        %v1218 = vpack.c.b16 %v1206, %v1205
        %v1219 = vpack.c.b16 %v1208, %v1207
        %v1220 = vpack.c.b16 %v1210, %v1209
        %v1221 = vpack.c.b16 %v1212, %v1211
        %v1222 = vpack.c.b16 %v1214, %v1213
        %1231 = vmatprep.subr.bf16.mxu0 0
        %1232 = vmatpush1.bf16.msra.mxu0 %v1215
        %1233 = vmatprep.subr.bf16.mxu0 0
        %1234 = vmatpush1.bf16.msra.mxu0 %v1216
        %1235 = vmatprep.subr.bf16.mxu0 0
        %1236 = vmatpush1.bf16.msra.mxu0 %v1217
        %1237 = vmatprep.subr.bf16.mxu0 0
        %1238 = vmatpush1.bf16.msra.mxu0 %v1218
        %1239 = vmatprep.subr.bf16.mxu0 0
        %1240 = vmatpush1.bf16.msra.mxu0 %v1219
        %1241 = vmatprep.subr.bf16.mxu0 0
        %1242 = vmatpush1.bf16.msra.mxu0 %v1220
        %1243 = vmatprep.subr.bf16.mxu0 0
        %1244 = vmatpush1.bf16.msra.mxu0 %v1221
        %1245 = vmatprep.subr.bf16.mxu0 0
        %1246 = vmatpush1.bf16.msra.mxu0 %v1222
        %1247 = vmatprep.subr.bf16.mxu0 0
        %1248 = vmatpush1.bf16.msra.mxu0 0
        %1249 = vmatprep.subr.bf16.mxu0 0
        %1250 = vmatpush1.bf16.msra.mxu0 0
        %1251 = vmatprep.subr.bf16.mxu0 0
        %1252 = vmatpush1.bf16.msra.mxu0 0
        %1253 = vmatprep.subr.bf16.mxu0 0
        %1254 = vmatpush1.bf16.msra.mxu0 0
        %1255 = vmatprep.subr.bf16.mxu0 0
        %1256 = vmatpush1.bf16.msra.mxu0 0
        %1257 = vmatprep.subr.bf16.mxu0 0
        %1258 = vmatpush1.bf16.msra.mxu0 0
        %1259 = vmatprep.subr.bf16.mxu0 0
        %1260 = vmatpush1.bf16.msra.mxu0 0
        %1261 = vmatprep.subr.bf16.mxu0 0
        %1262 = vmatpush1.bf16.msra.mxu0 0
        %1263 = vmatprep.mubr.bf16.mxu0 0
        %1264 = vmatmul.mubr.bf16.gmra.mrb[0].mxu0 %v1159
        %v1265 = vpop.f32.mrb[0].mxu0
        %v1266 = vadd.f32 %v1181, %v1265
        %v1267 = vpop.f32.mrb[0].mxu0
        %v1268 = vpop.f32.mrb[0].mxu0
        %v1269 = vpop.f32.mrb[0].mxu0
        %1270 = vdwg.mxu0
        %v1271 = vadd.f32 %v1007, %v1266
        %v1272 = vpack.c.bf16 %v1271, %v1271
        %1273 = vst [vmem:[%s594] sm:$0xf] %v1272
        %p1274 = scmp.lt.s32.totalorder %s31, 1
        %s1275 = scalar_select %p1274, %s31, 1
        %s1276 = smul.addr %s1275, 4
        %s1277 = scalar_lea.vmem %s17, %s1276
        // Predicated region
        $region105: #{simba_forward.8} parent=87 // pred_check
          %p1278 = pneg %p411
        $region106: #{simba_forward.8} parent=87 // pred_check_branch
          %1280 = sbr.rel (%p1278) target = $region108
        $region107: #{simba_forward.8} parent=87 // pred_region
          _
        $region108: #{simba_forward.8} parent=87 // pred_fallthru
          _
      $region88: #{simba_forward.8} parent=5 // pred_fallthru
        _
      %p1281 = scmp.le.s32.totalorder 2, %s26
      // Predicated region
      $region109: #{simba_forward.8} parent=5 // pred_check
        %p1282 = pneg %p1281
      $region110: #{simba_forward.8} parent=5 // pred_check_branch
        %1284 = sbr.rel (%p1282) target = $region112
      $region111: #{simba_forward.8} parent=5 // pred_region
        %s1285 = ssub.s32 %s26, 2
        // Predicated region
        $region113: #{simba_forward.8} parent=111 // pred_check
          %p1286 = pneg %p417
        $region114: #{simba_forward.8} parent=111 // pred_check_branch
          %1288 = sbr.rel (%p1286) target = $region116
        $region115: #{simba_forward.8} parent=111 // pred_region
          %p1289 = scmp.lt.s32.totalorder %s32, 1
          %s1290 = scalar_select %p1289, %s32, 1
          %s1291 = smul.addr %s1290, 4
          %s1292 = scalar_lea.vmem %s17, %s1291
        $region116: #{simba_forward.8} parent=111 // pred_fallthru
          _
      $region112: #{simba_forward.8} parent=5 // pred_fallthru
        _
    $region6: #{simba_forward.8} parent=1 // loop_footer
      %s30 = sadd.s32 1, %s26
    $region7: #{simba_forward.8} parent=1 // loop_footer_branch
      %25 = sbr.rel target = $region3
    $region8: #{simba_forward.8} parent=1 // loop_exit
      _
    %1293 = vsyncpa [#allocation3], 1
    %s1294 = scalar_lea.sflag [#allocation3], 1
    %1295 = vsyncpa %s1294, 1
    %1296 = vsyncpa [#allocation5], 1
    %1297 = vsyncpa [#allocation8], 1

// kernel: simba_forward.9
$region0: #{simba_forward.9}
  #allocation0 [shape = 'u32[]', space=smem, size = 0x4, offset = 0x4, fixed_abs, tag = 'smem constant byte address 0x4 - core index']
  #allocation1 [shape = 'u32[144,128]{1,0:T(1,128)}', space=vmem, size = 0x12000, scoped, tag = 'internal scratch']
  %s0 = inlined_call_operand.vmem [shape: bf16[2,8,128], index: 0, kind: input, shape index: {}]
  %s1 = inlined_call_operand.vmem [shape: f32[1,128], index: 1, kind: input, shape index: {}]
  %s2 = inlined_call_operand.vmem [shape: f32[1,128], index: 2, kind: input, shape index: {}]
  %s3 = inlined_call_operand.vmem [shape: bf16[128,128], index: 3, kind: input, shape index: {}]
  %s4 = inlined_call_operand.vmem [shape: f32[1,128], index: 4, kind: input, shape index: {}]
  %s5 = inlined_call_operand.vmem [shape: bf16[128,128], index: 5, kind: input, shape index: {}]
  %s6 = inlined_call_operand.vmem [shape: f32[1,128], index: 6, kind: input, shape index: {}]
  %s7 = inlined_call_operand.vmem [shape: f32[1,128], index: 7, kind: input, shape index: {}]
  %s8 = inlined_call_operand.vmem [shape: f32[1,128], index: 8, kind: input, shape index: {}]
  %s9 = inlined_call_operand.vmem [shape: bf16[128,128], index: 9, kind: input, shape index: {}]
  %s10 = inlined_call_operand.vmem [shape: f32[1,128], index: 10, kind: input, shape index: {}]
  %s11 = inlined_call_operand.hbm [shape: f32[2,1,128], index: 11, kind: output, shape index: {}]
  %s12 = sld [smem:[#allocation0]]
  $region77: #{simba_forward.9} parent=0
    _
  %s14 = ssub.s32 1, %s12
  %s15 = scalar_select 0, %s14, %s12
  $region1: #{simba_forward.9} parent=0
    #allocation2 [shape = 'u8[1024]{0}', space=vmem, size = 0x400, scoped, tag = 'output window, operand 0']
    #allocation3 [shape = 's32[2]{0}', space=sflag, size = 0x8, scoped, tag = 'scoped memory for simba_forward.9']
    %16 = vsyncpa [#allocation3], 0
    %s17 = scalar_lea.sflag [#allocation3], 1
    %18 = vsyncpa %s17, 0
    loop: start=0, step=1, limit=4
    $region2: #{simba_forward.9} parent=1 // loop_pre_header
      _
    $region3: #{simba_forward.9} parent=1 // loop_header
      %s20 = sphi 0, %s24
      %p21 = scmp.ge.s32.totalorder %s20, 4
      %s30 = sphi 0, %s32
      %s33 = sphi 0, %s30
      %s34 = sphi 0, %s33
      %s50 = sphi 0, %s34
      %s54 = sphi 0, %s54
      %s56 = sphi 0, %s54
      %s57 = sphi 0, %s56
      %s71 = sphi 0, %s57
      %s75 = sphi 0, %s75
      %s77 = sphi 0, %s75
      %s78 = sphi 0, %s77
      %s92 = sphi 0, %s78
      %s96 = sphi 0, %s96
      %s98 = sphi 0, %s96
      %s99 = sphi 0, %s98
      %s113 = sphi 0, %s99
      %s117 = sphi 0, %s117
      %s119 = sphi 0, %s117
      %s120 = sphi 0, %s119
      %s134 = sphi 0, %s120
      %s138 = sphi 0, %s138
      %s140 = sphi 0, %s138
      %s141 = sphi 0, %s140
      %s155 = sphi 0, %s141
      %s159 = sphi 0, %s159
      %s161 = sphi 0, %s159
      %s162 = sphi 0, %s161
      %s176 = sphi 0, %s162
      %s180 = sphi 0, %s180
      %s182 = sphi 0, %s180
      %s183 = sphi 0, %s182
      %s197 = sphi 0, %s183
      %s201 = sphi 0, %s201
      %s203 = sphi 0, %s201
      %s204 = sphi 0, %s203
      %s218 = sphi 0, %s204
      %s222 = sphi 0, %s222
      %s224 = sphi 0, %s222
      %s225 = sphi 0, %s224
      %s239 = sphi 0, %s225
      %s243 = sphi 0, %s243
      %s245 = sphi 0, %s243
      %s246 = sphi 0, %s245
      %s260 = sphi 0, %s246
      %s266 = sphi 0, %s268
      %s269 = sphi 0, %s266
      %s270 = sphi 0, %s269
      %s286 = sphi 0, %s270
    $region4: #{simba_forward.9} parent=1 // loop_header_branch
      %23 = sbr.rel (%p21) target = $region8
    $region5: #{simba_forward.9} parent=1 // loop_body
      %s25 = ssub.s32 %s20, 1
      %s26 = ssub.s32 %s20, 2
      %s27 = sadd.s32 %s20, 1
      %s28 = ssub.s32 %s20, %s27
      %p29 = scmp.eq.s32.totalorder %s28, 0
      %s31 = sadd.s32 %s30, 1
      %s32 = scalar_select %p29, %s30, %s31
      %p35 = pneg %p29
      %p36 = scmp.eq.s32.totalorder %s20, 1
      %p37 = por %p35, %p36
      %p38 = scmp.ne.s32.totalorder %s30, %s33
      %p39 = scmp.eq.s32.totalorder %s20, 0
      %p40 = por %p38, %p39
      %p41 = scmp.ne.s32.totalorder %s30, %s33
      %p42 = scmp.eq.s32.totalorder %s25, 1
      %p43 = por %p41, %p42
      %p44 = scmp.ne.s32.totalorder %s33, %s34
      %p45 = scmp.eq.s32.totalorder %s25, 0
      %p46 = por %p44, %p45
      %p47 = scmp.ne.s32.totalorder %s33, %s34
      %p48 = scmp.eq.s32.totalorder %s26, 1
      %p49 = por %p47, %p48
      %p51 = scmp.ne.s32.totalorder %s34, %s50
      %p52 = scmp.eq.s32.totalorder %s26, 0
      %p53 = por %p51, %p52
      %s55 = sadd.s32 %s54, 1
      %p58 = scmp.eq.s32.totalorder %s20, 1
      %p59 = scmp.ne.s32.totalorder %s54, %s56
      %p60 = scmp.eq.s32.totalorder %s20, 0
      %p61 = por %p59, %p60
      %p62 = scmp.ne.s32.totalorder %s54, %s56
      %p63 = scmp.eq.s32.totalorder %s25, 1
      %p64 = por %p62, %p63
      %p65 = scmp.ne.s32.totalorder %s56, %s57
      %p66 = scmp.eq.s32.totalorder %s25, 0
      %p67 = por %p65, %p66
      %p68 = scmp.ne.s32.totalorder %s56, %s57
      %p69 = scmp.eq.s32.totalorder %s26, 1
      %p70 = por %p68, %p69
      %p72 = scmp.ne.s32.totalorder %s57, %s71
      %p73 = scmp.eq.s32.totalorder %s26, 0
      %p74 = por %p72, %p73
      %s76 = sadd.s32 %s75, 1
      %p79 = scmp.eq.s32.totalorder %s20, 1
      %p80 = scmp.ne.s32.totalorder %s75, %s77
      %p81 = scmp.eq.s32.totalorder %s20, 0
      %p82 = por %p80, %p81
      %p83 = scmp.ne.s32.totalorder %s75, %s77
      %p84 = scmp.eq.s32.totalorder %s25, 1
      %p85 = por %p83, %p84
      %p86 = scmp.ne.s32.totalorder %s77, %s78
      %p87 = scmp.eq.s32.totalorder %s25, 0
      %p88 = por %p86, %p87
      %p89 = scmp.ne.s32.totalorder %s77, %s78
      %p90 = scmp.eq.s32.totalorder %s26, 1
      %p91 = por %p89, %p90
      %p93 = scmp.ne.s32.totalorder %s78, %s92
      %p94 = scmp.eq.s32.totalorder %s26, 0
      %p95 = por %p93, %p94
      %s97 = sadd.s32 %s96, 1
      %p100 = scmp.eq.s32.totalorder %s20, 1
      %p101 = scmp.ne.s32.totalorder %s96, %s98
      %p102 = scmp.eq.s32.totalorder %s20, 0
      %p103 = por %p101, %p102
      %p104 = scmp.ne.s32.totalorder %s96, %s98
      %p105 = scmp.eq.s32.totalorder %s25, 1
      %p106 = por %p104, %p105
      %p107 = scmp.ne.s32.totalorder %s98, %s99
      %p108 = scmp.eq.s32.totalorder %s25, 0
      %p109 = por %p107, %p108
      %p110 = scmp.ne.s32.totalorder %s98, %s99
      %p111 = scmp.eq.s32.totalorder %s26, 1
      %p112 = por %p110, %p111
      %p114 = scmp.ne.s32.totalorder %s99, %s113
      %p115 = scmp.eq.s32.totalorder %s26, 0
      %p116 = por %p114, %p115
      %s118 = sadd.s32 %s117, 1
      %p121 = scmp.eq.s32.totalorder %s20, 1
      %p122 = scmp.ne.s32.totalorder %s117, %s119
      %p123 = scmp.eq.s32.totalorder %s20, 0
      %p124 = por %p122, %p123
      %p125 = scmp.ne.s32.totalorder %s117, %s119
      %p126 = scmp.eq.s32.totalorder %s25, 1
      %p127 = por %p125, %p126
      %p128 = scmp.ne.s32.totalorder %s119, %s120
      %p129 = scmp.eq.s32.totalorder %s25, 0
      %p130 = por %p128, %p129
      %p131 = scmp.ne.s32.totalorder %s119, %s120
      %p132 = scmp.eq.s32.totalorder %s26, 1
      %p133 = por %p131, %p132
      %p135 = scmp.ne.s32.totalorder %s120, %s134
      %p136 = scmp.eq.s32.totalorder %s26, 0
      %p137 = por %p135, %p136
      %s139 = sadd.s32 %s138, 1
      %p142 = scmp.eq.s32.totalorder %s20, 1
      %p143 = scmp.ne.s32.totalorder %s138, %s140
      %p144 = scmp.eq.s32.totalorder %s20, 0
      %p145 = por %p143, %p144
      %p146 = scmp.ne.s32.totalorder %s138, %s140
      %p147 = scmp.eq.s32.totalorder %s25, 1
      %p148 = por %p146, %p147
      %p149 = scmp.ne.s32.totalorder %s140, %s141
      %p150 = scmp.eq.s32.totalorder %s25, 0
      %p151 = por %p149, %p150
      %p152 = scmp.ne.s32.totalorder %s140, %s141
      %p153 = scmp.eq.s32.totalorder %s26, 1
      %p154 = por %p152, %p153
      %p156 = scmp.ne.s32.totalorder %s141, %s155
      %p157 = scmp.eq.s32.totalorder %s26, 0
      %p158 = por %p156, %p157
      %s160 = sadd.s32 %s159, 1
      %p163 = scmp.eq.s32.totalorder %s20, 1
      %p164 = scmp.ne.s32.totalorder %s159, %s161
      %p165 = scmp.eq.s32.totalorder %s20, 0
      %p166 = por %p164, %p165
      %p167 = scmp.ne.s32.totalorder %s159, %s161
      %p168 = scmp.eq.s32.totalorder %s25, 1
      %p169 = por %p167, %p168
      %p170 = scmp.ne.s32.totalorder %s161, %s162
      %p171 = scmp.eq.s32.totalorder %s25, 0
      %p172 = por %p170, %p171
      %p173 = scmp.ne.s32.totalorder %s161, %s162
      %p174 = scmp.eq.s32.totalorder %s26, 1
      %p175 = por %p173, %p174
      %p177 = scmp.ne.s32.totalorder %s162, %s176
      %p178 = scmp.eq.s32.totalorder %s26, 0
      %p179 = por %p177, %p178
      %s181 = sadd.s32 %s180, 1
      %p184 = scmp.eq.s32.totalorder %s20, 1
      %p185 = scmp.ne.s32.totalorder %s180, %s182
      %p186 = scmp.eq.s32.totalorder %s20, 0
      %p187 = por %p185, %p186
      %p188 = scmp.ne.s32.totalorder %s180, %s182
      %p189 = scmp.eq.s32.totalorder %s25, 1
      %p190 = por %p188, %p189
      %p191 = scmp.ne.s32.totalorder %s182, %s183
      %p192 = scmp.eq.s32.totalorder %s25, 0
      %p193 = por %p191, %p192
      %p194 = scmp.ne.s32.totalorder %s182, %s183
      %p195 = scmp.eq.s32.totalorder %s26, 1
      %p196 = por %p194, %p195
      %p198 = scmp.ne.s32.totalorder %s183, %s197
      %p199 = scmp.eq.s32.totalorder %s26, 0
      %p200 = por %p198, %p199
      %s202 = sadd.s32 %s201, 1
      %p205 = scmp.eq.s32.totalorder %s20, 1
      %p206 = scmp.ne.s32.totalorder %s201, %s203
      %p207 = scmp.eq.s32.totalorder %s20, 0
      %p208 = por %p206, %p207
      %p209 = scmp.ne.s32.totalorder %s201, %s203
      %p210 = scmp.eq.s32.totalorder %s25, 1
      %p211 = por %p209, %p210
      %p212 = scmp.ne.s32.totalorder %s203, %s204
      %p213 = scmp.eq.s32.totalorder %s25, 0
      %p214 = por %p212, %p213
      %p215 = scmp.ne.s32.totalorder %s203, %s204
      %p216 = scmp.eq.s32.totalorder %s26, 1
      %p217 = por %p215, %p216
      %p219 = scmp.ne.s32.totalorder %s204, %s218
      %p220 = scmp.eq.s32.totalorder %s26, 0
      %p221 = por %p219, %p220
      %s223 = sadd.s32 %s222, 1
      %p226 = scmp.eq.s32.totalorder %s20, 1
      %p227 = scmp.ne.s32.totalorder %s222, %s224
      %p228 = scmp.eq.s32.totalorder %s20, 0
      %p229 = por %p227, %p228
      %p230 = scmp.ne.s32.totalorder %s222, %s224
      %p231 = scmp.eq.s32.totalorder %s25, 1
      %p232 = por %p230, %p231
      %p233 = scmp.ne.s32.totalorder %s224, %s225
      %p234 = scmp.eq.s32.totalorder %s25, 0
      %p235 = por %p233, %p234
      %p236 = scmp.ne.s32.totalorder %s224, %s225
      %p237 = scmp.eq.s32.totalorder %s26, 1
      %p238 = por %p236, %p237
      %p240 = scmp.ne.s32.totalorder %s225, %s239
      %p241 = scmp.eq.s32.totalorder %s26, 0
      %p242 = por %p240, %p241
      %s244 = sadd.s32 %s243, 1
      %p247 = scmp.eq.s32.totalorder %s20, 1
      %p248 = scmp.ne.s32.totalorder %s243, %s245
      %p249 = scmp.eq.s32.totalorder %s20, 0
      %p250 = por %p248, %p249
      %p251 = scmp.ne.s32.totalorder %s243, %s245
      %p252 = scmp.eq.s32.totalorder %s25, 1
      %p253 = por %p251, %p252
      %p254 = scmp.ne.s32.totalorder %s245, %s246
      %p255 = scmp.eq.s32.totalorder %s25, 0
      %p256 = por %p254, %p255
      %p257 = scmp.ne.s32.totalorder %s245, %s246
      %p258 = scmp.eq.s32.totalorder %s26, 1
      %p259 = por %p257, %p258
      %p261 = scmp.ne.s32.totalorder %s246, %s260
      %p262 = scmp.eq.s32.totalorder %s26, 0
      %p263 = por %p261, %p262
      %s264 = ssub.s32 %s20, %s27
      %p265 = scmp.eq.s32.totalorder %s264, 0
      %s267 = sadd.s32 %s266, 1
      %s268 = scalar_select %p265, %s266, %s267
      %p271 = pneg %p265
      %p272 = scmp.eq.s32.totalorder %s20, 1
      %p273 = por %p271, %p272
      %p274 = scmp.ne.s32.totalorder %s266, %s269
      %p275 = scmp.eq.s32.totalorder %s20, 0
      %p276 = por %p274, %p275
      %p277 = scmp.ne.s32.totalorder %s266, %s269
      %p278 = scmp.eq.s32.totalorder %s25, 1
      %p279 = por %p277, %p278
      %p280 = scmp.ne.s32.totalorder %s269, %s270
      %p281 = scmp.eq.s32.totalorder %s25, 0
      %p282 = por %p280, %p281
      %p283 = scmp.ne.s32.totalorder %s269, %s270
      %p284 = scmp.eq.s32.totalorder %s26, 1
      %p285 = por %p283, %p284
      %p287 = scmp.ne.s32.totalorder %s270, %s286
      %p288 = scmp.eq.s32.totalorder %s26, 0
      %p289 = por %p287, %p288
      %p290 = scmp.le.s32.totalorder 1, %s20
      %p291 = scmp.lt.s32.totalorder %s20, 3
      %p292 = pnand %p290, %p291
      %p293 = pneg %p292
      // Predicated region
      $region9: #{simba_forward.9} parent=5 // pred_check
        _
      $region10: #{simba_forward.9} parent=5 // pred_check_branch
        %295 = sbr.rel (%p292) target = $region12
      $region11: #{simba_forward.9} parent=5 // pred_region
        %s296 = ssub.s32 %s20, 1
        // Predicated region
        $region13: #{simba_forward.9} parent=11 // pred_check
          %p297 = pneg %p67
        $region14: #{simba_forward.9} parent=11 // pred_check_branch
          %299 = sbr.rel (%p297) target = $region16
        $region15: #{simba_forward.9} parent=11 // pred_region
          _
        $region16: #{simba_forward.9} parent=11 // pred_fallthru
          _
        // Predicated region
        $region17: #{simba_forward.9} parent=11 // pred_check
          %p300 = pneg %p88
        $region18: #{simba_forward.9} parent=11 // pred_check_branch
          %302 = sbr.rel (%p300) target = $region20
        $region19: #{simba_forward.9} parent=11 // pred_region
          _
        $region20: #{simba_forward.9} parent=11 // pred_fallthru
          _
        // Predicated region
        $region21: #{simba_forward.9} parent=11 // pred_check
          %p303 = pneg %p109
        $region22: #{simba_forward.9} parent=11 // pred_check_branch
          %305 = sbr.rel (%p303) target = $region24
        $region23: #{simba_forward.9} parent=11 // pred_region
          _
        $region24: #{simba_forward.9} parent=11 // pred_fallthru
          _
        // Predicated region
        $region25: #{simba_forward.9} parent=11 // pred_check
          %p306 = pneg %p130
        $region26: #{simba_forward.9} parent=11 // pred_check_branch
          %308 = sbr.rel (%p306) target = $region28
        $region27: #{simba_forward.9} parent=11 // pred_region
          _
        $region28: #{simba_forward.9} parent=11 // pred_fallthru
          _
        // Predicated region
        $region29: #{simba_forward.9} parent=11 // pred_check
          %p309 = pneg %p151
        $region30: #{simba_forward.9} parent=11 // pred_check_branch
          %311 = sbr.rel (%p309) target = $region32
        $region31: #{simba_forward.9} parent=11 // pred_region
          _
        $region32: #{simba_forward.9} parent=11 // pred_fallthru
          _
        // Predicated region
        $region33: #{simba_forward.9} parent=11 // pred_check
          %p312 = pneg %p172
        $region34: #{simba_forward.9} parent=11 // pred_check_branch
          %314 = sbr.rel (%p312) target = $region36
        $region35: #{simba_forward.9} parent=11 // pred_region
          _
        $region36: #{simba_forward.9} parent=11 // pred_fallthru
          _
        // Predicated region
        $region37: #{simba_forward.9} parent=11 // pred_check
          %p315 = pneg %p193
        $region38: #{simba_forward.9} parent=11 // pred_check_branch
          %317 = sbr.rel (%p315) target = $region40
        $region39: #{simba_forward.9} parent=11 // pred_region
          _
        $region40: #{simba_forward.9} parent=11 // pred_fallthru
          _
        // Predicated region
        $region41: #{simba_forward.9} parent=11 // pred_check
          %p318 = pneg %p214
        $region42: #{simba_forward.9} parent=11 // pred_check_branch
          %320 = sbr.rel (%p318) target = $region44
        $region43: #{simba_forward.9} parent=11 // pred_region
          _
        $region44: #{simba_forward.9} parent=11 // pred_fallthru
          _
        // Predicated region
        $region45: #{simba_forward.9} parent=11 // pred_check
          %p321 = pneg %p235
        $region46: #{simba_forward.9} parent=11 // pred_check_branch
          %323 = sbr.rel (%p321) target = $region48
        $region47: #{simba_forward.9} parent=11 // pred_region
          _
        $region48: #{simba_forward.9} parent=11 // pred_fallthru
          _
        // Predicated region
        $region49: #{simba_forward.9} parent=11 // pred_check
          %p324 = pneg %p256
        $region50: #{simba_forward.9} parent=11 // pred_check_branch
          %326 = sbr.rel (%p324) target = $region52
        $region51: #{simba_forward.9} parent=11 // pred_region
          _
        $region52: #{simba_forward.9} parent=11 // pred_fallthru
          _
      $region12: #{simba_forward.9} parent=5 // pred_fallthru
        _
      %p327 = scmp.lt.s32.totalorder %s20, 2
      // Predicated region
      $region53: #{simba_forward.9} parent=5 // pred_check
        %p328 = pneg %p327
      $region54: #{simba_forward.9} parent=5 // pred_check_branch
        %330 = sbr.rel (%p328) target = $region56
      $region55: #{simba_forward.9} parent=5 // pred_region
        // Predicated region
        $region57: #{simba_forward.9} parent=55 // pred_check
          %p331 = pneg %p40
        $region58: #{simba_forward.9} parent=55 // pred_check_branch
          %333 = sbr.rel (%p331) target = $region60
        $region59: #{simba_forward.9} parent=55 // pred_region
          %p334 = scmp.lt.s32.totalorder %s20, 1
          %s335 = scalar_select %p334, %s20, 1
          %s336 = smul.addr %s335, 4
          %s337 = scalar_lea.vmem %s0, %s336
        $region60: #{simba_forward.9} parent=55 // pred_fallthru
          _
      $region56: #{simba_forward.9} parent=5 // pred_fallthru
        _
      %p338 = scmp.le.s32.totalorder 1, %s20
      %p339 = scmp.lt.s32.totalorder %s20, 3
      %p340 = pnand %p338, %p339
      %p341 = pneg %p340
      // Predicated region
      $region61: #{simba_forward.9} parent=5 // pred_check
        _
      $region62: #{simba_forward.9} parent=5 // pred_check_branch
        %343 = sbr.rel (%p340) target = $region64
      $region63: #{simba_forward.9} parent=5 // pred_region
        %s344 = ssub.s32 %s20, 1
        %p345 = scmp.lt.s32.totalorder %s25, 1
        %s346 = scalar_select %p345, %s25, 1
        %s347 = smul.addr %s346, 4
        %s348 = scalar_lea.vmem %s0, %s347
        %p349 = pneg %p46
        %p350 = pneg %p43
        %p351 = pneg %p67
        %p352 = pneg %p64
        %p353 = pneg %p88
        %p354 = pneg %p85
        %p355 = pneg %p109
        %p356 = pneg %p106
        %p357 = pneg %p130
        %p358 = pneg %p127
        %p359 = pneg %p151
        %p360 = pneg %p148
        %p361 = pneg %p172
        %p362 = pneg %p169
        %p363 = pneg %p193
        %p364 = pneg %p190
        %p365 = pneg %p214
        %p366 = pneg %p211
        %p367 = pneg %p235
        %p368 = pneg %p232
        %p369 = pneg %p256
        %p370 = pneg %p253
        %p371 = pneg %p282
        %p372 = pneg %p279
        %s373 = sand.u32 %s269, 1
        %s374 = scalar_lea.sflag [#allocation3], %s373
        %s375 = sand.u32 %s269, 1
        %s376 = scalar_lea.vmem [#allocation2], %s375
        %p377 = scmp.lt.s32.totalorder %s25, 1
        %s378 = scalar_select %p377, %s25, 1
        %s379 = smul.addr %s378, 4
        %s380 = scalar_lea.vmem %s0, %s379
        %v386 = vld [vmem:[%s380] sm:$0xf]
        %vm387 = vcmask 64512
        %v389 = vsel %vm387, 1065369472, 0
        %vm391 = vcmask 1043456
        %v393 = vsel %vm391, %v386, 0
        %395 = vmatprep.subr.bf16.mxu0 0
        %396 = vmatpush1.bf16.msra.mxu0 %v393
        %397 = vmatprep.subr.bf16.mxu0 0
        %398 = vmatpush1.bf16.msra.mxu0 0
        %399 = vmatprep.subr.bf16.mxu0 0
        %400 = vmatpush1.bf16.msra.mxu0 0
        %401 = vmatprep.subr.bf16.mxu0 0
        %402 = vmatpush1.bf16.msra.mxu0 0
        %403 = vmatprep.subr.bf16.mxu0 0
        %404 = vmatpush1.bf16.msra.mxu0 0
        %405 = vmatprep.subr.bf16.mxu0 0
        %406 = vmatpush1.bf16.msra.mxu0 0
        %407 = vmatprep.subr.bf16.mxu0 0
        %408 = vmatpush1.bf16.msra.mxu0 0
        %409 = vmatprep.subr.bf16.mxu0 0
        %410 = vmatpush1.bf16.msra.mxu0 0
        %411 = vmatprep.subr.bf16.mxu0 0
        %412 = vmatpush1.bf16.msra.mxu0 0
        %413 = vmatprep.subr.bf16.mxu0 0
        %414 = vmatpush1.bf16.msra.mxu0 0
        %415 = vmatprep.subr.bf16.mxu0 0
        %416 = vmatpush1.bf16.msra.mxu0 0
        %417 = vmatprep.subr.bf16.mxu0 0
        %418 = vmatpush1.bf16.msra.mxu0 0
        %419 = vmatprep.subr.bf16.mxu0 0
        %420 = vmatpush1.bf16.msra.mxu0 0
        %421 = vmatprep.subr.bf16.mxu0 0
        %422 = vmatpush1.bf16.msra.mxu0 0
        %423 = vmatprep.subr.bf16.mxu0 0
        %424 = vmatpush1.bf16.msra.mxu0 0
        %425 = vmatprep.subr.bf16.mxu0 0
        %426 = vmatpush1.bf16.msra.mxu0 0
        %427 = vmatprep.mubr.bf16.mxu0 0
        %428 = vmatmul.mubr.bf16.gmra.mrb[0].mxu0 %v389
        %v429 = vpop.f32.mrb[0].mxu0
        %v430 = vadd.f32 0.0, %v429
        %v431 = vpop.f32.mrb[0].mxu0
        %v432 = vpop.f32.mrb[0].mxu0
        %v433 = vpop.f32.mrb[0].mxu0
        %434 = vdwg.mxu0
        %v435 = vmul.f32 %v430, 0.125
        %v436 = vld [vmem:[%s1] sm:$0x1]
        %v437 = vld [vmem:[%s2] sm:$0x1]
        %vm438 = vcmask 1040384
        %v439 = vsel %vm438, %v435, 0.0
        %440 = vadd.xlane.f32.xlu0 %v439
        %v441 = vpop.xlane.xlu0 %440
        %v442 = vmul.f32 %v441, 0.015625
        %v443 = vmul.f32 %v435, %v435
        %v444 = vsel %vm438, %v443, 0.0
        %445 = vadd.xlane.f32.xlu0 %v444
        %v446 = vpop.xlane.xlu0 %445
        %v447 = vmul.f32 %v446, 0.015625
        %v448 = vmul.f32 %v442, %v442
        %v449 = vsub.f32 %v447, %v448
        %v450 = vmax.f32 %v449, 0.0
        %v451 = vsub.f32 %v435, %v442
        %v452 = vadd.f32 %v450, 1e-05
        %v453 = vrsqrt.pop %v452
        %v454 = vmul.f32 %v451, %v453
        %v455 = vmul.f32 %v454, %v436
        %v456 = vadd.f32 %v455, %v437
        %v457 = vpack.c.bf16 %v456, %v456
        %v458 = vld [vmem:[%s3] sm:$0xf]
        %v459 = vld [vmem:[%s3 + $0x4] sm:$0xf]
        %v460 = vld [vmem:[%s3 + $0x8] sm:$0xf]
        %v461 = vld [vmem:[%s3 + $0xc] sm:$0xf]
        %v462 = vld [vmem:[%s3 + $0x10] sm:$0xf]
        %v463 = vld [vmem:[%s3 + $0x14] sm:$0xf]
        %v464 = vld [vmem:[%s3 + $0x18] sm:$0xf]
        %v465 = vld [vmem:[%s3 + $0x1c] sm:$0xf]
        %v466 = vld [vmem:[%s3 + $0x20] sm:$0xf]
        %v467 = vld [vmem:[%s3 + $0x24] sm:$0xf]
        %v468 = vld [vmem:[%s3 + $0x28] sm:$0xf]
        %v469 = vld [vmem:[%s3 + $0x2c] sm:$0xf]
        %v470 = vld [vmem:[%s3 + $0x30] sm:$0xf]
        %v471 = vld [vmem:[%s3 + $0x34] sm:$0xf]
        %v472 = vld [vmem:[%s3 + $0x38] sm:$0xf]
        %v473 = vld [vmem:[%s3 + $0x3c] sm:$0xf]
        %v474 = vld [vmem:[%s4] sm:$0x1]
        %v491 = vunpack.c.l.b16 %v458
        %v492 = vunpack.c.l.b16 %v459
        %v493 = vunpack.c.l.b16 %v460
        %v494 = vunpack.c.l.b16 %v461
        %v495 = vunpack.c.l.b16 %v462
        %v496 = vunpack.c.l.b16 %v463
        %v497 = vunpack.c.l.b16 %v464
        %v498 = vunpack.c.l.b16 %v465
        %v499 = vunpack.c.l.b16 %v466
        %v500 = vunpack.c.l.b16 %v467
        %v501 = vunpack.c.l.b16 %v468
        %v502 = vunpack.c.l.b16 %v469
        %v503 = vunpack.c.l.b16 %v470
        %v504 = vunpack.c.l.b16 %v471
        %v505 = vunpack.c.l.b16 %v472
        %v506 = vunpack.c.l.b16 %v473
        %v507 = vpack.c.b16 %v492, %v491
        %v508 = vpack.c.b16 %v494, %v493
        %v509 = vpack.c.b16 %v496, %v495
        %v510 = vpack.c.b16 %v498, %v497
        %v511 = vpack.c.b16 %v500, %v499
        %v512 = vpack.c.b16 %v502, %v501
        %v513 = vpack.c.b16 %v504, %v503
        %v514 = vpack.c.b16 %v506, %v505
        %523 = vmatprep.subr.bf16.mxu0 0
        %524 = vmatpush1.bf16.msra.mxu0 %v507
        %525 = vmatprep.subr.bf16.mxu0 0
        %526 = vmatpush1.bf16.msra.mxu0 %v508
        %527 = vmatprep.subr.bf16.mxu0 0
        %528 = vmatpush1.bf16.msra.mxu0 %v509
        %529 = vmatprep.subr.bf16.mxu0 0
        %530 = vmatpush1.bf16.msra.mxu0 %v510
        %531 = vmatprep.subr.bf16.mxu0 0
        %532 = vmatpush1.bf16.msra.mxu0 %v511
        %533 = vmatprep.subr.bf16.mxu0 0
        %534 = vmatpush1.bf16.msra.mxu0 %v512
        %535 = vmatprep.subr.bf16.mxu0 0
        %536 = vmatpush1.bf16.msra.mxu0 %v513
        %537 = vmatprep.subr.bf16.mxu0 0
        %538 = vmatpush1.bf16.msra.mxu0 %v514
        %539 = vmatprep.subr.bf16.mxu0 0
        %540 = vmatpush1.bf16.msra.mxu0 0
        %541 = vmatprep.subr.bf16.mxu0 0
        %542 = vmatpush1.bf16.msra.mxu0 0
        %543 = vmatprep.subr.bf16.mxu0 0
        %544 = vmatpush1.bf16.msra.mxu0 0
        %545 = vmatprep.subr.bf16.mxu0 0
        %546 = vmatpush1.bf16.msra.mxu0 0
        %547 = vmatprep.subr.bf16.mxu0 0
        %548 = vmatpush1.bf16.msra.mxu0 0
        %549 = vmatprep.subr.bf16.mxu0 0
        %550 = vmatpush1.bf16.msra.mxu0 0
        %551 = vmatprep.subr.bf16.mxu0 0
        %552 = vmatpush1.bf16.msra.mxu0 0
        %553 = vmatprep.subr.bf16.mxu0 0
        %554 = vmatpush1.bf16.msra.mxu0 0
        %555 = vmatprep.mubr.bf16.mxu0 0
        %556 = vmatmul.mubr.bf16.gmra.mrb[0].mxu0 %v457
        %v557 = vpop.f32.mrb[0].mxu0
        %v558 = vadd.f32 %v474, %v557
        %v559 = vpop.f32.mrb[0].mxu0
        %v560 = vpop.f32.mrb[0].mxu0
        %v561 = vpop.f32.mrb[0].mxu0
        %562 = vdwg.mxu0
        %v563 = vpack.c.bf16 %v558, %v558
        %v564 = vmul.bf16 %v563, %v563
        %v565 = vmul.bf16 %v563, %v564
        %v566 = vmul.bf16 %v565, 1027030327
        %v567 = vadd.bf16 %v563, %v566
        %v568 = vmul.bf16 %v567, 1061961548
        %v569 = vtanh.bf16.pop %v568
        %v570 = vadd.bf16 %v569, 1065369472
        %v571 = vmul.bf16 %v570, 1056980736
        %v572 = vmul.bf16 %v563, %v571
        %v573 = vld [vmem:[%s5] sm:$0xf]
        %v574 = vld [vmem:[%s5 + $0x4] sm:$0xf]
        %v575 = vld [vmem:[%s5 + $0x8] sm:$0xf]
        %v576 = vld [vmem:[%s5 + $0xc] sm:$0xf]
        %v577 = vld [vmem:[%s5 + $0x10] sm:$0xf]
        %v578 = vld [vmem:[%s5 + $0x14] sm:$0xf]
        %v579 = vld [vmem:[%s5 + $0x18] sm:$0xf]
        %v580 = vld [vmem:[%s5 + $0x1c] sm:$0xf]
        %v581 = vld [vmem:[%s5 + $0x20] sm:$0xf]
        %v582 = vld [vmem:[%s5 + $0x24] sm:$0xf]
        %v583 = vld [vmem:[%s5 + $0x28] sm:$0xf]
        %v584 = vld [vmem:[%s5 + $0x2c] sm:$0xf]
        %v585 = vld [vmem:[%s5 + $0x30] sm:$0xf]
        %v586 = vld [vmem:[%s5 + $0x34] sm:$0xf]
        %v587 = vld [vmem:[%s5 + $0x38] sm:$0xf]
        %v588 = vld [vmem:[%s5 + $0x3c] sm:$0xf]
        %v589 = vld [vmem:[%s6] sm:$0x1]
        %v606 = vunpack.c.l.b16 %v573
        %v607 = vunpack.c.l.b16 %v574
        %v608 = vunpack.c.l.b16 %v575
        %v609 = vunpack.c.l.b16 %v576
        %v610 = vunpack.c.l.b16 %v577
        %v611 = vunpack.c.l.b16 %v578
        %v612 = vunpack.c.l.b16 %v579
        %v613 = vunpack.c.l.b16 %v580
        %v614 = vunpack.c.l.b16 %v581
        %v615 = vunpack.c.l.b16 %v582
        %v616 = vunpack.c.l.b16 %v583
        %v617 = vunpack.c.l.b16 %v584
        %v618 = vunpack.c.l.b16 %v585
        %v619 = vunpack.c.l.b16 %v586
        %v620 = vunpack.c.l.b16 %v587
        %v621 = vunpack.c.l.b16 %v588
        %v622 = vpack.c.b16 %v607, %v606
        %v623 = vpack.c.b16 %v609, %v608
        %v624 = vpack.c.b16 %v611, %v610
        %v625 = vpack.c.b16 %v613, %v612
        %v626 = vpack.c.b16 %v615, %v614
        %v627 = vpack.c.b16 %v617, %v616
        %v628 = vpack.c.b16 %v619, %v618
        %v629 = vpack.c.b16 %v621, %v620
        %638 = vmatprep.subr.bf16.mxu0 0
        %639 = vmatpush1.bf16.msra.mxu0 %v622
        %640 = vmatprep.subr.bf16.mxu0 0
        %641 = vmatpush1.bf16.msra.mxu0 %v623
        %642 = vmatprep.subr.bf16.mxu0 0
        %643 = vmatpush1.bf16.msra.mxu0 %v624
        %644 = vmatprep.subr.bf16.mxu0 0
        %645 = vmatpush1.bf16.msra.mxu0 %v625
        %646 = vmatprep.subr.bf16.mxu0 0
        %647 = vmatpush1.bf16.msra.mxu0 %v626
        %648 = vmatprep.subr.bf16.mxu0 0
        %649 = vmatpush1.bf16.msra.mxu0 %v627
        %650 = vmatprep.subr.bf16.mxu0 0
        %651 = vmatpush1.bf16.msra.mxu0 %v628
        %652 = vmatprep.subr.bf16.mxu0 0
        %653 = vmatpush1.bf16.msra.mxu0 %v629
        %654 = vmatprep.subr.bf16.mxu0 0
        %655 = vmatpush1.bf16.msra.mxu0 0
        %656 = vmatprep.subr.bf16.mxu0 0
        %657 = vmatpush1.bf16.msra.mxu0 0
        %658 = vmatprep.subr.bf16.mxu0 0
        %659 = vmatpush1.bf16.msra.mxu0 0
        %660 = vmatprep.subr.bf16.mxu0 0
        %661 = vmatpush1.bf16.msra.mxu0 0
        %662 = vmatprep.subr.bf16.mxu0 0
        %663 = vmatpush1.bf16.msra.mxu0 0
        %664 = vmatprep.subr.bf16.mxu0 0
        %665 = vmatpush1.bf16.msra.mxu0 0
        %666 = vmatprep.subr.bf16.mxu0 0
        %667 = vmatpush1.bf16.msra.mxu0 0
        %668 = vmatprep.subr.bf16.mxu0 0
        %669 = vmatpush1.bf16.msra.mxu0 0
        %670 = vmatprep.mubr.bf16.mxu0 0
        %671 = vmatmul.mubr.bf16.gmra.mrb[0].mxu0 %v572
        %v672 = vpop.f32.mrb[0].mxu0
        %v673 = vadd.f32 %v589, %v672
        %v674 = vpop.f32.mrb[0].mxu0
        %v675 = vpop.f32.mrb[0].mxu0
        %v676 = vpop.f32.mrb[0].mxu0
        %677 = vdwg.mxu0
        %v678 = vadd.f32 %v435, %v673
        %v679 = vld [vmem:[%s7] sm:$0x1]
        %v680 = vld [vmem:[%s8] sm:$0x1]
        %v681 = vsel %vm438, %v678, 0.0
        %682 = vadd.xlane.f32.xlu0 %v681
        %v683 = vpop.xlane.xlu0 %682
        %v684 = vmul.f32 %v683, 0.015625
        %v685 = vmul.f32 %v678, %v678
        %v686 = vsel %vm438, %v685, 0.0
        %687 = vadd.xlane.f32.xlu0 %v686
        %v688 = vpop.xlane.xlu0 %687
        %v689 = vmul.f32 %v688, 0.015625
        %v690 = vmul.f32 %v684, %v684
        %v691 = vsub.f32 %v689, %v690
        %v692 = vmax.f32 %v691, 0.0
        %v693 = vsub.f32 %v678, %v684
        %v694 = vadd.f32 %v692, 1e-05
        %v695 = vrsqrt.pop %v694
        %v696 = vmul.f32 %v693, %v695
        %v697 = vmul.f32 %v696, %v679
        %v698 = vadd.f32 %v697, %v680
        %v699 = vpack.c.bf16 %v698, %v698
        %v700 = vld [vmem:[%s9] sm:$0xf]
        %v701 = vld [vmem:[%s9 + $0x4] sm:$0xf]
        %v702 = vld [vmem:[%s9 + $0x8] sm:$0xf]
        %v703 = vld [vmem:[%s9 + $0xc] sm:$0xf]
        %v704 = vld [vmem:[%s9 + $0x10] sm:$0xf]
        %v705 = vld [vmem:[%s9 + $0x14] sm:$0xf]
        %v706 = vld [vmem:[%s9 + $0x18] sm:$0xf]
        %v707 = vld [vmem:[%s9 + $0x1c] sm:$0xf]
        %v708 = vld [vmem:[%s9 + $0x20] sm:$0xf]
        %v709 = vld [vmem:[%s9 + $0x24] sm:$0xf]
        %v710 = vld [vmem:[%s9 + $0x28] sm:$0xf]
        %v711 = vld [vmem:[%s9 + $0x2c] sm:$0xf]
        %v712 = vld [vmem:[%s9 + $0x30] sm:$0xf]
        %v713 = vld [vmem:[%s9 + $0x34] sm:$0xf]
        %v714 = vld [vmem:[%s9 + $0x38] sm:$0xf]
        %v715 = vld [vmem:[%s9 + $0x3c] sm:$0xf]
        %v716 = vld [vmem:[%s10] sm:$0x1]
        %v733 = vunpack.c.l.b16 %v700
        %v734 = vunpack.c.l.b16 %v701
        %v735 = vunpack.c.l.b16 %v702
        %v736 = vunpack.c.l.b16 %v703
        %v737 = vunpack.c.l.b16 %v704
        %v738 = vunpack.c.l.b16 %v705
        %v739 = vunpack.c.l.b16 %v706
        %v740 = vunpack.c.l.b16 %v707
        %v741 = vunpack.c.l.b16 %v708
        %v742 = vunpack.c.l.b16 %v709
        %v743 = vunpack.c.l.b16 %v710
        %v744 = vunpack.c.l.b16 %v711
        %v745 = vunpack.c.l.b16 %v712
        %v746 = vunpack.c.l.b16 %v713
        %v747 = vunpack.c.l.b16 %v714
        %v748 = vunpack.c.l.b16 %v715
        %v749 = vpack.c.b16 %v734, %v733
        %v750 = vpack.c.b16 %v736, %v735
        %v751 = vpack.c.b16 %v738, %v737
        %v752 = vpack.c.b16 %v740, %v739
        %v753 = vpack.c.b16 %v742, %v741
        %v754 = vpack.c.b16 %v744, %v743
        %v755 = vpack.c.b16 %v746, %v745
        %v756 = vpack.c.b16 %v748, %v747
        %765 = vmatprep.subr.bf16.mxu0 0
        %766 = vmatpush1.bf16.msra.mxu0 %v749
        %767 = vmatprep.subr.bf16.mxu0 0
        %768 = vmatpush1.bf16.msra.mxu0 %v750
        %769 = vmatprep.subr.bf16.mxu0 0
        %770 = vmatpush1.bf16.msra.mxu0 %v751
        %771 = vmatprep.subr.bf16.mxu0 0
        %772 = vmatpush1.bf16.msra.mxu0 %v752
        %773 = vmatprep.subr.bf16.mxu0 0
        %774 = vmatpush1.bf16.msra.mxu0 %v753
        %775 = vmatprep.subr.bf16.mxu0 0
        %776 = vmatpush1.bf16.msra.mxu0 %v754
        %777 = vmatprep.subr.bf16.mxu0 0
        %778 = vmatpush1.bf16.msra.mxu0 %v755
        %779 = vmatprep.subr.bf16.mxu0 0
        %780 = vmatpush1.bf16.msra.mxu0 %v756
        %781 = vmatprep.subr.bf16.mxu0 0
        %782 = vmatpush1.bf16.msra.mxu0 0
        %783 = vmatprep.subr.bf16.mxu0 0
        %784 = vmatpush1.bf16.msra.mxu0 0
        %785 = vmatprep.subr.bf16.mxu0 0
        %786 = vmatpush1.bf16.msra.mxu0 0
        %787 = vmatprep.subr.bf16.mxu0 0
        %788 = vmatpush1.bf16.msra.mxu0 0
        %789 = vmatprep.subr.bf16.mxu0 0
        %790 = vmatpush1.bf16.msra.mxu0 0
        %791 = vmatprep.subr.bf16.mxu0 0
        %792 = vmatpush1.bf16.msra.mxu0 0
        %793 = vmatprep.subr.bf16.mxu0 0
        %794 = vmatpush1.bf16.msra.mxu0 0
        %795 = vmatprep.subr.bf16.mxu0 0
        %796 = vmatpush1.bf16.msra.mxu0 0
        %797 = vmatprep.mubr.bf16.mxu0 0
        %798 = vmatmul.mubr.bf16.gmra.mrb[0].mxu0 %v699
        %v799 = vpop.f32.mrb[0].mxu0
        %v800 = vadd.f32 %v716, %v799
        %v801 = vpop.f32.mrb[0].mxu0
        %v802 = vpop.f32.mrb[0].mxu0
        %v803 = vpop.f32.mrb[0].mxu0
        %804 = vdwg.mxu0
        %805 = vst [vmem:[%s376] sm:$0x1] %v800
        %s806 = sand.u32 %s269, 1
        %s807 = scalar_lea.sflag [#allocation3], %s806
        %s808 = sand.u32 %s269, 1
        %s809 = scalar_lea.vmem [#allocation2], %s808
        // Predicated region
        $region65: #{simba_forward.9} parent=63 // pred_check
          %p810 = pneg %p279
        $region66: #{simba_forward.9} parent=63 // pred_check_branch
          %812 = sbr.rel (%p810) target = $region68
        $region67: #{simba_forward.9} parent=63 // pred_region
          %s814 = ssub.s32 16, 16
          %815 = vsyncadd %s807, %s814
          %s816 = smul.addr %s25, 16
          %s817 = scalar_lea.hbm %s11, %s816
          %s819 = sshll.u32 %s809, 4
          %s820 = int_to_ptr.vmem [resolvable:$true] %s819
          %822 = dma.vmem_to_hbm [thread:$0]  %s820, 16, %s817, %s807
        $region68: #{simba_forward.9} parent=63 // pred_fallthru
          _
      $region64: #{simba_forward.9} parent=5 // pred_fallthru
        _
      %p823 = scmp.le.s32.totalorder 2, %s20
      // Predicated region
      $region69: #{simba_forward.9} parent=5 // pred_check
        %p824 = pneg %p823
      $region70: #{simba_forward.9} parent=5 // pred_check_branch
        %826 = sbr.rel (%p824) target = $region72
      $region71: #{simba_forward.9} parent=5 // pred_region
        %s827 = ssub.s32 %s20, 2
        // Predicated region
        $region73: #{simba_forward.9} parent=71 // pred_check
          %p828 = pneg %p285
        $region74: #{simba_forward.9} parent=71 // pred_check_branch
          %830 = sbr.rel (%p828) target = $region76
        $region75: #{simba_forward.9} parent=71 // pred_region
          %s831 = sand.u32 %s270, 1
          %s832 = scalar_lea.sflag [#allocation3], %s831
          %s833 = sand.u32 %s270, 1
          %s834 = scalar_lea.vmem [#allocation2], %s833
          %835 = dma.done %s832, 16
        $region76: #{simba_forward.9} parent=71 // pred_fallthru
          _
      $region72: #{simba_forward.9} parent=5 // pred_fallthru
        _
    $region6: #{simba_forward.9} parent=1 // loop_footer
      %s24 = sadd.s32 1, %s20
    $region7: #{simba_forward.9} parent=1 // loop_footer_branch
      %19 = sbr.rel target = $region3
    $region8: #{simba_forward.9} parent=1 // loop_exit
      _
    %836 = vsyncpa [#allocation3], 1
    %s837 = scalar_lea.sflag [#allocation3], 1
    %838 = vsyncpa %s837, 1

</llo_original>
